<compile_context>
chip_gen: v7x
topology: tpu7x:2x2x1
jax: 0.10.0
libtpu: 0.0.40
codegen_flags: <defaults>
</compile_context>

<pallas_src>
import functools

import jax
import jax.numpy as jnp
from jax import lax
from jax.experimental import pallas as pl
from jax.experimental.pallas import tpu as pltpu

C = 128          # channels fixed by the module definition
EPS = 1e-5       # InstanceNorm2d default


def _resblock_kernel(x_ref, w1_ref, w2_ref, o_ref, pad_ref, acc_ref, *, H, W):
    # x_ref:  (1, NpadX, C) f32  -- reflection-padded input, flattened (H+2, W+2)
    # w*_ref: (9, C, C)     bf16 -- conv taps, (kh*kw, Cin, Cout)
    # o_ref:  (1, M, C)     f32  -- extended output (W valid + 2 junk cols / row)
    # pad_ref:(NpadX, C)    f32  -- padded-image scratch (reused by both convs)
    # acc_ref:(M, C)        f32  -- conv accumulator (reused by both convs)
    Wp = W + 2
    M = H * Wp
    inv_n = 1.0 / float(H * W)

    def conv(w_ref):
        # 3x3 conv = 9 shifted contiguous-view matmuls over the flat padded buffer.
        for k in range(9):
            dh, dw = k // 3, k % 3
            patch = pad_ref[pl.ds(dh * Wp + dw, M), :].astype(jnp.bfloat16)
            contrib = jnp.dot(patch, w_ref[k],
                              preferred_element_type=jnp.float32)
            if k == 0:
                acc_ref[...] = contrib
            else:
                acc_ref[...] += contrib

    # mask of valid (non-junk) extended rows for the InstanceNorm statistics
    col = lax.broadcasted_iota(jnp.int32, (M, 1), 0) % Wp
    valid = col < W

    def in_stats():
        a = acc_ref[...]
        s1 = jnp.sum(jnp.where(valid, a, 0.0), axis=0, keepdims=True)
        s2 = jnp.sum(jnp.where(valid, a * a, 0.0), axis=0, keepdims=True)
        mean = s1 * inv_n
        var = s2 * inv_n - mean * mean          # one-pass biased variance
        return mean, lax.rsqrt(var + EPS)

    # ---------------- conv1 ----------------
    # Wrapper already reflection-padded x, so filling the scratch is one copy.
    pad_ref[...] = x_ref[0]
    conv(w1_ref)
    mean1, scale1 = in_stats()

    def nr(start, size):
        # IN + ReLU on extended rows [start, start+size) of the conv1 accumulator.
        y = (acc_ref[pl.ds(start, size), :] - mean1) * scale1
        return jnp.maximum(y, 0.0)

    # ---- rebuild padded buffer with ReflectionPad1(ReLU(IN(conv1))) ----
    # Interior: the extended layout and the padded layout share row-stride Wp,
    # so one contiguous bulk store covers every interior pixel (junk columns
    # land on border slots and are overwritten below).
    pad_ref[pl.ds(Wp + 1, M), :] = nr(0, M)
    # left / right reflection columns of the interior rows
    for h in range(H):
        r = h + 1
        pad_ref[pl.ds(r * Wp, 1), :] = nr(h * Wp + 1, 1)
        pad_ref[pl.ds(r * Wp + Wp - 1, 1), :] = nr(h * Wp + (W - 2), 1)
    # top / bottom reflected rows (source rows 1 and H-2)
    for r, sh in ((0, 1), (H + 1, H - 2)):
        pad_ref[pl.ds(r * Wp, 1), :] = nr(sh * Wp + 1, 1)
        pad_ref[pl.ds(r * Wp + 1, W), :] = nr(sh * Wp, W)
        pad_ref[pl.ds(r * Wp + 1 + W, 1), :] = nr(sh * Wp + (W - 2), 1)
    # (rows past the padded image keep the zeros copied from the wrapper padding;
    #  they are only ever read into masked junk columns.)

    # ---------------- conv2 + IN + residual ----------------
    conv(w2_ref)
    mean2, scale2 = in_stats()
    # The interior of padded x, read at offset Wp+1, is exactly aligned with the
    # extended output rows, so the residual add is a single bulk op.
    x_int = x_ref[0, pl.ds(Wp + 1, M), :]
    o_ref[0] = x_int + (acc_ref[...] - mean2) * scale2


def residual_block(x_nchw, w1, b1, w2, b2):
    """x_nchw: (B, 128, H, W) f32. w*: (128,128,3,3) OIHW. b*: (128,).

    b1/b2 are accepted for interface parity but unused: a per-channel bias
    immediately before InstanceNorm2d(affine=False) is exactly cancelled by the
    mean subtraction, so removing it is bit-exact w.r.t. the module semantics.
    """
    del b1, b2
    B, Cin, H, W = x_nchw.shape
    assert Cin == C and H >= 2 and W >= 2, "need C=128 and H,W >= 2 (reflection pad)"
    Hp, Wp = H + 2, W + 2
    Npad = Hp * Wp
    M = H * Wp
    # A few extra (zero) rows so the last (dh=2,dw=2) tap's contiguous view stays
    # in bounds; their contents only ever reach the masked junk columns.
    NpadX = ((Npad + 2 + 15) // 16) * 16

    # Layout glue (in a real model keep activations NHWC and fuse this away).
    x_nhwc = jnp.transpose(x_nchw, (0, 2, 3, 1)).astype(jnp.float32)
    x_pad = jnp.pad(x_nhwc, ((0, 0), (1, 1), (1, 1), (0, 0)), mode="reflect")
    x_flat = jnp.pad(x_pad.reshape(B, Npad, C), ((0, 0), (0, NpadX - Npad), (0, 0)))

    def prep_w(w):   # OIHW -> (kh*kw, Cin, Cout), bf16 (halves weight DMA)
        return jnp.transpose(w, (2, 3, 1, 0)).reshape(9, C, C).astype(jnp.bfloat16)

    w1_p, w2_p = prep_w(w1), prep_w(w2)
    kernel = functools.partial(_resblock_kernel, H=H, W=W)

    out_ext = pl.pallas_call(
        kernel,
        out_shape=jax.ShapeDtypeStruct((B, M, C), jnp.float32),
        grid_spec=pltpu.PrefetchScalarGridSpec(
            num_scalar_prefetch=0,
            grid=(B,),
            in_specs=[
                pl.BlockSpec((1, NpadX, C), lambda b: (b, 0, 0)),
                pl.BlockSpec((9, C, C), lambda b: (0, 0, 0)),
                pl.BlockSpec((9, C, C), lambda b: (0, 0, 0)),
            ],
            out_specs=pl.BlockSpec((1, M, C), lambda b: (b, 0, 0)),
            scratch_shapes=[
                pltpu.VMEM((NpadX, C), jnp.float32),   # padded-image scratch
                pltpu.VMEM((M, C), jnp.float32),       # conv accumulator
            ],
        ),
        compiler_params=pltpu.CompilerParams(
            dimension_semantics=("parallel",)),
    )(x_flat, w1_p, w2_p)

    # Trim junk columns and return to NCHW.
    out = out_ext.reshape(B, H, Wp, C)[:, :, :W, :]
    return jnp.transpose(out, (0, 3, 1, 2))


def _reference(x_nchw, w1, b1, w2, b2):
    # Pure-JAX reference mirroring the PyTorch forward (NCHW, f32, with bias).
    def refl_pad(t):
        return jnp.pad(t, ((0, 0), (0, 0), (1, 1), (1, 1)), mode="reflect")

    def conv(t, w, b):
        y = lax.conv_general_dilated(
            t, w, window_strides=(1, 1), padding="VALID",
            dimension_numbers=("NCHW", "OIHW", "NCHW"))
        return y + b[None, :, None, None]

    def inorm(t):
        mean = jnp.mean(t, axis=(2, 3), keepdims=True)
        var = jnp.mean((t - mean) ** 2, axis=(2, 3), keepdims=True)
        return (t - mean) * lax.rsqrt(var + EPS)

    y = inorm(conv(refl_pad(x_nchw), w1, b1))
    y = jnp.maximum(y, 0.0)
    y = inorm(conv(refl_pad(y), w2, b2))
    return x_nchw + y


if __name__ == "__main__":
    key = jax.random.PRNGKey(0)
    kx, kw1, kb1, kw2, kb2 = jax.random.split(key, 5)

    B, H, W = 2, 16, 16
    x = jax.random.normal(kx, (B, C, H, W), jnp.float32)
    scale = 1.0 / (C * 9) ** 0.5
    w1 = jax.random.normal(kw1, (C, C, 3, 3), jnp.float32) * scale
    b1 = jax.random.normal(kb1, (C,), jnp.float32) * 0.1
    w2 = jax.random.normal(kw2, (C, C, 3, 3), jnp.float32) * scale
    b2 = jax.random.normal(kb2, (C,), jnp.float32) * 0.1

    run = jax.jit(residual_block)
    out = jax.block_until_ready(run(x, w1, b1, w2, b2))

    ref = _reference(x, w1, b1, w2, b2)
    assert out.shape == (B, C, H, W)
    # bf16 MXU operands through two conv+IN stages -> loosened tolerance.
    max_err = float(jnp.max(jnp.abs(out - ref)))
    rel_err = float(jnp.linalg.norm(out - ref) / jnp.linalg.norm(ref))
    assert max_err < 3e-2, max_err
    assert rel_err < 1e-2, rel_err

    print("KERNEL_OK")
</pallas_src>

<mosaic_0001>
module attributes {stable_mosaic.version = 11 : i64} {
  func.func @_resblock_kernel(%arg0: i32, %arg1: memref<1x336x128xf32, #tpu.memory_space<vmem>>, %arg2: memref<9x128x128xbf16, #tpu.memory_space<vmem>>, %arg3: memref<9x128x128xbf16, #tpu.memory_space<vmem>>, %arg4: memref<1x288x128xf32, #tpu.memory_space<vmem>>, %arg5: memref<336x128xf32, #tpu.memory_space<vmem>>, %arg6: memref<288x128xf32, #tpu.memory_space<vmem>>) attributes {dimension_semantics = [#tpu.dimension_semantics<parallel>], iteration_bounds = array<i64: 2>, scalar_prefetch = 0 : i64, scratch_operands = 2 : i64, tpu.core_type = #tpu.core_type<tc>, window_params = [{transform_indices = @transform_0, window_bounds = array<i64: 1, 336, 128>}, {pipeline_mode = #tpu.pipeline_mode<synchronous>, transform_indices = @transform_1, window_bounds = array<i64: 9, 128, 128>}, {pipeline_mode = #tpu.pipeline_mode<synchronous>, transform_indices = @transform_2, window_bounds = array<i64: 9, 128, 128>}, {transform_indices = @transform_3, window_bounds = array<i64: 1, 288, 128>}]} {
    %0 = tpu.iota {dimensions = array<i32: 0>} : vector<288x1xi32>
    %c18_i32 = arith.constant 18 : i32
    %c0_i32 = arith.constant 0 : i32
    %1 = arith.cmpi eq, %c18_i32, %c0_i32 : i32
    %c1_i32 = arith.constant 1 : i32
    %2 = arith.select %1, %c1_i32, %c18_i32 : i32
    %3 = vector.broadcast %2 : i32 to vector<288x1xi32>
    %4 = arith.remsi %0, %3 : vector<288x1xi32>
    %c0_i32_0 = arith.constant 0 : i32
    %5 = vector.broadcast %c0_i32_0 : i32 to vector<288x1xi32>
    %6 = arith.cmpi ne, %4, %5 : vector<288x1xi32>
    %c0_i32_1 = arith.constant 0 : i32
    %7 = vector.broadcast %c0_i32_1 : i32 to vector<288x1xi32>
    %8 = arith.cmpi slt, %4, %7 : vector<288x1xi32>
    %c0_i32_2 = arith.constant 0 : i32
    %9 = arith.cmpi slt, %2, %c0_i32_2 : i32
    %10 = vector.broadcast %9 : i1 to vector<288x1xi1>
    %11 = vector.broadcast %10 : vector<288x1xi1> to vector<288x1xi1>
    %12 = arith.xori %8, %11 : vector<288x1xi1>
    %13 = arith.andi %12, %6 : vector<288x1xi1>
    %14 = vector.broadcast %2 : i32 to vector<288x1xi32>
    %15 = arith.addi %4, %14 : vector<288x1xi32>
    %16 = arith.select %13, %15, %4 : vector<288x1xi1>, vector<288x1xi32>
    %c16_i32 = arith.constant 16 : i32
    %17 = vector.broadcast %c16_i32 : i32 to vector<288x1xi32>
    %18 = arith.cmpi slt, %16, %17 : vector<288x1xi32>
    %c0 = arith.constant 0 : index
    %c0_3 = arith.constant 0 : index
    %c0_4 = arith.constant 0 : index
    %19 = vector.load %arg1[%c0, %c0_3, %c0_4] : memref<1x336x128xf32, #tpu.memory_space<vmem>>, vector<1x336x128xf32>
    %20 = vector.shape_cast %19 : vector<1x336x128xf32> to vector<336x128xf32>
    %c0_5 = arith.constant 0 : index
    %c0_6 = arith.constant 0 : index
    %21 = vector.load %arg5[%c0_5, %c0_6] : memref<336x128xf32, #tpu.memory_space<vmem>>, vector<336x128xf32>
    tpu.vector_store %arg5[%c0_5, %c0_6], %20 {strides = array<i32>} : memref<336x128xf32, #tpu.memory_space<vmem>>, vector<336x128xf32>,
    %c0_7 = arith.constant 0 : index
    %c0_8 = arith.constant 0 : index
    %22 = vector.load %arg5[%c0_7, %c0_8] : memref<336x128xf32, #tpu.memory_space<vmem>>, vector<288x128xf32>
    %23 = arith.truncf %22 : vector<288x128xf32> to vector<288x128xbf16>
    %c0_9 = arith.constant 0 : index
    %c0_10 = arith.constant 0 : index
    %c0_11 = arith.constant 0 : index
    %24 = vector.load %arg2[%c0_9, %c0_10, %c0_11] : memref<9x128x128xbf16, #tpu.memory_space<vmem>>, vector<1x128x128xbf16>
    %25 = vector.shape_cast %24 : vector<1x128x128xbf16> to vector<128x128xbf16>
    %cst = arith.constant dense<0.000000e+00> : vector<288x128xf32>
    %26 = tpu.matmul %23, %25, %cst {dimension_numbers = #tpu.dot_dimension_numbers<[1], [0], [0], [1], [0, 0, 1, 1], [], []>} : vector<288x128xbf16>, vector<128x128xbf16>, vector<288x128xf32> -> vector<288x128xf32>
    %c0_12 = arith.constant 0 : index
    %c0_13 = arith.constant 0 : index
    %27 = vector.load %arg6[%c0_12, %c0_13] : memref<288x128xf32, #tpu.memory_space<vmem>>, vector<288x128xf32>
    tpu.vector_store %arg6[%c0_12, %c0_13], %26 {strides = array<i32>} : memref<288x128xf32, #tpu.memory_space<vmem>>, vector<288x128xf32>,
    %c1 = arith.constant 1 : index
    %c0_14 = arith.constant 0 : index
    %28 = vector.load %arg5[%c1, %c0_14] : memref<336x128xf32, #tpu.memory_space<vmem>>, vector<288x128xf32>
    %29 = arith.truncf %28 : vector<288x128xf32> to vector<288x128xbf16>
    %c1_15 = arith.constant 1 : index
    %c0_16 = arith.constant 0 : index
    %c0_17 = arith.constant 0 : index
    %30 = vector.load %arg2[%c1_15, %c0_16, %c0_17] : memref<9x128x128xbf16, #tpu.memory_space<vmem>>, vector<1x128x128xbf16>
    %31 = vector.shape_cast %30 : vector<1x128x128xbf16> to vector<128x128xbf16>
    %cst_18 = arith.constant dense<0.000000e+00> : vector<288x128xf32>
    %32 = tpu.matmul %29, %31, %cst_18 {dimension_numbers = #tpu.dot_dimension_numbers<[1], [0], [0], [1], [0, 0, 1, 1], [], []>} : vector<288x128xbf16>, vector<128x128xbf16>, vector<288x128xf32> -> vector<288x128xf32>
    %c0_19 = arith.constant 0 : index
    %c0_20 = arith.constant 0 : index
    %33 = vector.load %arg6[%c0_19, %c0_20] : memref<288x128xf32, #tpu.memory_space<vmem>>, vector<288x128xf32>
    %34 = arith.addf %33, %32 : vector<288x128xf32>
    %c0_21 = arith.constant 0 : index
    %c0_22 = arith.constant 0 : index
    %35 = vector.load %arg6[%c0_21, %c0_22] : memref<288x128xf32, #tpu.memory_space<vmem>>, vector<288x128xf32>
    tpu.vector_store %arg6[%c0_21, %c0_22], %34 {strides = array<i32>} : memref<288x128xf32, #tpu.memory_space<vmem>>, vector<288x128xf32>,
    %c2 = arith.constant 2 : index
    %c0_23 = arith.constant 0 : index
    %36 = vector.load %arg5[%c2, %c0_23] : memref<336x128xf32, #tpu.memory_space<vmem>>, vector<288x128xf32>
    %37 = arith.truncf %36 : vector<288x128xf32> to vector<288x128xbf16>
    %c2_24 = arith.constant 2 : index
    %c0_25 = arith.constant 0 : index
    %c0_26 = arith.constant 0 : index
    %38 = vector.load %arg2[%c2_24, %c0_25, %c0_26] : memref<9x128x128xbf16, #tpu.memory_space<vmem>>, vector<1x128x128xbf16>
    %39 = vector.shape_cast %38 : vector<1x128x128xbf16> to vector<128x128xbf16>
    %cst_27 = arith.constant dense<0.000000e+00> : vector<288x128xf32>
    %40 = tpu.matmul %37, %39, %cst_27 {dimension_numbers = #tpu.dot_dimension_numbers<[1], [0], [0], [1], [0, 0, 1, 1], [], []>} : vector<288x128xbf16>, vector<128x128xbf16>, vector<288x128xf32> -> vector<288x128xf32>
    %c0_28 = arith.constant 0 : index
    %c0_29 = arith.constant 0 : index
    %41 = vector.load %arg6[%c0_28, %c0_29] : memref<288x128xf32, #tpu.memory_space<vmem>>, vector<288x128xf32>
    %42 = arith.addf %41, %40 : vector<288x128xf32>
    %c0_30 = arith.constant 0 : index
    %c0_31 = arith.constant 0 : index
    %43 = vector.load %arg6[%c0_30, %c0_31] : memref<288x128xf32, #tpu.memory_space<vmem>>, vector<288x128xf32>
    tpu.vector_store %arg6[%c0_30, %c0_31], %42 {strides = array<i32>} : memref<288x128xf32, #tpu.memory_space<vmem>>, vector<288x128xf32>,
    %c18 = arith.constant 18 : index
    %c0_32 = arith.constant 0 : index
    %44 = vector.load %arg5[%c18, %c0_32] : memref<336x128xf32, #tpu.memory_space<vmem>>, vector<288x128xf32>
    %45 = arith.truncf %44 : vector<288x128xf32> to vector<288x128xbf16>
    %c3 = arith.constant 3 : index
    %c0_33 = arith.constant 0 : index
    %c0_34 = arith.constant 0 : index
    %46 = vector.load %arg2[%c3, %c0_33, %c0_34] : memref<9x128x128xbf16, #tpu.memory_space<vmem>>, vector<1x128x128xbf16>
    %47 = vector.shape_cast %46 : vector<1x128x128xbf16> to vector<128x128xbf16>
    %cst_35 = arith.constant dense<0.000000e+00> : vector<288x128xf32>
    %48 = tpu.matmul %45, %47, %cst_35 {dimension_numbers = #tpu.dot_dimension_numbers<[1], [0], [0], [1], [0, 0, 1, 1], [], []>} : vector<288x128xbf16>, vector<128x128xbf16>, vector<288x128xf32> -> vector<288x128xf32>
    %c0_36 = arith.constant 0 : index
    %c0_37 = arith.constant 0 : index
    %49 = vector.load %arg6[%c0_36, %c0_37] : memref<288x128xf32, #tpu.memory_space<vmem>>, vector<288x128xf32>
    %50 = arith.addf %49, %48 : vector<288x128xf32>
    %c0_38 = arith.constant 0 : index
    %c0_39 = arith.constant 0 : index
    %51 = vector.load %arg6[%c0_38, %c0_39] : memref<288x128xf32, #tpu.memory_space<vmem>>, vector<288x128xf32>
    tpu.vector_store %arg6[%c0_38, %c0_39], %50 {strides = array<i32>} : memref<288x128xf32, #tpu.memory_space<vmem>>, vector<288x128xf32>,
    %c19 = arith.constant 19 : index
    %c0_40 = arith.constant 0 : index
    %52 = vector.load %arg5[%c19, %c0_40] : memref<336x128xf32, #tpu.memory_space<vmem>>, vector<288x128xf32>
    %53 = arith.truncf %52 : vector<288x128xf32> to vector<288x128xbf16>
    %c4 = arith.constant 4 : index
    %c0_41 = arith.constant 0 : index
    %c0_42 = arith.constant 0 : index
    %54 = vector.load %arg2[%c4, %c0_41, %c0_42] : memref<9x128x128xbf16, #tpu.memory_space<vmem>>, vector<1x128x128xbf16>
    %55 = vector.shape_cast %54 : vector<1x128x128xbf16> to vector<128x128xbf16>
    %cst_43 = arith.constant dense<0.000000e+00> : vector<288x128xf32>
    %56 = tpu.matmul %53, %55, %cst_43 {dimension_numbers = #tpu.dot_dimension_numbers<[1], [0], [0], [1], [0, 0, 1, 1], [], []>} : vector<288x128xbf16>, vector<128x128xbf16>, vector<288x128xf32> -> vector<288x128xf32>
    %c0_44 = arith.constant 0 : index
    %c0_45 = arith.constant 0 : index
    %57 = vector.load %arg6[%c0_44, %c0_45] : memref<288x128xf32, #tpu.memory_space<vmem>>, vector<288x128xf32>
    %58 = arith.addf %57, %56 : vector<288x128xf32>
    %c0_46 = arith.constant 0 : index
    %c0_47 = arith.constant 0 : index
    %59 = vector.load %arg6[%c0_46, %c0_47] : memref<288x128xf32, #tpu.memory_space<vmem>>, vector<288x128xf32>
    tpu.vector_store %arg6[%c0_46, %c0_47], %58 {strides = array<i32>} : memref<288x128xf32, #tpu.memory_space<vmem>>, vector<288x128xf32>,
    %c20 = arith.constant 20 : index
    %c0_48 = arith.constant 0 : index
    %60 = vector.load %arg5[%c20, %c0_48] : memref<336x128xf32, #tpu.memory_space<vmem>>, vector<288x128xf32>
    %61 = arith.truncf %60 : vector<288x128xf32> to vector<288x128xbf16>
    %c5 = arith.constant 5 : index
    %c0_49 = arith.constant 0 : index
    %c0_50 = arith.constant 0 : index
    %62 = vector.load %arg2[%c5, %c0_49, %c0_50] : memref<9x128x128xbf16, #tpu.memory_space<vmem>>, vector<1x128x128xbf16>
    %63 = vector.shape_cast %62 : vector<1x128x128xbf16> to vector<128x128xbf16>
    %cst_51 = arith.constant dense<0.000000e+00> : vector<288x128xf32>
    %64 = tpu.matmul %61, %63, %cst_51 {dimension_numbers = #tpu.dot_dimension_numbers<[1], [0], [0], [1], [0, 0, 1, 1], [], []>} : vector<288x128xbf16>, vector<128x128xbf16>, vector<288x128xf32> -> vector<288x128xf32>
    %c0_52 = arith.constant 0 : index
    %c0_53 = arith.constant 0 : index
    %65 = vector.load %arg6[%c0_52, %c0_53] : memref<288x128xf32, #tpu.memory_space<vmem>>, vector<288x128xf32>
    %66 = arith.addf %65, %64 : vector<288x128xf32>
    %c0_54 = arith.constant 0 : index
    %c0_55 = arith.constant 0 : index
    %67 = vector.load %arg6[%c0_54, %c0_55] : memref<288x128xf32, #tpu.memory_space<vmem>>, vector<288x128xf32>
    tpu.vector_store %arg6[%c0_54, %c0_55], %66 {strides = array<i32>} : memref<288x128xf32, #tpu.memory_space<vmem>>, vector<288x128xf32>,
    %c36 = arith.constant 36 : index
    %c0_56 = arith.constant 0 : index
    %68 = vector.load %arg5[%c36, %c0_56] : memref<336x128xf32, #tpu.memory_space<vmem>>, vector<288x128xf32>
    %69 = arith.truncf %68 : vector<288x128xf32> to vector<288x128xbf16>
    %c6 = arith.constant 6 : index
    %c0_57 = arith.constant 0 : index
    %c0_58 = arith.constant 0 : index
    %70 = vector.load %arg2[%c6, %c0_57, %c0_58] : memref<9x128x128xbf16, #tpu.memory_space<vmem>>, vector<1x128x128xbf16>
    %71 = vector.shape_cast %70 : vector<1x128x128xbf16> to vector<128x128xbf16>
    %cst_59 = arith.constant dense<0.000000e+00> : vector<288x128xf32>
    %72 = tpu.matmul %69, %71, %cst_59 {dimension_numbers = #tpu.dot_dimension_numbers<[1], [0], [0], [1], [0, 0, 1, 1], [], []>} : vector<288x128xbf16>, vector<128x128xbf16>, vector<288x128xf32> -> vector<288x128xf32>
    %c0_60 = arith.constant 0 : index
    %c0_61 = arith.constant 0 : index
    %73 = vector.load %arg6[%c0_60, %c0_61] : memref<288x128xf32, #tpu.memory_space<vmem>>, vector<288x128xf32>
    %74 = arith.addf %73, %72 : vector<288x128xf32>
    %c0_62 = arith.constant 0 : index
    %c0_63 = arith.constant 0 : index
    %75 = vector.load %arg6[%c0_62, %c0_63] : memref<288x128xf32, #tpu.memory_space<vmem>>, vector<288x128xf32>
    tpu.vector_store %arg6[%c0_62, %c0_63], %74 {strides = array<i32>} : memref<288x128xf32, #tpu.memory_space<vmem>>, vector<288x128xf32>,
    %c37 = arith.constant 37 : index
    %c0_64 = arith.constant 0 : index
    %76 = vector.load %arg5[%c37, %c0_64] : memref<336x128xf32, #tpu.memory_space<vmem>>, vector<288x128xf32>
    %77 = arith.truncf %76 : vector<288x128xf32> to vector<288x128xbf16>
    %c7 = arith.constant 7 : index
    %c0_65 = arith.constant 0 : index
    %c0_66 = arith.constant 0 : index
    %78 = vector.load %arg2[%c7, %c0_65, %c0_66] : memref<9x128x128xbf16, #tpu.memory_space<vmem>>, vector<1x128x128xbf16>
    %79 = vector.shape_cast %78 : vector<1x128x128xbf16> to vector<128x128xbf16>
    %cst_67 = arith.constant dense<0.000000e+00> : vector<288x128xf32>
    %80 = tpu.matmul %77, %79, %cst_67 {dimension_numbers = #tpu.dot_dimension_numbers<[1], [0], [0], [1], [0, 0, 1, 1], [], []>} : vector<288x128xbf16>, vector<128x128xbf16>, vector<288x128xf32> -> vector<288x128xf32>
    %c0_68 = arith.constant 0 : index
    %c0_69 = arith.constant 0 : index
    %81 = vector.load %arg6[%c0_68, %c0_69] : memref<288x128xf32, #tpu.memory_space<vmem>>, vector<288x128xf32>
    %82 = arith.addf %81, %80 : vector<288x128xf32>
    %c0_70 = arith.constant 0 : index
    %c0_71 = arith.constant 0 : index
    %83 = vector.load %arg6[%c0_70, %c0_71] : memref<288x128xf32, #tpu.memory_space<vmem>>, vector<288x128xf32>
    tpu.vector_store %arg6[%c0_70, %c0_71], %82 {strides = array<i32>} : memref<288x128xf32, #tpu.memory_space<vmem>>, vector<288x128xf32>,
    %c38 = arith.constant 38 : index
    %c0_72 = arith.constant 0 : index
    %84 = vector.load %arg5[%c38, %c0_72] : memref<336x128xf32, #tpu.memory_space<vmem>>, vector<288x128xf32>
    %85 = arith.truncf %84 : vector<288x128xf32> to vector<288x128xbf16>
    %c8 = arith.constant 8 : index
    %c0_73 = arith.constant 0 : index
    %c0_74 = arith.constant 0 : index
    %86 = vector.load %arg2[%c8, %c0_73, %c0_74] : memref<9x128x128xbf16, #tpu.memory_space<vmem>>, vector<1x128x128xbf16>
    %87 = vector.shape_cast %86 : vector<1x128x128xbf16> to vector<128x128xbf16>
    %cst_75 = arith.constant dense<0.000000e+00> : vector<288x128xf32>
    %88 = tpu.matmul %85, %87, %cst_75 {dimension_numbers = #tpu.dot_dimension_numbers<[1], [0], [0], [1], [0, 0, 1, 1], [], []>} : vector<288x128xbf16>, vector<128x128xbf16>, vector<288x128xf32> -> vector<288x128xf32>
    %c0_76 = arith.constant 0 : index
    %c0_77 = arith.constant 0 : index
    %89 = vector.load %arg6[%c0_76, %c0_77] : memref<288x128xf32, #tpu.memory_space<vmem>>, vector<288x128xf32>
    %90 = arith.addf %89, %88 : vector<288x128xf32>
    %c0_78 = arith.constant 0 : index
    %c0_79 = arith.constant 0 : index
    %91 = vector.load %arg6[%c0_78, %c0_79] : memref<288x128xf32, #tpu.memory_space<vmem>>, vector<288x128xf32>
    tpu.vector_store %arg6[%c0_78, %c0_79], %90 {strides = array<i32>} : memref<288x128xf32, #tpu.memory_space<vmem>>, vector<288x128xf32>,
    %c0_80 = arith.constant 0 : index
    %c0_81 = arith.constant 0 : index
    %92 = vector.load %arg6[%c0_80, %c0_81] : memref<288x128xf32, #tpu.memory_space<vmem>>, vector<288x128xf32>
    %cst_82 = arith.constant 0.000000e+00 : f32
    %93 = vector.shape_cast %18 : vector<288x1xi1> to vector<288x1xi1>
    %94 = vector.broadcast %93 : vector<288x1xi1> to vector<288x128xi1>
    %95 = vector.broadcast %cst_82 : f32 to vector<288x128xf32>
    %96 = arith.select %94, %92, %95 : vector<288x128xi1>, vector<288x128xf32>
    %cst_83 = arith.constant dense<0.000000e+00> : vector<128xf32>
    %97 = vector.multi_reduction <add>, %96, %cst_83 [0] : vector<288x128xf32> to vector<128xf32>
    %98 = vector.shape_cast %97 : vector<128xf32> to vector<1x128xf32>
    %99 = arith.mulf %92, %92 : vector<288x128xf32>
    %cst_84 = arith.constant 0.000000e+00 : f32
    %100 = vector.shape_cast %18 : vector<288x1xi1> to vector<288x1xi1>
    %101 = vector.broadcast %100 : vector<288x1xi1> to vector<288x128xi1>
    %102 = vector.broadcast %cst_84 : f32 to vector<288x128xf32>
    %103 = arith.select %101, %99, %102 : vector<288x128xi1>, vector<288x128xf32>
    %cst_85 = arith.constant dense<0.000000e+00> : vector<128xf32>
    %104 = vector.multi_reduction <add>, %103, %cst_85 [0] : vector<288x128xf32> to vector<128xf32>
    %105 = vector.shape_cast %104 : vector<128xf32> to vector<1x128xf32>
    %cst_86 = arith.constant 3.906250e-03 : f32
    %106 = vector.broadcast %cst_86 : f32 to vector<1x128xf32>
    %107 = arith.mulf %98, %106 : vector<1x128xf32>
    %cst_87 = arith.constant 3.906250e-03 : f32
    %108 = vector.broadcast %cst_87 : f32 to vector<1x128xf32>
    %109 = arith.mulf %105, %108 : vector<1x128xf32>
    %110 = arith.mulf %107, %107 : vector<1x128xf32>
    %111 = arith.subf %109, %110 : vector<1x128xf32>
    %cst_88 = arith.constant 9.99999974E-6 : f32
    %112 = vector.broadcast %cst_88 : f32 to vector<1x128xf32>
    %113 = arith.addf %111, %112 : vector<1x128xf32>
    %114 = math.rsqrt %113 : vector<1x128xf32>
    %c0_89 = arith.constant 0 : index
    %c0_90 = arith.constant 0 : index
    %115 = vector.load %arg6[%c0_89, %c0_90] : memref<288x128xf32, #tpu.memory_space<vmem>>, vector<288x128xf32>
    %116 = vector.broadcast %107 : vector<1x128xf32> to vector<288x128xf32>
    %117 = arith.subf %115, %116 : vector<288x128xf32>
    %118 = vector.broadcast %114 : vector<1x128xf32> to vector<288x128xf32>
    %119 = arith.mulf %117, %118 : vector<288x128xf32>
    %cst_91 = arith.constant 0.000000e+00 : f32
    %120 = vector.broadcast %cst_91 : f32 to vector<288x128xf32>
    %121 = arith.maximumf %119, %120 : vector<288x128xf32>
    %c19_92 = arith.constant 19 : index
    %c0_93 = arith.constant 0 : index
    %122 = vector.load %arg5[%c19_92, %c0_93] : memref<336x128xf32, #tpu.memory_space<vmem>>, vector<288x128xf32>
    tpu.vector_store %arg5[%c19_92, %c0_93], %121 {strides = array<i32>} : memref<336x128xf32, #tpu.memory_space<vmem>>, vector<288x128xf32>,
    %c1_94 = arith.constant 1 : index
    %c0_95 = arith.constant 0 : index
    %123 = vector.load %arg6[%c1_94, %c0_95] : memref<288x128xf32, #tpu.memory_space<vmem>>, vector<1x128xf32>
    %124 = arith.subf %123, %107 : vector<1x128xf32>
    %125 = arith.mulf %124, %114 : vector<1x128xf32>
    %cst_96 = arith.constant 0.000000e+00 : f32
    %126 = vector.broadcast %cst_96 : f32 to vector<1x128xf32>
    %127 = arith.maximumf %125, %126 : vector<1x128xf32>
    %c18_97 = arith.constant 18 : index
    %c0_98 = arith.constant 0 : index
    %128 = vector.load %arg5[%c18_97, %c0_98] : memref<336x128xf32, #tpu.memory_space<vmem>>, vector<1x128xf32>
    tpu.vector_store %arg5[%c18_97, %c0_98], %127 {strides = array<i32>} : memref<336x128xf32, #tpu.memory_space<vmem>>, vector<1x128xf32>,
    %c14 = arith.constant 14 : index
    %c0_99 = arith.constant 0 : index
    %129 = vector.load %arg6[%c14, %c0_99] : memref<288x128xf32, #tpu.memory_space<vmem>>, vector<1x128xf32>
    %130 = arith.subf %129, %107 : vector<1x128xf32>
    %131 = arith.mulf %130, %114 : vector<1x128xf32>
    %cst_100 = arith.constant 0.000000e+00 : f32
    %132 = vector.broadcast %cst_100 : f32 to vector<1x128xf32>
    %133 = arith.maximumf %131, %132 : vector<1x128xf32>
    %c35 = arith.constant 35 : index
    %c0_101 = arith.constant 0 : index
    %134 = vector.load %arg5[%c35, %c0_101] : memref<336x128xf32, #tpu.memory_space<vmem>>, vector<1x128xf32>
    tpu.vector_store %arg5[%c35, %c0_101], %133 {strides = array<i32>} : memref<336x128xf32, #tpu.memory_space<vmem>>, vector<1x128xf32>,
    %c19_102 = arith.constant 19 : index
    %c0_103 = arith.constant 0 : index
    %135 = vector.load %arg6[%c19_102, %c0_103] : memref<288x128xf32, #tpu.memory_space<vmem>>, vector<1x128xf32>
    %136 = arith.subf %135, %107 : vector<1x128xf32>
    %137 = arith.mulf %136, %114 : vector<1x128xf32>
    %cst_104 = arith.constant 0.000000e+00 : f32
    %138 = vector.broadcast %cst_104 : f32 to vector<1x128xf32>
    %139 = arith.maximumf %137, %138 : vector<1x128xf32>
    %c36_105 = arith.constant 36 : index
    %c0_106 = arith.constant 0 : index
    %140 = vector.load %arg5[%c36_105, %c0_106] : memref<336x128xf32, #tpu.memory_space<vmem>>, vector<1x128xf32>
    tpu.vector_store %arg5[%c36_105, %c0_106], %139 {strides = array<i32>} : memref<336x128xf32, #tpu.memory_space<vmem>>, vector<1x128xf32>,
    %c32 = arith.constant 32 : index
    %c0_107 = arith.constant 0 : index
    %141 = vector.load %arg6[%c32, %c0_107] : memref<288x128xf32, #tpu.memory_space<vmem>>, vector<1x128xf32>
    %142 = arith.subf %141, %107 : vector<1x128xf32>
    %143 = arith.mulf %142, %114 : vector<1x128xf32>
    %cst_108 = arith.constant 0.000000e+00 : f32
    %144 = vector.broadcast %cst_108 : f32 to vector<1x128xf32>
    %145 = arith.maximumf %143, %144 : vector<1x128xf32>
    %c53 = arith.constant 53 : index
    %c0_109 = arith.constant 0 : index
    %146 = vector.load %arg5[%c53, %c0_109] : memref<336x128xf32, #tpu.memory_space<vmem>>, vector<1x128xf32>
    tpu.vector_store %arg5[%c53, %c0_109], %145 {strides = array<i32>} : memref<336x128xf32, #tpu.memory_space<vmem>>, vector<1x128xf32>,
    %c37_110 = arith.constant 37 : index
    %c0_111 = arith.constant 0 : index
    %147 = vector.load %arg6[%c37_110, %c0_111] : memref<288x128xf32, #tpu.memory_space<vmem>>, vector<1x128xf32>
    %148 = arith.subf %147, %107 : vector<1x128xf32>
    %149 = arith.mulf %148, %114 : vector<1x128xf32>
    %cst_112 = arith.constant 0.000000e+00 : f32
    %150 = vector.broadcast %cst_112 : f32 to vector<1x128xf32>
    %151 = arith.maximumf %149, %150 : vector<1x128xf32>
    %c54 = arith.constant 54 : index
    %c0_113 = arith.constant 0 : index
    %152 = vector.load %arg5[%c54, %c0_113] : memref<336x128xf32, #tpu.memory_space<vmem>>, vector<1x128xf32>
    tpu.vector_store %arg5[%c54, %c0_113], %151 {strides = array<i32>} : memref<336x128xf32, #tpu.memory_space<vmem>>, vector<1x128xf32>,
    %c50 = arith.constant 50 : index
    %c0_114 = arith.constant 0 : index
    %153 = vector.load %arg6[%c50, %c0_114] : memref<288x128xf32, #tpu.memory_space<vmem>>, vector<1x128xf32>
    %154 = arith.subf %153, %107 : vector<1x128xf32>
    %155 = arith.mulf %154, %114 : vector<1x128xf32>
    %cst_115 = arith.constant 0.000000e+00 : f32
    %156 = vector.broadcast %cst_115 : f32 to vector<1x128xf32>
    %157 = arith.maximumf %155, %156 : vector<1x128xf32>
    %c71 = arith.constant 71 : index
    %c0_116 = arith.constant 0 : index
    %158 = vector.load %arg5[%c71, %c0_116] : memref<336x128xf32, #tpu.memory_space<vmem>>, vector<1x128xf32>
    tpu.vector_store %arg5[%c71, %c0_116], %157 {strides = array<i32>} : memref<336x128xf32, #tpu.memory_space<vmem>>, vector<1x128xf32>,
    %c55 = arith.constant 55 : index
    %c0_117 = arith.constant 0 : index
    %159 = vector.load %arg6[%c55, %c0_117] : memref<288x128xf32, #tpu.memory_space<vmem>>, vector<1x128xf32>
    %160 = arith.subf %159, %107 : vector<1x128xf32>
    %161 = arith.mulf %160, %114 : vector<1x128xf32>
    %cst_118 = arith.constant 0.000000e+00 : f32
    %162 = vector.broadcast %cst_118 : f32 to vector<1x128xf32>
    %163 = arith.maximumf %161, %162 : vector<1x128xf32>
    %c72 = arith.constant 72 : index
    %c0_119 = arith.constant 0 : index
    %164 = vector.load %arg5[%c72, %c0_119] : memref<336x128xf32, #tpu.memory_space<vmem>>, vector<1x128xf32>
    tpu.vector_store %arg5[%c72, %c0_119], %163 {strides = array<i32>} : memref<336x128xf32, #tpu.memory_space<vmem>>, vector<1x128xf32>,
    %c68 = arith.constant 68 : index
    %c0_120 = arith.constant 0 : index
    %165 = vector.load %arg6[%c68, %c0_120] : memref<288x128xf32, #tpu.memory_space<vmem>>, vector<1x128xf32>
    %166 = arith.subf %165, %107 : vector<1x128xf32>
    %167 = arith.mulf %166, %114 : vector<1x128xf32>
    %cst_121 = arith.constant 0.000000e+00 : f32
    %168 = vector.broadcast %cst_121 : f32 to vector<1x128xf32>
    %169 = arith.maximumf %167, %168 : vector<1x128xf32>
    %c89 = arith.constant 89 : index
    %c0_122 = arith.constant 0 : index
    %170 = vector.load %arg5[%c89, %c0_122] : memref<336x128xf32, #tpu.memory_space<vmem>>, vector<1x128xf32>
    tpu.vector_store %arg5[%c89, %c0_122], %169 {strides = array<i32>} : memref<336x128xf32, #tpu.memory_space<vmem>>, vector<1x128xf32>,
    %c73 = arith.constant 73 : index
    %c0_123 = arith.constant 0 : index
    %171 = vector.load %arg6[%c73, %c0_123] : memref<288x128xf32, #tpu.memory_space<vmem>>, vector<1x128xf32>
    %172 = arith.subf %171, %107 : vector<1x128xf32>
    %173 = arith.mulf %172, %114 : vector<1x128xf32>
    %cst_124 = arith.constant 0.000000e+00 : f32
    %174 = vector.broadcast %cst_124 : f32 to vector<1x128xf32>
    %175 = arith.maximumf %173, %174 : vector<1x128xf32>
    %c90 = arith.constant 90 : index
    %c0_125 = arith.constant 0 : index
    %176 = vector.load %arg5[%c90, %c0_125] : memref<336x128xf32, #tpu.memory_space<vmem>>, vector<1x128xf32>
    tpu.vector_store %arg5[%c90, %c0_125], %175 {strides = array<i32>} : memref<336x128xf32, #tpu.memory_space<vmem>>, vector<1x128xf32>,
    %c86 = arith.constant 86 : index
    %c0_126 = arith.constant 0 : index
    %177 = vector.load %arg6[%c86, %c0_126] : memref<288x128xf32, #tpu.memory_space<vmem>>, vector<1x128xf32>
    %178 = arith.subf %177, %107 : vector<1x128xf32>
    %179 = arith.mulf %178, %114 : vector<1x128xf32>
    %cst_127 = arith.constant 0.000000e+00 : f32
    %180 = vector.broadcast %cst_127 : f32 to vector<1x128xf32>
    %181 = arith.maximumf %179, %180 : vector<1x128xf32>
    %c107 = arith.constant 107 : index
    %c0_128 = arith.constant 0 : index
    %182 = vector.load %arg5[%c107, %c0_128] : memref<336x128xf32, #tpu.memory_space<vmem>>, vector<1x128xf32>
    tpu.vector_store %arg5[%c107, %c0_128], %181 {strides = array<i32>} : memref<336x128xf32, #tpu.memory_space<vmem>>, vector<1x128xf32>,
    %c91 = arith.constant 91 : index
    %c0_129 = arith.constant 0 : index
    %183 = vector.load %arg6[%c91, %c0_129] : memref<288x128xf32, #tpu.memory_space<vmem>>, vector<1x128xf32>
    %184 = arith.subf %183, %107 : vector<1x128xf32>
    %185 = arith.mulf %184, %114 : vector<1x128xf32>
    %cst_130 = arith.constant 0.000000e+00 : f32
    %186 = vector.broadcast %cst_130 : f32 to vector<1x128xf32>
    %187 = arith.maximumf %185, %186 : vector<1x128xf32>
    %c108 = arith.constant 108 : index
    %c0_131 = arith.constant 0 : index
    %188 = vector.load %arg5[%c108, %c0_131] : memref<336x128xf32, #tpu.memory_space<vmem>>, vector<1x128xf32>
    tpu.vector_store %arg5[%c108, %c0_131], %187 {strides = array<i32>} : memref<336x128xf32, #tpu.memory_space<vmem>>, vector<1x128xf32>,
    %c104 = arith.constant 104 : index
    %c0_132 = arith.constant 0 : index
    %189 = vector.load %arg6[%c104, %c0_132] : memref<288x128xf32, #tpu.memory_space<vmem>>, vector<1x128xf32>
    %190 = arith.subf %189, %107 : vector<1x128xf32>
    %191 = arith.mulf %190, %114 : vector<1x128xf32>
    %cst_133 = arith.constant 0.000000e+00 : f32
    %192 = vector.broadcast %cst_133 : f32 to vector<1x128xf32>
    %193 = arith.maximumf %191, %192 : vector<1x128xf32>
    %c125 = arith.constant 125 : index
    %c0_134 = arith.constant 0 : index
    %194 = vector.load %arg5[%c125, %c0_134] : memref<336x128xf32, #tpu.memory_space<vmem>>, vector<1x128xf32>
    tpu.vector_store %arg5[%c125, %c0_134], %193 {strides = array<i32>} : memref<336x128xf32, #tpu.memory_space<vmem>>, vector<1x128xf32>,
    %c109 = arith.constant 109 : index
    %c0_135 = arith.constant 0 : index
    %195 = vector.load %arg6[%c109, %c0_135] : memref<288x128xf32, #tpu.memory_space<vmem>>, vector<1x128xf32>
    %196 = arith.subf %195, %107 : vector<1x128xf32>
    %197 = arith.mulf %196, %114 : vector<1x128xf32>
    %cst_136 = arith.constant 0.000000e+00 : f32
    %198 = vector.broadcast %cst_136 : f32 to vector<1x128xf32>
    %199 = arith.maximumf %197, %198 : vector<1x128xf32>
    %c126 = arith.constant 126 : index
    %c0_137 = arith.constant 0 : index
    %200 = vector.load %arg5[%c126, %c0_137] : memref<336x128xf32, #tpu.memory_space<vmem>>, vector<1x128xf32>
    tpu.vector_store %arg5[%c126, %c0_137], %199 {strides = array<i32>} : memref<336x128xf32, #tpu.memory_space<vmem>>, vector<1x128xf32>,
    %c122 = arith.constant 122 : index
    %c0_138 = arith.constant 0 : index
    %201 = vector.load %arg6[%c122, %c0_138] : memref<288x128xf32, #tpu.memory_space<vmem>>, vector<1x128xf32>
    %202 = arith.subf %201, %107 : vector<1x128xf32>
    %203 = arith.mulf %202, %114 : vector<1x128xf32>
    %cst_139 = arith.constant 0.000000e+00 : f32
    %204 = vector.broadcast %cst_139 : f32 to vector<1x128xf32>
    %205 = arith.maximumf %203, %204 : vector<1x128xf32>
    %c143 = arith.constant 143 : index
    %c0_140 = arith.constant 0 : index
    %206 = vector.load %arg5[%c143, %c0_140] : memref<336x128xf32, #tpu.memory_space<vmem>>, vector<1x128xf32>
    tpu.vector_store %arg5[%c143, %c0_140], %205 {strides = array<i32>} : memref<336x128xf32, #tpu.memory_space<vmem>>, vector<1x128xf32>,
    %c127 = arith.constant 127 : index
    %c0_141 = arith.constant 0 : index
    %207 = vector.load %arg6[%c127, %c0_141] : memref<288x128xf32, #tpu.memory_space<vmem>>, vector<1x128xf32>
    %208 = arith.subf %207, %107 : vector<1x128xf32>
    %209 = arith.mulf %208, %114 : vector<1x128xf32>
    %cst_142 = arith.constant 0.000000e+00 : f32
    %210 = vector.broadcast %cst_142 : f32 to vector<1x128xf32>
    %211 = arith.maximumf %209, %210 : vector<1x128xf32>
    %c144 = arith.constant 144 : index
    %c0_143 = arith.constant 0 : index
    %212 = vector.load %arg5[%c144, %c0_143] : memref<336x128xf32, #tpu.memory_space<vmem>>, vector<1x128xf32>
    tpu.vector_store %arg5[%c144, %c0_143], %211 {strides = array<i32>} : memref<336x128xf32, #tpu.memory_space<vmem>>, vector<1x128xf32>,
    %c140 = arith.constant 140 : index
    %c0_144 = arith.constant 0 : index
    %213 = vector.load %arg6[%c140, %c0_144] : memref<288x128xf32, #tpu.memory_space<vmem>>, vector<1x128xf32>
    %214 = arith.subf %213, %107 : vector<1x128xf32>
    %215 = arith.mulf %214, %114 : vector<1x128xf32>
    %cst_145 = arith.constant 0.000000e+00 : f32
    %216 = vector.broadcast %cst_145 : f32 to vector<1x128xf32>
    %217 = arith.maximumf %215, %216 : vector<1x128xf32>
    %c161 = arith.constant 161 : index
    %c0_146 = arith.constant 0 : index
    %218 = vector.load %arg5[%c161, %c0_146] : memref<336x128xf32, #tpu.memory_space<vmem>>, vector<1x128xf32>
    tpu.vector_store %arg5[%c161, %c0_146], %217 {strides = array<i32>} : memref<336x128xf32, #tpu.memory_space<vmem>>, vector<1x128xf32>,
    %c145 = arith.constant 145 : index
    %c0_147 = arith.constant 0 : index
    %219 = vector.load %arg6[%c145, %c0_147] : memref<288x128xf32, #tpu.memory_space<vmem>>, vector<1x128xf32>
    %220 = arith.subf %219, %107 : vector<1x128xf32>
    %221 = arith.mulf %220, %114 : vector<1x128xf32>
    %cst_148 = arith.constant 0.000000e+00 : f32
    %222 = vector.broadcast %cst_148 : f32 to vector<1x128xf32>
    %223 = arith.maximumf %221, %222 : vector<1x128xf32>
    %c162 = arith.constant 162 : index
    %c0_149 = arith.constant 0 : index
    %224 = vector.load %arg5[%c162, %c0_149] : memref<336x128xf32, #tpu.memory_space<vmem>>, vector<1x128xf32>
    tpu.vector_store %arg5[%c162, %c0_149], %223 {strides = array<i32>} : memref<336x128xf32, #tpu.memory_space<vmem>>, vector<1x128xf32>,
    %c158 = arith.constant 158 : index
    %c0_150 = arith.constant 0 : index
    %225 = vector.load %arg6[%c158, %c0_150] : memref<288x128xf32, #tpu.memory_space<vmem>>, vector<1x128xf32>
    %226 = arith.subf %225, %107 : vector<1x128xf32>
    %227 = arith.mulf %226, %114 : vector<1x128xf32>
    %cst_151 = arith.constant 0.000000e+00 : f32
    %228 = vector.broadcast %cst_151 : f32 to vector<1x128xf32>
    %229 = arith.maximumf %227, %228 : vector<1x128xf32>
    %c179 = arith.constant 179 : index
    %c0_152 = arith.constant 0 : index
    %230 = vector.load %arg5[%c179, %c0_152] : memref<336x128xf32, #tpu.memory_space<vmem>>, vector<1x128xf32>
    tpu.vector_store %arg5[%c179, %c0_152], %229 {strides = array<i32>} : memref<336x128xf32, #tpu.memory_space<vmem>>, vector<1x128xf32>,
    %c163 = arith.constant 163 : index
    %c0_153 = arith.constant 0 : index
    %231 = vector.load %arg6[%c163, %c0_153] : memref<288x128xf32, #tpu.memory_space<vmem>>, vector<1x128xf32>
    %232 = arith.subf %231, %107 : vector<1x128xf32>
    %233 = arith.mulf %232, %114 : vector<1x128xf32>
    %cst_154 = arith.constant 0.000000e+00 : f32
    %234 = vector.broadcast %cst_154 : f32 to vector<1x128xf32>
    %235 = arith.maximumf %233, %234 : vector<1x128xf32>
    %c180 = arith.constant 180 : index
    %c0_155 = arith.constant 0 : index
    %236 = vector.load %arg5[%c180, %c0_155] : memref<336x128xf32, #tpu.memory_space<vmem>>, vector<1x128xf32>
    tpu.vector_store %arg5[%c180, %c0_155], %235 {strides = array<i32>} : memref<336x128xf32, #tpu.memory_space<vmem>>, vector<1x128xf32>,
    %c176 = arith.constant 176 : index
    %c0_156 = arith.constant 0 : index
    %237 = vector.load %arg6[%c176, %c0_156] : memref<288x128xf32, #tpu.memory_space<vmem>>, vector<1x128xf32>
    %238 = arith.subf %237, %107 : vector<1x128xf32>
    %239 = arith.mulf %238, %114 : vector<1x128xf32>
    %cst_157 = arith.constant 0.000000e+00 : f32
    %240 = vector.broadcast %cst_157 : f32 to vector<1x128xf32>
    %241 = arith.maximumf %239, %240 : vector<1x128xf32>
    %c197 = arith.constant 197 : index
    %c0_158 = arith.constant 0 : index
    %242 = vector.load %arg5[%c197, %c0_158] : memref<336x128xf32, #tpu.memory_space<vmem>>, vector<1x128xf32>
    tpu.vector_store %arg5[%c197, %c0_158], %241 {strides = array<i32>} : memref<336x128xf32, #tpu.memory_space<vmem>>, vector<1x128xf32>,
    %c181 = arith.constant 181 : index
    %c0_159 = arith.constant 0 : index
    %243 = vector.load %arg6[%c181, %c0_159] : memref<288x128xf32, #tpu.memory_space<vmem>>, vector<1x128xf32>
    %244 = arith.subf %243, %107 : vector<1x128xf32>
    %245 = arith.mulf %244, %114 : vector<1x128xf32>
    %cst_160 = arith.constant 0.000000e+00 : f32
    %246 = vector.broadcast %cst_160 : f32 to vector<1x128xf32>
    %247 = arith.maximumf %245, %246 : vector<1x128xf32>
    %c198 = arith.constant 198 : index
    %c0_161 = arith.constant 0 : index
    %248 = vector.load %arg5[%c198, %c0_161] : memref<336x128xf32, #tpu.memory_space<vmem>>, vector<1x128xf32>
    tpu.vector_store %arg5[%c198, %c0_161], %247 {strides = array<i32>} : memref<336x128xf32, #tpu.memory_space<vmem>>, vector<1x128xf32>,
    %c194 = arith.constant 194 : index
    %c0_162 = arith.constant 0 : index
    %249 = vector.load %arg6[%c194, %c0_162] : memref<288x128xf32, #tpu.memory_space<vmem>>, vector<1x128xf32>
    %250 = arith.subf %249, %107 : vector<1x128xf32>
    %251 = arith.mulf %250, %114 : vector<1x128xf32>
    %cst_163 = arith.constant 0.000000e+00 : f32
    %252 = vector.broadcast %cst_163 : f32 to vector<1x128xf32>
    %253 = arith.maximumf %251, %252 : vector<1x128xf32>
    %c215 = arith.constant 215 : index
    %c0_164 = arith.constant 0 : index
    %254 = vector.load %arg5[%c215, %c0_164] : memref<336x128xf32, #tpu.memory_space<vmem>>, vector<1x128xf32>
    tpu.vector_store %arg5[%c215, %c0_164], %253 {strides = array<i32>} : memref<336x128xf32, #tpu.memory_space<vmem>>, vector<1x128xf32>,
    %c199 = arith.constant 199 : index
    %c0_165 = arith.constant 0 : index
    %255 = vector.load %arg6[%c199, %c0_165] : memref<288x128xf32, #tpu.memory_space<vmem>>, vector<1x128xf32>
    %256 = arith.subf %255, %107 : vector<1x128xf32>
    %257 = arith.mulf %256, %114 : vector<1x128xf32>
    %cst_166 = arith.constant 0.000000e+00 : f32
    %258 = vector.broadcast %cst_166 : f32 to vector<1x128xf32>
    %259 = arith.maximumf %257, %258 : vector<1x128xf32>
    %c216 = arith.constant 216 : index
    %c0_167 = arith.constant 0 : index
    %260 = vector.load %arg5[%c216, %c0_167] : memref<336x128xf32, #tpu.memory_space<vmem>>, vector<1x128xf32>
    tpu.vector_store %arg5[%c216, %c0_167], %259 {strides = array<i32>} : memref<336x128xf32, #tpu.memory_space<vmem>>, vector<1x128xf32>,
    %c212 = arith.constant 212 : index
    %c0_168 = arith.constant 0 : index
    %261 = vector.load %arg6[%c212, %c0_168] : memref<288x128xf32, #tpu.memory_space<vmem>>, vector<1x128xf32>
    %262 = arith.subf %261, %107 : vector<1x128xf32>
    %263 = arith.mulf %262, %114 : vector<1x128xf32>
    %cst_169 = arith.constant 0.000000e+00 : f32
    %264 = vector.broadcast %cst_169 : f32 to vector<1x128xf32>
    %265 = arith.maximumf %263, %264 : vector<1x128xf32>
    %c233 = arith.constant 233 : index
    %c0_170 = arith.constant 0 : index
    %266 = vector.load %arg5[%c233, %c0_170] : memref<336x128xf32, #tpu.memory_space<vmem>>, vector<1x128xf32>
    tpu.vector_store %arg5[%c233, %c0_170], %265 {strides = array<i32>} : memref<336x128xf32, #tpu.memory_space<vmem>>, vector<1x128xf32>,
    %c217 = arith.constant 217 : index
    %c0_171 = arith.constant 0 : index
    %267 = vector.load %arg6[%c217, %c0_171] : memref<288x128xf32, #tpu.memory_space<vmem>>, vector<1x128xf32>
    %268 = arith.subf %267, %107 : vector<1x128xf32>
    %269 = arith.mulf %268, %114 : vector<1x128xf32>
    %cst_172 = arith.constant 0.000000e+00 : f32
    %270 = vector.broadcast %cst_172 : f32 to vector<1x128xf32>
    %271 = arith.maximumf %269, %270 : vector<1x128xf32>
    %c234 = arith.constant 234 : index
    %c0_173 = arith.constant 0 : index
    %272 = vector.load %arg5[%c234, %c0_173] : memref<336x128xf32, #tpu.memory_space<vmem>>, vector<1x128xf32>
    tpu.vector_store %arg5[%c234, %c0_173], %271 {strides = array<i32>} : memref<336x128xf32, #tpu.memory_space<vmem>>, vector<1x128xf32>,
    %c230 = arith.constant 230 : index
    %c0_174 = arith.constant 0 : index
    %273 = vector.load %arg6[%c230, %c0_174] : memref<288x128xf32, #tpu.memory_space<vmem>>, vector<1x128xf32>
    %274 = arith.subf %273, %107 : vector<1x128xf32>
    %275 = arith.mulf %274, %114 : vector<1x128xf32>
    %cst_175 = arith.constant 0.000000e+00 : f32
    %276 = vector.broadcast %cst_175 : f32 to vector<1x128xf32>
    %277 = arith.maximumf %275, %276 : vector<1x128xf32>
    %c251 = arith.constant 251 : index
    %c0_176 = arith.constant 0 : index
    %278 = vector.load %arg5[%c251, %c0_176] : memref<336x128xf32, #tpu.memory_space<vmem>>, vector<1x128xf32>
    tpu.vector_store %arg5[%c251, %c0_176], %277 {strides = array<i32>} : memref<336x128xf32, #tpu.memory_space<vmem>>, vector<1x128xf32>,
    %c235 = arith.constant 235 : index
    %c0_177 = arith.constant 0 : index
    %279 = vector.load %arg6[%c235, %c0_177] : memref<288x128xf32, #tpu.memory_space<vmem>>, vector<1x128xf32>
    %280 = arith.subf %279, %107 : vector<1x128xf32>
    %281 = arith.mulf %280, %114 : vector<1x128xf32>
    %cst_178 = arith.constant 0.000000e+00 : f32
    %282 = vector.broadcast %cst_178 : f32 to vector<1x128xf32>
    %283 = arith.maximumf %281, %282 : vector<1x128xf32>
    %c252 = arith.constant 252 : index
    %c0_179 = arith.constant 0 : index
    %284 = vector.load %arg5[%c252, %c0_179] : memref<336x128xf32, #tpu.memory_space<vmem>>, vector<1x128xf32>
    tpu.vector_store %arg5[%c252, %c0_179], %283 {strides = array<i32>} : memref<336x128xf32, #tpu.memory_space<vmem>>, vector<1x128xf32>,
    %c248 = arith.constant 248 : index
    %c0_180 = arith.constant 0 : index
    %285 = vector.load %arg6[%c248, %c0_180] : memref<288x128xf32, #tpu.memory_space<vmem>>, vector<1x128xf32>
    %286 = arith.subf %285, %107 : vector<1x128xf32>
    %287 = arith.mulf %286, %114 : vector<1x128xf32>
    %cst_181 = arith.constant 0.000000e+00 : f32
    %288 = vector.broadcast %cst_181 : f32 to vector<1x128xf32>
    %289 = arith.maximumf %287, %288 : vector<1x128xf32>
    %c269 = arith.constant 269 : index
    %c0_182 = arith.constant 0 : index
    %290 = vector.load %arg5[%c269, %c0_182] : memref<336x128xf32, #tpu.memory_space<vmem>>, vector<1x128xf32>
    tpu.vector_store %arg5[%c269, %c0_182], %289 {strides = array<i32>} : memref<336x128xf32, #tpu.memory_space<vmem>>, vector<1x128xf32>,
    %c253 = arith.constant 253 : index
    %c0_183 = arith.constant 0 : index
    %291 = vector.load %arg6[%c253, %c0_183] : memref<288x128xf32, #tpu.memory_space<vmem>>, vector<1x128xf32>
    %292 = arith.subf %291, %107 : vector<1x128xf32>
    %293 = arith.mulf %292, %114 : vector<1x128xf32>
    %cst_184 = arith.constant 0.000000e+00 : f32
    %294 = vector.broadcast %cst_184 : f32 to vector<1x128xf32>
    %295 = arith.maximumf %293, %294 : vector<1x128xf32>
    %c270 = arith.constant 270 : index
    %c0_185 = arith.constant 0 : index
    %296 = vector.load %arg5[%c270, %c0_185] : memref<336x128xf32, #tpu.memory_space<vmem>>, vector<1x128xf32>
    tpu.vector_store %arg5[%c270, %c0_185], %295 {strides = array<i32>} : memref<336x128xf32, #tpu.memory_space<vmem>>, vector<1x128xf32>,
    %c266 = arith.constant 266 : index
    %c0_186 = arith.constant 0 : index
    %297 = vector.load %arg6[%c266, %c0_186] : memref<288x128xf32, #tpu.memory_space<vmem>>, vector<1x128xf32>
    %298 = arith.subf %297, %107 : vector<1x128xf32>
    %299 = arith.mulf %298, %114 : vector<1x128xf32>
    %cst_187 = arith.constant 0.000000e+00 : f32
    %300 = vector.broadcast %cst_187 : f32 to vector<1x128xf32>
    %301 = arith.maximumf %299, %300 : vector<1x128xf32>
    %c287 = arith.constant 287 : index
    %c0_188 = arith.constant 0 : index
    %302 = vector.load %arg5[%c287, %c0_188] : memref<336x128xf32, #tpu.memory_space<vmem>>, vector<1x128xf32>
    tpu.vector_store %arg5[%c287, %c0_188], %301 {strides = array<i32>} : memref<336x128xf32, #tpu.memory_space<vmem>>, vector<1x128xf32>,
    %c271 = arith.constant 271 : index
    %c0_189 = arith.constant 0 : index
    %303 = vector.load %arg6[%c271, %c0_189] : memref<288x128xf32, #tpu.memory_space<vmem>>, vector<1x128xf32>
    %304 = arith.subf %303, %107 : vector<1x128xf32>
    %305 = arith.mulf %304, %114 : vector<1x128xf32>
    %cst_190 = arith.constant 0.000000e+00 : f32
    %306 = vector.broadcast %cst_190 : f32 to vector<1x128xf32>
    %307 = arith.maximumf %305, %306 : vector<1x128xf32>
    %c288 = arith.constant 288 : index
    %c0_191 = arith.constant 0 : index
    %308 = vector.load %arg5[%c288, %c0_191] : memref<336x128xf32, #tpu.memory_space<vmem>>, vector<1x128xf32>
    tpu.vector_store %arg5[%c288, %c0_191], %307 {strides = array<i32>} : memref<336x128xf32, #tpu.memory_space<vmem>>, vector<1x128xf32>,
    %c284 = arith.constant 284 : index
    %c0_192 = arith.constant 0 : index
    %309 = vector.load %arg6[%c284, %c0_192] : memref<288x128xf32, #tpu.memory_space<vmem>>, vector<1x128xf32>
    %310 = arith.subf %309, %107 : vector<1x128xf32>
    %311 = arith.mulf %310, %114 : vector<1x128xf32>
    %cst_193 = arith.constant 0.000000e+00 : f32
    %312 = vector.broadcast %cst_193 : f32 to vector<1x128xf32>
    %313 = arith.maximumf %311, %312 : vector<1x128xf32>
    %c305 = arith.constant 305 : index
    %c0_194 = arith.constant 0 : index
    %314 = vector.load %arg5[%c305, %c0_194] : memref<336x128xf32, #tpu.memory_space<vmem>>, vector<1x128xf32>
    tpu.vector_store %arg5[%c305, %c0_194], %313 {strides = array<i32>} : memref<336x128xf32, #tpu.memory_space<vmem>>, vector<1x128xf32>,
    %c19_195 = arith.constant 19 : index
    %c0_196 = arith.constant 0 : index
    %315 = vector.load %arg6[%c19_195, %c0_196] : memref<288x128xf32, #tpu.memory_space<vmem>>, vector<1x128xf32>
    %316 = arith.subf %315, %107 : vector<1x128xf32>
    %317 = arith.mulf %316, %114 : vector<1x128xf32>
    %cst_197 = arith.constant 0.000000e+00 : f32
    %318 = vector.broadcast %cst_197 : f32 to vector<1x128xf32>
    %319 = arith.maximumf %317, %318 : vector<1x128xf32>
    %c0_198 = arith.constant 0 : index
    %c0_199 = arith.constant 0 : index
    %320 = vector.load %arg5[%c0_198, %c0_199] : memref<336x128xf32, #tpu.memory_space<vmem>>, vector<1x128xf32>
    tpu.vector_store %arg5[%c0_198, %c0_199], %319 {strides = array<i32>} : memref<336x128xf32, #tpu.memory_space<vmem>>, vector<1x128xf32>,
    %c18_200 = arith.constant 18 : index
    %c0_201 = arith.constant 0 : index
    %321 = vector.load %arg6[%c18_200, %c0_201] : memref<288x128xf32, #tpu.memory_space<vmem>>, vector<16x128xf32>
    %322 = vector.broadcast %107 : vector<1x128xf32> to vector<16x128xf32>
    %323 = arith.subf %321, %322 : vector<16x128xf32>
    %324 = vector.broadcast %114 : vector<1x128xf32> to vector<16x128xf32>
    %325 = arith.mulf %323, %324 : vector<16x128xf32>
    %cst_202 = arith.constant 0.000000e+00 : f32
    %326 = vector.broadcast %cst_202 : f32 to vector<16x128xf32>
    %327 = arith.maximumf %325, %326 : vector<16x128xf32>
    %c1_203 = arith.constant 1 : index
    %c0_204 = arith.constant 0 : index
    %328 = vector.load %arg5[%c1_203, %c0_204] : memref<336x128xf32, #tpu.memory_space<vmem>>, vector<16x128xf32>
    tpu.vector_store %arg5[%c1_203, %c0_204], %327 {strides = array<i32>} : memref<336x128xf32, #tpu.memory_space<vmem>>, vector<16x128xf32>,
    %c32_205 = arith.constant 32 : index
    %c0_206 = arith.constant 0 : index
    %329 = vector.load %arg6[%c32_205, %c0_206] : memref<288x128xf32, #tpu.memory_space<vmem>>, vector<1x128xf32>
    %330 = arith.subf %329, %107 : vector<1x128xf32>
    %331 = arith.mulf %330, %114 : vector<1x128xf32>
    %cst_207 = arith.constant 0.000000e+00 : f32
    %332 = vector.broadcast %cst_207 : f32 to vector<1x128xf32>
    %333 = arith.maximumf %331, %332 : vector<1x128xf32>
    %c17 = arith.constant 17 : index
    %c0_208 = arith.constant 0 : index
    %334 = vector.load %arg5[%c17, %c0_208] : memref<336x128xf32, #tpu.memory_space<vmem>>, vector<1x128xf32>
    tpu.vector_store %arg5[%c17, %c0_208], %333 {strides = array<i32>} : memref<336x128xf32, #tpu.memory_space<vmem>>, vector<1x128xf32>,
    %c253_209 = arith.constant 253 : index
    %c0_210 = arith.constant 0 : index
    %335 = vector.load %arg6[%c253_209, %c0_210] : memref<288x128xf32, #tpu.memory_space<vmem>>, vector<1x128xf32>
    %336 = arith.subf %335, %107 : vector<1x128xf32>
    %337 = arith.mulf %336, %114 : vector<1x128xf32>
    %cst_211 = arith.constant 0.000000e+00 : f32
    %338 = vector.broadcast %cst_211 : f32 to vector<1x128xf32>
    %339 = arith.maximumf %337, %338 : vector<1x128xf32>
    %c306 = arith.constant 306 : index
    %c0_212 = arith.constant 0 : index
    %340 = vector.load %arg5[%c306, %c0_212] : memref<336x128xf32, #tpu.memory_space<vmem>>, vector<1x128xf32>
    tpu.vector_store %arg5[%c306, %c0_212], %339 {strides = array<i32>} : memref<336x128xf32, #tpu.memory_space<vmem>>, vector<1x128xf32>,
    %c252_213 = arith.constant 252 : index
    %c0_214 = arith.constant 0 : index
    %341 = vector.load %arg6[%c252_213, %c0_214] : memref<288x128xf32, #tpu.memory_space<vmem>>, vector<16x128xf32>
    %342 = vector.broadcast %107 : vector<1x128xf32> to vector<16x128xf32>
    %343 = arith.subf %341, %342 : vector<16x128xf32>
    %344 = vector.broadcast %114 : vector<1x128xf32> to vector<16x128xf32>
    %345 = arith.mulf %343, %344 : vector<16x128xf32>
    %cst_215 = arith.constant 0.000000e+00 : f32
    %346 = vector.broadcast %cst_215 : f32 to vector<16x128xf32>
    %347 = arith.maximumf %345, %346 : vector<16x128xf32>
    %c307 = arith.constant 307 : index
    %c0_216 = arith.constant 0 : index
    %348 = vector.load %arg5[%c307, %c0_216] : memref<336x128xf32, #tpu.memory_space<vmem>>, vector<16x128xf32>
    tpu.vector_store %arg5[%c307, %c0_216], %347 {strides = array<i32>} : memref<336x128xf32, #tpu.memory_space<vmem>>, vector<16x128xf32>,
    %c266_217 = arith.constant 266 : index
    %c0_218 = arith.constant 0 : index
    %349 = vector.load %arg6[%c266_217, %c0_218] : memref<288x128xf32, #tpu.memory_space<vmem>>, vector<1x128xf32>
    %350 = arith.subf %349, %107 : vector<1x128xf32>
    %351 = arith.mulf %350, %114 : vector<1x128xf32>
    %cst_219 = arith.constant 0.000000e+00 : f32
    %352 = vector.broadcast %cst_219 : f32 to vector<1x128xf32>
    %353 = arith.maximumf %351, %352 : vector<1x128xf32>
    %c323 = arith.constant 323 : index
    %c0_220 = arith.constant 0 : index
    %354 = vector.load %arg5[%c323, %c0_220] : memref<336x128xf32, #tpu.memory_space<vmem>>, vector<1x128xf32>
    tpu.vector_store %arg5[%c323, %c0_220], %353 {strides = array<i32>} : memref<336x128xf32, #tpu.memory_space<vmem>>, vector<1x128xf32>,
    %c0_221 = arith.constant 0 : index
    %c0_222 = arith.constant 0 : index
    %355 = vector.load %arg5[%c0_221, %c0_222] : memref<336x128xf32, #tpu.memory_space<vmem>>, vector<288x128xf32>
    %356 = arith.truncf %355 : vector<288x128xf32> to vector<288x128xbf16>
    %c0_223 = arith.constant 0 : index
    %c0_224 = arith.constant 0 : index
    %c0_225 = arith.constant 0 : index
    %357 = vector.load %arg3[%c0_223, %c0_224, %c0_225] : memref<9x128x128xbf16, #tpu.memory_space<vmem>>, vector<1x128x128xbf16>
    %358 = vector.shape_cast %357 : vector<1x128x128xbf16> to vector<128x128xbf16>
    %cst_226 = arith.constant dense<0.000000e+00> : vector<288x128xf32>
    %359 = tpu.matmul %356, %358, %cst_226 {dimension_numbers = #tpu.dot_dimension_numbers<[1], [0], [0], [1], [0, 0, 1, 1], [], []>} : vector<288x128xbf16>, vector<128x128xbf16>, vector<288x128xf32> -> vector<288x128xf32>
    %c0_227 = arith.constant 0 : index
    %c0_228 = arith.constant 0 : index
    %360 = vector.load %arg6[%c0_227, %c0_228] : memref<288x128xf32, #tpu.memory_space<vmem>>, vector<288x128xf32>
    tpu.vector_store %arg6[%c0_227, %c0_228], %359 {strides = array<i32>} : memref<288x128xf32, #tpu.memory_space<vmem>>, vector<288x128xf32>,
    %c1_229 = arith.constant 1 : index
    %c0_230 = arith.constant 0 : index
    %361 = vector.load %arg5[%c1_229, %c0_230] : memref<336x128xf32, #tpu.memory_space<vmem>>, vector<288x128xf32>
    %362 = arith.truncf %361 : vector<288x128xf32> to vector<288x128xbf16>
    %c1_231 = arith.constant 1 : index
    %c0_232 = arith.constant 0 : index
    %c0_233 = arith.constant 0 : index
    %363 = vector.load %arg3[%c1_231, %c0_232, %c0_233] : memref<9x128x128xbf16, #tpu.memory_space<vmem>>, vector<1x128x128xbf16>
    %364 = vector.shape_cast %363 : vector<1x128x128xbf16> to vector<128x128xbf16>
    %cst_234 = arith.constant dense<0.000000e+00> : vector<288x128xf32>
    %365 = tpu.matmul %362, %364, %cst_234 {dimension_numbers = #tpu.dot_dimension_numbers<[1], [0], [0], [1], [0, 0, 1, 1], [], []>} : vector<288x128xbf16>, vector<128x128xbf16>, vector<288x128xf32> -> vector<288x128xf32>
    %c0_235 = arith.constant 0 : index
    %c0_236 = arith.constant 0 : index
    %366 = vector.load %arg6[%c0_235, %c0_236] : memref<288x128xf32, #tpu.memory_space<vmem>>, vector<288x128xf32>
    %367 = arith.addf %366, %365 : vector<288x128xf32>
    %c0_237 = arith.constant 0 : index
    %c0_238 = arith.constant 0 : index
    %368 = vector.load %arg6[%c0_237, %c0_238] : memref<288x128xf32, #tpu.memory_space<vmem>>, vector<288x128xf32>
    tpu.vector_store %arg6[%c0_237, %c0_238], %367 {strides = array<i32>} : memref<288x128xf32, #tpu.memory_space<vmem>>, vector<288x128xf32>,
    %c2_239 = arith.constant 2 : index
    %c0_240 = arith.constant 0 : index
    %369 = vector.load %arg5[%c2_239, %c0_240] : memref<336x128xf32, #tpu.memory_space<vmem>>, vector<288x128xf32>
    %370 = arith.truncf %369 : vector<288x128xf32> to vector<288x128xbf16>
    %c2_241 = arith.constant 2 : index
    %c0_242 = arith.constant 0 : index
    %c0_243 = arith.constant 0 : index
    %371 = vector.load %arg3[%c2_241, %c0_242, %c0_243] : memref<9x128x128xbf16, #tpu.memory_space<vmem>>, vector<1x128x128xbf16>
    %372 = vector.shape_cast %371 : vector<1x128x128xbf16> to vector<128x128xbf16>
    %cst_244 = arith.constant dense<0.000000e+00> : vector<288x128xf32>
    %373 = tpu.matmul %370, %372, %cst_244 {dimension_numbers = #tpu.dot_dimension_numbers<[1], [0], [0], [1], [0, 0, 1, 1], [], []>} : vector<288x128xbf16>, vector<128x128xbf16>, vector<288x128xf32> -> vector<288x128xf32>
    %c0_245 = arith.constant 0 : index
    %c0_246 = arith.constant 0 : index
    %374 = vector.load %arg6[%c0_245, %c0_246] : memref<288x128xf32, #tpu.memory_space<vmem>>, vector<288x128xf32>
    %375 = arith.addf %374, %373 : vector<288x128xf32>
    %c0_247 = arith.constant 0 : index
    %c0_248 = arith.constant 0 : index
    %376 = vector.load %arg6[%c0_247, %c0_248] : memref<288x128xf32, #tpu.memory_space<vmem>>, vector<288x128xf32>
    tpu.vector_store %arg6[%c0_247, %c0_248], %375 {strides = array<i32>} : memref<288x128xf32, #tpu.memory_space<vmem>>, vector<288x128xf32>,
    %c18_249 = arith.constant 18 : index
    %c0_250 = arith.constant 0 : index
    %377 = vector.load %arg5[%c18_249, %c0_250] : memref<336x128xf32, #tpu.memory_space<vmem>>, vector<288x128xf32>
    %378 = arith.truncf %377 : vector<288x128xf32> to vector<288x128xbf16>
    %c3_251 = arith.constant 3 : index
    %c0_252 = arith.constant 0 : index
    %c0_253 = arith.constant 0 : index
    %379 = vector.load %arg3[%c3_251, %c0_252, %c0_253] : memref<9x128x128xbf16, #tpu.memory_space<vmem>>, vector<1x128x128xbf16>
    %380 = vector.shape_cast %379 : vector<1x128x128xbf16> to vector<128x128xbf16>
    %cst_254 = arith.constant dense<0.000000e+00> : vector<288x128xf32>
    %381 = tpu.matmul %378, %380, %cst_254 {dimension_numbers = #tpu.dot_dimension_numbers<[1], [0], [0], [1], [0, 0, 1, 1], [], []>} : vector<288x128xbf16>, vector<128x128xbf16>, vector<288x128xf32> -> vector<288x128xf32>
    %c0_255 = arith.constant 0 : index
    %c0_256 = arith.constant 0 : index
    %382 = vector.load %arg6[%c0_255, %c0_256] : memref<288x128xf32, #tpu.memory_space<vmem>>, vector<288x128xf32>
    %383 = arith.addf %382, %381 : vector<288x128xf32>
    %c0_257 = arith.constant 0 : index
    %c0_258 = arith.constant 0 : index
    %384 = vector.load %arg6[%c0_257, %c0_258] : memref<288x128xf32, #tpu.memory_space<vmem>>, vector<288x128xf32>
    tpu.vector_store %arg6[%c0_257, %c0_258], %383 {strides = array<i32>} : memref<288x128xf32, #tpu.memory_space<vmem>>, vector<288x128xf32>,
    %c19_259 = arith.constant 19 : index
    %c0_260 = arith.constant 0 : index
    %385 = vector.load %arg5[%c19_259, %c0_260] : memref<336x128xf32, #tpu.memory_space<vmem>>, vector<288x128xf32>
    %386 = arith.truncf %385 : vector<288x128xf32> to vector<288x128xbf16>
    %c4_261 = arith.constant 4 : index
    %c0_262 = arith.constant 0 : index
    %c0_263 = arith.constant 0 : index
    %387 = vector.load %arg3[%c4_261, %c0_262, %c0_263] : memref<9x128x128xbf16, #tpu.memory_space<vmem>>, vector<1x128x128xbf16>
    %388 = vector.shape_cast %387 : vector<1x128x128xbf16> to vector<128x128xbf16>
    %cst_264 = arith.constant dense<0.000000e+00> : vector<288x128xf32>
    %389 = tpu.matmul %386, %388, %cst_264 {dimension_numbers = #tpu.dot_dimension_numbers<[1], [0], [0], [1], [0, 0, 1, 1], [], []>} : vector<288x128xbf16>, vector<128x128xbf16>, vector<288x128xf32> -> vector<288x128xf32>
    %c0_265 = arith.constant 0 : index
    %c0_266 = arith.constant 0 : index
    %390 = vector.load %arg6[%c0_265, %c0_266] : memref<288x128xf32, #tpu.memory_space<vmem>>, vector<288x128xf32>
    %391 = arith.addf %390, %389 : vector<288x128xf32>
    %c0_267 = arith.constant 0 : index
    %c0_268 = arith.constant 0 : index
    %392 = vector.load %arg6[%c0_267, %c0_268] : memref<288x128xf32, #tpu.memory_space<vmem>>, vector<288x128xf32>
    tpu.vector_store %arg6[%c0_267, %c0_268], %391 {strides = array<i32>} : memref<288x128xf32, #tpu.memory_space<vmem>>, vector<288x128xf32>,
    %c20_269 = arith.constant 20 : index
    %c0_270 = arith.constant 0 : index
    %393 = vector.load %arg5[%c20_269, %c0_270] : memref<336x128xf32, #tpu.memory_space<vmem>>, vector<288x128xf32>
    %394 = arith.truncf %393 : vector<288x128xf32> to vector<288x128xbf16>
    %c5_271 = arith.constant 5 : index
    %c0_272 = arith.constant 0 : index
    %c0_273 = arith.constant 0 : index
    %395 = vector.load %arg3[%c5_271, %c0_272, %c0_273] : memref<9x128x128xbf16, #tpu.memory_space<vmem>>, vector<1x128x128xbf16>
    %396 = vector.shape_cast %395 : vector<1x128x128xbf16> to vector<128x128xbf16>
    %cst_274 = arith.constant dense<0.000000e+00> : vector<288x128xf32>
    %397 = tpu.matmul %394, %396, %cst_274 {dimension_numbers = #tpu.dot_dimension_numbers<[1], [0], [0], [1], [0, 0, 1, 1], [], []>} : vector<288x128xbf16>, vector<128x128xbf16>, vector<288x128xf32> -> vector<288x128xf32>
    %c0_275 = arith.constant 0 : index
    %c0_276 = arith.constant 0 : index
    %398 = vector.load %arg6[%c0_275, %c0_276] : memref<288x128xf32, #tpu.memory_space<vmem>>, vector<288x128xf32>
    %399 = arith.addf %398, %397 : vector<288x128xf32>
    %c0_277 = arith.constant 0 : index
    %c0_278 = arith.constant 0 : index
    %400 = vector.load %arg6[%c0_277, %c0_278] : memref<288x128xf32, #tpu.memory_space<vmem>>, vector<288x128xf32>
    tpu.vector_store %arg6[%c0_277, %c0_278], %399 {strides = array<i32>} : memref<288x128xf32, #tpu.memory_space<vmem>>, vector<288x128xf32>,
    %c36_279 = arith.constant 36 : index
    %c0_280 = arith.constant 0 : index
    %401 = vector.load %arg5[%c36_279, %c0_280] : memref<336x128xf32, #tpu.memory_space<vmem>>, vector<288x128xf32>
    %402 = arith.truncf %401 : vector<288x128xf32> to vector<288x128xbf16>
    %c6_281 = arith.constant 6 : index
    %c0_282 = arith.constant 0 : index
    %c0_283 = arith.constant 0 : index
    %403 = vector.load %arg3[%c6_281, %c0_282, %c0_283] : memref<9x128x128xbf16, #tpu.memory_space<vmem>>, vector<1x128x128xbf16>
    %404 = vector.shape_cast %403 : vector<1x128x128xbf16> to vector<128x128xbf16>
    %cst_284 = arith.constant dense<0.000000e+00> : vector<288x128xf32>
    %405 = tpu.matmul %402, %404, %cst_284 {dimension_numbers = #tpu.dot_dimension_numbers<[1], [0], [0], [1], [0, 0, 1, 1], [], []>} : vector<288x128xbf16>, vector<128x128xbf16>, vector<288x128xf32> -> vector<288x128xf32>
    %c0_285 = arith.constant 0 : index
    %c0_286 = arith.constant 0 : index
    %406 = vector.load %arg6[%c0_285, %c0_286] : memref<288x128xf32, #tpu.memory_space<vmem>>, vector<288x128xf32>
    %407 = arith.addf %406, %405 : vector<288x128xf32>
    %c0_287 = arith.constant 0 : index
    %c0_288 = arith.constant 0 : index
    %408 = vector.load %arg6[%c0_287, %c0_288] : memref<288x128xf32, #tpu.memory_space<vmem>>, vector<288x128xf32>
    tpu.vector_store %arg6[%c0_287, %c0_288], %407 {strides = array<i32>} : memref<288x128xf32, #tpu.memory_space<vmem>>, vector<288x128xf32>,
    %c37_289 = arith.constant 37 : index
    %c0_290 = arith.constant 0 : index
    %409 = vector.load %arg5[%c37_289, %c0_290] : memref<336x128xf32, #tpu.memory_space<vmem>>, vector<288x128xf32>
    %410 = arith.truncf %409 : vector<288x128xf32> to vector<288x128xbf16>
    %c7_291 = arith.constant 7 : index
    %c0_292 = arith.constant 0 : index
    %c0_293 = arith.constant 0 : index
    %411 = vector.load %arg3[%c7_291, %c0_292, %c0_293] : memref<9x128x128xbf16, #tpu.memory_space<vmem>>, vector<1x128x128xbf16>
    %412 = vector.shape_cast %411 : vector<1x128x128xbf16> to vector<128x128xbf16>
    %cst_294 = arith.constant dense<0.000000e+00> : vector<288x128xf32>
    %413 = tpu.matmul %410, %412, %cst_294 {dimension_numbers = #tpu.dot_dimension_numbers<[1], [0], [0], [1], [0, 0, 1, 1], [], []>} : vector<288x128xbf16>, vector<128x128xbf16>, vector<288x128xf32> -> vector<288x128xf32>
    %c0_295 = arith.constant 0 : index
    %c0_296 = arith.constant 0 : index
    %414 = vector.load %arg6[%c0_295, %c0_296] : memref<288x128xf32, #tpu.memory_space<vmem>>, vector<288x128xf32>
    %415 = arith.addf %414, %413 : vector<288x128xf32>
    %c0_297 = arith.constant 0 : index
    %c0_298 = arith.constant 0 : index
    %416 = vector.load %arg6[%c0_297, %c0_298] : memref<288x128xf32, #tpu.memory_space<vmem>>, vector<288x128xf32>
    tpu.vector_store %arg6[%c0_297, %c0_298], %415 {strides = array<i32>} : memref<288x128xf32, #tpu.memory_space<vmem>>, vector<288x128xf32>,
    %c38_299 = arith.constant 38 : index
    %c0_300 = arith.constant 0 : index
    %417 = vector.load %arg5[%c38_299, %c0_300] : memref<336x128xf32, #tpu.memory_space<vmem>>, vector<288x128xf32>
    %418 = arith.truncf %417 : vector<288x128xf32> to vector<288x128xbf16>
    %c8_301 = arith.constant 8 : index
    %c0_302 = arith.constant 0 : index
    %c0_303 = arith.constant 0 : index
    %419 = vector.load %arg3[%c8_301, %c0_302, %c0_303] : memref<9x128x128xbf16, #tpu.memory_space<vmem>>, vector<1x128x128xbf16>
    %420 = vector.shape_cast %419 : vector<1x128x128xbf16> to vector<128x128xbf16>
    %cst_304 = arith.constant dense<0.000000e+00> : vector<288x128xf32>
    %421 = tpu.matmul %418, %420, %cst_304 {dimension_numbers = #tpu.dot_dimension_numbers<[1], [0], [0], [1], [0, 0, 1, 1], [], []>} : vector<288x128xbf16>, vector<128x128xbf16>, vector<288x128xf32> -> vector<288x128xf32>
    %c0_305 = arith.constant 0 : index
    %c0_306 = arith.constant 0 : index
    %422 = vector.load %arg6[%c0_305, %c0_306] : memref<288x128xf32, #tpu.memory_space<vmem>>, vector<288x128xf32>
    %423 = arith.addf %422, %421 : vector<288x128xf32>
    %c0_307 = arith.constant 0 : index
    %c0_308 = arith.constant 0 : index
    %424 = vector.load %arg6[%c0_307, %c0_308] : memref<288x128xf32, #tpu.memory_space<vmem>>, vector<288x128xf32>
    tpu.vector_store %arg6[%c0_307, %c0_308], %423 {strides = array<i32>} : memref<288x128xf32, #tpu.memory_space<vmem>>, vector<288x128xf32>,
    %c0_309 = arith.constant 0 : index
    %c0_310 = arith.constant 0 : index
    %425 = vector.load %arg6[%c0_309, %c0_310] : memref<288x128xf32, #tpu.memory_space<vmem>>, vector<288x128xf32>
    %cst_311 = arith.constant 0.000000e+00 : f32
    %426 = vector.shape_cast %18 : vector<288x1xi1> to vector<288x1xi1>
    %427 = vector.broadcast %426 : vector<288x1xi1> to vector<288x128xi1>
    %428 = vector.broadcast %cst_311 : f32 to vector<288x128xf32>
    %429 = arith.select %427, %425, %428 : vector<288x128xi1>, vector<288x128xf32>
    %cst_312 = arith.constant dense<0.000000e+00> : vector<128xf32>
    %430 = vector.multi_reduction <add>, %429, %cst_312 [0] : vector<288x128xf32> to vector<128xf32>
    %431 = vector.shape_cast %430 : vector<128xf32> to vector<1x128xf32>
    %432 = arith.mulf %425, %425 : vector<288x128xf32>
    %cst_313 = arith.constant 0.000000e+00 : f32
    %433 = vector.shape_cast %18 : vector<288x1xi1> to vector<288x1xi1>
    %434 = vector.broadcast %433 : vector<288x1xi1> to vector<288x128xi1>
    %435 = vector.broadcast %cst_313 : f32 to vector<288x128xf32>
    %436 = arith.select %434, %432, %435 : vector<288x128xi1>, vector<288x128xf32>
    %cst_314 = arith.constant dense<0.000000e+00> : vector<128xf32>
    %437 = vector.multi_reduction <add>, %436, %cst_314 [0] : vector<288x128xf32> to vector<128xf32>
    %438 = vector.shape_cast %437 : vector<128xf32> to vector<1x128xf32>
    %cst_315 = arith.constant 3.906250e-03 : f32
    %439 = vector.broadcast %cst_315 : f32 to vector<1x128xf32>
    %440 = arith.mulf %431, %439 : vector<1x128xf32>
    %cst_316 = arith.constant 3.906250e-03 : f32
    %441 = vector.broadcast %cst_316 : f32 to vector<1x128xf32>
    %442 = arith.mulf %438, %441 : vector<1x128xf32>
    %443 = arith.mulf %440, %440 : vector<1x128xf32>
    %444 = arith.subf %442, %443 : vector<1x128xf32>
    %cst_317 = arith.constant 9.99999974E-6 : f32
    %445 = vector.broadcast %cst_317 : f32 to vector<1x128xf32>
    %446 = arith.addf %444, %445 : vector<1x128xf32>
    %447 = math.rsqrt %446 : vector<1x128xf32>
    %c0_318 = arith.constant 0 : index
    %c19_319 = arith.constant 19 : index
    %c0_320 = arith.constant 0 : index
    %448 = vector.load %arg1[%c0_318, %c19_319, %c0_320] : memref<1x336x128xf32, #tpu.memory_space<vmem>>, vector<1x288x128xf32>
    %449 = vector.shape_cast %448 : vector<1x288x128xf32> to vector<288x128xf32>
    %c0_321 = arith.constant 0 : index
    %c0_322 = arith.constant 0 : index
    %450 = vector.load %arg6[%c0_321, %c0_322] : memref<288x128xf32, #tpu.memory_space<vmem>>, vector<288x128xf32>
    %451 = vector.broadcast %440 : vector<1x128xf32> to vector<288x128xf32>
    %452 = arith.subf %450, %451 : vector<288x128xf32>
    %453 = vector.broadcast %447 : vector<1x128xf32> to vector<288x128xf32>
    %454 = arith.mulf %452, %453 : vector<288x128xf32>
    %455 = arith.addf %449, %454 : vector<288x128xf32>
    %c0_323 = arith.constant 0 : index
    %c0_324 = arith.constant 0 : index
    %c0_325 = arith.constant 0 : index
    %456 = vector.load %arg4[%c0_323, %c0_324, %c0_325] : memref<1x288x128xf32, #tpu.memory_space<vmem>>, vector<1x288x128xf32>
    %457 = vector.shape_cast %456 : vector<1x288x128xf32> to vector<288x128xf32>
    %458 = vector.shape_cast %455 : vector<288x128xf32> to vector<1x288x128xf32>
    tpu.vector_store %arg4[%c0_323, %c0_324, %c0_325], %458 {strides = array<i32>} : memref<1x288x128xf32, #tpu.memory_space<vmem>>, vector<1x288x128xf32>,
    return
  }
  func.func @transform_0(%arg0: i32) -> (i32, i32, i32) {
    %c0_i32 = arith.constant 0 : i32
    %c0_i32_0 = arith.constant 0 : i32
    %c0_i32_1 = arith.constant 0 : i32
    return %arg0, %c0_i32, %c0_i32_0 : i32, i32, i32
  }
  func.func @transform_1(%arg0: i32) -> (i32, i32, i32) {
    %c0_i32 = arith.constant 0 : i32
    %c0_i32_0 = arith.constant 0 : i32
    %c0_i32_1 = arith.constant 0 : i32
    %c0_i32_2 = arith.constant 0 : i32
    return %c0_i32, %c0_i32_0, %c0_i32_1 : i32, i32, i32
  }
  func.func @transform_2(%arg0: i32) -> (i32, i32, i32) {
    %c0_i32 = arith.constant 0 : i32
    %c0_i32_0 = arith.constant 0 : i32
    %c0_i32_1 = arith.constant 0 : i32
    %c0_i32_2 = arith.constant 0 : i32
    return %c0_i32, %c0_i32_0, %c0_i32_1 : i32, i32, i32
  }
  func.func @transform_3(%arg0: i32) -> (i32, i32, i32) {
    %c0_i32 = arith.constant 0 : i32
    %c0_i32_0 = arith.constant 0 : i32
    %c0_i32_1 = arith.constant 0 : i32
    return %arg0, %c0_i32, %c0_i32_0 : i32, i32, i32
  }
}

</mosaic_0001>

<llo_original>
// kernel: residual_block.1
$region0: #{residual_block.1}
  #allocation0 [shape = 'u32[]', space=smem, size = 0x4, offset = 0x4, fixed_abs, tag = 'smem constant byte address 0x4 - core index']
  #allocation1 [shape = 'u32[144,128]{1,0:T(1,128)}', space=vmem, size = 0x12000, scoped, tag = 'internal scratch']
  #allocation2 [shape = 'f32[336,128]{1,0:T(8,128)}', space=vmem, size = 0x2a000, scoped, tag = 'scratch operand']
  #allocation3 [shape = 'f32[288,128]{1,0:T(8,128)}', space=vmem, size = 0x24000, scoped, tag = 'scratch operand']
  %s0 = inlined_call_operand.vmem [shape: f32[2,336,128], index: 0, kind: input, shape index: {}]
  %s1 = inlined_call_operand.vmem [shape: bf16[9,128,128], index: 1, kind: input, shape index: {}]
  %s2 = inlined_call_operand.vmem [shape: bf16[9,128,128], index: 2, kind: input, shape index: {}]
  %s3 = inlined_call_operand.vmem [shape: f32[2,288,128], index: 3, kind: output, shape index: {}]
  %s4 = sld [smem:[#allocation0]]
  $region45: #{residual_block.1} parent=0
    _
  %s6 = ssub.s32 1, %s4
  %s7 = scalar_select 0, %s6, %s4
  loop: start=0, step=1, limit=4
  $region2: #{residual_block.1} parent=0 // loop_pre_header
    _
  $region3: #{residual_block.1} parent=0 // loop_header
    %s9 = sphi 0, %s13
    %p10 = scmp.ge.s32.totalorder %s9, 4
    %s19 = sphi 0, %s21
    %s22 = sphi 0, %s19
    %s23 = sphi 0, %s22
    %s39 = sphi 0, %s23
    %s43 = sphi 0, %s43
    %s45 = sphi 0, %s43
    %s46 = sphi 0, %s45
    %s60 = sphi 0, %s46
    %s64 = sphi 0, %s64
    %s66 = sphi 0, %s64
    %s67 = sphi 0, %s66
    %s81 = sphi 0, %s67
    %s87 = sphi 0, %s89
    %s90 = sphi 0, %s87
    %s91 = sphi 0, %s90
    %s107 = sphi 0, %s91
  $region4: #{residual_block.1} parent=0 // loop_header_branch
    %12 = sbr.rel (%p10) target = $region8
  $region5: #{residual_block.1} parent=0 // loop_body
    %s14 = ssub.s32 %s9, 1
    %s15 = ssub.s32 %s9, 2
    %s16 = sadd.s32 %s9, 1
    %s17 = ssub.s32 %s9, %s16
    %p18 = scmp.eq.s32.totalorder %s17, 0
    %s20 = sadd.s32 %s19, 1
    %s21 = scalar_select %p18, %s19, %s20
    %p24 = pneg %p18
    %p25 = scmp.eq.s32.totalorder %s9, 1
    %p26 = por %p24, %p25
    %p27 = scmp.ne.s32.totalorder %s19, %s22
    %p28 = scmp.eq.s32.totalorder %s9, 0
    %p29 = por %p27, %p28
    %p30 = scmp.ne.s32.totalorder %s19, %s22
    %p31 = scmp.eq.s32.totalorder %s14, 1
    %p32 = por %p30, %p31
    %p33 = scmp.ne.s32.totalorder %s22, %s23
    %p34 = scmp.eq.s32.totalorder %s14, 0
    %p35 = por %p33, %p34
    %p36 = scmp.ne.s32.totalorder %s22, %s23
    %p37 = scmp.eq.s32.totalorder %s15, 1
    %p38 = por %p36, %p37
    %p40 = scmp.ne.s32.totalorder %s23, %s39
    %p41 = scmp.eq.s32.totalorder %s15, 0
    %p42 = por %p40, %p41
    %s44 = sadd.s32 %s43, 1
    %p47 = scmp.eq.s32.totalorder %s9, 1
    %p48 = scmp.ne.s32.totalorder %s43, %s45
    %p49 = scmp.eq.s32.totalorder %s9, 0
    %p50 = por %p48, %p49
    %p51 = scmp.ne.s32.totalorder %s43, %s45
    %p52 = scmp.eq.s32.totalorder %s14, 1
    %p53 = por %p51, %p52
    %p54 = scmp.ne.s32.totalorder %s45, %s46
    %p55 = scmp.eq.s32.totalorder %s14, 0
    %p56 = por %p54, %p55
    %p57 = scmp.ne.s32.totalorder %s45, %s46
    %p58 = scmp.eq.s32.totalorder %s15, 1
    %p59 = por %p57, %p58
    %p61 = scmp.ne.s32.totalorder %s46, %s60
    %p62 = scmp.eq.s32.totalorder %s15, 0
    %p63 = por %p61, %p62
    %s65 = sadd.s32 %s64, 1
    %p68 = scmp.eq.s32.totalorder %s9, 1
    %p69 = scmp.ne.s32.totalorder %s64, %s66
    %p70 = scmp.eq.s32.totalorder %s9, 0
    %p71 = por %p69, %p70
    %p72 = scmp.ne.s32.totalorder %s64, %s66
    %p73 = scmp.eq.s32.totalorder %s14, 1
    %p74 = por %p72, %p73
    %p75 = scmp.ne.s32.totalorder %s66, %s67
    %p76 = scmp.eq.s32.totalorder %s14, 0
    %p77 = por %p75, %p76
    %p78 = scmp.ne.s32.totalorder %s66, %s67
    %p79 = scmp.eq.s32.totalorder %s15, 1
    %p80 = por %p78, %p79
    %p82 = scmp.ne.s32.totalorder %s67, %s81
    %p83 = scmp.eq.s32.totalorder %s15, 0
    %p84 = por %p82, %p83
    %s85 = ssub.s32 %s9, %s16
    %p86 = scmp.eq.s32.totalorder %s85, 0
    %s88 = sadd.s32 %s87, 1
    %s89 = scalar_select %p86, %s87, %s88
    %p92 = pneg %p86
    %p93 = scmp.eq.s32.totalorder %s9, 1
    %p94 = por %p92, %p93
    %p95 = scmp.ne.s32.totalorder %s87, %s90
    %p96 = scmp.eq.s32.totalorder %s9, 0
    %p97 = por %p95, %p96
    %p98 = scmp.ne.s32.totalorder %s87, %s90
    %p99 = scmp.eq.s32.totalorder %s14, 1
    %p100 = por %p98, %p99
    %p101 = scmp.ne.s32.totalorder %s90, %s91
    %p102 = scmp.eq.s32.totalorder %s14, 0
    %p103 = por %p101, %p102
    %p104 = scmp.ne.s32.totalorder %s90, %s91
    %p105 = scmp.eq.s32.totalorder %s15, 1
    %p106 = por %p104, %p105
    %p108 = scmp.ne.s32.totalorder %s91, %s107
    %p109 = scmp.eq.s32.totalorder %s15, 0
    %p110 = por %p108, %p109
    %p111 = scmp.le.s32.totalorder 1, %s9
    %p112 = scmp.lt.s32.totalorder %s9, 3
    %p113 = pnand %p111, %p112
    %p114 = pneg %p113
    // Predicated region
    $region9: #{residual_block.1} parent=5 // pred_check
      _
    $region10: #{residual_block.1} parent=5 // pred_check_branch
      %116 = sbr.rel (%p113) target = $region12
    $region11: #{residual_block.1} parent=5 // pred_region
      %s117 = ssub.s32 %s9, 1
      // Predicated region
      $region13: #{residual_block.1} parent=11 // pred_check
        %p118 = pneg %p56
      $region14: #{residual_block.1} parent=11 // pred_check_branch
        %120 = sbr.rel (%p118) target = $region16
      $region15: #{residual_block.1} parent=11 // pred_region
        _
      $region16: #{residual_block.1} parent=11 // pred_fallthru
        _
      // Predicated region
      $region17: #{residual_block.1} parent=11 // pred_check
        %p121 = pneg %p77
      $region18: #{residual_block.1} parent=11 // pred_check_branch
        %123 = sbr.rel (%p121) target = $region20
      $region19: #{residual_block.1} parent=11 // pred_region
        _
      $region20: #{residual_block.1} parent=11 // pred_fallthru
        _
    $region12: #{residual_block.1} parent=5 // pred_fallthru
      _
    %p124 = scmp.lt.s32.totalorder %s9, 2
    // Predicated region
    $region21: #{residual_block.1} parent=5 // pred_check
      %p125 = pneg %p124
    $region22: #{residual_block.1} parent=5 // pred_check_branch
      %127 = sbr.rel (%p125) target = $region24
    $region23: #{residual_block.1} parent=5 // pred_region
      // Predicated region
      $region25: #{residual_block.1} parent=23 // pred_check
        %p128 = pneg %p29
      $region26: #{residual_block.1} parent=23 // pred_check_branch
        %130 = sbr.rel (%p128) target = $region28
      $region27: #{residual_block.1} parent=23 // pred_region
        %p131 = scmp.lt.s32.totalorder %s9, 1
        %s132 = scalar_select %p131, %s9, 1
        %s133 = smul.addr %s132, 42
        %s134 = smul.addr %s133, 8
        %s135 = scalar_lea.vmem %s0, %s134
      $region28: #{residual_block.1} parent=23 // pred_fallthru
        _
    $region24: #{residual_block.1} parent=5 // pred_fallthru
      _
    %p136 = scmp.le.s32.totalorder 1, %s9
    %p137 = scmp.lt.s32.totalorder %s9, 3
    %p138 = pnand %p136, %p137
    %p139 = pneg %p138
    // Predicated region
    $region29: #{residual_block.1} parent=5 // pred_check
      _
    $region30: #{residual_block.1} parent=5 // pred_check_branch
      %141 = sbr.rel (%p138) target = $region32
    $region31: #{residual_block.1} parent=5 // pred_region
      %s142 = ssub.s32 %s9, 1
      %p143 = scmp.lt.s32.totalorder %s14, 1
      %s144 = scalar_select %p143, %s14, 1
      %s145 = smul.addr %s144, 42
      %s146 = smul.addr %s145, 8
      %s147 = scalar_lea.vmem %s0, %s146
      %p148 = pneg %p35
      %p149 = pneg %p32
      %p150 = pneg %p56
      %p151 = pneg %p53
      %p152 = pneg %p77
      %p153 = pneg %p74
      %p154 = pneg %p103
      %p155 = pneg %p100
      %p156 = scmp.lt.s32.totalorder %s14, 1
      %s157 = scalar_select %p156, %s14, 1
      %s158 = smul.addr %s157, 36
      %s159 = smul.addr %s158, 8
      %s160 = scalar_lea.vmem %s3, %s159
      %p161 = scmp.lt.s32.totalorder %s14, 1
      %s162 = scalar_select %p161, %s14, 1
      %s163 = smul.addr %s162, 42
      %s164 = smul.addr %s163, 8
      %s165 = scalar_lea.vmem %s0, %s164
      %p166 = scmp.lt.s32.totalorder %s14, 1
      %s167 = scalar_select %p166, %s14, 1
      %s168 = smul.addr %s167, 36
      %s169 = smul.addr %s168, 8
      %s170 = scalar_lea.vmem %s3, %s169
      %v172 = vlaneseq
      %v173 = vshrl.u32 %v172, 7
      %v174 = vadd.s32 %v173, 8
      %v175 = vadd.s32 %v173, 16
      %v176 = vadd.s32 %v173, 24
      %v177 = vadd.s32 %v173, 32
      %v178 = vadd.s32 %v173, 40
      %v179 = vadd.s32 %v173, 48
      %v180 = vadd.s32 %v173, 56
      %v181 = vadd.s32 %v173, 64
      %v182 = vadd.s32 %v173, 72
      %v183 = vadd.s32 %v173, 80
      %v184 = vadd.s32 %v173, 88
      %v185 = vadd.s32 %v173, 96
      %v186 = vadd.s32 %v173, 104
      %v187 = vadd.s32 %v173, 112
      %v188 = vadd.s32 %v173, 120
      %v189 = vadd.s32 %v173, 128
      %v190 = vadd.s32 %v173, 136
      %v191 = vadd.s32 %v173, 144
      %v192 = vadd.s32 %v173, 152
      %v193 = vadd.s32 %v173, 160
      %v194 = vadd.s32 %v173, 168
      %v195 = vadd.s32 %v173, 176
      %v196 = vadd.s32 %v173, 184
      %v197 = vadd.s32 %v173, 192
      %v198 = vadd.s32 %v173, 200
      %v199 = vadd.s32 %v173, 208
      %v200 = vadd.s32 %v173, 216
      %v201 = vadd.s32 %v173, 224
      %v202 = vadd.s32 %v173, 232
      %v203 = vadd.s32 %v173, 240
      %v204 = vadd.s32 %v173, 248
      %v205 = vadd.s32 %v173, 256
      %v206 = vadd.s32 %v173, 264
      %v207 = vadd.s32 %v173, 272
      %v208 = vadd.s32 %v173, 280
      %vm209 = vcmp.lt.s32.totalorder %v173, 0
      %v210 = vsub.s32 0, %v173
      %v211 = vsel %vm209, %v210, %v173
      %v212 = vmul.u32.u64.compose %v211, 3817748708
      %v213 = vextract.low.u32 %v212
      %v214 = vextract.high.u32 %v212
      %v215 = vshrl.u32 %v214, 4
      %v216 = vmul.u32 %v215, 18
      %v217 = vsub.s32 %v211, %v216
      %v218 = vsub.s32 0, %v217
      %v219 = vsel %vm209, %v218, %v217
      %vm220 = vcmp.lt.s32.totalorder %v174, 0
      %v221 = vsub.s32 0, %v174
      %v222 = vsel %vm220, %v221, %v174
      %v223 = vmul.u32.u64.compose %v222, 3817748708
      %v224 = vextract.low.u32 %v223
      %v225 = vextract.high.u32 %v223
      %v226 = vshrl.u32 %v225, 4
      %v227 = vmul.u32 %v226, 18
      %v228 = vsub.s32 %v222, %v227
      %v229 = vsub.s32 0, %v228
      %v230 = vsel %vm220, %v229, %v228
      %vm231 = vcmp.lt.s32.totalorder %v175, 0
      %v232 = vsub.s32 0, %v175
      %v233 = vsel %vm231, %v232, %v175
      %v234 = vmul.u32.u64.compose %v233, 3817748708
      %v235 = vextract.low.u32 %v234
      %v236 = vextract.high.u32 %v234
      %v237 = vshrl.u32 %v236, 4
      %v238 = vmul.u32 %v237, 18
      %v239 = vsub.s32 %v233, %v238
      %v240 = vsub.s32 0, %v239
      %v241 = vsel %vm231, %v240, %v239
      %vm242 = vcmp.lt.s32.totalorder %v176, 0
      %v243 = vsub.s32 0, %v176
      %v244 = vsel %vm242, %v243, %v176
      %v245 = vmul.u32.u64.compose %v244, 3817748708
      %v246 = vextract.low.u32 %v245
      %v247 = vextract.high.u32 %v245
      %v248 = vshrl.u32 %v247, 4
      %v249 = vmul.u32 %v248, 18
      %v250 = vsub.s32 %v244, %v249
      %v251 = vsub.s32 0, %v250
      %v252 = vsel %vm242, %v251, %v250
      %vm253 = vcmp.lt.s32.totalorder %v177, 0
      %v254 = vsub.s32 0, %v177
      %v255 = vsel %vm253, %v254, %v177
      %v256 = vmul.u32.u64.compose %v255, 3817748708
      %v257 = vextract.low.u32 %v256
      %v258 = vextract.high.u32 %v256
      %v259 = vshrl.u32 %v258, 4
      %v260 = vmul.u32 %v259, 18
      %v261 = vsub.s32 %v255, %v260
      %v262 = vsub.s32 0, %v261
      %v263 = vsel %vm253, %v262, %v261
      %vm264 = vcmp.lt.s32.totalorder %v178, 0
      %v265 = vsub.s32 0, %v178
      %v266 = vsel %vm264, %v265, %v178
      %v267 = vmul.u32.u64.compose %v266, 3817748708
      %v268 = vextract.low.u32 %v267
      %v269 = vextract.high.u32 %v267
      %v270 = vshrl.u32 %v269, 4
      %v271 = vmul.u32 %v270, 18
      %v272 = vsub.s32 %v266, %v271
      %v273 = vsub.s32 0, %v272
      %v274 = vsel %vm264, %v273, %v272
      %vm275 = vcmp.lt.s32.totalorder %v179, 0
      %v276 = vsub.s32 0, %v179
      %v277 = vsel %vm275, %v276, %v179
      %v278 = vmul.u32.u64.compose %v277, 3817748708
      %v279 = vextract.low.u32 %v278
      %v280 = vextract.high.u32 %v278
      %v281 = vshrl.u32 %v280, 4
      %v282 = vmul.u32 %v281, 18
      %v283 = vsub.s32 %v277, %v282
      %v284 = vsub.s32 0, %v283
      %v285 = vsel %vm275, %v284, %v283
      %vm286 = vcmp.lt.s32.totalorder %v180, 0
      %v287 = vsub.s32 0, %v180
      %v288 = vsel %vm286, %v287, %v180
      %v289 = vmul.u32.u64.compose %v288, 3817748708
      %v290 = vextract.low.u32 %v289
      %v291 = vextract.high.u32 %v289
      %v292 = vshrl.u32 %v291, 4
      %v293 = vmul.u32 %v292, 18
      %v294 = vsub.s32 %v288, %v293
      %v295 = vsub.s32 0, %v294
      %v296 = vsel %vm286, %v295, %v294
      %vm297 = vcmp.lt.s32.totalorder %v181, 0
      %v298 = vsub.s32 0, %v181
      %v299 = vsel %vm297, %v298, %v181
      %v300 = vmul.u32.u64.compose %v299, 3817748708
      %v301 = vextract.low.u32 %v300
      %v302 = vextract.high.u32 %v300
      %v303 = vshrl.u32 %v302, 4
      %v304 = vmul.u32 %v303, 18
      %v305 = vsub.s32 %v299, %v304
      %v306 = vsub.s32 0, %v305
      %v307 = vsel %vm297, %v306, %v305
      %vm308 = vcmp.lt.s32.totalorder %v182, 0
      %v309 = vsub.s32 0, %v182
      %v310 = vsel %vm308, %v309, %v182
      %v311 = vmul.u32.u64.compose %v310, 3817748708
      %v312 = vextract.low.u32 %v311
      %v313 = vextract.high.u32 %v311
      %v314 = vshrl.u32 %v313, 4
      %v315 = vmul.u32 %v314, 18
      %v316 = vsub.s32 %v310, %v315
      %v317 = vsub.s32 0, %v316
      %v318 = vsel %vm308, %v317, %v316
      %vm319 = vcmp.lt.s32.totalorder %v183, 0
      %v320 = vsub.s32 0, %v183
      %v321 = vsel %vm319, %v320, %v183
      %v322 = vmul.u32.u64.compose %v321, 3817748708
      %v323 = vextract.low.u32 %v322
      %v324 = vextract.high.u32 %v322
      %v325 = vshrl.u32 %v324, 4
      %v326 = vmul.u32 %v325, 18
      %v327 = vsub.s32 %v321, %v326
      %v328 = vsub.s32 0, %v327
      %v329 = vsel %vm319, %v328, %v327
      %vm330 = vcmp.lt.s32.totalorder %v184, 0
      %v331 = vsub.s32 0, %v184
      %v332 = vsel %vm330, %v331, %v184
      %v333 = vmul.u32.u64.compose %v332, 3817748708
      %v334 = vextract.low.u32 %v333
      %v335 = vextract.high.u32 %v333
      %v336 = vshrl.u32 %v335, 4
      %v337 = vmul.u32 %v336, 18
      %v338 = vsub.s32 %v332, %v337
      %v339 = vsub.s32 0, %v338
      %v340 = vsel %vm330, %v339, %v338
      %vm341 = vcmp.lt.s32.totalorder %v185, 0
      %v342 = vsub.s32 0, %v185
      %v343 = vsel %vm341, %v342, %v185
      %v344 = vmul.u32.u64.compose %v343, 3817748708
      %v345 = vextract.low.u32 %v344
      %v346 = vextract.high.u32 %v344
      %v347 = vshrl.u32 %v346, 4
      %v348 = vmul.u32 %v347, 18
      %v349 = vsub.s32 %v343, %v348
      %v350 = vsub.s32 0, %v349
      %v351 = vsel %vm341, %v350, %v349
      %vm352 = vcmp.lt.s32.totalorder %v186, 0
      %v353 = vsub.s32 0, %v186
      %v354 = vsel %vm352, %v353, %v186
      %v355 = vmul.u32.u64.compose %v354, 3817748708
      %v356 = vextract.low.u32 %v355
      %v357 = vextract.high.u32 %v355
      %v358 = vshrl.u32 %v357, 4
      %v359 = vmul.u32 %v358, 18
      %v360 = vsub.s32 %v354, %v359
      %v361 = vsub.s32 0, %v360
      %v362 = vsel %vm352, %v361, %v360
      %vm363 = vcmp.lt.s32.totalorder %v187, 0
      %v364 = vsub.s32 0, %v187
      %v365 = vsel %vm363, %v364, %v187
      %v366 = vmul.u32.u64.compose %v365, 3817748708
      %v367 = vextract.low.u32 %v366
      %v368 = vextract.high.u32 %v366
      %v369 = vshrl.u32 %v368, 4
      %v370 = vmul.u32 %v369, 18
      %v371 = vsub.s32 %v365, %v370
      %v372 = vsub.s32 0, %v371
      %v373 = vsel %vm363, %v372, %v371
      %vm374 = vcmp.lt.s32.totalorder %v188, 0
      %v375 = vsub.s32 0, %v188
      %v376 = vsel %vm374, %v375, %v188
      %v377 = vmul.u32.u64.compose %v376, 3817748708
      %v378 = vextract.low.u32 %v377
      %v379 = vextract.high.u32 %v377
      %v380 = vshrl.u32 %v379, 4
      %v381 = vmul.u32 %v380, 18
      %v382 = vsub.s32 %v376, %v381
      %v383 = vsub.s32 0, %v382
      %v384 = vsel %vm374, %v383, %v382
      %vm385 = vcmp.lt.s32.totalorder %v189, 0
      %v386 = vsub.s32 0, %v189
      %v387 = vsel %vm385, %v386, %v189
      %v388 = vmul.u32.u64.compose %v387, 3817748708
      %v389 = vextract.low.u32 %v388
      %v390 = vextract.high.u32 %v388
      %v391 = vshrl.u32 %v390, 4
      %v392 = vmul.u32 %v391, 18
      %v393 = vsub.s32 %v387, %v392
      %v394 = vsub.s32 0, %v393
      %v395 = vsel %vm385, %v394, %v393
      %vm396 = vcmp.lt.s32.totalorder %v190, 0
      %v397 = vsub.s32 0, %v190
      %v398 = vsel %vm396, %v397, %v190
      %v399 = vmul.u32.u64.compose %v398, 3817748708
      %v400 = vextract.low.u32 %v399
      %v401 = vextract.high.u32 %v399
      %v402 = vshrl.u32 %v401, 4
      %v403 = vmul.u32 %v402, 18
      %v404 = vsub.s32 %v398, %v403
      %v405 = vsub.s32 0, %v404
      %v406 = vsel %vm396, %v405, %v404
      %vm407 = vcmp.lt.s32.totalorder %v191, 0
      %v408 = vsub.s32 0, %v191
      %v409 = vsel %vm407, %v408, %v191
      %v410 = vmul.u32.u64.compose %v409, 3817748708
      %v411 = vextract.low.u32 %v410
      %v412 = vextract.high.u32 %v410
      %v413 = vshrl.u32 %v412, 4
      %v414 = vmul.u32 %v413, 18
      %v415 = vsub.s32 %v409, %v414
      %v416 = vsub.s32 0, %v415
      %v417 = vsel %vm407, %v416, %v415
      %vm418 = vcmp.lt.s32.totalorder %v192, 0
      %v419 = vsub.s32 0, %v192
      %v420 = vsel %vm418, %v419, %v192
      %v421 = vmul.u32.u64.compose %v420, 3817748708
      %v422 = vextract.low.u32 %v421
      %v423 = vextract.high.u32 %v421
      %v424 = vshrl.u32 %v423, 4
      %v425 = vmul.u32 %v424, 18
      %v426 = vsub.s32 %v420, %v425
      %v427 = vsub.s32 0, %v426
      %v428 = vsel %vm418, %v427, %v426
      %vm429 = vcmp.lt.s32.totalorder %v193, 0
      %v430 = vsub.s32 0, %v193
      %v431 = vsel %vm429, %v430, %v193
      %v432 = vmul.u32.u64.compose %v431, 3817748708
      %v433 = vextract.low.u32 %v432
      %v434 = vextract.high.u32 %v432
      %v435 = vshrl.u32 %v434, 4
      %v436 = vmul.u32 %v435, 18
      %v437 = vsub.s32 %v431, %v436
      %v438 = vsub.s32 0, %v437
      %v439 = vsel %vm429, %v438, %v437
      %vm440 = vcmp.lt.s32.totalorder %v194, 0
      %v441 = vsub.s32 0, %v194
      %v442 = vsel %vm440, %v441, %v194
      %v443 = vmul.u32.u64.compose %v442, 3817748708
      %v444 = vextract.low.u32 %v443
      %v445 = vextract.high.u32 %v443
      %v446 = vshrl.u32 %v445, 4
      %v447 = vmul.u32 %v446, 18
      %v448 = vsub.s32 %v442, %v447
      %v449 = vsub.s32 0, %v448
      %v450 = vsel %vm440, %v449, %v448
      %vm451 = vcmp.lt.s32.totalorder %v195, 0
      %v452 = vsub.s32 0, %v195
      %v453 = vsel %vm451, %v452, %v195
      %v454 = vmul.u32.u64.compose %v453, 3817748708
      %v455 = vextract.low.u32 %v454
      %v456 = vextract.high.u32 %v454
      %v457 = vshrl.u32 %v456, 4
      %v458 = vmul.u32 %v457, 18
      %v459 = vsub.s32 %v453, %v458
      %v460 = vsub.s32 0, %v459
      %v461 = vsel %vm451, %v460, %v459
      %vm462 = vcmp.lt.s32.totalorder %v196, 0
      %v463 = vsub.s32 0, %v196
      %v464 = vsel %vm462, %v463, %v196
      %v465 = vmul.u32.u64.compose %v464, 3817748708
      %v466 = vextract.low.u32 %v465
      %v467 = vextract.high.u32 %v465
      %v468 = vshrl.u32 %v467, 4
      %v469 = vmul.u32 %v468, 18
      %v470 = vsub.s32 %v464, %v469
      %v471 = vsub.s32 0, %v470
      %v472 = vsel %vm462, %v471, %v470
      %vm473 = vcmp.lt.s32.totalorder %v197, 0
      %v474 = vsub.s32 0, %v197
      %v475 = vsel %vm473, %v474, %v197
      %v476 = vmul.u32.u64.compose %v475, 3817748708
      %v477 = vextract.low.u32 %v476
      %v478 = vextract.high.u32 %v476
      %v479 = vshrl.u32 %v478, 4
      %v480 = vmul.u32 %v479, 18
      %v481 = vsub.s32 %v475, %v480
      %v482 = vsub.s32 0, %v481
      %v483 = vsel %vm473, %v482, %v481
      %vm484 = vcmp.lt.s32.totalorder %v198, 0
      %v485 = vsub.s32 0, %v198
      %v486 = vsel %vm484, %v485, %v198
      %v487 = vmul.u32.u64.compose %v486, 3817748708
      %v488 = vextract.low.u32 %v487
      %v489 = vextract.high.u32 %v487
      %v490 = vshrl.u32 %v489, 4
      %v491 = vmul.u32 %v490, 18
      %v492 = vsub.s32 %v486, %v491
      %v493 = vsub.s32 0, %v492
      %v494 = vsel %vm484, %v493, %v492
      %vm495 = vcmp.lt.s32.totalorder %v199, 0
      %v496 = vsub.s32 0, %v199
      %v497 = vsel %vm495, %v496, %v199
      %v498 = vmul.u32.u64.compose %v497, 3817748708
      %v499 = vextract.low.u32 %v498
      %v500 = vextract.high.u32 %v498
      %v501 = vshrl.u32 %v500, 4
      %v502 = vmul.u32 %v501, 18
      %v503 = vsub.s32 %v497, %v502
      %v504 = vsub.s32 0, %v503
      %v505 = vsel %vm495, %v504, %v503
      %vm506 = vcmp.lt.s32.totalorder %v200, 0
      %v507 = vsub.s32 0, %v200
      %v508 = vsel %vm506, %v507, %v200
      %v509 = vmul.u32.u64.compose %v508, 3817748708
      %v510 = vextract.low.u32 %v509
      %v511 = vextract.high.u32 %v509
      %v512 = vshrl.u32 %v511, 4
      %v513 = vmul.u32 %v512, 18
      %v514 = vsub.s32 %v508, %v513
      %v515 = vsub.s32 0, %v514
      %v516 = vsel %vm506, %v515, %v514
      %vm517 = vcmp.lt.s32.totalorder %v201, 0
      %v518 = vsub.s32 0, %v201
      %v519 = vsel %vm517, %v518, %v201
      %v520 = vmul.u32.u64.compose %v519, 3817748708
      %v521 = vextract.low.u32 %v520
      %v522 = vextract.high.u32 %v520
      %v523 = vshrl.u32 %v522, 4
      %v524 = vmul.u32 %v523, 18
      %v525 = vsub.s32 %v519, %v524
      %v526 = vsub.s32 0, %v525
      %v527 = vsel %vm517, %v526, %v525
      %vm528 = vcmp.lt.s32.totalorder %v202, 0
      %v529 = vsub.s32 0, %v202
      %v530 = vsel %vm528, %v529, %v202
      %v531 = vmul.u32.u64.compose %v530, 3817748708
      %v532 = vextract.low.u32 %v531
      %v533 = vextract.high.u32 %v531
      %v534 = vshrl.u32 %v533, 4
      %v535 = vmul.u32 %v534, 18
      %v536 = vsub.s32 %v530, %v535
      %v537 = vsub.s32 0, %v536
      %v538 = vsel %vm528, %v537, %v536
      %vm539 = vcmp.lt.s32.totalorder %v203, 0
      %v540 = vsub.s32 0, %v203
      %v541 = vsel %vm539, %v540, %v203
      %v542 = vmul.u32.u64.compose %v541, 3817748708
      %v543 = vextract.low.u32 %v542
      %v544 = vextract.high.u32 %v542
      %v545 = vshrl.u32 %v544, 4
      %v546 = vmul.u32 %v545, 18
      %v547 = vsub.s32 %v541, %v546
      %v548 = vsub.s32 0, %v547
      %v549 = vsel %vm539, %v548, %v547
      %vm550 = vcmp.lt.s32.totalorder %v204, 0
      %v551 = vsub.s32 0, %v204
      %v552 = vsel %vm550, %v551, %v204
      %v553 = vmul.u32.u64.compose %v552, 3817748708
      %v554 = vextract.low.u32 %v553
      %v555 = vextract.high.u32 %v553
      %v556 = vshrl.u32 %v555, 4
      %v557 = vmul.u32 %v556, 18
      %v558 = vsub.s32 %v552, %v557
      %v559 = vsub.s32 0, %v558
      %v560 = vsel %vm550, %v559, %v558
      %vm561 = vcmp.lt.s32.totalorder %v205, 0
      %v562 = vsub.s32 0, %v205
      %v563 = vsel %vm561, %v562, %v205
      %v564 = vmul.u32.u64.compose %v563, 3817748708
      %v565 = vextract.low.u32 %v564
      %v566 = vextract.high.u32 %v564
      %v567 = vshrl.u32 %v566, 4
      %v568 = vmul.u32 %v567, 18
      %v569 = vsub.s32 %v563, %v568
      %v570 = vsub.s32 0, %v569
      %v571 = vsel %vm561, %v570, %v569
      %vm572 = vcmp.lt.s32.totalorder %v206, 0
      %v573 = vsub.s32 0, %v206
      %v574 = vsel %vm572, %v573, %v206
      %v575 = vmul.u32.u64.compose %v574, 3817748708
      %v576 = vextract.low.u32 %v575
      %v577 = vextract.high.u32 %v575
      %v578 = vshrl.u32 %v577, 4
      %v579 = vmul.u32 %v578, 18
      %v580 = vsub.s32 %v574, %v579
      %v581 = vsub.s32 0, %v580
      %v582 = vsel %vm572, %v581, %v580
      %vm583 = vcmp.lt.s32.totalorder %v207, 0
      %v584 = vsub.s32 0, %v207
      %v585 = vsel %vm583, %v584, %v207
      %v586 = vmul.u32.u64.compose %v585, 3817748708
      %v587 = vextract.low.u32 %v586
      %v588 = vextract.high.u32 %v586
      %v589 = vshrl.u32 %v588, 4
      %v590 = vmul.u32 %v589, 18
      %v591 = vsub.s32 %v585, %v590
      %v592 = vsub.s32 0, %v591
      %v593 = vsel %vm583, %v592, %v591
      %vm594 = vcmp.lt.s32.totalorder %v208, 0
      %v595 = vsub.s32 0, %v208
      %v596 = vsel %vm594, %v595, %v208
      %v597 = vmul.u32.u64.compose %v596, 3817748708
      %v598 = vextract.low.u32 %v597
      %v599 = vextract.high.u32 %v597
      %v600 = vshrl.u32 %v599, 4
      %v601 = vmul.u32 %v600, 18
      %v602 = vsub.s32 %v596, %v601
      %v603 = vsub.s32 0, %v602
      %v604 = vsel %vm594, %v603, %v602
      %vm605 = vcmp.ne.s32.totalorder %v219, 0
      %vm606 = vcmp.ne.s32.totalorder %v230, 0
      %vm607 = vcmp.ne.s32.totalorder %v241, 0
      %vm608 = vcmp.ne.s32.totalorder %v252, 0
      %vm609 = vcmp.ne.s32.totalorder %v263, 0
      %vm610 = vcmp.ne.s32.totalorder %v274, 0
      %vm611 = vcmp.ne.s32.totalorder %v285, 0
      %vm612 = vcmp.ne.s32.totalorder %v296, 0
      %vm613 = vcmp.ne.s32.totalorder %v307, 0
      %vm614 = vcmp.ne.s32.totalorder %v318, 0
      %vm615 = vcmp.ne.s32.totalorder %v329, 0
      %vm616 = vcmp.ne.s32.totalorder %v340, 0
      %vm617 = vcmp.ne.s32.totalorder %v351, 0
      %vm618 = vcmp.ne.s32.totalorder %v362, 0
      %vm619 = vcmp.ne.s32.totalorder %v373, 0
      %vm620 = vcmp.ne.s32.totalorder %v384, 0
      %vm621 = vcmp.ne.s32.totalorder %v395, 0
      %vm622 = vcmp.ne.s32.totalorder %v406, 0
      %vm623 = vcmp.ne.s32.totalorder %v417, 0
      %vm624 = vcmp.ne.s32.totalorder %v428, 0
      %vm625 = vcmp.ne.s32.totalorder %v439, 0
      %vm626 = vcmp.ne.s32.totalorder %v450, 0
      %vm627 = vcmp.ne.s32.totalorder %v461, 0
      %vm628 = vcmp.ne.s32.totalorder %v472, 0
      %vm629 = vcmp.ne.s32.totalorder %v483, 0
      %vm630 = vcmp.ne.s32.totalorder %v494, 0
      %vm631 = vcmp.ne.s32.totalorder %v505, 0
      %vm632 = vcmp.ne.s32.totalorder %v516, 0
      %vm633 = vcmp.ne.s32.totalorder %v527, 0
      %vm634 = vcmp.ne.s32.totalorder %v538, 0
      %vm635 = vcmp.ne.s32.totalorder %v549, 0
      %vm636 = vcmp.ne.s32.totalorder %v560, 0
      %vm637 = vcmp.ne.s32.totalorder %v571, 0
      %vm638 = vcmp.ne.s32.totalorder %v582, 0
      %vm639 = vcmp.ne.s32.totalorder %v593, 0
      %vm640 = vcmp.ne.s32.totalorder %v604, 0
      %vm641 = vcmp.lt.s32.totalorder %v219, 0
      %vm642 = vcmp.lt.s32.totalorder %v230, 0
      %vm643 = vcmp.lt.s32.totalorder %v241, 0
      %vm644 = vcmp.lt.s32.totalorder %v252, 0
      %vm645 = vcmp.lt.s32.totalorder %v263, 0
      %vm646 = vcmp.lt.s32.totalorder %v274, 0
      %vm647 = vcmp.lt.s32.totalorder %v285, 0
      %vm648 = vcmp.lt.s32.totalorder %v296, 0
      %vm649 = vcmp.lt.s32.totalorder %v307, 0
      %vm650 = vcmp.lt.s32.totalorder %v318, 0
      %vm651 = vcmp.lt.s32.totalorder %v329, 0
      %vm652 = vcmp.lt.s32.totalorder %v340, 0
      %vm653 = vcmp.lt.s32.totalorder %v351, 0
      %vm654 = vcmp.lt.s32.totalorder %v362, 0
      %vm655 = vcmp.lt.s32.totalorder %v373, 0
      %vm656 = vcmp.lt.s32.totalorder %v384, 0
      %vm657 = vcmp.lt.s32.totalorder %v395, 0
      %vm658 = vcmp.lt.s32.totalorder %v406, 0
      %vm659 = vcmp.lt.s32.totalorder %v417, 0
      %vm660 = vcmp.lt.s32.totalorder %v428, 0
      %vm661 = vcmp.lt.s32.totalorder %v439, 0
      %vm662 = vcmp.lt.s32.totalorder %v450, 0
      %vm663 = vcmp.lt.s32.totalorder %v461, 0
      %vm664 = vcmp.lt.s32.totalorder %v472, 0
      %vm665 = vcmp.lt.s32.totalorder %v483, 0
      %vm666 = vcmp.lt.s32.totalorder %v494, 0
      %vm667 = vcmp.lt.s32.totalorder %v505, 0
      %vm668 = vcmp.lt.s32.totalorder %v516, 0
      %vm669 = vcmp.lt.s32.totalorder %v527, 0
      %vm670 = vcmp.lt.s32.totalorder %v538, 0
      %vm671 = vcmp.lt.s32.totalorder %v549, 0
      %vm672 = vcmp.lt.s32.totalorder %v560, 0
      %vm673 = vcmp.lt.s32.totalorder %v571, 0
      %vm674 = vcmp.lt.s32.totalorder %v582, 0
      %vm675 = vcmp.lt.s32.totalorder %v593, 0
      %vm676 = vcmp.lt.s32.totalorder %v604, 0
      %vm677 = vmand %vm641, %vm605
      %vm678 = vmand %vm642, %vm606
      %vm679 = vmand %vm643, %vm607
      %vm680 = vmand %vm644, %vm608
      %vm681 = vmand %vm645, %vm609
      %vm682 = vmand %vm646, %vm610
      %vm683 = vmand %vm647, %vm611
      %vm684 = vmand %vm648, %vm612
      %vm685 = vmand %vm649, %vm613
      %vm686 = vmand %vm650, %vm614
      %vm687 = vmand %vm651, %vm615
      %vm688 = vmand %vm652, %vm616
      %vm689 = vmand %vm653, %vm617
      %vm690 = vmand %vm654, %vm618
      %vm691 = vmand %vm655, %vm619
      %vm692 = vmand %vm656, %vm620
      %vm693 = vmand %vm657, %vm621
      %vm694 = vmand %vm658, %vm622
      %vm695 = vmand %vm659, %vm623
      %vm696 = vmand %vm660, %vm624
      %vm697 = vmand %vm661, %vm625
      %vm698 = vmand %vm662, %vm626
      %vm699 = vmand %vm663, %vm627
      %vm700 = vmand %vm664, %vm628
      %vm701 = vmand %vm665, %vm629
      %vm702 = vmand %vm666, %vm630
      %vm703 = vmand %vm667, %vm631
      %vm704 = vmand %vm668, %vm632
      %vm705 = vmand %vm669, %vm633
      %vm706 = vmand %vm670, %vm634
      %vm707 = vmand %vm671, %vm635
      %vm708 = vmand %vm672, %vm636
      %vm709 = vmand %vm673, %vm637
      %vm710 = vmand %vm674, %vm638
      %vm711 = vmand %vm675, %vm639
      %vm712 = vmand %vm676, %vm640
      %v713 = vadd.s32 %v219, 18
      %v714 = vadd.s32 %v230, 18
      %v715 = vadd.s32 %v241, 18
      %v716 = vadd.s32 %v252, 18
      %v717 = vadd.s32 %v263, 18
      %v718 = vadd.s32 %v274, 18
      %v719 = vadd.s32 %v285, 18
      %v720 = vadd.s32 %v296, 18
      %v721 = vadd.s32 %v307, 18
      %v722 = vadd.s32 %v318, 18
      %v723 = vadd.s32 %v329, 18
      %v724 = vadd.s32 %v340, 18
      %v725 = vadd.s32 %v351, 18
      %v726 = vadd.s32 %v362, 18
      %v727 = vadd.s32 %v373, 18
      %v728 = vadd.s32 %v384, 18
      %v729 = vadd.s32 %v395, 18
      %v730 = vadd.s32 %v406, 18
      %v731 = vadd.s32 %v417, 18
      %v732 = vadd.s32 %v428, 18
      %v733 = vadd.s32 %v439, 18
      %v734 = vadd.s32 %v450, 18
      %v735 = vadd.s32 %v461, 18
      %v736 = vadd.s32 %v472, 18
      %v737 = vadd.s32 %v483, 18
      %v738 = vadd.s32 %v494, 18
      %v739 = vadd.s32 %v505, 18
      %v740 = vadd.s32 %v516, 18
      %v741 = vadd.s32 %v527, 18
      %v742 = vadd.s32 %v538, 18
      %v743 = vadd.s32 %v549, 18
      %v744 = vadd.s32 %v560, 18
      %v745 = vadd.s32 %v571, 18
      %v746 = vadd.s32 %v582, 18
      %v747 = vadd.s32 %v593, 18
      %v748 = vadd.s32 %v604, 18
      %v749 = vsel %vm677, %v713, %v219
      %v750 = vsel %vm678, %v714, %v230
      %v751 = vsel %vm679, %v715, %v241
      %v752 = vsel %vm680, %v716, %v252
      %v753 = vsel %vm681, %v717, %v263
      %v754 = vsel %vm682, %v718, %v274
      %v755 = vsel %vm683, %v719, %v285
      %v756 = vsel %vm684, %v720, %v296
      %v757 = vsel %vm685, %v721, %v307
      %v758 = vsel %vm686, %v722, %v318
      %v759 = vsel %vm687, %v723, %v329
      %v760 = vsel %vm688, %v724, %v340
      %v761 = vsel %vm689, %v725, %v351
      %v762 = vsel %vm690, %v726, %v362
      %v763 = vsel %vm691, %v727, %v373
      %v764 = vsel %vm692, %v728, %v384
      %v765 = vsel %vm693, %v729, %v395
      %v766 = vsel %vm694, %v730, %v406
      %v767 = vsel %vm695, %v731, %v417
      %v768 = vsel %vm696, %v732, %v428
      %v769 = vsel %vm697, %v733, %v439
      %v770 = vsel %vm698, %v734, %v450
      %v771 = vsel %vm699, %v735, %v461
      %v772 = vsel %vm700, %v736, %v472
      %v773 = vsel %vm701, %v737, %v483
      %v774 = vsel %vm702, %v738, %v494
      %v775 = vsel %vm703, %v739, %v505
      %v776 = vsel %vm704, %v740, %v516
      %v777 = vsel %vm705, %v741, %v527
      %v778 = vsel %vm706, %v742, %v538
      %v779 = vsel %vm707, %v743, %v549
      %v780 = vsel %vm708, %v744, %v560
      %v781 = vsel %vm709, %v745, %v571
      %v782 = vsel %vm710, %v746, %v582
      %v783 = vsel %vm711, %v747, %v593
      %v784 = vsel %vm712, %v748, %v604
      %vm785 = vcmp.lt.s32.totalorder %v749, 16
      %vm786 = vcmp.lt.s32.totalorder %v750, 16
      %vm787 = vcmp.lt.s32.totalorder %v751, 16
      %vm788 = vcmp.lt.s32.totalorder %v752, 16
      %vm789 = vcmp.lt.s32.totalorder %v753, 16
      %vm790 = vcmp.lt.s32.totalorder %v754, 16
      %vm791 = vcmp.lt.s32.totalorder %v755, 16
      %vm792 = vcmp.lt.s32.totalorder %v756, 16
      %vm793 = vcmp.lt.s32.totalorder %v757, 16
      %vm794 = vcmp.lt.s32.totalorder %v758, 16
      %vm795 = vcmp.lt.s32.totalorder %v759, 16
      %vm796 = vcmp.lt.s32.totalorder %v760, 16
      %vm797 = vcmp.lt.s32.totalorder %v761, 16
      %vm798 = vcmp.lt.s32.totalorder %v762, 16
      %vm799 = vcmp.lt.s32.totalorder %v763, 16
      %vm800 = vcmp.lt.s32.totalorder %v764, 16
      %vm801 = vcmp.lt.s32.totalorder %v765, 16
      %vm802 = vcmp.lt.s32.totalorder %v766, 16
      %vm803 = vcmp.lt.s32.totalorder %v767, 16
      %vm804 = vcmp.lt.s32.totalorder %v768, 16
      %vm805 = vcmp.lt.s32.totalorder %v769, 16
      %vm806 = vcmp.lt.s32.totalorder %v770, 16
      %vm807 = vcmp.lt.s32.totalorder %v771, 16
      %vm808 = vcmp.lt.s32.totalorder %v772, 16
      %vm809 = vcmp.lt.s32.totalorder %v773, 16
      %vm810 = vcmp.lt.s32.totalorder %v774, 16
      %vm811 = vcmp.lt.s32.totalorder %v775, 16
      %vm812 = vcmp.lt.s32.totalorder %v776, 16
      %vm813 = vcmp.lt.s32.totalorder %v777, 16
      %vm814 = vcmp.lt.s32.totalorder %v778, 16
      %vm815 = vcmp.lt.s32.totalorder %v779, 16
      %vm816 = vcmp.lt.s32.totalorder %v780, 16
      %vm817 = vcmp.lt.s32.totalorder %v781, 16
      %vm818 = vcmp.lt.s32.totalorder %v782, 16
      %vm819 = vcmp.lt.s32.totalorder %v783, 16
      %vm820 = vcmp.lt.s32.totalorder %v784, 16
      %v821 = vld [vmem:[%s165] sm:$0xff]
      %v822 = vld [vmem:[%s165 + $0x8] sm:$0xff]
      %v823 = vld [vmem:[%s165 + $0x10] sm:$0xff]
      %v824 = vld [vmem:[%s165 + $0x18] sm:$0xff]
      %v825 = vld [vmem:[%s165 + $0x20] sm:$0xff]
      %v826 = vld [vmem:[%s165 + $0x28] sm:$0xff]
      %v827 = vld [vmem:[%s165 + $0x30] sm:$0xff]
      %v828 = vld [vmem:[%s165 + $0x38] sm:$0xff]
      %v829 = vld [vmem:[%s165 + $0x40] sm:$0xff]
      %v830 = vld [vmem:[%s165 + $0x48] sm:$0xff]
      %v831 = vld [vmem:[%s165 + $0x50] sm:$0xff]
      %v832 = vld [vmem:[%s165 + $0x58] sm:$0xff]
      %v833 = vld [vmem:[%s165 + $0x60] sm:$0xff]
      %v834 = vld [vmem:[%s165 + $0x68] sm:$0xff]
      %v835 = vld [vmem:[%s165 + $0x70] sm:$0xff]
      %v836 = vld [vmem:[%s165 + $0x78] sm:$0xff]
      %v837 = vld [vmem:[%s165 + $0x80] sm:$0xff]
      %v838 = vld [vmem:[%s165 + $0x88] sm:$0xff]
      %v839 = vld [vmem:[%s165 + $0x90] sm:$0xff]
      %v840 = vld [vmem:[%s165 + $0x98] sm:$0xff]
      %v841 = vld [vmem:[%s165 + $0xa0] sm:$0xff]
      %v842 = vld [vmem:[%s165 + $0xa8] sm:$0xff]
      %v843 = vld [vmem:[%s165 + $0xb0] sm:$0xff]
      %v844 = vld [vmem:[%s165 + $0xb8] sm:$0xff]
      %v845 = vld [vmem:[%s165 + $0xc0] sm:$0xff]
      %v846 = vld [vmem:[%s165 + $0xc8] sm:$0xff]
      %v847 = vld [vmem:[%s165 + $0xd0] sm:$0xff]
      %v848 = vld [vmem:[%s165 + $0xd8] sm:$0xff]
      %v849 = vld [vmem:[%s165 + $0xe0] sm:$0xff]
      %v850 = vld [vmem:[%s165 + $0xe8] sm:$0xff]
      %v851 = vld [vmem:[%s165 + $0xf0] sm:$0xff]
      %v852 = vld [vmem:[%s165 + $0xf8] sm:$0xff]
      %v853 = vld [vmem:[%s165 + $0x100] sm:$0xff]
      %v854 = vld [vmem:[%s165 + $0x108] sm:$0xff]
      %v855 = vld [vmem:[%s165 + $0x110] sm:$0xff]
      %v856 = vld [vmem:[%s165 + $0x118] sm:$0xff]
      %v857 = vld [vmem:[%s165 + $0x120] sm:$0xff]
      %v858 = vld [vmem:[%s165 + $0x128] sm:$0xff]
      %v859 = vld [vmem:[%s165 + $0x130] sm:$0xff]
      %v860 = vld [vmem:[%s165 + $0x138] sm:$0xff]
      %v861 = vld [vmem:[%s165 + $0x140] sm:$0xff]
      %v862 = vld [vmem:[%s165 + $0x148] sm:$0xff]
      %863 = vst [vmem:[#allocation2] sm:$0xff] %v821
      %864 = vst [vmem:[#allocation2 + $0x8] sm:$0xff] %v822
      %865 = vst [vmem:[#allocation2 + $0x10] sm:$0xff] %v823
      %866 = vst [vmem:[#allocation2 + $0x18] sm:$0xff] %v824
      %867 = vst [vmem:[#allocation2 + $0x20] sm:$0xff] %v825
      %868 = vst [vmem:[#allocation2 + $0x28] sm:$0xff] %v826
      %869 = vst [vmem:[#allocation2 + $0x30] sm:$0xff] %v827
      %870 = vst [vmem:[#allocation2 + $0x38] sm:$0xff] %v828
      %871 = vst [vmem:[#allocation2 + $0x40] sm:$0xff] %v829
      %872 = vst [vmem:[#allocation2 + $0x48] sm:$0xff] %v830
      %873 = vst [vmem:[#allocation2 + $0x50] sm:$0xff] %v831
      %874 = vst [vmem:[#allocation2 + $0x58] sm:$0xff] %v832
      %875 = vst [vmem:[#allocation2 + $0x60] sm:$0xff] %v833
      %876 = vst [vmem:[#allocation2 + $0x68] sm:$0xff] %v834
      %877 = vst [vmem:[#allocation2 + $0x70] sm:$0xff] %v835
      %878 = vst [vmem:[#allocation2 + $0x78] sm:$0xff] %v836
      %879 = vst [vmem:[#allocation2 + $0x80] sm:$0xff] %v837
      %880 = vst [vmem:[#allocation2 + $0x88] sm:$0xff] %v838
      %881 = vst [vmem:[#allocation2 + $0x90] sm:$0xff] %v839
      %882 = vst [vmem:[#allocation2 + $0x98] sm:$0xff] %v840
      %883 = vst [vmem:[#allocation2 + $0xa0] sm:$0xff] %v841
      %884 = vst [vmem:[#allocation2 + $0xa8] sm:$0xff] %v842
      %885 = vst [vmem:[#allocation2 + $0xb0] sm:$0xff] %v843
      %886 = vst [vmem:[#allocation2 + $0xb8] sm:$0xff] %v844
      %887 = vst [vmem:[#allocation2 + $0xc0] sm:$0xff] %v845
      %888 = vst [vmem:[#allocation2 + $0xc8] sm:$0xff] %v846
      %889 = vst [vmem:[#allocation2 + $0xd0] sm:$0xff] %v847
      %890 = vst [vmem:[#allocation2 + $0xd8] sm:$0xff] %v848
      %891 = vst [vmem:[#allocation2 + $0xe0] sm:$0xff] %v849
      %892 = vst [vmem:[#allocation2 + $0xe8] sm:$0xff] %v850
      %893 = vst [vmem:[#allocation2 + $0xf0] sm:$0xff] %v851
      %894 = vst [vmem:[#allocation2 + $0xf8] sm:$0xff] %v852
      %895 = vst [vmem:[#allocation2 + $0x100] sm:$0xff] %v853
      %896 = vst [vmem:[#allocation2 + $0x108] sm:$0xff] %v854
      %897 = vst [vmem:[#allocation2 + $0x110] sm:$0xff] %v855
      %898 = vst [vmem:[#allocation2 + $0x118] sm:$0xff] %v856
      %899 = vst [vmem:[#allocation2 + $0x120] sm:$0xff] %v857
      %900 = vst [vmem:[#allocation2 + $0x128] sm:$0xff] %v858
      %901 = vst [vmem:[#allocation2 + $0x130] sm:$0xff] %v859
      %902 = vst [vmem:[#allocation2 + $0x138] sm:$0xff] %v860
      %903 = vst [vmem:[#allocation2 + $0x140] sm:$0xff] %v861
      %904 = vst [vmem:[#allocation2 + $0x148] sm:$0xff] %v862
      %v905 = vld [vmem:[#allocation2] sm:$0xff]
      %v906 = vld [vmem:[#allocation2 + $0x8] sm:$0xff]
      %v907 = vld [vmem:[#allocation2 + $0x10] sm:$0xff]
      %v908 = vld [vmem:[#allocation2 + $0x18] sm:$0xff]
      %v909 = vld [vmem:[#allocation2 + $0x20] sm:$0xff]
      %v910 = vld [vmem:[#allocation2 + $0x28] sm:$0xff]
      %v911 = vld [vmem:[#allocation2 + $0x30] sm:$0xff]
      %v912 = vld [vmem:[#allocation2 + $0x38] sm:$0xff]
      %v913 = vld [vmem:[#allocation2 + $0x40] sm:$0xff]
      %v914 = vld [vmem:[#allocation2 + $0x48] sm:$0xff]
      %v915 = vld [vmem:[#allocation2 + $0x50] sm:$0xff]
      %v916 = vld [vmem:[#allocation2 + $0x58] sm:$0xff]
      %v917 = vld [vmem:[#allocation2 + $0x60] sm:$0xff]
      %v918 = vld [vmem:[#allocation2 + $0x68] sm:$0xff]
      %v919 = vld [vmem:[#allocation2 + $0x70] sm:$0xff]
      %v920 = vld [vmem:[#allocation2 + $0x78] sm:$0xff]
      %v921 = vld [vmem:[#allocation2 + $0x80] sm:$0xff]
      %v922 = vld [vmem:[#allocation2 + $0x88] sm:$0xff]
      %v923 = vld [vmem:[#allocation2 + $0x90] sm:$0xff]
      %v924 = vld [vmem:[#allocation2 + $0x98] sm:$0xff]
      %v925 = vld [vmem:[#allocation2 + $0xa0] sm:$0xff]
      %v926 = vld [vmem:[#allocation2 + $0xa8] sm:$0xff]
      %v927 = vld [vmem:[#allocation2 + $0xb0] sm:$0xff]
      %v928 = vld [vmem:[#allocation2 + $0xb8] sm:$0xff]
      %v929 = vld [vmem:[#allocation2 + $0xc0] sm:$0xff]
      %v930 = vld [vmem:[#allocation2 + $0xc8] sm:$0xff]
      %v931 = vld [vmem:[#allocation2 + $0xd0] sm:$0xff]
      %v932 = vld [vmem:[#allocation2 + $0xd8] sm:$0xff]
      %v933 = vld [vmem:[#allocation2 + $0xe0] sm:$0xff]
      %v934 = vld [vmem:[#allocation2 + $0xe8] sm:$0xff]
      %v935 = vld [vmem:[#allocation2 + $0xf0] sm:$0xff]
      %v936 = vld [vmem:[#allocation2 + $0xf8] sm:$0xff]
      %v937 = vld [vmem:[#allocation2 + $0x100] sm:$0xff]
      %v938 = vld [vmem:[#allocation2 + $0x108] sm:$0xff]
      %v939 = vld [vmem:[#allocation2 + $0x110] sm:$0xff]
      %v940 = vld [vmem:[#allocation2 + $0x118] sm:$0xff]
      %v941 = vpack.c.bf16 %v906, %v905
      %v942 = vpack.c.bf16 %v908, %v907
      %v943 = vpack.c.bf16 %v910, %v909
      %v944 = vpack.c.bf16 %v912, %v911
      %v945 = vpack.c.bf16 %v914, %v913
      %v946 = vpack.c.bf16 %v916, %v915
      %v947 = vpack.c.bf16 %v918, %v917
      %v948 = vpack.c.bf16 %v920, %v919
      %v949 = vpack.c.bf16 %v922, %v921
      %v950 = vpack.c.bf16 %v924, %v923
      %v951 = vpack.c.bf16 %v926, %v925
      %v952 = vpack.c.bf16 %v928, %v927
      %v953 = vpack.c.bf16 %v930, %v929
      %v954 = vpack.c.bf16 %v932, %v931
      %v955 = vpack.c.bf16 %v934, %v933
      %v956 = vpack.c.bf16 %v936, %v935
      %v957 = vpack.c.bf16 %v938, %v937
      %v958 = vpack.c.bf16 %v940, %v939
      %v959 = vld [vmem:[%s1] sm:$0xf]
      %v960 = vld [vmem:[%s1 + $0x4] sm:$0xf]
      %v961 = vld [vmem:[%s1 + $0x8] sm:$0xf]
      %v962 = vld [vmem:[%s1 + $0xc] sm:$0xf]
      %v963 = vld [vmem:[%s1 + $0x10] sm:$0xf]
      %v964 = vld [vmem:[%s1 + $0x14] sm:$0xf]
      %v965 = vld [vmem:[%s1 + $0x18] sm:$0xf]
      %v966 = vld [vmem:[%s1 + $0x1c] sm:$0xf]
      %v967 = vld [vmem:[%s1 + $0x20] sm:$0xf]
      %v968 = vld [vmem:[%s1 + $0x24] sm:$0xf]
      %v969 = vld [vmem:[%s1 + $0x28] sm:$0xf]
      %v970 = vld [vmem:[%s1 + $0x2c] sm:$0xf]
      %v971 = vld [vmem:[%s1 + $0x30] sm:$0xf]
      %v972 = vld [vmem:[%s1 + $0x34] sm:$0xf]
      %v973 = vld [vmem:[%s1 + $0x38] sm:$0xf]
      %v974 = vld [vmem:[%s1 + $0x3c] sm:$0xf]
      %v991 = vunpack.c.l.b16 %v959
      %v992 = vunpack.c.l.b16 %v960
      %v993 = vunpack.c.l.b16 %v961
      %v994 = vunpack.c.l.b16 %v962
      %v995 = vunpack.c.l.b16 %v963
      %v996 = vunpack.c.l.b16 %v964
      %v997 = vunpack.c.l.b16 %v965
      %v998 = vunpack.c.l.b16 %v966
      %v999 = vunpack.c.l.b16 %v967
      %v1000 = vunpack.c.l.b16 %v968
      %v1001 = vunpack.c.l.b16 %v969
      %v1002 = vunpack.c.l.b16 %v970
      %v1003 = vunpack.c.l.b16 %v971
      %v1004 = vunpack.c.l.b16 %v972
      %v1005 = vunpack.c.l.b16 %v973
      %v1006 = vunpack.c.l.b16 %v974
      %v1007 = vpack.c.b16 %v992, %v991
      %v1008 = vpack.c.b16 %v994, %v993
      %v1009 = vpack.c.b16 %v996, %v995
      %v1010 = vpack.c.b16 %v998, %v997
      %v1011 = vpack.c.b16 %v1000, %v999
      %v1012 = vpack.c.b16 %v1002, %v1001
      %v1013 = vpack.c.b16 %v1004, %v1003
      %v1014 = vpack.c.b16 %v1006, %v1005
      %1023 = vmatprep.subr.bf16.mxu0 0
      %1024 = vmatpush1.bf16.msra.mxu0 %v1007
      %1025 = vmatprep.subr.bf16.mxu0 0
      %1026 = vmatpush1.bf16.msra.mxu0 %v1008
      %1027 = vmatprep.subr.bf16.mxu0 0
      %1028 = vmatpush1.bf16.msra.mxu0 %v1009
      %1029 = vmatprep.subr.bf16.mxu0 0
      %1030 = vmatpush1.bf16.msra.mxu0 %v1010
      %1031 = vmatprep.subr.bf16.mxu0 0
      %1032 = vmatpush1.bf16.msra.mxu0 %v1011
      %1033 = vmatprep.subr.bf16.mxu0 0
      %1034 = vmatpush1.bf16.msra.mxu0 %v1012
      %1035 = vmatprep.subr.bf16.mxu0 0
      %1036 = vmatpush1.bf16.msra.mxu0 %v1013
      %1037 = vmatprep.subr.bf16.mxu0 0
      %1038 = vmatpush1.bf16.msra.mxu0 %v1014
      %1039 = vmatprep.subr.bf16.mxu0 0
      %1040 = vmatpush1.bf16.msra.mxu0 0
      %1041 = vmatprep.subr.bf16.mxu0 0
      %1042 = vmatpush1.bf16.msra.mxu0 0
      %1043 = vmatprep.subr.bf16.mxu0 0
      %1044 = vmatpush1.bf16.msra.mxu0 0
      %1045 = vmatprep.subr.bf16.mxu0 0
      %1046 = vmatpush1.bf16.msra.mxu0 0
      %1047 = vmatprep.subr.bf16.mxu0 0
      %1048 = vmatpush1.bf16.msra.mxu0 0
      %1049 = vmatprep.subr.bf16.mxu0 0
      %1050 = vmatpush1.bf16.msra.mxu0 0
      %1051 = vmatprep.subr.bf16.mxu0 0
      %1052 = vmatpush1.bf16.msra.mxu0 0
      %1053 = vmatprep.subr.bf16.mxu0 0
      %1054 = vmatpush1.bf16.msra.mxu0 0
      %1055 = vmatprep.mubr.bf16.mxu0 0
      %1056 = vmatmul.mubr.bf16.gmra.mrb[0].mxu0 %v941
      %v1057 = vpop.f32.mrb[0].mxu0
      %v1058 = vadd.f32 0.0, %v1057
      %v1059 = vpop.f32.mrb[0].mxu0
      %v1060 = vpop.f32.mrb[0].mxu0
      %v1061 = vadd.f32 0.0, %v1060
      %v1062 = vpop.f32.mrb[0].mxu0
      %1063 = vmatprep.mubr.bf16.mxu0 0
      %1064 = vmatmul.mubr.bf16.gmra.mrb[0].mxu0 %v942
      %v1065 = vpop.f32.mrb[0].mxu0
      %v1066 = vadd.f32 0.0, %v1065
      %v1067 = vpop.f32.mrb[0].mxu0
      %v1068 = vpop.f32.mrb[0].mxu0
      %v1069 = vadd.f32 0.0, %v1068
      %v1070 = vpop.f32.mrb[0].mxu0
      %1071 = vmatprep.mubr.bf16.mxu0 0
      %1072 = vmatmul.mubr.bf16.gmra.mrb[0].mxu0 %v943
      %v1073 = vpop.f32.mrb[0].mxu0
      %v1074 = vadd.f32 0.0, %v1073
      %v1075 = vpop.f32.mrb[0].mxu0
      %v1076 = vpop.f32.mrb[0].mxu0
      %v1077 = vadd.f32 0.0, %v1076
      %v1078 = vpop.f32.mrb[0].mxu0
      %1079 = vmatprep.mubr.bf16.mxu0 0
      %1080 = vmatmul.mubr.bf16.gmra.mrb[0].mxu0 %v944
      %v1081 = vpop.f32.mrb[0].mxu0
      %v1082 = vadd.f32 0.0, %v1081
      %v1083 = vpop.f32.mrb[0].mxu0
      %v1084 = vpop.f32.mrb[0].mxu0
      %v1085 = vadd.f32 0.0, %v1084
      %v1086 = vpop.f32.mrb[0].mxu0
      %1087 = vmatprep.mubr.bf16.mxu0 0
      %1088 = vmatmul.mubr.bf16.gmra.mrb[0].mxu0 %v945
      %v1089 = vpop.f32.mrb[0].mxu0
      %v1090 = vadd.f32 0.0, %v1089
      %v1091 = vpop.f32.mrb[0].mxu0
      %v1092 = vpop.f32.mrb[0].mxu0
      %v1093 = vadd.f32 0.0, %v1092
      %v1094 = vpop.f32.mrb[0].mxu0
      %1095 = vmatprep.mubr.bf16.mxu0 0
      %1096 = vmatmul.mubr.bf16.gmra.mrb[0].mxu0 %v946
      %v1097 = vpop.f32.mrb[0].mxu0
      %v1098 = vadd.f32 0.0, %v1097
      %v1099 = vpop.f32.mrb[0].mxu0
      %v1100 = vpop.f32.mrb[0].mxu0
      %v1101 = vadd.f32 0.0, %v1100
      %v1102 = vpop.f32.mrb[0].mxu0
      %1103 = vmatprep.mubr.bf16.mxu0 0
      %1104 = vmatmul.mubr.bf16.gmra.mrb[0].mxu0 %v947
      %v1105 = vpop.f32.mrb[0].mxu0
      %v1106 = vadd.f32 0.0, %v1105
      %v1107 = vpop.f32.mrb[0].mxu0
      %v1108 = vpop.f32.mrb[0].mxu0
      %v1109 = vadd.f32 0.0, %v1108
      %v1110 = vpop.f32.mrb[0].mxu0
      %1111 = vmatprep.mubr.bf16.mxu0 0
      %1112 = vmatmul.mubr.bf16.gmra.mrb[0].mxu0 %v948
      %v1113 = vpop.f32.mrb[0].mxu0
      %v1114 = vadd.f32 0.0, %v1113
      %v1115 = vpop.f32.mrb[0].mxu0
      %v1116 = vpop.f32.mrb[0].mxu0
      %v1117 = vadd.f32 0.0, %v1116
      %v1118 = vpop.f32.mrb[0].mxu0
      %1119 = vmatprep.mubr.bf16.mxu0 0
      %1120 = vmatmul.mubr.bf16.gmra.mrb[0].mxu0 %v949
      %v1121 = vpop.f32.mrb[0].mxu0
      %v1122 = vadd.f32 0.0, %v1121
      %v1123 = vpop.f32.mrb[0].mxu0
      %v1124 = vpop.f32.mrb[0].mxu0
      %v1125 = vadd.f32 0.0, %v1124
      %v1126 = vpop.f32.mrb[0].mxu0
      %1127 = vmatprep.mubr.bf16.mxu0 0
      %1128 = vmatmul.mubr.bf16.gmra.mrb[0].mxu0 %v950
      %v1129 = vpop.f32.mrb[0].mxu0
      %v1130 = vadd.f32 0.0, %v1129
      %v1131 = vpop.f32.mrb[0].mxu0
      %v1132 = vpop.f32.mrb[0].mxu0
      %v1133 = vadd.f32 0.0, %v1132
      %v1134 = vpop.f32.mrb[0].mxu0
      %1135 = vmatprep.mubr.bf16.mxu0 0
      %1136 = vmatmul.mubr.bf16.gmra.mrb[0].mxu0 %v951
      %v1137 = vpop.f32.mrb[0].mxu0
      %v1138 = vadd.f32 0.0, %v1137
      %v1139 = vpop.f32.mrb[0].mxu0
      %v1140 = vpop.f32.mrb[0].mxu0
      %v1141 = vadd.f32 0.0, %v1140
      %v1142 = vpop.f32.mrb[0].mxu0
      %1143 = vmatprep.mubr.bf16.mxu0 0
      %1144 = vmatmul.mubr.bf16.gmra.mrb[0].mxu0 %v952
      %v1145 = vpop.f32.mrb[0].mxu0
      %v1146 = vadd.f32 0.0, %v1145
      %v1147 = vpop.f32.mrb[0].mxu0
      %v1148 = vpop.f32.mrb[0].mxu0
      %v1149 = vadd.f32 0.0, %v1148
      %v1150 = vpop.f32.mrb[0].mxu0
      %1151 = vmatprep.mubr.bf16.mxu0 0
      %1152 = vmatmul.mubr.bf16.gmra.mrb[0].mxu0 %v953
      %v1153 = vpop.f32.mrb[0].mxu0
      %v1154 = vadd.f32 0.0, %v1153
      %v1155 = vpop.f32.mrb[0].mxu0
      %v1156 = vpop.f32.mrb[0].mxu0
      %v1157 = vadd.f32 0.0, %v1156
      %v1158 = vpop.f32.mrb[0].mxu0
      %1159 = vmatprep.mubr.bf16.mxu0 0
      %1160 = vmatmul.mubr.bf16.gmra.mrb[0].mxu0 %v954
      %v1161 = vpop.f32.mrb[0].mxu0
      %v1162 = vadd.f32 0.0, %v1161
      %v1163 = vpop.f32.mrb[0].mxu0
      %v1164 = vpop.f32.mrb[0].mxu0
      %v1165 = vadd.f32 0.0, %v1164
      %v1166 = vpop.f32.mrb[0].mxu0
      %1167 = vmatprep.mubr.bf16.mxu0 0
      %1168 = vmatmul.mubr.bf16.gmra.mrb[0].mxu0 %v955
      %v1169 = vpop.f32.mrb[0].mxu0
      %v1170 = vadd.f32 0.0, %v1169
      %v1171 = vpop.f32.mrb[0].mxu0
      %v1172 = vpop.f32.mrb[0].mxu0
      %v1173 = vadd.f32 0.0, %v1172
      %v1174 = vpop.f32.mrb[0].mxu0
      %1175 = vmatprep.mubr.bf16.mxu0 0
      %1176 = vmatmul.mubr.bf16.gmra.mrb[0].mxu0 %v956
      %v1177 = vpop.f32.mrb[0].mxu0
      %v1178 = vadd.f32 0.0, %v1177
      %v1179 = vpop.f32.mrb[0].mxu0
      %v1180 = vpop.f32.mrb[0].mxu0
      %v1181 = vadd.f32 0.0, %v1180
      %v1182 = vpop.f32.mrb[0].mxu0
      %1183 = vmatprep.mubr.bf16.mxu0 0
      %1184 = vmatmul.mubr.bf16.gmra.mrb[0].mxu0 %v957
      %v1185 = vpop.f32.mrb[0].mxu0
      %v1186 = vadd.f32 0.0, %v1185
      %v1187 = vpop.f32.mrb[0].mxu0
      %v1188 = vpop.f32.mrb[0].mxu0
      %v1189 = vadd.f32 0.0, %v1188
      %v1190 = vpop.f32.mrb[0].mxu0
      %1191 = vmatprep.mubr.bf16.mxu0 0
      %1192 = vmatmul.mubr.bf16.gmra.mrb[0].mxu0 %v958
      %v1193 = vpop.f32.mrb[0].mxu0
      %v1194 = vadd.f32 0.0, %v1193
      %v1195 = vpop.f32.mrb[0].mxu0
      %v1196 = vpop.f32.mrb[0].mxu0
      %v1197 = vadd.f32 0.0, %v1196
      %v1198 = vpop.f32.mrb[0].mxu0
      %1199 = vdwg.mxu0
      %1200 = vst [vmem:[#allocation3] sm:$0xff] %v1058
      %1201 = vst [vmem:[#allocation3 + $0x8] sm:$0xff] %v1061
      %1202 = vst [vmem:[#allocation3 + $0x10] sm:$0xff] %v1066
      %1203 = vst [vmem:[#allocation3 + $0x18] sm:$0xff] %v1069
      %1204 = vst [vmem:[#allocation3 + $0x20] sm:$0xff] %v1074
      %1205 = vst [vmem:[#allocation3 + $0x28] sm:$0xff] %v1077
      %1206 = vst [vmem:[#allocation3 + $0x30] sm:$0xff] %v1082
      %1207 = vst [vmem:[#allocation3 + $0x38] sm:$0xff] %v1085
      %1208 = vst [vmem:[#allocation3 + $0x40] sm:$0xff] %v1090
      %1209 = vst [vmem:[#allocation3 + $0x48] sm:$0xff] %v1093
      %1210 = vst [vmem:[#allocation3 + $0x50] sm:$0xff] %v1098
      %1211 = vst [vmem:[#allocation3 + $0x58] sm:$0xff] %v1101
      %1212 = vst [vmem:[#allocation3 + $0x60] sm:$0xff] %v1106
      %1213 = vst [vmem:[#allocation3 + $0x68] sm:$0xff] %v1109
      %1214 = vst [vmem:[#allocation3 + $0x70] sm:$0xff] %v1114
      %1215 = vst [vmem:[#allocation3 + $0x78] sm:$0xff] %v1117
      %1216 = vst [vmem:[#allocation3 + $0x80] sm:$0xff] %v1122
      %1217 = vst [vmem:[#allocation3 + $0x88] sm:$0xff] %v1125
      %1218 = vst [vmem:[#allocation3 + $0x90] sm:$0xff] %v1130
      %1219 = vst [vmem:[#allocation3 + $0x98] sm:$0xff] %v1133
      %1220 = vst [vmem:[#allocation3 + $0xa0] sm:$0xff] %v1138
      %1221 = vst [vmem:[#allocation3 + $0xa8] sm:$0xff] %v1141
      %1222 = vst [vmem:[#allocation3 + $0xb0] sm:$0xff] %v1146
      %1223 = vst [vmem:[#allocation3 + $0xb8] sm:$0xff] %v1149
      %1224 = vst [vmem:[#allocation3 + $0xc0] sm:$0xff] %v1154
      %1225 = vst [vmem:[#allocation3 + $0xc8] sm:$0xff] %v1157
      %1226 = vst [vmem:[#allocation3 + $0xd0] sm:$0xff] %v1162
      %1227 = vst [vmem:[#allocation3 + $0xd8] sm:$0xff] %v1165
      %1228 = vst [vmem:[#allocation3 + $0xe0] sm:$0xff] %v1170
      %1229 = vst [vmem:[#allocation3 + $0xe8] sm:$0xff] %v1173
      %1230 = vst [vmem:[#allocation3 + $0xf0] sm:$0xff] %v1178
      %1231 = vst [vmem:[#allocation3 + $0xf8] sm:$0xff] %v1181
      %1232 = vst [vmem:[#allocation3 + $0x100] sm:$0xff] %v1186
      %1233 = vst [vmem:[#allocation3 + $0x108] sm:$0xff] %v1189
      %1234 = vst [vmem:[#allocation3 + $0x110] sm:$0xff] %v1194
      %1235 = vst [vmem:[#allocation3 + $0x118] sm:$0xff] %v1197
      %v1236 = vld [vmem:[#allocation2 + $0x1] sm:$0xff]
      %v1237 = vld [vmem:[#allocation2 + $0x9] sm:$0xff]
      %v1238 = vld [vmem:[#allocation2 + $0x11] sm:$0xff]
      %v1239 = vld [vmem:[#allocation2 + $0x19] sm:$0xff]
      %v1240 = vld [vmem:[#allocation2 + $0x21] sm:$0xff]
      %v1241 = vld [vmem:[#allocation2 + $0x29] sm:$0xff]
      %v1242 = vld [vmem:[#allocation2 + $0x31] sm:$0xff]
      %v1243 = vld [vmem:[#allocation2 + $0x39] sm:$0xff]
      %v1244 = vld [vmem:[#allocation2 + $0x41] sm:$0xff]
      %v1245 = vld [vmem:[#allocation2 + $0x49] sm:$0xff]
      %v1246 = vld [vmem:[#allocation2 + $0x51] sm:$0xff]
      %v1247 = vld [vmem:[#allocation2 + $0x59] sm:$0xff]
      %v1248 = vld [vmem:[#allocation2 + $0x61] sm:$0xff]
      %v1249 = vld [vmem:[#allocation2 + $0x69] sm:$0xff]
      %v1250 = vld [vmem:[#allocation2 + $0x71] sm:$0xff]
      %v1251 = vld [vmem:[#allocation2 + $0x79] sm:$0xff]
      %v1252 = vld [vmem:[#allocation2 + $0x81] sm:$0xff]
      %v1253 = vld [vmem:[#allocation2 + $0x89] sm:$0xff]
      %v1254 = vld [vmem:[#allocation2 + $0x91] sm:$0xff]
      %v1255 = vld [vmem:[#allocation2 + $0x99] sm:$0xff]
      %v1256 = vld [vmem:[#allocation2 + $0xa1] sm:$0xff]
      %v1257 = vld [vmem:[#allocation2 + $0xa9] sm:$0xff]
      %v1258 = vld [vmem:[#allocation2 + $0xb1] sm:$0xff]
      %v1259 = vld [vmem:[#allocation2 + $0xb9] sm:$0xff]
      %v1260 = vld [vmem:[#allocation2 + $0xc1] sm:$0xff]
      %v1261 = vld [vmem:[#allocation2 + $0xc9] sm:$0xff]
      %v1262 = vld [vmem:[#allocation2 + $0xd1] sm:$0xff]
      %v1263 = vld [vmem:[#allocation2 + $0xd9] sm:$0xff]
      %v1264 = vld [vmem:[#allocation2 + $0xe1] sm:$0xff]
      %v1265 = vld [vmem:[#allocation2 + $0xe9] sm:$0xff]
      %v1266 = vld [vmem:[#allocation2 + $0xf1] sm:$0xff]
      %v1267 = vld [vmem:[#allocation2 + $0xf9] sm:$0xff]
      %v1268 = vld [vmem:[#allocation2 + $0x101] sm:$0xff]
      %v1269 = vld [vmem:[#allocation2 + $0x109] sm:$0xff]
      %v1270 = vld [vmem:[#allocation2 + $0x111] sm:$0xff]
      %v1271 = vld [vmem:[#allocation2 + $0x119] sm:$0xff]
      %v1272 = vpack.c.bf16 %v1237, %v1236
      %v1273 = vpack.c.bf16 %v1239, %v1238
      %v1274 = vpack.c.bf16 %v1241, %v1240
      %v1275 = vpack.c.bf16 %v1243, %v1242
      %v1276 = vpack.c.bf16 %v1245, %v1244
      %v1277 = vpack.c.bf16 %v1247, %v1246
      %v1278 = vpack.c.bf16 %v1249, %v1248
      %v1279 = vpack.c.bf16 %v1251, %v1250
      %v1280 = vpack.c.bf16 %v1253, %v1252
      %v1281 = vpack.c.bf16 %v1255, %v1254
      %v1282 = vpack.c.bf16 %v1257, %v1256
      %v1283 = vpack.c.bf16 %v1259, %v1258
      %v1284 = vpack.c.bf16 %v1261, %v1260
      %v1285 = vpack.c.bf16 %v1263, %v1262
      %v1286 = vpack.c.bf16 %v1265, %v1264
      %v1287 = vpack.c.bf16 %v1267, %v1266
      %v1288 = vpack.c.bf16 %v1269, %v1268
      %v1289 = vpack.c.bf16 %v1271, %v1270
      %s1290 = scalar_lea.vmem %s1, 64
      %v1291 = vld [vmem:[%s1290] sm:$0xf]
      %v1292 = vld [vmem:[%s1290 + $0x4] sm:$0xf]
      %v1293 = vld [vmem:[%s1290 + $0x8] sm:$0xf]
      %v1294 = vld [vmem:[%s1290 + $0xc] sm:$0xf]
      %v1295 = vld [vmem:[%s1290 + $0x10] sm:$0xf]
      %v1296 = vld [vmem:[%s1290 + $0x14] sm:$0xf]
      %v1297 = vld [vmem:[%s1290 + $0x18] sm:$0xf]
      %v1298 = vld [vmem:[%s1290 + $0x1c] sm:$0xf]
      %v1299 = vld [vmem:[%s1290 + $0x20] sm:$0xf]
      %v1300 = vld [vmem:[%s1290 + $0x24] sm:$0xf]
      %v1301 = vld [vmem:[%s1290 + $0x28] sm:$0xf]
      %v1302 = vld [vmem:[%s1290 + $0x2c] sm:$0xf]
      %v1303 = vld [vmem:[%s1290 + $0x30] sm:$0xf]
      %v1304 = vld [vmem:[%s1290 + $0x34] sm:$0xf]
      %v1305 = vld [vmem:[%s1290 + $0x38] sm:$0xf]
      %v1306 = vld [vmem:[%s1290 + $0x3c] sm:$0xf]
      %v1323 = vunpack.c.l.b16 %v1291
      %v1324 = vunpack.c.l.b16 %v1292
      %v1325 = vunpack.c.l.b16 %v1293
      %v1326 = vunpack.c.l.b16 %v1294
      %v1327 = vunpack.c.l.b16 %v1295
      %v1328 = vunpack.c.l.b16 %v1296
      %v1329 = vunpack.c.l.b16 %v1297
      %v1330 = vunpack.c.l.b16 %v1298
      %v1331 = vunpack.c.l.b16 %v1299
      %v1332 = vunpack.c.l.b16 %v1300
      %v1333 = vunpack.c.l.b16 %v1301
      %v1334 = vunpack.c.l.b16 %v1302
      %v1335 = vunpack.c.l.b16 %v1303
      %v1336 = vunpack.c.l.b16 %v1304
      %v1337 = vunpack.c.l.b16 %v1305
      %v1338 = vunpack.c.l.b16 %v1306
      %v1339 = vpack.c.b16 %v1324, %v1323
      %v1340 = vpack.c.b16 %v1326, %v1325
      %v1341 = vpack.c.b16 %v1328, %v1327
      %v1342 = vpack.c.b16 %v1330, %v1329
      %v1343 = vpack.c.b16 %v1332, %v1331
      %v1344 = vpack.c.b16 %v1334, %v1333
      %v1345 = vpack.c.b16 %v1336, %v1335
      %v1346 = vpack.c.b16 %v1338, %v1337
      %1355 = vmatprep.subr.bf16.mxu0 0
      %1356 = vmatpush1.bf16.msra.mxu0 %v1339
      %1357 = vmatprep.subr.bf16.mxu0 0
      %1358 = vmatpush1.bf16.msra.mxu0 %v1340
      %1359 = vmatprep.subr.bf16.mxu0 0
      %1360 = vmatpush1.bf16.msra.mxu0 %v1341
      %1361 = vmatprep.subr.bf16.mxu0 0
      %1362 = vmatpush1.bf16.msra.mxu0 %v1342
      %1363 = vmatprep.subr.bf16.mxu0 0
      %1364 = vmatpush1.bf16.msra.mxu0 %v1343
      %1365 = vmatprep.subr.bf16.mxu0 0
      %1366 = vmatpush1.bf16.msra.mxu0 %v1344
      %1367 = vmatprep.subr.bf16.mxu0 0
      %1368 = vmatpush1.bf16.msra.mxu0 %v1345
      %1369 = vmatprep.subr.bf16.mxu0 0
      %1370 = vmatpush1.bf16.msra.mxu0 %v1346
      %1371 = vmatprep.subr.bf16.mxu0 0
      %1372 = vmatpush1.bf16.msra.mxu0 0
      %1373 = vmatprep.subr.bf16.mxu0 0
      %1374 = vmatpush1.bf16.msra.mxu0 0
      %1375 = vmatprep.subr.bf16.mxu0 0
      %1376 = vmatpush1.bf16.msra.mxu0 0
      %1377 = vmatprep.subr.bf16.mxu0 0
      %1378 = vmatpush1.bf16.msra.mxu0 0
      %1379 = vmatprep.subr.bf16.mxu0 0
      %1380 = vmatpush1.bf16.msra.mxu0 0
      %1381 = vmatprep.subr.bf16.mxu0 0
      %1382 = vmatpush1.bf16.msra.mxu0 0
      %1383 = vmatprep.subr.bf16.mxu0 0
      %1384 = vmatpush1.bf16.msra.mxu0 0
      %1385 = vmatprep.subr.bf16.mxu0 0
      %1386 = vmatpush1.bf16.msra.mxu0 0
      %1387 = vmatprep.mubr.bf16.mxu0 0
      %1388 = vmatmul.mubr.bf16.gmra.mrb[0].mxu0 %v1272
      %v1389 = vpop.f32.mrb[0].mxu0
      %v1390 = vadd.f32 0.0, %v1389
      %v1391 = vpop.f32.mrb[0].mxu0
      %v1392 = vpop.f32.mrb[0].mxu0
      %v1393 = vadd.f32 0.0, %v1392
      %v1394 = vpop.f32.mrb[0].mxu0
      %1395 = vmatprep.mubr.bf16.mxu0 0
      %1396 = vmatmul.mubr.bf16.gmra.mrb[0].mxu0 %v1273
      %v1397 = vpop.f32.mrb[0].mxu0
      %v1398 = vadd.f32 0.0, %v1397
      %v1399 = vpop.f32.mrb[0].mxu0
      %v1400 = vpop.f32.mrb[0].mxu0
      %v1401 = vadd.f32 0.0, %v1400
      %v1402 = vpop.f32.mrb[0].mxu0
      %1403 = vmatprep.mubr.bf16.mxu0 0
      %1404 = vmatmul.mubr.bf16.gmra.mrb[0].mxu0 %v1274
      %v1405 = vpop.f32.mrb[0].mxu0
      %v1406 = vadd.f32 0.0, %v1405
      %v1407 = vpop.f32.mrb[0].mxu0
      %v1408 = vpop.f32.mrb[0].mxu0
      %v1409 = vadd.f32 0.0, %v1408
      %v1410 = vpop.f32.mrb[0].mxu0
      %1411 = vmatprep.mubr.bf16.mxu0 0
      %1412 = vmatmul.mubr.bf16.gmra.mrb[0].mxu0 %v1275
      %v1413 = vpop.f32.mrb[0].mxu0
      %v1414 = vadd.f32 0.0, %v1413
      %v1415 = vpop.f32.mrb[0].mxu0
      %v1416 = vpop.f32.mrb[0].mxu0
      %v1417 = vadd.f32 0.0, %v1416
      %v1418 = vpop.f32.mrb[0].mxu0
      %1419 = vmatprep.mubr.bf16.mxu0 0
      %1420 = vmatmul.mubr.bf16.gmra.mrb[0].mxu0 %v1276
      %v1421 = vpop.f32.mrb[0].mxu0
      %v1422 = vadd.f32 0.0, %v1421
      %v1423 = vpop.f32.mrb[0].mxu0
      %v1424 = vpop.f32.mrb[0].mxu0
      %v1425 = vadd.f32 0.0, %v1424
      %v1426 = vpop.f32.mrb[0].mxu0
      %1427 = vmatprep.mubr.bf16.mxu0 0
      %1428 = vmatmul.mubr.bf16.gmra.mrb[0].mxu0 %v1277
      %v1429 = vpop.f32.mrb[0].mxu0
      %v1430 = vadd.f32 0.0, %v1429
      %v1431 = vpop.f32.mrb[0].mxu0
      %v1432 = vpop.f32.mrb[0].mxu0
      %v1433 = vadd.f32 0.0, %v1432
      %v1434 = vpop.f32.mrb[0].mxu0
      %1435 = vmatprep.mubr.bf16.mxu0 0
      %1436 = vmatmul.mubr.bf16.gmra.mrb[0].mxu0 %v1278
      %v1437 = vpop.f32.mrb[0].mxu0
      %v1438 = vadd.f32 0.0, %v1437
      %v1439 = vpop.f32.mrb[0].mxu0
      %v1440 = vpop.f32.mrb[0].mxu0
      %v1441 = vadd.f32 0.0, %v1440
      %v1442 = vpop.f32.mrb[0].mxu0
      %1443 = vmatprep.mubr.bf16.mxu0 0
      %1444 = vmatmul.mubr.bf16.gmra.mrb[0].mxu0 %v1279
      %v1445 = vpop.f32.mrb[0].mxu0
      %v1446 = vadd.f32 0.0, %v1445
      %v1447 = vpop.f32.mrb[0].mxu0
      %v1448 = vpop.f32.mrb[0].mxu0
      %v1449 = vadd.f32 0.0, %v1448
      %v1450 = vpop.f32.mrb[0].mxu0
      %1451 = vmatprep.mubr.bf16.mxu0 0
      %1452 = vmatmul.mubr.bf16.gmra.mrb[0].mxu0 %v1280
      %v1453 = vpop.f32.mrb[0].mxu0
      %v1454 = vadd.f32 0.0, %v1453
      %v1455 = vpop.f32.mrb[0].mxu0
      %v1456 = vpop.f32.mrb[0].mxu0
      %v1457 = vadd.f32 0.0, %v1456
      %v1458 = vpop.f32.mrb[0].mxu0
      %1459 = vmatprep.mubr.bf16.mxu0 0
      %1460 = vmatmul.mubr.bf16.gmra.mrb[0].mxu0 %v1281
      %v1461 = vpop.f32.mrb[0].mxu0
      %v1462 = vadd.f32 0.0, %v1461
      %v1463 = vpop.f32.mrb[0].mxu0
      %v1464 = vpop.f32.mrb[0].mxu0
      %v1465 = vadd.f32 0.0, %v1464
      %v1466 = vpop.f32.mrb[0].mxu0
      %1467 = vmatprep.mubr.bf16.mxu0 0
      %1468 = vmatmul.mubr.bf16.gmra.mrb[0].mxu0 %v1282
      %v1469 = vpop.f32.mrb[0].mxu0
      %v1470 = vadd.f32 0.0, %v1469
      %v1471 = vpop.f32.mrb[0].mxu0
      %v1472 = vpop.f32.mrb[0].mxu0
      %v1473 = vadd.f32 0.0, %v1472
      %v1474 = vpop.f32.mrb[0].mxu0
      %1475 = vmatprep.mubr.bf16.mxu0 0
      %1476 = vmatmul.mubr.bf16.gmra.mrb[0].mxu0 %v1283
      %v1477 = vpop.f32.mrb[0].mxu0
      %v1478 = vadd.f32 0.0, %v1477
      %v1479 = vpop.f32.mrb[0].mxu0
      %v1480 = vpop.f32.mrb[0].mxu0
      %v1481 = vadd.f32 0.0, %v1480
      %v1482 = vpop.f32.mrb[0].mxu0
      %1483 = vmatprep.mubr.bf16.mxu0 0
      %1484 = vmatmul.mubr.bf16.gmra.mrb[0].mxu0 %v1284
      %v1485 = vpop.f32.mrb[0].mxu0
      %v1486 = vadd.f32 0.0, %v1485
      %v1487 = vpop.f32.mrb[0].mxu0
      %v1488 = vpop.f32.mrb[0].mxu0
      %v1489 = vadd.f32 0.0, %v1488
      %v1490 = vpop.f32.mrb[0].mxu0
      %1491 = vmatprep.mubr.bf16.mxu0 0
      %1492 = vmatmul.mubr.bf16.gmra.mrb[0].mxu0 %v1285
      %v1493 = vpop.f32.mrb[0].mxu0
      %v1494 = vadd.f32 0.0, %v1493
      %v1495 = vpop.f32.mrb[0].mxu0
      %v1496 = vpop.f32.mrb[0].mxu0
      %v1497 = vadd.f32 0.0, %v1496
      %v1498 = vpop.f32.mrb[0].mxu0
      %1499 = vmatprep.mubr.bf16.mxu0 0
      %1500 = vmatmul.mubr.bf16.gmra.mrb[0].mxu0 %v1286
      %v1501 = vpop.f32.mrb[0].mxu0
      %v1502 = vadd.f32 0.0, %v1501
      %v1503 = vpop.f32.mrb[0].mxu0
      %v1504 = vpop.f32.mrb[0].mxu0
      %v1505 = vadd.f32 0.0, %v1504
      %v1506 = vpop.f32.mrb[0].mxu0
      %1507 = vmatprep.mubr.bf16.mxu0 0
      %1508 = vmatmul.mubr.bf16.gmra.mrb[0].mxu0 %v1287
      %v1509 = vpop.f32.mrb[0].mxu0
      %v1510 = vadd.f32 0.0, %v1509
      %v1511 = vpop.f32.mrb[0].mxu0
      %v1512 = vpop.f32.mrb[0].mxu0
      %v1513 = vadd.f32 0.0, %v1512
      %v1514 = vpop.f32.mrb[0].mxu0
      %1515 = vmatprep.mubr.bf16.mxu0 0
      %1516 = vmatmul.mubr.bf16.gmra.mrb[0].mxu0 %v1288
      %v1517 = vpop.f32.mrb[0].mxu0
      %v1518 = vadd.f32 0.0, %v1517
      %v1519 = vpop.f32.mrb[0].mxu0
      %v1520 = vpop.f32.mrb[0].mxu0
      %v1521 = vadd.f32 0.0, %v1520
      %v1522 = vpop.f32.mrb[0].mxu0
      %1523 = vmatprep.mubr.bf16.mxu0 0
      %1524 = vmatmul.mubr.bf16.gmra.mrb[0].mxu0 %v1289
      %v1525 = vpop.f32.mrb[0].mxu0
      %v1526 = vadd.f32 0.0, %v1525
      %v1527 = vpop.f32.mrb[0].mxu0
      %v1528 = vpop.f32.mrb[0].mxu0
      %v1529 = vadd.f32 0.0, %v1528
      %v1530 = vpop.f32.mrb[0].mxu0
      %1531 = vdwg.mxu0
      %v1532 = vld [vmem:[#allocation3] sm:$0xff]
      %v1533 = vld [vmem:[#allocation3 + $0x8] sm:$0xff]
      %v1534 = vld [vmem:[#allocation3 + $0x10] sm:$0xff]
      %v1535 = vld [vmem:[#allocation3 + $0x18] sm:$0xff]
      %v1536 = vld [vmem:[#allocation3 + $0x20] sm:$0xff]
      %v1537 = vld [vmem:[#allocation3 + $0x28] sm:$0xff]
      %v1538 = vld [vmem:[#allocation3 + $0x30] sm:$0xff]
      %v1539 = vld [vmem:[#allocation3 + $0x38] sm:$0xff]
      %v1540 = vld [vmem:[#allocation3 + $0x40] sm:$0xff]
      %v1541 = vld [vmem:[#allocation3 + $0x48] sm:$0xff]
      %v1542 = vld [vmem:[#allocation3 + $0x50] sm:$0xff]
      %v1543 = vld [vmem:[#allocation3 + $0x58] sm:$0xff]
      %v1544 = vld [vmem:[#allocation3 + $0x60] sm:$0xff]
      %v1545 = vld [vmem:[#allocation3 + $0x68] sm:$0xff]
      %v1546 = vld [vmem:[#allocation3 + $0x70] sm:$0xff]
      %v1547 = vld [vmem:[#allocation3 + $0x78] sm:$0xff]
      %v1548 = vld [vmem:[#allocation3 + $0x80] sm:$0xff]
      %v1549 = vld [vmem:[#allocation3 + $0x88] sm:$0xff]
      %v1550 = vld [vmem:[#allocation3 + $0x90] sm:$0xff]
      %v1551 = vld [vmem:[#allocation3 + $0x98] sm:$0xff]
      %v1552 = vld [vmem:[#allocation3 + $0xa0] sm:$0xff]
      %v1553 = vld [vmem:[#allocation3 + $0xa8] sm:$0xff]
      %v1554 = vld [vmem:[#allocation3 + $0xb0] sm:$0xff]
      %v1555 = vld [vmem:[#allocation3 + $0xb8] sm:$0xff]
      %v1556 = vld [vmem:[#allocation3 + $0xc0] sm:$0xff]
      %v1557 = vld [vmem:[#allocation3 + $0xc8] sm:$0xff]
      %v1558 = vld [vmem:[#allocation3 + $0xd0] sm:$0xff]
      %v1559 = vld [vmem:[#allocation3 + $0xd8] sm:$0xff]
      %v1560 = vld [vmem:[#allocation3 + $0xe0] sm:$0xff]
      %v1561 = vld [vmem:[#allocation3 + $0xe8] sm:$0xff]
      %v1562 = vld [vmem:[#allocation3 + $0xf0] sm:$0xff]
      %v1563 = vld [vmem:[#allocation3 + $0xf8] sm:$0xff]
      %v1564 = vld [vmem:[#allocation3 + $0x100] sm:$0xff]
      %v1565 = vld [vmem:[#allocation3 + $0x108] sm:$0xff]
      %v1566 = vld [vmem:[#allocation3 + $0x110] sm:$0xff]
      %v1567 = vld [vmem:[#allocation3 + $0x118] sm:$0xff]
      %v1568 = vadd.f32 %v1532, %v1390
      %v1569 = vadd.f32 %v1533, %v1393
      %v1570 = vadd.f32 %v1534, %v1398
      %v1571 = vadd.f32 %v1535, %v1401
      %v1572 = vadd.f32 %v1536, %v1406
      %v1573 = vadd.f32 %v1537, %v1409
      %v1574 = vadd.f32 %v1538, %v1414
      %v1575 = vadd.f32 %v1539, %v1417
      %v1576 = vadd.f32 %v1540, %v1422
      %v1577 = vadd.f32 %v1541, %v1425
      %v1578 = vadd.f32 %v1542, %v1430
      %v1579 = vadd.f32 %v1543, %v1433
      %v1580 = vadd.f32 %v1544, %v1438
      %v1581 = vadd.f32 %v1545, %v1441
      %v1582 = vadd.f32 %v1546, %v1446
      %v1583 = vadd.f32 %v1547, %v1449
      %v1584 = vadd.f32 %v1548, %v1454
      %v1585 = vadd.f32 %v1549, %v1457
      %v1586 = vadd.f32 %v1550, %v1462
      %v1587 = vadd.f32 %v1551, %v1465
      %v1588 = vadd.f32 %v1552, %v1470
      %v1589 = vadd.f32 %v1553, %v1473
      %v1590 = vadd.f32 %v1554, %v1478
      %v1591 = vadd.f32 %v1555, %v1481
      %v1592 = vadd.f32 %v1556, %v1486
      %v1593 = vadd.f32 %v1557, %v1489
      %v1594 = vadd.f32 %v1558, %v1494
      %v1595 = vadd.f32 %v1559, %v1497
      %v1596 = vadd.f32 %v1560, %v1502
      %v1597 = vadd.f32 %v1561, %v1505
      %v1598 = vadd.f32 %v1562, %v1510
      %v1599 = vadd.f32 %v1563, %v1513
      %v1600 = vadd.f32 %v1564, %v1518
      %v1601 = vadd.f32 %v1565, %v1521
      %v1602 = vadd.f32 %v1566, %v1526
      %v1603 = vadd.f32 %v1567, %v1529
      %1604 = vst [vmem:[#allocation3] sm:$0xff] %v1568
      %1605 = vst [vmem:[#allocation3 + $0x8] sm:$0xff] %v1569
      %1606 = vst [vmem:[#allocation3 + $0x10] sm:$0xff] %v1570
      %1607 = vst [vmem:[#allocation3 + $0x18] sm:$0xff] %v1571
      %1608 = vst [vmem:[#allocation3 + $0x20] sm:$0xff] %v1572
      %1609 = vst [vmem:[#allocation3 + $0x28] sm:$0xff] %v1573
      %1610 = vst [vmem:[#allocation3 + $0x30] sm:$0xff] %v1574
      %1611 = vst [vmem:[#allocation3 + $0x38] sm:$0xff] %v1575
      %1612 = vst [vmem:[#allocation3 + $0x40] sm:$0xff] %v1576
      %1613 = vst [vmem:[#allocation3 + $0x48] sm:$0xff] %v1577
      %1614 = vst [vmem:[#allocation3 + $0x50] sm:$0xff] %v1578
      %1615 = vst [vmem:[#allocation3 + $0x58] sm:$0xff] %v1579
      %1616 = vst [vmem:[#allocation3 + $0x60] sm:$0xff] %v1580
      %1617 = vst [vmem:[#allocation3 + $0x68] sm:$0xff] %v1581
      %1618 = vst [vmem:[#allocation3 + $0x70] sm:$0xff] %v1582
      %1619 = vst [vmem:[#allocation3 + $0x78] sm:$0xff] %v1583
      %1620 = vst [vmem:[#allocation3 + $0x80] sm:$0xff] %v1584
      %1621 = vst [vmem:[#allocation3 + $0x88] sm:$0xff] %v1585
      %1622 = vst [vmem:[#allocation3 + $0x90] sm:$0xff] %v1586
      %1623 = vst [vmem:[#allocation3 + $0x98] sm:$0xff] %v1587
      %1624 = vst [vmem:[#allocation3 + $0xa0] sm:$0xff] %v1588
      %1625 = vst [vmem:[#allocation3 + $0xa8] sm:$0xff] %v1589
      %1626 = vst [vmem:[#allocation3 + $0xb0] sm:$0xff] %v1590
      %1627 = vst [vmem:[#allocation3 + $0xb8] sm:$0xff] %v1591
      %1628 = vst [vmem:[#allocation3 + $0xc0] sm:$0xff] %v1592
      %1629 = vst [vmem:[#allocation3 + $0xc8] sm:$0xff] %v1593
      %1630 = vst [vmem:[#allocation3 + $0xd0] sm:$0xff] %v1594
      %1631 = vst [vmem:[#allocation3 + $0xd8] sm:$0xff] %v1595
      %1632 = vst [vmem:[#allocation3 + $0xe0] sm:$0xff] %v1596
      %1633 = vst [vmem:[#allocation3 + $0xe8] sm:$0xff] %v1597
      %1634 = vst [vmem:[#allocation3 + $0xf0] sm:$0xff] %v1598
      %1635 = vst [vmem:[#allocation3 + $0xf8] sm:$0xff] %v1599
      %1636 = vst [vmem:[#allocation3 + $0x100] sm:$0xff] %v1600
      %1637 = vst [vmem:[#allocation3 + $0x108] sm:$0xff] %v1601
      %1638 = vst [vmem:[#allocation3 + $0x110] sm:$0xff] %v1602
      %1639 = vst [vmem:[#allocation3 + $0x118] sm:$0xff] %v1603
      %v1640 = vld [vmem:[#allocation2 + $0x2] sm:$0xff]
      %v1641 = vld [vmem:[#allocation2 + $0xa] sm:$0xff]
      %v1642 = vld [vmem:[#allocation2 + $0x12] sm:$0xff]
      %v1643 = vld [vmem:[#allocation2 + $0x1a] sm:$0xff]
      %v1644 = vld [vmem:[#allocation2 + $0x22] sm:$0xff]
      %v1645 = vld [vmem:[#allocation2 + $0x2a] sm:$0xff]
      %v1646 = vld [vmem:[#allocation2 + $0x32] sm:$0xff]
      %v1647 = vld [vmem:[#allocation2 + $0x3a] sm:$0xff]
      %v1648 = vld [vmem:[#allocation2 + $0x42] sm:$0xff]
      %v1649 = vld [vmem:[#allocation2 + $0x4a] sm:$0xff]
      %v1650 = vld [vmem:[#allocation2 + $0x52] sm:$0xff]
      %v1651 = vld [vmem:[#allocation2 + $0x5a] sm:$0xff]
      %v1652 = vld [vmem:[#allocation2 + $0x62] sm:$0xff]
      %v1653 = vld [vmem:[#allocation2 + $0x6a] sm:$0xff]
      %v1654 = vld [vmem:[#allocation2 + $0x72] sm:$0xff]
      %v1655 = vld [vmem:[#allocation2 + $0x7a] sm:$0xff]
      %v1656 = vld [vmem:[#allocation2 + $0x82] sm:$0xff]
      %v1657 = vld [vmem:[#allocation2 + $0x8a] sm:$0xff]
      %v1658 = vld [vmem:[#allocation2 + $0x92] sm:$0xff]
      %v1659 = vld [vmem:[#allocation2 + $0x9a] sm:$0xff]
      %v1660 = vld [vmem:[#allocation2 + $0xa2] sm:$0xff]
      %v1661 = vld [vmem:[#allocation2 + $0xaa] sm:$0xff]
      %v1662 = vld [vmem:[#allocation2 + $0xb2] sm:$0xff]
      %v1663 = vld [vmem:[#allocation2 + $0xba] sm:$0xff]
      %v1664 = vld [vmem:[#allocation2 + $0xc2] sm:$0xff]
      %v1665 = vld [vmem:[#allocation2 + $0xca] sm:$0xff]
      %v1666 = vld [vmem:[#allocation2 + $0xd2] sm:$0xff]
      %v1667 = vld [vmem:[#allocation2 + $0xda] sm:$0xff]
      %v1668 = vld [vmem:[#allocation2 + $0xe2] sm:$0xff]
      %v1669 = vld [vmem:[#allocation2 + $0xea] sm:$0xff]
      %v1670 = vld [vmem:[#allocation2 + $0xf2] sm:$0xff]
      %v1671 = vld [vmem:[#allocation2 + $0xfa] sm:$0xff]
      %v1672 = vld [vmem:[#allocation2 + $0x102] sm:$0xff]
      %v1673 = vld [vmem:[#allocation2 + $0x10a] sm:$0xff]
      %v1674 = vld [vmem:[#allocation2 + $0x112] sm:$0xff]
      %v1675 = vld [vmem:[#allocation2 + $0x11a] sm:$0xff]
      %v1676 = vpack.c.bf16 %v1641, %v1640
      %v1677 = vpack.c.bf16 %v1643, %v1642
      %v1678 = vpack.c.bf16 %v1645, %v1644
      %v1679 = vpack.c.bf16 %v1647, %v1646
      %v1680 = vpack.c.bf16 %v1649, %v1648
      %v1681 = vpack.c.bf16 %v1651, %v1650
      %v1682 = vpack.c.bf16 %v1653, %v1652
      %v1683 = vpack.c.bf16 %v1655, %v1654
      %v1684 = vpack.c.bf16 %v1657, %v1656
      %v1685 = vpack.c.bf16 %v1659, %v1658
      %v1686 = vpack.c.bf16 %v1661, %v1660
      %v1687 = vpack.c.bf16 %v1663, %v1662
      %v1688 = vpack.c.bf16 %v1665, %v1664
      %v1689 = vpack.c.bf16 %v1667, %v1666
      %v1690 = vpack.c.bf16 %v1669, %v1668
      %v1691 = vpack.c.bf16 %v1671, %v1670
      %v1692 = vpack.c.bf16 %v1673, %v1672
      %v1693 = vpack.c.bf16 %v1675, %v1674
      %s1694 = scalar_lea.vmem %s1, 128
      %v1695 = vld [vmem:[%s1694] sm:$0xf]
      %v1696 = vld [vmem:[%s1694 + $0x4] sm:$0xf]
      %v1697 = vld [vmem:[%s1694 + $0x8] sm:$0xf]
      %v1698 = vld [vmem:[%s1694 + $0xc] sm:$0xf]
      %v1699 = vld [vmem:[%s1694 + $0x10] sm:$0xf]
      %v1700 = vld [vmem:[%s1694 + $0x14] sm:$0xf]
      %v1701 = vld [vmem:[%s1694 + $0x18] sm:$0xf]
      %v1702 = vld [vmem:[%s1694 + $0x1c] sm:$0xf]
      %v1703 = vld [vmem:[%s1694 + $0x20] sm:$0xf]
      %v1704 = vld [vmem:[%s1694 + $0x24] sm:$0xf]
      %v1705 = vld [vmem:[%s1694 + $0x28] sm:$0xf]
      %v1706 = vld [vmem:[%s1694 + $0x2c] sm:$0xf]
      %v1707 = vld [vmem:[%s1694 + $0x30] sm:$0xf]
      %v1708 = vld [vmem:[%s1694 + $0x34] sm:$0xf]
      %v1709 = vld [vmem:[%s1694 + $0x38] sm:$0xf]
      %v1710 = vld [vmem:[%s1694 + $0x3c] sm:$0xf]
      %v1727 = vunpack.c.l.b16 %v1695
      %v1728 = vunpack.c.l.b16 %v1696
      %v1729 = vunpack.c.l.b16 %v1697
      %v1730 = vunpack.c.l.b16 %v1698
      %v1731 = vunpack.c.l.b16 %v1699
      %v1732 = vunpack.c.l.b16 %v1700
      %v1733 = vunpack.c.l.b16 %v1701
      %v1734 = vunpack.c.l.b16 %v1702
      %v1735 = vunpack.c.l.b16 %v1703
      %v1736 = vunpack.c.l.b16 %v1704
      %v1737 = vunpack.c.l.b16 %v1705
      %v1738 = vunpack.c.l.b16 %v1706
      %v1739 = vunpack.c.l.b16 %v1707
      %v1740 = vunpack.c.l.b16 %v1708
      %v1741 = vunpack.c.l.b16 %v1709
      %v1742 = vunpack.c.l.b16 %v1710
      %v1743 = vpack.c.b16 %v1728, %v1727
      %v1744 = vpack.c.b16 %v1730, %v1729
      %v1745 = vpack.c.b16 %v1732, %v1731
      %v1746 = vpack.c.b16 %v1734, %v1733
      %v1747 = vpack.c.b16 %v1736, %v1735
      %v1748 = vpack.c.b16 %v1738, %v1737
      %v1749 = vpack.c.b16 %v1740, %v1739
      %v1750 = vpack.c.b16 %v1742, %v1741
      %1759 = vmatprep.subr.bf16.mxu0 0
      %1760 = vmatpush1.bf16.msra.mxu0 %v1743
      %1761 = vmatprep.subr.bf16.mxu0 0
      %1762 = vmatpush1.bf16.msra.mxu0 %v1744
      %1763 = vmatprep.subr.bf16.mxu0 0
      %1764 = vmatpush1.bf16.msra.mxu0 %v1745
      %1765 = vmatprep.subr.bf16.mxu0 0
      %1766 = vmatpush1.bf16.msra.mxu0 %v1746
      %1767 = vmatprep.subr.bf16.mxu0 0
      %1768 = vmatpush1.bf16.msra.mxu0 %v1747
      %1769 = vmatprep.subr.bf16.mxu0 0
      %1770 = vmatpush1.bf16.msra.mxu0 %v1748
      %1771 = vmatprep.subr.bf16.mxu0 0
      %1772 = vmatpush1.bf16.msra.mxu0 %v1749
      %1773 = vmatprep.subr.bf16.mxu0 0
      %1774 = vmatpush1.bf16.msra.mxu0 %v1750
      %1775 = vmatprep.subr.bf16.mxu0 0
      %1776 = vmatpush1.bf16.msra.mxu0 0
      %1777 = vmatprep.subr.bf16.mxu0 0
      %1778 = vmatpush1.bf16.msra.mxu0 0
      %1779 = vmatprep.subr.bf16.mxu0 0
      %1780 = vmatpush1.bf16.msra.mxu0 0
      %1781 = vmatprep.subr.bf16.mxu0 0
      %1782 = vmatpush1.bf16.msra.mxu0 0
      %1783 = vmatprep.subr.bf16.mxu0 0
      %1784 = vmatpush1.bf16.msra.mxu0 0
      %1785 = vmatprep.subr.bf16.mxu0 0
      %1786 = vmatpush1.bf16.msra.mxu0 0
      %1787 = vmatprep.subr.bf16.mxu0 0
      %1788 = vmatpush1.bf16.msra.mxu0 0
      %1789 = vmatprep.subr.bf16.mxu0 0
      %1790 = vmatpush1.bf16.msra.mxu0 0
      %1791 = vmatprep.mubr.bf16.mxu0 0
      %1792 = vmatmul.mubr.bf16.gmra.mrb[0].mxu0 %v1676
      %v1793 = vpop.f32.mrb[0].mxu0
      %v1794 = vadd.f32 0.0, %v1793
      %v1795 = vpop.f32.mrb[0].mxu0
      %v1796 = vpop.f32.mrb[0].mxu0
      %v1797 = vadd.f32 0.0, %v1796
      %v1798 = vpop.f32.mrb[0].mxu0
      %1799 = vmatprep.mubr.bf16.mxu0 0
      %1800 = vmatmul.mubr.bf16.gmra.mrb[0].mxu0 %v1677
      %v1801 = vpop.f32.mrb[0].mxu0
      %v1802 = vadd.f32 0.0, %v1801
      %v1803 = vpop.f32.mrb[0].mxu0
      %v1804 = vpop.f32.mrb[0].mxu0
      %v1805 = vadd.f32 0.0, %v1804
      %v1806 = vpop.f32.mrb[0].mxu0
      %1807 = vmatprep.mubr.bf16.mxu0 0
      %1808 = vmatmul.mubr.bf16.gmra.mrb[0].mxu0 %v1678
      %v1809 = vpop.f32.mrb[0].mxu0
      %v1810 = vadd.f32 0.0, %v1809
      %v1811 = vpop.f32.mrb[0].mxu0
      %v1812 = vpop.f32.mrb[0].mxu0
      %v1813 = vadd.f32 0.0, %v1812
      %v1814 = vpop.f32.mrb[0].mxu0
      %1815 = vmatprep.mubr.bf16.mxu0 0
      %1816 = vmatmul.mubr.bf16.gmra.mrb[0].mxu0 %v1679
      %v1817 = vpop.f32.mrb[0].mxu0
      %v1818 = vadd.f32 0.0, %v1817
      %v1819 = vpop.f32.mrb[0].mxu0
      %v1820 = vpop.f32.mrb[0].mxu0
      %v1821 = vadd.f32 0.0, %v1820
      %v1822 = vpop.f32.mrb[0].mxu0
      %1823 = vmatprep.mubr.bf16.mxu0 0
      %1824 = vmatmul.mubr.bf16.gmra.mrb[0].mxu0 %v1680
      %v1825 = vpop.f32.mrb[0].mxu0
      %v1826 = vadd.f32 0.0, %v1825
      %v1827 = vpop.f32.mrb[0].mxu0
      %v1828 = vpop.f32.mrb[0].mxu0
      %v1829 = vadd.f32 0.0, %v1828
      %v1830 = vpop.f32.mrb[0].mxu0
      %1831 = vmatprep.mubr.bf16.mxu0 0
      %1832 = vmatmul.mubr.bf16.gmra.mrb[0].mxu0 %v1681
      %v1833 = vpop.f32.mrb[0].mxu0
      %v1834 = vadd.f32 0.0, %v1833
      %v1835 = vpop.f32.mrb[0].mxu0
      %v1836 = vpop.f32.mrb[0].mxu0
      %v1837 = vadd.f32 0.0, %v1836
      %v1838 = vpop.f32.mrb[0].mxu0
      %1839 = vmatprep.mubr.bf16.mxu0 0
      %1840 = vmatmul.mubr.bf16.gmra.mrb[0].mxu0 %v1682
      %v1841 = vpop.f32.mrb[0].mxu0
      %v1842 = vadd.f32 0.0, %v1841
      %v1843 = vpop.f32.mrb[0].mxu0
      %v1844 = vpop.f32.mrb[0].mxu0
      %v1845 = vadd.f32 0.0, %v1844
      %v1846 = vpop.f32.mrb[0].mxu0
      %1847 = vmatprep.mubr.bf16.mxu0 0
      %1848 = vmatmul.mubr.bf16.gmra.mrb[0].mxu0 %v1683
      %v1849 = vpop.f32.mrb[0].mxu0
      %v1850 = vadd.f32 0.0, %v1849
      %v1851 = vpop.f32.mrb[0].mxu0
      %v1852 = vpop.f32.mrb[0].mxu0
      %v1853 = vadd.f32 0.0, %v1852
      %v1854 = vpop.f32.mrb[0].mxu0
      %1855 = vmatprep.mubr.bf16.mxu0 0
      %1856 = vmatmul.mubr.bf16.gmra.mrb[0].mxu0 %v1684
      %v1857 = vpop.f32.mrb[0].mxu0
      %v1858 = vadd.f32 0.0, %v1857
      %v1859 = vpop.f32.mrb[0].mxu0
      %v1860 = vpop.f32.mrb[0].mxu0
      %v1861 = vadd.f32 0.0, %v1860
      %v1862 = vpop.f32.mrb[0].mxu0
      %1863 = vmatprep.mubr.bf16.mxu0 0
      %1864 = vmatmul.mubr.bf16.gmra.mrb[0].mxu0 %v1685
      %v1865 = vpop.f32.mrb[0].mxu0
      %v1866 = vadd.f32 0.0, %v1865
      %v1867 = vpop.f32.mrb[0].mxu0
      %v1868 = vpop.f32.mrb[0].mxu0
      %v1869 = vadd.f32 0.0, %v1868
      %v1870 = vpop.f32.mrb[0].mxu0
      %1871 = vmatprep.mubr.bf16.mxu0 0
      %1872 = vmatmul.mubr.bf16.gmra.mrb[0].mxu0 %v1686
      %v1873 = vpop.f32.mrb[0].mxu0
      %v1874 = vadd.f32 0.0, %v1873
      %v1875 = vpop.f32.mrb[0].mxu0
      %v1876 = vpop.f32.mrb[0].mxu0
      %v1877 = vadd.f32 0.0, %v1876
      %v1878 = vpop.f32.mrb[0].mxu0
      %1879 = vmatprep.mubr.bf16.mxu0 0
      %1880 = vmatmul.mubr.bf16.gmra.mrb[0].mxu0 %v1687
      %v1881 = vpop.f32.mrb[0].mxu0
      %v1882 = vadd.f32 0.0, %v1881
      %v1883 = vpop.f32.mrb[0].mxu0
      %v1884 = vpop.f32.mrb[0].mxu0
      %v1885 = vadd.f32 0.0, %v1884
      %v1886 = vpop.f32.mrb[0].mxu0
      %1887 = vmatprep.mubr.bf16.mxu0 0
      %1888 = vmatmul.mubr.bf16.gmra.mrb[0].mxu0 %v1688
      %v1889 = vpop.f32.mrb[0].mxu0
      %v1890 = vadd.f32 0.0, %v1889
      %v1891 = vpop.f32.mrb[0].mxu0
      %v1892 = vpop.f32.mrb[0].mxu0
      %v1893 = vadd.f32 0.0, %v1892
      %v1894 = vpop.f32.mrb[0].mxu0
      %1895 = vmatprep.mubr.bf16.mxu0 0
      %1896 = vmatmul.mubr.bf16.gmra.mrb[0].mxu0 %v1689
      %v1897 = vpop.f32.mrb[0].mxu0
      %v1898 = vadd.f32 0.0, %v1897
      %v1899 = vpop.f32.mrb[0].mxu0
      %v1900 = vpop.f32.mrb[0].mxu0
      %v1901 = vadd.f32 0.0, %v1900
      %v1902 = vpop.f32.mrb[0].mxu0
      %1903 = vmatprep.mubr.bf16.mxu0 0
      %1904 = vmatmul.mubr.bf16.gmra.mrb[0].mxu0 %v1690
      %v1905 = vpop.f32.mrb[0].mxu0
      %v1906 = vadd.f32 0.0, %v1905
      %v1907 = vpop.f32.mrb[0].mxu0
      %v1908 = vpop.f32.mrb[0].mxu0
      %v1909 = vadd.f32 0.0, %v1908
      %v1910 = vpop.f32.mrb[0].mxu0
      %1911 = vmatprep.mubr.bf16.mxu0 0
      %1912 = vmatmul.mubr.bf16.gmra.mrb[0].mxu0 %v1691
      %v1913 = vpop.f32.mrb[0].mxu0
      %v1914 = vadd.f32 0.0, %v1913
      %v1915 = vpop.f32.mrb[0].mxu0
      %v1916 = vpop.f32.mrb[0].mxu0
      %v1917 = vadd.f32 0.0, %v1916
      %v1918 = vpop.f32.mrb[0].mxu0
      %1919 = vmatprep.mubr.bf16.mxu0 0
      %1920 = vmatmul.mubr.bf16.gmra.mrb[0].mxu0 %v1692
      %v1921 = vpop.f32.mrb[0].mxu0
      %v1922 = vadd.f32 0.0, %v1921
      %v1923 = vpop.f32.mrb[0].mxu0
      %v1924 = vpop.f32.mrb[0].mxu0
      %v1925 = vadd.f32 0.0, %v1924
      %v1926 = vpop.f32.mrb[0].mxu0
      %1927 = vmatprep.mubr.bf16.mxu0 0
      %1928 = vmatmul.mubr.bf16.gmra.mrb[0].mxu0 %v1693
      %v1929 = vpop.f32.mrb[0].mxu0
      %v1930 = vadd.f32 0.0, %v1929
      %v1931 = vpop.f32.mrb[0].mxu0
      %v1932 = vpop.f32.mrb[0].mxu0
      %v1933 = vadd.f32 0.0, %v1932
      %v1934 = vpop.f32.mrb[0].mxu0
      %1935 = vdwg.mxu0
      %v1936 = vld [vmem:[#allocation3] sm:$0xff]
      %v1937 = vld [vmem:[#allocation3 + $0x8] sm:$0xff]
      %v1938 = vld [vmem:[#allocation3 + $0x10] sm:$0xff]
      %v1939 = vld [vmem:[#allocation3 + $0x18] sm:$0xff]
      %v1940 = vld [vmem:[#allocation3 + $0x20] sm:$0xff]
      %v1941 = vld [vmem:[#allocation3 + $0x28] sm:$0xff]
      %v1942 = vld [vmem:[#allocation3 + $0x30] sm:$0xff]
      %v1943 = vld [vmem:[#allocation3 + $0x38] sm:$0xff]
      %v1944 = vld [vmem:[#allocation3 + $0x40] sm:$0xff]
      %v1945 = vld [vmem:[#allocation3 + $0x48] sm:$0xff]
      %v1946 = vld [vmem:[#allocation3 + $0x50] sm:$0xff]
      %v1947 = vld [vmem:[#allocation3 + $0x58] sm:$0xff]
      %v1948 = vld [vmem:[#allocation3 + $0x60] sm:$0xff]
      %v1949 = vld [vmem:[#allocation3 + $0x68] sm:$0xff]
      %v1950 = vld [vmem:[#allocation3 + $0x70] sm:$0xff]
      %v1951 = vld [vmem:[#allocation3 + $0x78] sm:$0xff]
      %v1952 = vld [vmem:[#allocation3 + $0x80] sm:$0xff]
      %v1953 = vld [vmem:[#allocation3 + $0x88] sm:$0xff]
      %v1954 = vld [vmem:[#allocation3 + $0x90] sm:$0xff]
      %v1955 = vld [vmem:[#allocation3 + $0x98] sm:$0xff]
      %v1956 = vld [vmem:[#allocation3 + $0xa0] sm:$0xff]
      %v1957 = vld [vmem:[#allocation3 + $0xa8] sm:$0xff]
      %v1958 = vld [vmem:[#allocation3 + $0xb0] sm:$0xff]
      %v1959 = vld [vmem:[#allocation3 + $0xb8] sm:$0xff]
      %v1960 = vld [vmem:[#allocation3 + $0xc0] sm:$0xff]
      %v1961 = vld [vmem:[#allocation3 + $0xc8] sm:$0xff]
      %v1962 = vld [vmem:[#allocation3 + $0xd0] sm:$0xff]
      %v1963 = vld [vmem:[#allocation3 + $0xd8] sm:$0xff]
      %v1964 = vld [vmem:[#allocation3 + $0xe0] sm:$0xff]
      %v1965 = vld [vmem:[#allocation3 + $0xe8] sm:$0xff]
      %v1966 = vld [vmem:[#allocation3 + $0xf0] sm:$0xff]
      %v1967 = vld [vmem:[#allocation3 + $0xf8] sm:$0xff]
      %v1968 = vld [vmem:[#allocation3 + $0x100] sm:$0xff]
      %v1969 = vld [vmem:[#allocation3 + $0x108] sm:$0xff]
      %v1970 = vld [vmem:[#allocation3 + $0x110] sm:$0xff]
      %v1971 = vld [vmem:[#allocation3 + $0x118] sm:$0xff]
      %v1972 = vadd.f32 %v1936, %v1794
      %v1973 = vadd.f32 %v1937, %v1797
      %v1974 = vadd.f32 %v1938, %v1802
      %v1975 = vadd.f32 %v1939, %v1805
      %v1976 = vadd.f32 %v1940, %v1810
      %v1977 = vadd.f32 %v1941, %v1813
      %v1978 = vadd.f32 %v1942, %v1818
      %v1979 = vadd.f32 %v1943, %v1821
      %v1980 = vadd.f32 %v1944, %v1826
      %v1981 = vadd.f32 %v1945, %v1829
      %v1982 = vadd.f32 %v1946, %v1834
      %v1983 = vadd.f32 %v1947, %v1837
      %v1984 = vadd.f32 %v1948, %v1842
      %v1985 = vadd.f32 %v1949, %v1845
      %v1986 = vadd.f32 %v1950, %v1850
      %v1987 = vadd.f32 %v1951, %v1853
      %v1988 = vadd.f32 %v1952, %v1858
      %v1989 = vadd.f32 %v1953, %v1861
      %v1990 = vadd.f32 %v1954, %v1866
      %v1991 = vadd.f32 %v1955, %v1869
      %v1992 = vadd.f32 %v1956, %v1874
      %v1993 = vadd.f32 %v1957, %v1877
      %v1994 = vadd.f32 %v1958, %v1882
      %v1995 = vadd.f32 %v1959, %v1885
      %v1996 = vadd.f32 %v1960, %v1890
      %v1997 = vadd.f32 %v1961, %v1893
      %v1998 = vadd.f32 %v1962, %v1898
      %v1999 = vadd.f32 %v1963, %v1901
      %v2000 = vadd.f32 %v1964, %v1906
      %v2001 = vadd.f32 %v1965, %v1909
      %v2002 = vadd.f32 %v1966, %v1914
      %v2003 = vadd.f32 %v1967, %v1917
      %v2004 = vadd.f32 %v1968, %v1922
      %v2005 = vadd.f32 %v1969, %v1925
      %v2006 = vadd.f32 %v1970, %v1930
      %v2007 = vadd.f32 %v1971, %v1933
      %2008 = vst [vmem:[#allocation3] sm:$0xff] %v1972
      %2009 = vst [vmem:[#allocation3 + $0x8] sm:$0xff] %v1973
      %2010 = vst [vmem:[#allocation3 + $0x10] sm:$0xff] %v1974
      %2011 = vst [vmem:[#allocation3 + $0x18] sm:$0xff] %v1975
      %2012 = vst [vmem:[#allocation3 + $0x20] sm:$0xff] %v1976
      %2013 = vst [vmem:[#allocation3 + $0x28] sm:$0xff] %v1977
      %2014 = vst [vmem:[#allocation3 + $0x30] sm:$0xff] %v1978
      %2015 = vst [vmem:[#allocation3 + $0x38] sm:$0xff] %v1979
      %2016 = vst [vmem:[#allocation3 + $0x40] sm:$0xff] %v1980
      %2017 = vst [vmem:[#allocation3 + $0x48] sm:$0xff] %v1981
      %2018 = vst [vmem:[#allocation3 + $0x50] sm:$0xff] %v1982
      %2019 = vst [vmem:[#allocation3 + $0x58] sm:$0xff] %v1983
      %2020 = vst [vmem:[#allocation3 + $0x60] sm:$0xff] %v1984
      %2021 = vst [vmem:[#allocation3 + $0x68] sm:$0xff] %v1985
      %2022 = vst [vmem:[#allocation3 + $0x70] sm:$0xff] %v1986
      %2023 = vst [vmem:[#allocation3 + $0x78] sm:$0xff] %v1987
      %2024 = vst [vmem:[#allocation3 + $0x80] sm:$0xff] %v1988
      %2025 = vst [vmem:[#allocation3 + $0x88] sm:$0xff] %v1989
      %2026 = vst [vmem:[#allocation3 + $0x90] sm:$0xff] %v1990
      %2027 = vst [vmem:[#allocation3 + $0x98] sm:$0xff] %v1991
      %2028 = vst [vmem:[#allocation3 + $0xa0] sm:$0xff] %v1992
      %2029 = vst [vmem:[#allocation3 + $0xa8] sm:$0xff] %v1993
      %2030 = vst [vmem:[#allocation3 + $0xb0] sm:$0xff] %v1994
      %2031 = vst [vmem:[#allocation3 + $0xb8] sm:$0xff] %v1995
      %2032 = vst [vmem:[#allocation3 + $0xc0] sm:$0xff] %v1996
      %2033 = vst [vmem:[#allocation3 + $0xc8] sm:$0xff] %v1997
      %2034 = vst [vmem:[#allocation3 + $0xd0] sm:$0xff] %v1998
      %2035 = vst [vmem:[#allocation3 + $0xd8] sm:$0xff] %v1999
      %2036 = vst [vmem:[#allocation3 + $0xe0] sm:$0xff] %v2000
      %2037 = vst [vmem:[#allocation3 + $0xe8] sm:$0xff] %v2001
      %2038 = vst [vmem:[#allocation3 + $0xf0] sm:$0xff] %v2002
      %2039 = vst [vmem:[#allocation3 + $0xf8] sm:$0xff] %v2003
      %2040 = vst [vmem:[#allocation3 + $0x100] sm:$0xff] %v2004
      %2041 = vst [vmem:[#allocation3 + $0x108] sm:$0xff] %v2005
      %2042 = vst [vmem:[#allocation3 + $0x110] sm:$0xff] %v2006
      %2043 = vst [vmem:[#allocation3 + $0x118] sm:$0xff] %v2007
      %v2044 = vld [vmem:[#allocation2 + $0x12] sm:$0xff]
      %v2045 = vld [vmem:[#allocation2 + $0x1a] sm:$0xff]
      %v2046 = vld [vmem:[#allocation2 + $0x22] sm:$0xff]
      %v2047 = vld [vmem:[#allocation2 + $0x2a] sm:$0xff]
      %v2048 = vld [vmem:[#allocation2 + $0x32] sm:$0xff]
      %v2049 = vld [vmem:[#allocation2 + $0x3a] sm:$0xff]
      %v2050 = vld [vmem:[#allocation2 + $0x42] sm:$0xff]
      %v2051 = vld [vmem:[#allocation2 + $0x4a] sm:$0xff]
      %v2052 = vld [vmem:[#allocation2 + $0x52] sm:$0xff]
      %v2053 = vld [vmem:[#allocation2 + $0x5a] sm:$0xff]
      %v2054 = vld [vmem:[#allocation2 + $0x62] sm:$0xff]
      %v2055 = vld [vmem:[#allocation2 + $0x6a] sm:$0xff]
      %v2056 = vld [vmem:[#allocation2 + $0x72] sm:$0xff]
      %v2057 = vld [vmem:[#allocation2 + $0x7a] sm:$0xff]
      %v2058 = vld [vmem:[#allocation2 + $0x82] sm:$0xff]
      %v2059 = vld [vmem:[#allocation2 + $0x8a] sm:$0xff]
      %v2060 = vld [vmem:[#allocation2 + $0x92] sm:$0xff]
      %v2061 = vld [vmem:[#allocation2 + $0x9a] sm:$0xff]
      %v2062 = vld [vmem:[#allocation2 + $0xa2] sm:$0xff]
      %v2063 = vld [vmem:[#allocation2 + $0xaa] sm:$0xff]
      %v2064 = vld [vmem:[#allocation2 + $0xb2] sm:$0xff]
      %v2065 = vld [vmem:[#allocation2 + $0xba] sm:$0xff]
      %v2066 = vld [vmem:[#allocation2 + $0xc2] sm:$0xff]
      %v2067 = vld [vmem:[#allocation2 + $0xca] sm:$0xff]
      %v2068 = vld [vmem:[#allocation2 + $0xd2] sm:$0xff]
      %v2069 = vld [vmem:[#allocation2 + $0xda] sm:$0xff]
      %v2070 = vld [vmem:[#allocation2 + $0xe2] sm:$0xff]
      %v2071 = vld [vmem:[#allocation2 + $0xea] sm:$0xff]
      %v2072 = vld [vmem:[#allocation2 + $0xf2] sm:$0xff]
      %v2073 = vld [vmem:[#allocation2 + $0xfa] sm:$0xff]
      %v2074 = vld [vmem:[#allocation2 + $0x102] sm:$0xff]
      %v2075 = vld [vmem:[#allocation2 + $0x10a] sm:$0xff]
      %v2076 = vld [vmem:[#allocation2 + $0x112] sm:$0xff]
      %v2077 = vld [vmem:[#allocation2 + $0x11a] sm:$0xff]
      %v2078 = vld [vmem:[#allocation2 + $0x122] sm:$0xff]
      %v2079 = vld [vmem:[#allocation2 + $0x12a] sm:$0xff]
      %v2080 = vpack.c.bf16 %v2045, %v2044
      %v2081 = vpack.c.bf16 %v2047, %v2046
      %v2082 = vpack.c.bf16 %v2049, %v2048
      %v2083 = vpack.c.bf16 %v2051, %v2050
      %v2084 = vpack.c.bf16 %v2053, %v2052
      %v2085 = vpack.c.bf16 %v2055, %v2054
      %v2086 = vpack.c.bf16 %v2057, %v2056
      %v2087 = vpack.c.bf16 %v2059, %v2058
      %v2088 = vpack.c.bf16 %v2061, %v2060
      %v2089 = vpack.c.bf16 %v2063, %v2062
      %v2090 = vpack.c.bf16 %v2065, %v2064
      %v2091 = vpack.c.bf16 %v2067, %v2066
      %v2092 = vpack.c.bf16 %v2069, %v2068
      %v2093 = vpack.c.bf16 %v2071, %v2070
      %v2094 = vpack.c.bf16 %v2073, %v2072
      %v2095 = vpack.c.bf16 %v2075, %v2074
      %v2096 = vpack.c.bf16 %v2077, %v2076
      %v2097 = vpack.c.bf16 %v2079, %v2078
      %s2098 = scalar_lea.vmem %s1, 192
      %v2099 = vld [vmem:[%s2098] sm:$0xf]
      %v2100 = vld [vmem:[%s2098 + $0x4] sm:$0xf]
      %v2101 = vld [vmem:[%s2098 + $0x8] sm:$0xf]
      %v2102 = vld [vmem:[%s2098 + $0xc] sm:$0xf]
      %v2103 = vld [vmem:[%s2098 + $0x10] sm:$0xf]
      %v2104 = vld [vmem:[%s2098 + $0x14] sm:$0xf]
      %v2105 = vld [vmem:[%s2098 + $0x18] sm:$0xf]
      %v2106 = vld [vmem:[%s2098 + $0x1c] sm:$0xf]
      %v2107 = vld [vmem:[%s2098 + $0x20] sm:$0xf]
      %v2108 = vld [vmem:[%s2098 + $0x24] sm:$0xf]
      %v2109 = vld [vmem:[%s2098 + $0x28] sm:$0xf]
      %v2110 = vld [vmem:[%s2098 + $0x2c] sm:$0xf]
      %v2111 = vld [vmem:[%s2098 + $0x30] sm:$0xf]
      %v2112 = vld [vmem:[%s2098 + $0x34] sm:$0xf]
      %v2113 = vld [vmem:[%s2098 + $0x38] sm:$0xf]
      %v2114 = vld [vmem:[%s2098 + $0x3c] sm:$0xf]
      %v2131 = vunpack.c.l.b16 %v2099
      %v2132 = vunpack.c.l.b16 %v2100
      %v2133 = vunpack.c.l.b16 %v2101
      %v2134 = vunpack.c.l.b16 %v2102
      %v2135 = vunpack.c.l.b16 %v2103
      %v2136 = vunpack.c.l.b16 %v2104
      %v2137 = vunpack.c.l.b16 %v2105
      %v2138 = vunpack.c.l.b16 %v2106
      %v2139 = vunpack.c.l.b16 %v2107
      %v2140 = vunpack.c.l.b16 %v2108
      %v2141 = vunpack.c.l.b16 %v2109
      %v2142 = vunpack.c.l.b16 %v2110
      %v2143 = vunpack.c.l.b16 %v2111
      %v2144 = vunpack.c.l.b16 %v2112
      %v2145 = vunpack.c.l.b16 %v2113
      %v2146 = vunpack.c.l.b16 %v2114
      %v2147 = vpack.c.b16 %v2132, %v2131
      %v2148 = vpack.c.b16 %v2134, %v2133
      %v2149 = vpack.c.b16 %v2136, %v2135
      %v2150 = vpack.c.b16 %v2138, %v2137
      %v2151 = vpack.c.b16 %v2140, %v2139
      %v2152 = vpack.c.b16 %v2142, %v2141
      %v2153 = vpack.c.b16 %v2144, %v2143
      %v2154 = vpack.c.b16 %v2146, %v2145
      %2163 = vmatprep.subr.bf16.mxu0 0
      %2164 = vmatpush1.bf16.msra.mxu0 %v2147
      %2165 = vmatprep.subr.bf16.mxu0 0
      %2166 = vmatpush1.bf16.msra.mxu0 %v2148
      %2167 = vmatprep.subr.bf16.mxu0 0
      %2168 = vmatpush1.bf16.msra.mxu0 %v2149
      %2169 = vmatprep.subr.bf16.mxu0 0
      %2170 = vmatpush1.bf16.msra.mxu0 %v2150
      %2171 = vmatprep.subr.bf16.mxu0 0
      %2172 = vmatpush1.bf16.msra.mxu0 %v2151
      %2173 = vmatprep.subr.bf16.mxu0 0
      %2174 = vmatpush1.bf16.msra.mxu0 %v2152
      %2175 = vmatprep.subr.bf16.mxu0 0
      %2176 = vmatpush1.bf16.msra.mxu0 %v2153
      %2177 = vmatprep.subr.bf16.mxu0 0
      %2178 = vmatpush1.bf16.msra.mxu0 %v2154
      %2179 = vmatprep.subr.bf16.mxu0 0
      %2180 = vmatpush1.bf16.msra.mxu0 0
      %2181 = vmatprep.subr.bf16.mxu0 0
      %2182 = vmatpush1.bf16.msra.mxu0 0
      %2183 = vmatprep.subr.bf16.mxu0 0
      %2184 = vmatpush1.bf16.msra.mxu0 0
      %2185 = vmatprep.subr.bf16.mxu0 0
      %2186 = vmatpush1.bf16.msra.mxu0 0
      %2187 = vmatprep.subr.bf16.mxu0 0
      %2188 = vmatpush1.bf16.msra.mxu0 0
      %2189 = vmatprep.subr.bf16.mxu0 0
      %2190 = vmatpush1.bf16.msra.mxu0 0
      %2191 = vmatprep.subr.bf16.mxu0 0
      %2192 = vmatpush1.bf16.msra.mxu0 0
      %2193 = vmatprep.subr.bf16.mxu0 0
      %2194 = vmatpush1.bf16.msra.mxu0 0
      %2195 = vmatprep.mubr.bf16.mxu0 0
      %2196 = vmatmul.mubr.bf16.gmra.mrb[0].mxu0 %v2080
      %v2197 = vpop.f32.mrb[0].mxu0
      %v2198 = vadd.f32 0.0, %v2197
      %v2199 = vpop.f32.mrb[0].mxu0
      %v2200 = vpop.f32.mrb[0].mxu0
      %v2201 = vadd.f32 0.0, %v2200
      %v2202 = vpop.f32.mrb[0].mxu0
      %2203 = vmatprep.mubr.bf16.mxu0 0
      %2204 = vmatmul.mubr.bf16.gmra.mrb[0].mxu0 %v2081
      %v2205 = vpop.f32.mrb[0].mxu0
      %v2206 = vadd.f32 0.0, %v2205
      %v2207 = vpop.f32.mrb[0].mxu0
      %v2208 = vpop.f32.mrb[0].mxu0
      %v2209 = vadd.f32 0.0, %v2208
      %v2210 = vpop.f32.mrb[0].mxu0
      %2211 = vmatprep.mubr.bf16.mxu0 0
      %2212 = vmatmul.mubr.bf16.gmra.mrb[0].mxu0 %v2082
      %v2213 = vpop.f32.mrb[0].mxu0
      %v2214 = vadd.f32 0.0, %v2213
      %v2215 = vpop.f32.mrb[0].mxu0
      %v2216 = vpop.f32.mrb[0].mxu0
      %v2217 = vadd.f32 0.0, %v2216
      %v2218 = vpop.f32.mrb[0].mxu0
      %2219 = vmatprep.mubr.bf16.mxu0 0
      %2220 = vmatmul.mubr.bf16.gmra.mrb[0].mxu0 %v2083
      %v2221 = vpop.f32.mrb[0].mxu0
      %v2222 = vadd.f32 0.0, %v2221
      %v2223 = vpop.f32.mrb[0].mxu0
      %v2224 = vpop.f32.mrb[0].mxu0
      %v2225 = vadd.f32 0.0, %v2224
      %v2226 = vpop.f32.mrb[0].mxu0
      %2227 = vmatprep.mubr.bf16.mxu0 0
      %2228 = vmatmul.mubr.bf16.gmra.mrb[0].mxu0 %v2084
      %v2229 = vpop.f32.mrb[0].mxu0
      %v2230 = vadd.f32 0.0, %v2229
      %v2231 = vpop.f32.mrb[0].mxu0
      %v2232 = vpop.f32.mrb[0].mxu0
      %v2233 = vadd.f32 0.0, %v2232
      %v2234 = vpop.f32.mrb[0].mxu0
      %2235 = vmatprep.mubr.bf16.mxu0 0
      %2236 = vmatmul.mubr.bf16.gmra.mrb[0].mxu0 %v2085
      %v2237 = vpop.f32.mrb[0].mxu0
      %v2238 = vadd.f32 0.0, %v2237
      %v2239 = vpop.f32.mrb[0].mxu0
      %v2240 = vpop.f32.mrb[0].mxu0
      %v2241 = vadd.f32 0.0, %v2240
      %v2242 = vpop.f32.mrb[0].mxu0
      %2243 = vmatprep.mubr.bf16.mxu0 0
      %2244 = vmatmul.mubr.bf16.gmra.mrb[0].mxu0 %v2086
      %v2245 = vpop.f32.mrb[0].mxu0
      %v2246 = vadd.f32 0.0, %v2245
      %v2247 = vpop.f32.mrb[0].mxu0
      %v2248 = vpop.f32.mrb[0].mxu0
      %v2249 = vadd.f32 0.0, %v2248
      %v2250 = vpop.f32.mrb[0].mxu0
      %2251 = vmatprep.mubr.bf16.mxu0 0
      %2252 = vmatmul.mubr.bf16.gmra.mrb[0].mxu0 %v2087
      %v2253 = vpop.f32.mrb[0].mxu0
      %v2254 = vadd.f32 0.0, %v2253
      %v2255 = vpop.f32.mrb[0].mxu0
      %v2256 = vpop.f32.mrb[0].mxu0
      %v2257 = vadd.f32 0.0, %v2256
      %v2258 = vpop.f32.mrb[0].mxu0
      %2259 = vmatprep.mubr.bf16.mxu0 0
      %2260 = vmatmul.mubr.bf16.gmra.mrb[0].mxu0 %v2088
      %v2261 = vpop.f32.mrb[0].mxu0
      %v2262 = vadd.f32 0.0, %v2261
      %v2263 = vpop.f32.mrb[0].mxu0
      %v2264 = vpop.f32.mrb[0].mxu0
      %v2265 = vadd.f32 0.0, %v2264
      %v2266 = vpop.f32.mrb[0].mxu0
      %2267 = vmatprep.mubr.bf16.mxu0 0
      %2268 = vmatmul.mubr.bf16.gmra.mrb[0].mxu0 %v2089
      %v2269 = vpop.f32.mrb[0].mxu0
      %v2270 = vadd.f32 0.0, %v2269
      %v2271 = vpop.f32.mrb[0].mxu0
      %v2272 = vpop.f32.mrb[0].mxu0
      %v2273 = vadd.f32 0.0, %v2272
      %v2274 = vpop.f32.mrb[0].mxu0
      %2275 = vmatprep.mubr.bf16.mxu0 0
      %2276 = vmatmul.mubr.bf16.gmra.mrb[0].mxu0 %v2090
      %v2277 = vpop.f32.mrb[0].mxu0
      %v2278 = vadd.f32 0.0, %v2277
      %v2279 = vpop.f32.mrb[0].mxu0
      %v2280 = vpop.f32.mrb[0].mxu0
      %v2281 = vadd.f32 0.0, %v2280
      %v2282 = vpop.f32.mrb[0].mxu0
      %2283 = vmatprep.mubr.bf16.mxu0 0
      %2284 = vmatmul.mubr.bf16.gmra.mrb[0].mxu0 %v2091
      %v2285 = vpop.f32.mrb[0].mxu0
      %v2286 = vadd.f32 0.0, %v2285
      %v2287 = vpop.f32.mrb[0].mxu0
      %v2288 = vpop.f32.mrb[0].mxu0
      %v2289 = vadd.f32 0.0, %v2288
      %v2290 = vpop.f32.mrb[0].mxu0
      %2291 = vmatprep.mubr.bf16.mxu0 0
      %2292 = vmatmul.mubr.bf16.gmra.mrb[0].mxu0 %v2092
      %v2293 = vpop.f32.mrb[0].mxu0
      %v2294 = vadd.f32 0.0, %v2293
      %v2295 = vpop.f32.mrb[0].mxu0
      %v2296 = vpop.f32.mrb[0].mxu0
      %v2297 = vadd.f32 0.0, %v2296
      %v2298 = vpop.f32.mrb[0].mxu0
      %2299 = vmatprep.mubr.bf16.mxu0 0
      %2300 = vmatmul.mubr.bf16.gmra.mrb[0].mxu0 %v2093
      %v2301 = vpop.f32.mrb[0].mxu0
      %v2302 = vadd.f32 0.0, %v2301
      %v2303 = vpop.f32.mrb[0].mxu0
      %v2304 = vpop.f32.mrb[0].mxu0
      %v2305 = vadd.f32 0.0, %v2304
      %v2306 = vpop.f32.mrb[0].mxu0
      %2307 = vmatprep.mubr.bf16.mxu0 0
      %2308 = vmatmul.mubr.bf16.gmra.mrb[0].mxu0 %v2094
      %v2309 = vpop.f32.mrb[0].mxu0
      %v2310 = vadd.f32 0.0, %v2309
      %v2311 = vpop.f32.mrb[0].mxu0
      %v2312 = vpop.f32.mrb[0].mxu0
      %v2313 = vadd.f32 0.0, %v2312
      %v2314 = vpop.f32.mrb[0].mxu0
      %2315 = vmatprep.mubr.bf16.mxu0 0
      %2316 = vmatmul.mubr.bf16.gmra.mrb[0].mxu0 %v2095
      %v2317 = vpop.f32.mrb[0].mxu0
      %v2318 = vadd.f32 0.0, %v2317
      %v2319 = vpop.f32.mrb[0].mxu0
      %v2320 = vpop.f32.mrb[0].mxu0
      %v2321 = vadd.f32 0.0, %v2320
      %v2322 = vpop.f32.mrb[0].mxu0
      %2323 = vmatprep.mubr.bf16.mxu0 0
      %2324 = vmatmul.mubr.bf16.gmra.mrb[0].mxu0 %v2096
      %v2325 = vpop.f32.mrb[0].mxu0
      %v2326 = vadd.f32 0.0, %v2325
      %v2327 = vpop.f32.mrb[0].mxu0
      %v2328 = vpop.f32.mrb[0].mxu0
      %v2329 = vadd.f32 0.0, %v2328
      %v2330 = vpop.f32.mrb[0].mxu0
      %2331 = vmatprep.mubr.bf16.mxu0 0
      %2332 = vmatmul.mubr.bf16.gmra.mrb[0].mxu0 %v2097
      %v2333 = vpop.f32.mrb[0].mxu0
      %v2334 = vadd.f32 0.0, %v2333
      %v2335 = vpop.f32.mrb[0].mxu0
      %v2336 = vpop.f32.mrb[0].mxu0
      %v2337 = vadd.f32 0.0, %v2336
      %v2338 = vpop.f32.mrb[0].mxu0
      %2339 = vdwg.mxu0
      %v2340 = vld [vmem:[#allocation3] sm:$0xff]
      %v2341 = vld [vmem:[#allocation3 + $0x8] sm:$0xff]
      %v2342 = vld [vmem:[#allocation3 + $0x10] sm:$0xff]
      %v2343 = vld [vmem:[#allocation3 + $0x18] sm:$0xff]
      %v2344 = vld [vmem:[#allocation3 + $0x20] sm:$0xff]
      %v2345 = vld [vmem:[#allocation3 + $0x28] sm:$0xff]
      %v2346 = vld [vmem:[#allocation3 + $0x30] sm:$0xff]
      %v2347 = vld [vmem:[#allocation3 + $0x38] sm:$0xff]
      %v2348 = vld [vmem:[#allocation3 + $0x40] sm:$0xff]
      %v2349 = vld [vmem:[#allocation3 + $0x48] sm:$0xff]
      %v2350 = vld [vmem:[#allocation3 + $0x50] sm:$0xff]
      %v2351 = vld [vmem:[#allocation3 + $0x58] sm:$0xff]
      %v2352 = vld [vmem:[#allocation3 + $0x60] sm:$0xff]
      %v2353 = vld [vmem:[#allocation3 + $0x68] sm:$0xff]
      %v2354 = vld [vmem:[#allocation3 + $0x70] sm:$0xff]
      %v2355 = vld [vmem:[#allocation3 + $0x78] sm:$0xff]
      %v2356 = vld [vmem:[#allocation3 + $0x80] sm:$0xff]
      %v2357 = vld [vmem:[#allocation3 + $0x88] sm:$0xff]
      %v2358 = vld [vmem:[#allocation3 + $0x90] sm:$0xff]
      %v2359 = vld [vmem:[#allocation3 + $0x98] sm:$0xff]
      %v2360 = vld [vmem:[#allocation3 + $0xa0] sm:$0xff]
      %v2361 = vld [vmem:[#allocation3 + $0xa8] sm:$0xff]
      %v2362 = vld [vmem:[#allocation3 + $0xb0] sm:$0xff]
      %v2363 = vld [vmem:[#allocation3 + $0xb8] sm:$0xff]
      %v2364 = vld [vmem:[#allocation3 + $0xc0] sm:$0xff]
      %v2365 = vld [vmem:[#allocation3 + $0xc8] sm:$0xff]
      %v2366 = vld [vmem:[#allocation3 + $0xd0] sm:$0xff]
      %v2367 = vld [vmem:[#allocation3 + $0xd8] sm:$0xff]
      %v2368 = vld [vmem:[#allocation3 + $0xe0] sm:$0xff]
      %v2369 = vld [vmem:[#allocation3 + $0xe8] sm:$0xff]
      %v2370 = vld [vmem:[#allocation3 + $0xf0] sm:$0xff]
      %v2371 = vld [vmem:[#allocation3 + $0xf8] sm:$0xff]
      %v2372 = vld [vmem:[#allocation3 + $0x100] sm:$0xff]
      %v2373 = vld [vmem:[#allocation3 + $0x108] sm:$0xff]
      %v2374 = vld [vmem:[#allocation3 + $0x110] sm:$0xff]
      %v2375 = vld [vmem:[#allocation3 + $0x118] sm:$0xff]
      %v2376 = vadd.f32 %v2340, %v2198
      %v2377 = vadd.f32 %v2341, %v2201
      %v2378 = vadd.f32 %v2342, %v2206
      %v2379 = vadd.f32 %v2343, %v2209
      %v2380 = vadd.f32 %v2344, %v2214
      %v2381 = vadd.f32 %v2345, %v2217
      %v2382 = vadd.f32 %v2346, %v2222
      %v2383 = vadd.f32 %v2347, %v2225
      %v2384 = vadd.f32 %v2348, %v2230
      %v2385 = vadd.f32 %v2349, %v2233
      %v2386 = vadd.f32 %v2350, %v2238
      %v2387 = vadd.f32 %v2351, %v2241
      %v2388 = vadd.f32 %v2352, %v2246
      %v2389 = vadd.f32 %v2353, %v2249
      %v2390 = vadd.f32 %v2354, %v2254
      %v2391 = vadd.f32 %v2355, %v2257
      %v2392 = vadd.f32 %v2356, %v2262
      %v2393 = vadd.f32 %v2357, %v2265
      %v2394 = vadd.f32 %v2358, %v2270
      %v2395 = vadd.f32 %v2359, %v2273
      %v2396 = vadd.f32 %v2360, %v2278
      %v2397 = vadd.f32 %v2361, %v2281
      %v2398 = vadd.f32 %v2362, %v2286
      %v2399 = vadd.f32 %v2363, %v2289
      %v2400 = vadd.f32 %v2364, %v2294
      %v2401 = vadd.f32 %v2365, %v2297
      %v2402 = vadd.f32 %v2366, %v2302
      %v2403 = vadd.f32 %v2367, %v2305
      %v2404 = vadd.f32 %v2368, %v2310
      %v2405 = vadd.f32 %v2369, %v2313
      %v2406 = vadd.f32 %v2370, %v2318
      %v2407 = vadd.f32 %v2371, %v2321
      %v2408 = vadd.f32 %v2372, %v2326
      %v2409 = vadd.f32 %v2373, %v2329
      %v2410 = vadd.f32 %v2374, %v2334
      %v2411 = vadd.f32 %v2375, %v2337
      %2412 = vst [vmem:[#allocation3] sm:$0xff] %v2376
      %2413 = vst [vmem:[#allocation3 + $0x8] sm:$0xff] %v2377
      %2414 = vst [vmem:[#allocation3 + $0x10] sm:$0xff] %v2378
      %2415 = vst [vmem:[#allocation3 + $0x18] sm:$0xff] %v2379
      %2416 = vst [vmem:[#allocation3 + $0x20] sm:$0xff] %v2380
      %2417 = vst [vmem:[#allocation3 + $0x28] sm:$0xff] %v2381
      %2418 = vst [vmem:[#allocation3 + $0x30] sm:$0xff] %v2382
      %2419 = vst [vmem:[#allocation3 + $0x38] sm:$0xff] %v2383
      %2420 = vst [vmem:[#allocation3 + $0x40] sm:$0xff] %v2384
      %2421 = vst [vmem:[#allocation3 + $0x48] sm:$0xff] %v2385
      %2422 = vst [vmem:[#allocation3 + $0x50] sm:$0xff] %v2386
      %2423 = vst [vmem:[#allocation3 + $0x58] sm:$0xff] %v2387
      %2424 = vst [vmem:[#allocation3 + $0x60] sm:$0xff] %v2388
      %2425 = vst [vmem:[#allocation3 + $0x68] sm:$0xff] %v2389
      %2426 = vst [vmem:[#allocation3 + $0x70] sm:$0xff] %v2390
      %2427 = vst [vmem:[#allocation3 + $0x78] sm:$0xff] %v2391
      %2428 = vst [vmem:[#allocation3 + $0x80] sm:$0xff] %v2392
      %2429 = vst [vmem:[#allocation3 + $0x88] sm:$0xff] %v2393
      %2430 = vst [vmem:[#allocation3 + $0x90] sm:$0xff] %v2394
      %2431 = vst [vmem:[#allocation3 + $0x98] sm:$0xff] %v2395
      %2432 = vst [vmem:[#allocation3 + $0xa0] sm:$0xff] %v2396
      %2433 = vst [vmem:[#allocation3 + $0xa8] sm:$0xff] %v2397
      %2434 = vst [vmem:[#allocation3 + $0xb0] sm:$0xff] %v2398
      %2435 = vst [vmem:[#allocation3 + $0xb8] sm:$0xff] %v2399
      %2436 = vst [vmem:[#allocation3 + $0xc0] sm:$0xff] %v2400
      %2437 = vst [vmem:[#allocation3 + $0xc8] sm:$0xff] %v2401
      %2438 = vst [vmem:[#allocation3 + $0xd0] sm:$0xff] %v2402
      %2439 = vst [vmem:[#allocation3 + $0xd8] sm:$0xff] %v2403
      %2440 = vst [vmem:[#allocation3 + $0xe0] sm:$0xff] %v2404
      %2441 = vst [vmem:[#allocation3 + $0xe8] sm:$0xff] %v2405
      %2442 = vst [vmem:[#allocation3 + $0xf0] sm:$0xff] %v2406
      %2443 = vst [vmem:[#allocation3 + $0xf8] sm:$0xff] %v2407
      %2444 = vst [vmem:[#allocation3 + $0x100] sm:$0xff] %v2408
      %2445 = vst [vmem:[#allocation3 + $0x108] sm:$0xff] %v2409
      %2446 = vst [vmem:[#allocation3 + $0x110] sm:$0xff] %v2410
      %2447 = vst [vmem:[#allocation3 + $0x118] sm:$0xff] %v2411
      %v2448 = vld [vmem:[#allocation2 + $0x13] sm:$0xff]
      %v2449 = vld [vmem:[#allocation2 + $0x1b] sm:$0xff]
      %v2450 = vld [vmem:[#allocation2 + $0x23] sm:$0xff]
      %v2451 = vld [vmem:[#allocation2 + $0x2b] sm:$0xff]
      %v2452 = vld [vmem:[#allocation2 + $0x33] sm:$0xff]
      %v2453 = vld [vmem:[#allocation2 + $0x3b] sm:$0xff]
      %v2454 = vld [vmem:[#allocation2 + $0x43] sm:$0xff]
      %v2455 = vld [vmem:[#allocation2 + $0x4b] sm:$0xff]
      %v2456 = vld [vmem:[#allocation2 + $0x53] sm:$0xff]
      %v2457 = vld [vmem:[#allocation2 + $0x5b] sm:$0xff]
      %v2458 = vld [vmem:[#allocation2 + $0x63] sm:$0xff]
      %v2459 = vld [vmem:[#allocation2 + $0x6b] sm:$0xff]
      %v2460 = vld [vmem:[#allocation2 + $0x73] sm:$0xff]
      %v2461 = vld [vmem:[#allocation2 + $0x7b] sm:$0xff]
      %v2462 = vld [vmem:[#allocation2 + $0x83] sm:$0xff]
      %v2463 = vld [vmem:[#allocation2 + $0x8b] sm:$0xff]
      %v2464 = vld [vmem:[#allocation2 + $0x93] sm:$0xff]
      %v2465 = vld [vmem:[#allocation2 + $0x9b] sm:$0xff]
      %v2466 = vld [vmem:[#allocation2 + $0xa3] sm:$0xff]
      %v2467 = vld [vmem:[#allocation2 + $0xab] sm:$0xff]
      %v2468 = vld [vmem:[#allocation2 + $0xb3] sm:$0xff]
      %v2469 = vld [vmem:[#allocation2 + $0xbb] sm:$0xff]
      %v2470 = vld [vmem:[#allocation2 + $0xc3] sm:$0xff]
      %v2471 = vld [vmem:[#allocation2 + $0xcb] sm:$0xff]
      %v2472 = vld [vmem:[#allocation2 + $0xd3] sm:$0xff]
      %v2473 = vld [vmem:[#allocation2 + $0xdb] sm:$0xff]
      %v2474 = vld [vmem:[#allocation2 + $0xe3] sm:$0xff]
      %v2475 = vld [vmem:[#allocation2 + $0xeb] sm:$0xff]
      %v2476 = vld [vmem:[#allocation2 + $0xf3] sm:$0xff]
      %v2477 = vld [vmem:[#allocation2 + $0xfb] sm:$0xff]
      %v2478 = vld [vmem:[#allocation2 + $0x103] sm:$0xff]
      %v2479 = vld [vmem:[#allocation2 + $0x10b] sm:$0xff]
      %v2480 = vld [vmem:[#allocation2 + $0x113] sm:$0xff]
      %v2481 = vld [vmem:[#allocation2 + $0x11b] sm:$0xff]
      %v2482 = vld [vmem:[#allocation2 + $0x123] sm:$0xff]
      %v2483 = vld [vmem:[#allocation2 + $0x12b] sm:$0xff]
      %v2484 = vpack.c.bf16 %v2449, %v2448
      %v2485 = vpack.c.bf16 %v2451, %v2450
      %v2486 = vpack.c.bf16 %v2453, %v2452
      %v2487 = vpack.c.bf16 %v2455, %v2454
      %v2488 = vpack.c.bf16 %v2457, %v2456
      %v2489 = vpack.c.bf16 %v2459, %v2458
      %v2490 = vpack.c.bf16 %v2461, %v2460
      %v2491 = vpack.c.bf16 %v2463, %v2462
      %v2492 = vpack.c.bf16 %v2465, %v2464
      %v2493 = vpack.c.bf16 %v2467, %v2466
      %v2494 = vpack.c.bf16 %v2469, %v2468
      %v2495 = vpack.c.bf16 %v2471, %v2470
      %v2496 = vpack.c.bf16 %v2473, %v2472
      %v2497 = vpack.c.bf16 %v2475, %v2474
      %v2498 = vpack.c.bf16 %v2477, %v2476
      %v2499 = vpack.c.bf16 %v2479, %v2478
      %v2500 = vpack.c.bf16 %v2481, %v2480
      %v2501 = vpack.c.bf16 %v2483, %v2482
      %s2502 = scalar_lea.vmem %s1, 256
      %v2503 = vld [vmem:[%s2502] sm:$0xf]
      %v2504 = vld [vmem:[%s2502 + $0x4] sm:$0xf]
      %v2505 = vld [vmem:[%s2502 + $0x8] sm:$0xf]
      %v2506 = vld [vmem:[%s2502 + $0xc] sm:$0xf]
      %v2507 = vld [vmem:[%s2502 + $0x10] sm:$0xf]
      %v2508 = vld [vmem:[%s2502 + $0x14] sm:$0xf]
      %v2509 = vld [vmem:[%s2502 + $0x18] sm:$0xf]
      %v2510 = vld [vmem:[%s2502 + $0x1c] sm:$0xf]
      %v2511 = vld [vmem:[%s2502 + $0x20] sm:$0xf]
      %v2512 = vld [vmem:[%s2502 + $0x24] sm:$0xf]
      %v2513 = vld [vmem:[%s2502 + $0x28] sm:$0xf]
      %v2514 = vld [vmem:[%s2502 + $0x2c] sm:$0xf]
      %v2515 = vld [vmem:[%s2502 + $0x30] sm:$0xf]
      %v2516 = vld [vmem:[%s2502 + $0x34] sm:$0xf]
      %v2517 = vld [vmem:[%s2502 + $0x38] sm:$0xf]
      %v2518 = vld [vmem:[%s2502 + $0x3c] sm:$0xf]
      %v2535 = vunpack.c.l.b16 %v2503
      %v2536 = vunpack.c.l.b16 %v2504
      %v2537 = vunpack.c.l.b16 %v2505
      %v2538 = vunpack.c.l.b16 %v2506
      %v2539 = vunpack.c.l.b16 %v2507
      %v2540 = vunpack.c.l.b16 %v2508
      %v2541 = vunpack.c.l.b16 %v2509
      %v2542 = vunpack.c.l.b16 %v2510
      %v2543 = vunpack.c.l.b16 %v2511
      %v2544 = vunpack.c.l.b16 %v2512
      %v2545 = vunpack.c.l.b16 %v2513
      %v2546 = vunpack.c.l.b16 %v2514
      %v2547 = vunpack.c.l.b16 %v2515
      %v2548 = vunpack.c.l.b16 %v2516
      %v2549 = vunpack.c.l.b16 %v2517
      %v2550 = vunpack.c.l.b16 %v2518
      %v2551 = vpack.c.b16 %v2536, %v2535
      %v2552 = vpack.c.b16 %v2538, %v2537
      %v2553 = vpack.c.b16 %v2540, %v2539
      %v2554 = vpack.c.b16 %v2542, %v2541
      %v2555 = vpack.c.b16 %v2544, %v2543
      %v2556 = vpack.c.b16 %v2546, %v2545
      %v2557 = vpack.c.b16 %v2548, %v2547
      %v2558 = vpack.c.b16 %v2550, %v2549
      %2567 = vmatprep.subr.bf16.mxu0 0
      %2568 = vmatpush1.bf16.msra.mxu0 %v2551
      %2569 = vmatprep.subr.bf16.mxu0 0
      %2570 = vmatpush1.bf16.msra.mxu0 %v2552
      %2571 = vmatprep.subr.bf16.mxu0 0
      %2572 = vmatpush1.bf16.msra.mxu0 %v2553
      %2573 = vmatprep.subr.bf16.mxu0 0
      %2574 = vmatpush1.bf16.msra.mxu0 %v2554
      %2575 = vmatprep.subr.bf16.mxu0 0
      %2576 = vmatpush1.bf16.msra.mxu0 %v2555
      %2577 = vmatprep.subr.bf16.mxu0 0
      %2578 = vmatpush1.bf16.msra.mxu0 %v2556
      %2579 = vmatprep.subr.bf16.mxu0 0
      %2580 = vmatpush1.bf16.msra.mxu0 %v2557
      %2581 = vmatprep.subr.bf16.mxu0 0
      %2582 = vmatpush1.bf16.msra.mxu0 %v2558
      %2583 = vmatprep.subr.bf16.mxu0 0
      %2584 = vmatpush1.bf16.msra.mxu0 0
      %2585 = vmatprep.subr.bf16.mxu0 0
      %2586 = vmatpush1.bf16.msra.mxu0 0
      %2587 = vmatprep.subr.bf16.mxu0 0
      %2588 = vmatpush1.bf16.msra.mxu0 0
      %2589 = vmatprep.subr.bf16.mxu0 0
      %2590 = vmatpush1.bf16.msra.mxu0 0
      %2591 = vmatprep.subr.bf16.mxu0 0
      %2592 = vmatpush1.bf16.msra.mxu0 0
      %2593 = vmatprep.subr.bf16.mxu0 0
      %2594 = vmatpush1.bf16.msra.mxu0 0
      %2595 = vmatprep.subr.bf16.mxu0 0
      %2596 = vmatpush1.bf16.msra.mxu0 0
      %2597 = vmatprep.subr.bf16.mxu0 0
      %2598 = vmatpush1.bf16.msra.mxu0 0
      %2599 = vmatprep.mubr.bf16.mxu0 0
      %2600 = vmatmul.mubr.bf16.gmra.mrb[0].mxu0 %v2484
      %v2601 = vpop.f32.mrb[0].mxu0
      %v2602 = vadd.f32 0.0, %v2601
      %v2603 = vpop.f32.mrb[0].mxu0
      %v2604 = vpop.f32.mrb[0].mxu0
      %v2605 = vadd.f32 0.0, %v2604
      %v2606 = vpop.f32.mrb[0].mxu0
      %2607 = vmatprep.mubr.bf16.mxu0 0
      %2608 = vmatmul.mubr.bf16.gmra.mrb[0].mxu0 %v2485
      %v2609 = vpop.f32.mrb[0].mxu0
      %v2610 = vadd.f32 0.0, %v2609
      %v2611 = vpop.f32.mrb[0].mxu0
      %v2612 = vpop.f32.mrb[0].mxu0
      %v2613 = vadd.f32 0.0, %v2612
      %v2614 = vpop.f32.mrb[0].mxu0
      %2615 = vmatprep.mubr.bf16.mxu0 0
      %2616 = vmatmul.mubr.bf16.gmra.mrb[0].mxu0 %v2486
      %v2617 = vpop.f32.mrb[0].mxu0
      %v2618 = vadd.f32 0.0, %v2617
      %v2619 = vpop.f32.mrb[0].mxu0
      %v2620 = vpop.f32.mrb[0].mxu0
      %v2621 = vadd.f32 0.0, %v2620
      %v2622 = vpop.f32.mrb[0].mxu0
      %2623 = vmatprep.mubr.bf16.mxu0 0
      %2624 = vmatmul.mubr.bf16.gmra.mrb[0].mxu0 %v2487
      %v2625 = vpop.f32.mrb[0].mxu0
      %v2626 = vadd.f32 0.0, %v2625
      %v2627 = vpop.f32.mrb[0].mxu0
      %v2628 = vpop.f32.mrb[0].mxu0
      %v2629 = vadd.f32 0.0, %v2628
      %v2630 = vpop.f32.mrb[0].mxu0
      %2631 = vmatprep.mubr.bf16.mxu0 0
      %2632 = vmatmul.mubr.bf16.gmra.mrb[0].mxu0 %v2488
      %v2633 = vpop.f32.mrb[0].mxu0
      %v2634 = vadd.f32 0.0, %v2633
      %v2635 = vpop.f32.mrb[0].mxu0
      %v2636 = vpop.f32.mrb[0].mxu0
      %v2637 = vadd.f32 0.0, %v2636
      %v2638 = vpop.f32.mrb[0].mxu0
      %2639 = vmatprep.mubr.bf16.mxu0 0
      %2640 = vmatmul.mubr.bf16.gmra.mrb[0].mxu0 %v2489
      %v2641 = vpop.f32.mrb[0].mxu0
      %v2642 = vadd.f32 0.0, %v2641
      %v2643 = vpop.f32.mrb[0].mxu0
      %v2644 = vpop.f32.mrb[0].mxu0
      %v2645 = vadd.f32 0.0, %v2644
      %v2646 = vpop.f32.mrb[0].mxu0
      %2647 = vmatprep.mubr.bf16.mxu0 0
      %2648 = vmatmul.mubr.bf16.gmra.mrb[0].mxu0 %v2490
      %v2649 = vpop.f32.mrb[0].mxu0
      %v2650 = vadd.f32 0.0, %v2649
      %v2651 = vpop.f32.mrb[0].mxu0
      %v2652 = vpop.f32.mrb[0].mxu0
      %v2653 = vadd.f32 0.0, %v2652
      %v2654 = vpop.f32.mrb[0].mxu0
      %2655 = vmatprep.mubr.bf16.mxu0 0
      %2656 = vmatmul.mubr.bf16.gmra.mrb[0].mxu0 %v2491
      %v2657 = vpop.f32.mrb[0].mxu0
      %v2658 = vadd.f32 0.0, %v2657
      %v2659 = vpop.f32.mrb[0].mxu0
      %v2660 = vpop.f32.mrb[0].mxu0
      %v2661 = vadd.f32 0.0, %v2660
      %v2662 = vpop.f32.mrb[0].mxu0
      %2663 = vmatprep.mubr.bf16.mxu0 0
      %2664 = vmatmul.mubr.bf16.gmra.mrb[0].mxu0 %v2492
      %v2665 = vpop.f32.mrb[0].mxu0
      %v2666 = vadd.f32 0.0, %v2665
      %v2667 = vpop.f32.mrb[0].mxu0
      %v2668 = vpop.f32.mrb[0].mxu0
      %v2669 = vadd.f32 0.0, %v2668
      %v2670 = vpop.f32.mrb[0].mxu0
      %2671 = vmatprep.mubr.bf16.mxu0 0
      %2672 = vmatmul.mubr.bf16.gmra.mrb[0].mxu0 %v2493
      %v2673 = vpop.f32.mrb[0].mxu0
      %v2674 = vadd.f32 0.0, %v2673
      %v2675 = vpop.f32.mrb[0].mxu0
      %v2676 = vpop.f32.mrb[0].mxu0
      %v2677 = vadd.f32 0.0, %v2676
      %v2678 = vpop.f32.mrb[0].mxu0
      %2679 = vmatprep.mubr.bf16.mxu0 0
      %2680 = vmatmul.mubr.bf16.gmra.mrb[0].mxu0 %v2494
      %v2681 = vpop.f32.mrb[0].mxu0
      %v2682 = vadd.f32 0.0, %v2681
      %v2683 = vpop.f32.mrb[0].mxu0
      %v2684 = vpop.f32.mrb[0].mxu0
      %v2685 = vadd.f32 0.0, %v2684
      %v2686 = vpop.f32.mrb[0].mxu0
      %2687 = vmatprep.mubr.bf16.mxu0 0
      %2688 = vmatmul.mubr.bf16.gmra.mrb[0].mxu0 %v2495
      %v2689 = vpop.f32.mrb[0].mxu0
      %v2690 = vadd.f32 0.0, %v2689
      %v2691 = vpop.f32.mrb[0].mxu0
      %v2692 = vpop.f32.mrb[0].mxu0
      %v2693 = vadd.f32 0.0, %v2692
      %v2694 = vpop.f32.mrb[0].mxu0
      %2695 = vmatprep.mubr.bf16.mxu0 0
      %2696 = vmatmul.mubr.bf16.gmra.mrb[0].mxu0 %v2496
      %v2697 = vpop.f32.mrb[0].mxu0
      %v2698 = vadd.f32 0.0, %v2697
      %v2699 = vpop.f32.mrb[0].mxu0
      %v2700 = vpop.f32.mrb[0].mxu0
      %v2701 = vadd.f32 0.0, %v2700
      %v2702 = vpop.f32.mrb[0].mxu0
      %2703 = vmatprep.mubr.bf16.mxu0 0
      %2704 = vmatmul.mubr.bf16.gmra.mrb[0].mxu0 %v2497
      %v2705 = vpop.f32.mrb[0].mxu0
      %v2706 = vadd.f32 0.0, %v2705
      %v2707 = vpop.f32.mrb[0].mxu0
      %v2708 = vpop.f32.mrb[0].mxu0
      %v2709 = vadd.f32 0.0, %v2708
      %v2710 = vpop.f32.mrb[0].mxu0
      %2711 = vmatprep.mubr.bf16.mxu0 0
      %2712 = vmatmul.mubr.bf16.gmra.mrb[0].mxu0 %v2498
      %v2713 = vpop.f32.mrb[0].mxu0
      %v2714 = vadd.f32 0.0, %v2713
      %v2715 = vpop.f32.mrb[0].mxu0
      %v2716 = vpop.f32.mrb[0].mxu0
      %v2717 = vadd.f32 0.0, %v2716
      %v2718 = vpop.f32.mrb[0].mxu0
      %2719 = vmatprep.mubr.bf16.mxu0 0
      %2720 = vmatmul.mubr.bf16.gmra.mrb[0].mxu0 %v2499
      %v2721 = vpop.f32.mrb[0].mxu0
      %v2722 = vadd.f32 0.0, %v2721
      %v2723 = vpop.f32.mrb[0].mxu0
      %v2724 = vpop.f32.mrb[0].mxu0
      %v2725 = vadd.f32 0.0, %v2724
      %v2726 = vpop.f32.mrb[0].mxu0
      %2727 = vmatprep.mubr.bf16.mxu0 0
      %2728 = vmatmul.mubr.bf16.gmra.mrb[0].mxu0 %v2500
      %v2729 = vpop.f32.mrb[0].mxu0
      %v2730 = vadd.f32 0.0, %v2729
      %v2731 = vpop.f32.mrb[0].mxu0
      %v2732 = vpop.f32.mrb[0].mxu0
      %v2733 = vadd.f32 0.0, %v2732
      %v2734 = vpop.f32.mrb[0].mxu0
      %2735 = vmatprep.mubr.bf16.mxu0 0
      %2736 = vmatmul.mubr.bf16.gmra.mrb[0].mxu0 %v2501
      %v2737 = vpop.f32.mrb[0].mxu0
      %v2738 = vadd.f32 0.0, %v2737
      %v2739 = vpop.f32.mrb[0].mxu0
      %v2740 = vpop.f32.mrb[0].mxu0
      %v2741 = vadd.f32 0.0, %v2740
      %v2742 = vpop.f32.mrb[0].mxu0
      %2743 = vdwg.mxu0
      %v2744 = vld [vmem:[#allocation3] sm:$0xff]
      %v2745 = vld [vmem:[#allocation3 + $0x8] sm:$0xff]
      %v2746 = vld [vmem:[#allocation3 + $0x10] sm:$0xff]
      %v2747 = vld [vmem:[#allocation3 + $0x18] sm:$0xff]
      %v2748 = vld [vmem:[#allocation3 + $0x20] sm:$0xff]
      %v2749 = vld [vmem:[#allocation3 + $0x28] sm:$0xff]
      %v2750 = vld [vmem:[#allocation3 + $0x30] sm:$0xff]
      %v2751 = vld [vmem:[#allocation3 + $0x38] sm:$0xff]
      %v2752 = vld [vmem:[#allocation3 + $0x40] sm:$0xff]
      %v2753 = vld [vmem:[#allocation3 + $0x48] sm:$0xff]
      %v2754 = vld [vmem:[#allocation3 + $0x50] sm:$0xff]
      %v2755 = vld [vmem:[#allocation3 + $0x58] sm:$0xff]
      %v2756 = vld [vmem:[#allocation3 + $0x60] sm:$0xff]
      %v2757 = vld [vmem:[#allocation3 + $0x68] sm:$0xff]
      %v2758 = vld [vmem:[#allocation3 + $0x70] sm:$0xff]
      %v2759 = vld [vmem:[#allocation3 + $0x78] sm:$0xff]
      %v2760 = vld [vmem:[#allocation3 + $0x80] sm:$0xff]
      %v2761 = vld [vmem:[#allocation3 + $0x88] sm:$0xff]
      %v2762 = vld [vmem:[#allocation3 + $0x90] sm:$0xff]
      %v2763 = vld [vmem:[#allocation3 + $0x98] sm:$0xff]
      %v2764 = vld [vmem:[#allocation3 + $0xa0] sm:$0xff]
      %v2765 = vld [vmem:[#allocation3 + $0xa8] sm:$0xff]
      %v2766 = vld [vmem:[#allocation3 + $0xb0] sm:$0xff]
      %v2767 = vld [vmem:[#allocation3 + $0xb8] sm:$0xff]
      %v2768 = vld [vmem:[#allocation3 + $0xc0] sm:$0xff]
      %v2769 = vld [vmem:[#allocation3 + $0xc8] sm:$0xff]
      %v2770 = vld [vmem:[#allocation3 + $0xd0] sm:$0xff]
      %v2771 = vld [vmem:[#allocation3 + $0xd8] sm:$0xff]
      %v2772 = vld [vmem:[#allocation3 + $0xe0] sm:$0xff]
      %v2773 = vld [vmem:[#allocation3 + $0xe8] sm:$0xff]
      %v2774 = vld [vmem:[#allocation3 + $0xf0] sm:$0xff]
      %v2775 = vld [vmem:[#allocation3 + $0xf8] sm:$0xff]
      %v2776 = vld [vmem:[#allocation3 + $0x100] sm:$0xff]
      %v2777 = vld [vmem:[#allocation3 + $0x108] sm:$0xff]
      %v2778 = vld [vmem:[#allocation3 + $0x110] sm:$0xff]
      %v2779 = vld [vmem:[#allocation3 + $0x118] sm:$0xff]
      %v2780 = vadd.f32 %v2744, %v2602
      %v2781 = vadd.f32 %v2745, %v2605
      %v2782 = vadd.f32 %v2746, %v2610
      %v2783 = vadd.f32 %v2747, %v2613
      %v2784 = vadd.f32 %v2748, %v2618
      %v2785 = vadd.f32 %v2749, %v2621
      %v2786 = vadd.f32 %v2750, %v2626
      %v2787 = vadd.f32 %v2751, %v2629
      %v2788 = vadd.f32 %v2752, %v2634
      %v2789 = vadd.f32 %v2753, %v2637
      %v2790 = vadd.f32 %v2754, %v2642
      %v2791 = vadd.f32 %v2755, %v2645
      %v2792 = vadd.f32 %v2756, %v2650
      %v2793 = vadd.f32 %v2757, %v2653
      %v2794 = vadd.f32 %v2758, %v2658
      %v2795 = vadd.f32 %v2759, %v2661
      %v2796 = vadd.f32 %v2760, %v2666
      %v2797 = vadd.f32 %v2761, %v2669
      %v2798 = vadd.f32 %v2762, %v2674
      %v2799 = vadd.f32 %v2763, %v2677
      %v2800 = vadd.f32 %v2764, %v2682
      %v2801 = vadd.f32 %v2765, %v2685
      %v2802 = vadd.f32 %v2766, %v2690
      %v2803 = vadd.f32 %v2767, %v2693
      %v2804 = vadd.f32 %v2768, %v2698
      %v2805 = vadd.f32 %v2769, %v2701
      %v2806 = vadd.f32 %v2770, %v2706
      %v2807 = vadd.f32 %v2771, %v2709
      %v2808 = vadd.f32 %v2772, %v2714
      %v2809 = vadd.f32 %v2773, %v2717
      %v2810 = vadd.f32 %v2774, %v2722
      %v2811 = vadd.f32 %v2775, %v2725
      %v2812 = vadd.f32 %v2776, %v2730
      %v2813 = vadd.f32 %v2777, %v2733
      %v2814 = vadd.f32 %v2778, %v2738
      %v2815 = vadd.f32 %v2779, %v2741
      %2816 = vst [vmem:[#allocation3] sm:$0xff] %v2780
      %2817 = vst [vmem:[#allocation3 + $0x8] sm:$0xff] %v2781
      %2818 = vst [vmem:[#allocation3 + $0x10] sm:$0xff] %v2782
      %2819 = vst [vmem:[#allocation3 + $0x18] sm:$0xff] %v2783
      %2820 = vst [vmem:[#allocation3 + $0x20] sm:$0xff] %v2784
      %2821 = vst [vmem:[#allocation3 + $0x28] sm:$0xff] %v2785
      %2822 = vst [vmem:[#allocation3 + $0x30] sm:$0xff] %v2786
      %2823 = vst [vmem:[#allocation3 + $0x38] sm:$0xff] %v2787
      %2824 = vst [vmem:[#allocation3 + $0x40] sm:$0xff] %v2788
      %2825 = vst [vmem:[#allocation3 + $0x48] sm:$0xff] %v2789
      %2826 = vst [vmem:[#allocation3 + $0x50] sm:$0xff] %v2790
      %2827 = vst [vmem:[#allocation3 + $0x58] sm:$0xff] %v2791
      %2828 = vst [vmem:[#allocation3 + $0x60] sm:$0xff] %v2792
      %2829 = vst [vmem:[#allocation3 + $0x68] sm:$0xff] %v2793
      %2830 = vst [vmem:[#allocation3 + $0x70] sm:$0xff] %v2794
      %2831 = vst [vmem:[#allocation3 + $0x78] sm:$0xff] %v2795
      %2832 = vst [vmem:[#allocation3 + $0x80] sm:$0xff] %v2796
      %2833 = vst [vmem:[#allocation3 + $0x88] sm:$0xff] %v2797
      %2834 = vst [vmem:[#allocation3 + $0x90] sm:$0xff] %v2798
      %2835 = vst [vmem:[#allocation3 + $0x98] sm:$0xff] %v2799
      %2836 = vst [vmem:[#allocation3 + $0xa0] sm:$0xff] %v2800
      %2837 = vst [vmem:[#allocation3 + $0xa8] sm:$0xff] %v2801
      %2838 = vst [vmem:[#allocation3 + $0xb0] sm:$0xff] %v2802
      %2839 = vst [vmem:[#allocation3 + $0xb8] sm:$0xff] %v2803
      %2840 = vst [vmem:[#allocation3 + $0xc0] sm:$0xff] %v2804
      %2841 = vst [vmem:[#allocation3 + $0xc8] sm:$0xff] %v2805
      %2842 = vst [vmem:[#allocation3 + $0xd0] sm:$0xff] %v2806
      %2843 = vst [vmem:[#allocation3 + $0xd8] sm:$0xff] %v2807
      %2844 = vst [vmem:[#allocation3 + $0xe0] sm:$0xff] %v2808
      %2845 = vst [vmem:[#allocation3 + $0xe8] sm:$0xff] %v2809
      %2846 = vst [vmem:[#allocation3 + $0xf0] sm:$0xff] %v2810
      %2847 = vst [vmem:[#allocation3 + $0xf8] sm:$0xff] %v2811
      %2848 = vst [vmem:[#allocation3 + $0x100] sm:$0xff] %v2812
      %2849 = vst [vmem:[#allocation3 + $0x108] sm:$0xff] %v2813
      %2850 = vst [vmem:[#allocation3 + $0x110] sm:$0xff] %v2814
      %2851 = vst [vmem:[#allocation3 + $0x118] sm:$0xff] %v2815
      %v2852 = vld [vmem:[#allocation2 + $0x14] sm:$0xff]
      %v2853 = vld [vmem:[#allocation2 + $0x1c] sm:$0xff]
      %v2854 = vld [vmem:[#allocation2 + $0x24] sm:$0xff]
      %v2855 = vld [vmem:[#allocation2 + $0x2c] sm:$0xff]
      %v2856 = vld [vmem:[#allocation2 + $0x34] sm:$0xff]
      %v2857 = vld [vmem:[#allocation2 + $0x3c] sm:$0xff]
      %v2858 = vld [vmem:[#allocation2 + $0x44] sm:$0xff]
      %v2859 = vld [vmem:[#allocation2 + $0x4c] sm:$0xff]
      %v2860 = vld [vmem:[#allocation2 + $0x54] sm:$0xff]
      %v2861 = vld [vmem:[#allocation2 + $0x5c] sm:$0xff]
      %v2862 = vld [vmem:[#allocation2 + $0x64] sm:$0xff]
      %v2863 = vld [vmem:[#allocation2 + $0x6c] sm:$0xff]
      %v2864 = vld [vmem:[#allocation2 + $0x74] sm:$0xff]
      %v2865 = vld [vmem:[#allocation2 + $0x7c] sm:$0xff]
      %v2866 = vld [vmem:[#allocation2 + $0x84] sm:$0xff]
      %v2867 = vld [vmem:[#allocation2 + $0x8c] sm:$0xff]
      %v2868 = vld [vmem:[#allocation2 + $0x94] sm:$0xff]
      %v2869 = vld [vmem:[#allocation2 + $0x9c] sm:$0xff]
      %v2870 = vld [vmem:[#allocation2 + $0xa4] sm:$0xff]
      %v2871 = vld [vmem:[#allocation2 + $0xac] sm:$0xff]
      %v2872 = vld [vmem:[#allocation2 + $0xb4] sm:$0xff]
      %v2873 = vld [vmem:[#allocation2 + $0xbc] sm:$0xff]
      %v2874 = vld [vmem:[#allocation2 + $0xc4] sm:$0xff]
      %v2875 = vld [vmem:[#allocation2 + $0xcc] sm:$0xff]
      %v2876 = vld [vmem:[#allocation2 + $0xd4] sm:$0xff]
      %v2877 = vld [vmem:[#allocation2 + $0xdc] sm:$0xff]
      %v2878 = vld [vmem:[#allocation2 + $0xe4] sm:$0xff]
      %v2879 = vld [vmem:[#allocation2 + $0xec] sm:$0xff]
      %v2880 = vld [vmem:[#allocation2 + $0xf4] sm:$0xff]
      %v2881 = vld [vmem:[#allocation2 + $0xfc] sm:$0xff]
      %v2882 = vld [vmem:[#allocation2 + $0x104] sm:$0xff]
      %v2883 = vld [vmem:[#allocation2 + $0x10c] sm:$0xff]
      %v2884 = vld [vmem:[#allocation2 + $0x114] sm:$0xff]
      %v2885 = vld [vmem:[#allocation2 + $0x11c] sm:$0xff]
      %v2886 = vld [vmem:[#allocation2 + $0x124] sm:$0xff]
      %v2887 = vld [vmem:[#allocation2 + $0x12c] sm:$0xff]
      %v2888 = vpack.c.bf16 %v2853, %v2852
      %v2889 = vpack.c.bf16 %v2855, %v2854
      %v2890 = vpack.c.bf16 %v2857, %v2856
      %v2891 = vpack.c.bf16 %v2859, %v2858
      %v2892 = vpack.c.bf16 %v2861, %v2860
      %v2893 = vpack.c.bf16 %v2863, %v2862
      %v2894 = vpack.c.bf16 %v2865, %v2864
      %v2895 = vpack.c.bf16 %v2867, %v2866
      %v2896 = vpack.c.bf16 %v2869, %v2868
      %v2897 = vpack.c.bf16 %v2871, %v2870
      %v2898 = vpack.c.bf16 %v2873, %v2872
      %v2899 = vpack.c.bf16 %v2875, %v2874
      %v2900 = vpack.c.bf16 %v2877, %v2876
      %v2901 = vpack.c.bf16 %v2879, %v2878
      %v2902 = vpack.c.bf16 %v2881, %v2880
      %v2903 = vpack.c.bf16 %v2883, %v2882
      %v2904 = vpack.c.bf16 %v2885, %v2884
      %v2905 = vpack.c.bf16 %v2887, %v2886
      %s2906 = scalar_lea.vmem %s1, 320
      %v2907 = vld [vmem:[%s2906] sm:$0xf]
      %v2908 = vld [vmem:[%s2906 + $0x4] sm:$0xf]
      %v2909 = vld [vmem:[%s2906 + $0x8] sm:$0xf]
      %v2910 = vld [vmem:[%s2906 + $0xc] sm:$0xf]
      %v2911 = vld [vmem:[%s2906 + $0x10] sm:$0xf]
      %v2912 = vld [vmem:[%s2906 + $0x14] sm:$0xf]
      %v2913 = vld [vmem:[%s2906 + $0x18] sm:$0xf]
      %v2914 = vld [vmem:[%s2906 + $0x1c] sm:$0xf]
      %v2915 = vld [vmem:[%s2906 + $0x20] sm:$0xf]
      %v2916 = vld [vmem:[%s2906 + $0x24] sm:$0xf]
      %v2917 = vld [vmem:[%s2906 + $0x28] sm:$0xf]
      %v2918 = vld [vmem:[%s2906 + $0x2c] sm:$0xf]
      %v2919 = vld [vmem:[%s2906 + $0x30] sm:$0xf]
      %v2920 = vld [vmem:[%s2906 + $0x34] sm:$0xf]
      %v2921 = vld [vmem:[%s2906 + $0x38] sm:$0xf]
      %v2922 = vld [vmem:[%s2906 + $0x3c] sm:$0xf]
      %v2939 = vunpack.c.l.b16 %v2907
      %v2940 = vunpack.c.l.b16 %v2908
      %v2941 = vunpack.c.l.b16 %v2909
      %v2942 = vunpack.c.l.b16 %v2910
      %v2943 = vunpack.c.l.b16 %v2911
      %v2944 = vunpack.c.l.b16 %v2912
      %v2945 = vunpack.c.l.b16 %v2913
      %v2946 = vunpack.c.l.b16 %v2914
      %v2947 = vunpack.c.l.b16 %v2915
      %v2948 = vunpack.c.l.b16 %v2916
      %v2949 = vunpack.c.l.b16 %v2917
      %v2950 = vunpack.c.l.b16 %v2918
      %v2951 = vunpack.c.l.b16 %v2919
      %v2952 = vunpack.c.l.b16 %v2920
      %v2953 = vunpack.c.l.b16 %v2921
      %v2954 = vunpack.c.l.b16 %v2922
      %v2955 = vpack.c.b16 %v2940, %v2939
      %v2956 = vpack.c.b16 %v2942, %v2941
      %v2957 = vpack.c.b16 %v2944, %v2943
      %v2958 = vpack.c.b16 %v2946, %v2945
      %v2959 = vpack.c.b16 %v2948, %v2947
      %v2960 = vpack.c.b16 %v2950, %v2949
      %v2961 = vpack.c.b16 %v2952, %v2951
      %v2962 = vpack.c.b16 %v2954, %v2953
      %2971 = vmatprep.subr.bf16.mxu0 0
      %2972 = vmatpush1.bf16.msra.mxu0 %v2955
      %2973 = vmatprep.subr.bf16.mxu0 0
      %2974 = vmatpush1.bf16.msra.mxu0 %v2956
      %2975 = vmatprep.subr.bf16.mxu0 0
      %2976 = vmatpush1.bf16.msra.mxu0 %v2957
      %2977 = vmatprep.subr.bf16.mxu0 0
      %2978 = vmatpush1.bf16.msra.mxu0 %v2958
      %2979 = vmatprep.subr.bf16.mxu0 0
      %2980 = vmatpush1.bf16.msra.mxu0 %v2959
      %2981 = vmatprep.subr.bf16.mxu0 0
      %2982 = vmatpush1.bf16.msra.mxu0 %v2960
      %2983 = vmatprep.subr.bf16.mxu0 0
      %2984 = vmatpush1.bf16.msra.mxu0 %v2961
      %2985 = vmatprep.subr.bf16.mxu0 0
      %2986 = vmatpush1.bf16.msra.mxu0 %v2962
      %2987 = vmatprep.subr.bf16.mxu0 0
      %2988 = vmatpush1.bf16.msra.mxu0 0
      %2989 = vmatprep.subr.bf16.mxu0 0
      %2990 = vmatpush1.bf16.msra.mxu0 0
      %2991 = vmatprep.subr.bf16.mxu0 0
      %2992 = vmatpush1.bf16.msra.mxu0 0
      %2993 = vmatprep.subr.bf16.mxu0 0
      %2994 = vmatpush1.bf16.msra.mxu0 0
      %2995 = vmatprep.subr.bf16.mxu0 0
      %2996 = vmatpush1.bf16.msra.mxu0 0
      %2997 = vmatprep.subr.bf16.mxu0 0
      %2998 = vmatpush1.bf16.msra.mxu0 0
      %2999 = vmatprep.subr.bf16.mxu0 0
      %3000 = vmatpush1.bf16.msra.mxu0 0
      %3001 = vmatprep.subr.bf16.mxu0 0
      %3002 = vmatpush1.bf16.msra.mxu0 0
      %3003 = vmatprep.mubr.bf16.mxu0 0
      %3004 = vmatmul.mubr.bf16.gmra.mrb[0].mxu0 %v2888
      %v3005 = vpop.f32.mrb[0].mxu0
      %v3006 = vadd.f32 0.0, %v3005
      %v3007 = vpop.f32.mrb[0].mxu0
      %v3008 = vpop.f32.mrb[0].mxu0
      %v3009 = vadd.f32 0.0, %v3008
      %v3010 = vpop.f32.mrb[0].mxu0
      %3011 = vmatprep.mubr.bf16.mxu0 0
      %3012 = vmatmul.mubr.bf16.gmra.mrb[0].mxu0 %v2889
      %v3013 = vpop.f32.mrb[0].mxu0
      %v3014 = vadd.f32 0.0, %v3013
      %v3015 = vpop.f32.mrb[0].mxu0
      %v3016 = vpop.f32.mrb[0].mxu0
      %v3017 = vadd.f32 0.0, %v3016
      %v3018 = vpop.f32.mrb[0].mxu0
      %3019 = vmatprep.mubr.bf16.mxu0 0
      %3020 = vmatmul.mubr.bf16.gmra.mrb[0].mxu0 %v2890
      %v3021 = vpop.f32.mrb[0].mxu0
      %v3022 = vadd.f32 0.0, %v3021
      %v3023 = vpop.f32.mrb[0].mxu0
      %v3024 = vpop.f32.mrb[0].mxu0
      %v3025 = vadd.f32 0.0, %v3024
      %v3026 = vpop.f32.mrb[0].mxu0
      %3027 = vmatprep.mubr.bf16.mxu0 0
      %3028 = vmatmul.mubr.bf16.gmra.mrb[0].mxu0 %v2891
      %v3029 = vpop.f32.mrb[0].mxu0
      %v3030 = vadd.f32 0.0, %v3029
      %v3031 = vpop.f32.mrb[0].mxu0
      %v3032 = vpop.f32.mrb[0].mxu0
      %v3033 = vadd.f32 0.0, %v3032
      %v3034 = vpop.f32.mrb[0].mxu0
      %3035 = vmatprep.mubr.bf16.mxu0 0
      %3036 = vmatmul.mubr.bf16.gmra.mrb[0].mxu0 %v2892
      %v3037 = vpop.f32.mrb[0].mxu0
      %v3038 = vadd.f32 0.0, %v3037
      %v3039 = vpop.f32.mrb[0].mxu0
      %v3040 = vpop.f32.mrb[0].mxu0
      %v3041 = vadd.f32 0.0, %v3040
      %v3042 = vpop.f32.mrb[0].mxu0
      %3043 = vmatprep.mubr.bf16.mxu0 0
      %3044 = vmatmul.mubr.bf16.gmra.mrb[0].mxu0 %v2893
      %v3045 = vpop.f32.mrb[0].mxu0
      %v3046 = vadd.f32 0.0, %v3045
      %v3047 = vpop.f32.mrb[0].mxu0
      %v3048 = vpop.f32.mrb[0].mxu0
      %v3049 = vadd.f32 0.0, %v3048
      %v3050 = vpop.f32.mrb[0].mxu0
      %3051 = vmatprep.mubr.bf16.mxu0 0
      %3052 = vmatmul.mubr.bf16.gmra.mrb[0].mxu0 %v2894
      %v3053 = vpop.f32.mrb[0].mxu0
      %v3054 = vadd.f32 0.0, %v3053
      %v3055 = vpop.f32.mrb[0].mxu0
      %v3056 = vpop.f32.mrb[0].mxu0
      %v3057 = vadd.f32 0.0, %v3056
      %v3058 = vpop.f32.mrb[0].mxu0
      %3059 = vmatprep.mubr.bf16.mxu0 0
      %3060 = vmatmul.mubr.bf16.gmra.mrb[0].mxu0 %v2895
      %v3061 = vpop.f32.mrb[0].mxu0
      %v3062 = vadd.f32 0.0, %v3061
      %v3063 = vpop.f32.mrb[0].mxu0
      %v3064 = vpop.f32.mrb[0].mxu0
      %v3065 = vadd.f32 0.0, %v3064
      %v3066 = vpop.f32.mrb[0].mxu0
      %3067 = vmatprep.mubr.bf16.mxu0 0
      %3068 = vmatmul.mubr.bf16.gmra.mrb[0].mxu0 %v2896
      %v3069 = vpop.f32.mrb[0].mxu0
      %v3070 = vadd.f32 0.0, %v3069
      %v3071 = vpop.f32.mrb[0].mxu0
      %v3072 = vpop.f32.mrb[0].mxu0
      %v3073 = vadd.f32 0.0, %v3072
      %v3074 = vpop.f32.mrb[0].mxu0
      %3075 = vmatprep.mubr.bf16.mxu0 0
      %3076 = vmatmul.mubr.bf16.gmra.mrb[0].mxu0 %v2897
      %v3077 = vpop.f32.mrb[0].mxu0
      %v3078 = vadd.f32 0.0, %v3077
      %v3079 = vpop.f32.mrb[0].mxu0
      %v3080 = vpop.f32.mrb[0].mxu0
      %v3081 = vadd.f32 0.0, %v3080
      %v3082 = vpop.f32.mrb[0].mxu0
      %3083 = vmatprep.mubr.bf16.mxu0 0
      %3084 = vmatmul.mubr.bf16.gmra.mrb[0].mxu0 %v2898
      %v3085 = vpop.f32.mrb[0].mxu0
      %v3086 = vadd.f32 0.0, %v3085
      %v3087 = vpop.f32.mrb[0].mxu0
      %v3088 = vpop.f32.mrb[0].mxu0
      %v3089 = vadd.f32 0.0, %v3088
      %v3090 = vpop.f32.mrb[0].mxu0
      %3091 = vmatprep.mubr.bf16.mxu0 0
      %3092 = vmatmul.mubr.bf16.gmra.mrb[0].mxu0 %v2899
      %v3093 = vpop.f32.mrb[0].mxu0
      %v3094 = vadd.f32 0.0, %v3093
      %v3095 = vpop.f32.mrb[0].mxu0
      %v3096 = vpop.f32.mrb[0].mxu0
      %v3097 = vadd.f32 0.0, %v3096
      %v3098 = vpop.f32.mrb[0].mxu0
      %3099 = vmatprep.mubr.bf16.mxu0 0
      %3100 = vmatmul.mubr.bf16.gmra.mrb[0].mxu0 %v2900
      %v3101 = vpop.f32.mrb[0].mxu0
      %v3102 = vadd.f32 0.0, %v3101
      %v3103 = vpop.f32.mrb[0].mxu0
      %v3104 = vpop.f32.mrb[0].mxu0
      %v3105 = vadd.f32 0.0, %v3104
      %v3106 = vpop.f32.mrb[0].mxu0
      %3107 = vmatprep.mubr.bf16.mxu0 0
      %3108 = vmatmul.mubr.bf16.gmra.mrb[0].mxu0 %v2901
      %v3109 = vpop.f32.mrb[0].mxu0
      %v3110 = vadd.f32 0.0, %v3109
      %v3111 = vpop.f32.mrb[0].mxu0
      %v3112 = vpop.f32.mrb[0].mxu0
      %v3113 = vadd.f32 0.0, %v3112
      %v3114 = vpop.f32.mrb[0].mxu0
      %3115 = vmatprep.mubr.bf16.mxu0 0
      %3116 = vmatmul.mubr.bf16.gmra.mrb[0].mxu0 %v2902
      %v3117 = vpop.f32.mrb[0].mxu0
      %v3118 = vadd.f32 0.0, %v3117
      %v3119 = vpop.f32.mrb[0].mxu0
      %v3120 = vpop.f32.mrb[0].mxu0
      %v3121 = vadd.f32 0.0, %v3120
      %v3122 = vpop.f32.mrb[0].mxu0
      %3123 = vmatprep.mubr.bf16.mxu0 0
      %3124 = vmatmul.mubr.bf16.gmra.mrb[0].mxu0 %v2903
      %v3125 = vpop.f32.mrb[0].mxu0
      %v3126 = vadd.f32 0.0, %v3125
      %v3127 = vpop.f32.mrb[0].mxu0
      %v3128 = vpop.f32.mrb[0].mxu0
      %v3129 = vadd.f32 0.0, %v3128
      %v3130 = vpop.f32.mrb[0].mxu0
      %3131 = vmatprep.mubr.bf16.mxu0 0
      %3132 = vmatmul.mubr.bf16.gmra.mrb[0].mxu0 %v2904
      %v3133 = vpop.f32.mrb[0].mxu0
      %v3134 = vadd.f32 0.0, %v3133
      %v3135 = vpop.f32.mrb[0].mxu0
      %v3136 = vpop.f32.mrb[0].mxu0
      %v3137 = vadd.f32 0.0, %v3136
      %v3138 = vpop.f32.mrb[0].mxu0
      %3139 = vmatprep.mubr.bf16.mxu0 0
      %3140 = vmatmul.mubr.bf16.gmra.mrb[0].mxu0 %v2905
      %v3141 = vpop.f32.mrb[0].mxu0
      %v3142 = vadd.f32 0.0, %v3141
      %v3143 = vpop.f32.mrb[0].mxu0
      %v3144 = vpop.f32.mrb[0].mxu0
      %v3145 = vadd.f32 0.0, %v3144
      %v3146 = vpop.f32.mrb[0].mxu0
      %3147 = vdwg.mxu0
      %v3148 = vld [vmem:[#allocation3] sm:$0xff]
      %v3149 = vld [vmem:[#allocation3 + $0x8] sm:$0xff]
      %v3150 = vld [vmem:[#allocation3 + $0x10] sm:$0xff]
      %v3151 = vld [vmem:[#allocation3 + $0x18] sm:$0xff]
      %v3152 = vld [vmem:[#allocation3 + $0x20] sm:$0xff]
      %v3153 = vld [vmem:[#allocation3 + $0x28] sm:$0xff]
      %v3154 = vld [vmem:[#allocation3 + $0x30] sm:$0xff]
      %v3155 = vld [vmem:[#allocation3 + $0x38] sm:$0xff]
      %v3156 = vld [vmem:[#allocation3 + $0x40] sm:$0xff]
      %v3157 = vld [vmem:[#allocation3 + $0x48] sm:$0xff]
      %v3158 = vld [vmem:[#allocation3 + $0x50] sm:$0xff]
      %v3159 = vld [vmem:[#allocation3 + $0x58] sm:$0xff]
      %v3160 = vld [vmem:[#allocation3 + $0x60] sm:$0xff]
      %v3161 = vld [vmem:[#allocation3 + $0x68] sm:$0xff]
      %v3162 = vld [vmem:[#allocation3 + $0x70] sm:$0xff]
      %v3163 = vld [vmem:[#allocation3 + $0x78] sm:$0xff]
      %v3164 = vld [vmem:[#allocation3 + $0x80] sm:$0xff]
      %v3165 = vld [vmem:[#allocation3 + $0x88] sm:$0xff]
      %v3166 = vld [vmem:[#allocation3 + $0x90] sm:$0xff]
      %v3167 = vld [vmem:[#allocation3 + $0x98] sm:$0xff]
      %v3168 = vld [vmem:[#allocation3 + $0xa0] sm:$0xff]
      %v3169 = vld [vmem:[#allocation3 + $0xa8] sm:$0xff]
      %v3170 = vld [vmem:[#allocation3 + $0xb0] sm:$0xff]
      %v3171 = vld [vmem:[#allocation3 + $0xb8] sm:$0xff]
      %v3172 = vld [vmem:[#allocation3 + $0xc0] sm:$0xff]
      %v3173 = vld [vmem:[#allocation3 + $0xc8] sm:$0xff]
      %v3174 = vld [vmem:[#allocation3 + $0xd0] sm:$0xff]
      %v3175 = vld [vmem:[#allocation3 + $0xd8] sm:$0xff]
      %v3176 = vld [vmem:[#allocation3 + $0xe0] sm:$0xff]
      %v3177 = vld [vmem:[#allocation3 + $0xe8] sm:$0xff]
      %v3178 = vld [vmem:[#allocation3 + $0xf0] sm:$0xff]
      %v3179 = vld [vmem:[#allocation3 + $0xf8] sm:$0xff]
      %v3180 = vld [vmem:[#allocation3 + $0x100] sm:$0xff]
      %v3181 = vld [vmem:[#allocation3 + $0x108] sm:$0xff]
      %v3182 = vld [vmem:[#allocation3 + $0x110] sm:$0xff]
      %v3183 = vld [vmem:[#allocation3 + $0x118] sm:$0xff]
      %v3184 = vadd.f32 %v3148, %v3006
      %v3185 = vadd.f32 %v3149, %v3009
      %v3186 = vadd.f32 %v3150, %v3014
      %v3187 = vadd.f32 %v3151, %v3017
      %v3188 = vadd.f32 %v3152, %v3022
      %v3189 = vadd.f32 %v3153, %v3025
      %v3190 = vadd.f32 %v3154, %v3030
      %v3191 = vadd.f32 %v3155, %v3033
      %v3192 = vadd.f32 %v3156, %v3038
      %v3193 = vadd.f32 %v3157, %v3041
      %v3194 = vadd.f32 %v3158, %v3046
      %v3195 = vadd.f32 %v3159, %v3049
      %v3196 = vadd.f32 %v3160, %v3054
      %v3197 = vadd.f32 %v3161, %v3057
      %v3198 = vadd.f32 %v3162, %v3062
      %v3199 = vadd.f32 %v3163, %v3065
      %v3200 = vadd.f32 %v3164, %v3070
      %v3201 = vadd.f32 %v3165, %v3073
      %v3202 = vadd.f32 %v3166, %v3078
      %v3203 = vadd.f32 %v3167, %v3081
      %v3204 = vadd.f32 %v3168, %v3086
      %v3205 = vadd.f32 %v3169, %v3089
      %v3206 = vadd.f32 %v3170, %v3094
      %v3207 = vadd.f32 %v3171, %v3097
      %v3208 = vadd.f32 %v3172, %v3102
      %v3209 = vadd.f32 %v3173, %v3105
      %v3210 = vadd.f32 %v3174, %v3110
      %v3211 = vadd.f32 %v3175, %v3113
      %v3212 = vadd.f32 %v3176, %v3118
      %v3213 = vadd.f32 %v3177, %v3121
      %v3214 = vadd.f32 %v3178, %v3126
      %v3215 = vadd.f32 %v3179, %v3129
      %v3216 = vadd.f32 %v3180, %v3134
      %v3217 = vadd.f32 %v3181, %v3137
      %v3218 = vadd.f32 %v3182, %v3142
      %v3219 = vadd.f32 %v3183, %v3145
      %3220 = vst [vmem:[#allocation3] sm:$0xff] %v3184
      %3221 = vst [vmem:[#allocation3 + $0x8] sm:$0xff] %v3185
      %3222 = vst [vmem:[#allocation3 + $0x10] sm:$0xff] %v3186
      %3223 = vst [vmem:[#allocation3 + $0x18] sm:$0xff] %v3187
      %3224 = vst [vmem:[#allocation3 + $0x20] sm:$0xff] %v3188
      %3225 = vst [vmem:[#allocation3 + $0x28] sm:$0xff] %v3189
      %3226 = vst [vmem:[#allocation3 + $0x30] sm:$0xff] %v3190
      %3227 = vst [vmem:[#allocation3 + $0x38] sm:$0xff] %v3191
      %3228 = vst [vmem:[#allocation3 + $0x40] sm:$0xff] %v3192
      %3229 = vst [vmem:[#allocation3 + $0x48] sm:$0xff] %v3193
      %3230 = vst [vmem:[#allocation3 + $0x50] sm:$0xff] %v3194
      %3231 = vst [vmem:[#allocation3 + $0x58] sm:$0xff] %v3195
      %3232 = vst [vmem:[#allocation3 + $0x60] sm:$0xff] %v3196
      %3233 = vst [vmem:[#allocation3 + $0x68] sm:$0xff] %v3197
      %3234 = vst [vmem:[#allocation3 + $0x70] sm:$0xff] %v3198
      %3235 = vst [vmem:[#allocation3 + $0x78] sm:$0xff] %v3199
      %3236 = vst [vmem:[#allocation3 + $0x80] sm:$0xff] %v3200
      %3237 = vst [vmem:[#allocation3 + $0x88] sm:$0xff] %v3201
      %3238 = vst [vmem:[#allocation3 + $0x90] sm:$0xff] %v3202
      %3239 = vst [vmem:[#allocation3 + $0x98] sm:$0xff] %v3203
      %3240 = vst [vmem:[#allocation3 + $0xa0] sm:$0xff] %v3204
      %3241 = vst [vmem:[#allocation3 + $0xa8] sm:$0xff] %v3205
      %3242 = vst [vmem:[#allocation3 + $0xb0] sm:$0xff] %v3206
      %3243 = vst [vmem:[#allocation3 + $0xb8] sm:$0xff] %v3207
      %3244 = vst [vmem:[#allocation3 + $0xc0] sm:$0xff] %v3208
      %3245 = vst [vmem:[#allocation3 + $0xc8] sm:$0xff] %v3209
      %3246 = vst [vmem:[#allocation3 + $0xd0] sm:$0xff] %v3210
      %3247 = vst [vmem:[#allocation3 + $0xd8] sm:$0xff] %v3211
      %3248 = vst [vmem:[#allocation3 + $0xe0] sm:$0xff] %v3212
      %3249 = vst [vmem:[#allocation3 + $0xe8] sm:$0xff] %v3213
      %3250 = vst [vmem:[#allocation3 + $0xf0] sm:$0xff] %v3214
      %3251 = vst [vmem:[#allocation3 + $0xf8] sm:$0xff] %v3215
      %3252 = vst [vmem:[#allocation3 + $0x100] sm:$0xff] %v3216
      %3253 = vst [vmem:[#allocation3 + $0x108] sm:$0xff] %v3217
      %3254 = vst [vmem:[#allocation3 + $0x110] sm:$0xff] %v3218
      %3255 = vst [vmem:[#allocation3 + $0x118] sm:$0xff] %v3219
      %v3256 = vld [vmem:[#allocation2 + $0x24] sm:$0xff]
      %v3257 = vld [vmem:[#allocation2 + $0x2c] sm:$0xff]
      %v3258 = vld [vmem:[#allocation2 + $0x34] sm:$0xff]
      %v3259 = vld [vmem:[#allocation2 + $0x3c] sm:$0xff]
      %v3260 = vld [vmem:[#allocation2 + $0x44] sm:$0xff]
      %v3261 = vld [vmem:[#allocation2 + $0x4c] sm:$0xff]
      %v3262 = vld [vmem:[#allocation2 + $0x54] sm:$0xff]
      %v3263 = vld [vmem:[#allocation2 + $0x5c] sm:$0xff]
      %v3264 = vld [vmem:[#allocation2 + $0x64] sm:$0xff]
      %v3265 = vld [vmem:[#allocation2 + $0x6c] sm:$0xff]
      %v3266 = vld [vmem:[#allocation2 + $0x74] sm:$0xff]
      %v3267 = vld [vmem:[#allocation2 + $0x7c] sm:$0xff]
      %v3268 = vld [vmem:[#allocation2 + $0x84] sm:$0xff]
      %v3269 = vld [vmem:[#allocation2 + $0x8c] sm:$0xff]
      %v3270 = vld [vmem:[#allocation2 + $0x94] sm:$0xff]
      %v3271 = vld [vmem:[#allocation2 + $0x9c] sm:$0xff]
      %v3272 = vld [vmem:[#allocation2 + $0xa4] sm:$0xff]
      %v3273 = vld [vmem:[#allocation2 + $0xac] sm:$0xff]
      %v3274 = vld [vmem:[#allocation2 + $0xb4] sm:$0xff]
      %v3275 = vld [vmem:[#allocation2 + $0xbc] sm:$0xff]
      %v3276 = vld [vmem:[#allocation2 + $0xc4] sm:$0xff]
      %v3277 = vld [vmem:[#allocation2 + $0xcc] sm:$0xff]
      %v3278 = vld [vmem:[#allocation2 + $0xd4] sm:$0xff]
      %v3279 = vld [vmem:[#allocation2 + $0xdc] sm:$0xff]
      %v3280 = vld [vmem:[#allocation2 + $0xe4] sm:$0xff]
      %v3281 = vld [vmem:[#allocation2 + $0xec] sm:$0xff]
      %v3282 = vld [vmem:[#allocation2 + $0xf4] sm:$0xff]
      %v3283 = vld [vmem:[#allocation2 + $0xfc] sm:$0xff]
      %v3284 = vld [vmem:[#allocation2 + $0x104] sm:$0xff]
      %v3285 = vld [vmem:[#allocation2 + $0x10c] sm:$0xff]
      %v3286 = vld [vmem:[#allocation2 + $0x114] sm:$0xff]
      %v3287 = vld [vmem:[#allocation2 + $0x11c] sm:$0xff]
      %v3288 = vld [vmem:[#allocation2 + $0x124] sm:$0xff]
      %v3289 = vld [vmem:[#allocation2 + $0x12c] sm:$0xff]
      %v3290 = vld [vmem:[#allocation2 + $0x134] sm:$0xff]
      %v3291 = vld [vmem:[#allocation2 + $0x13c] sm:$0xff]
      %v3292 = vpack.c.bf16 %v3257, %v3256
      %v3293 = vpack.c.bf16 %v3259, %v3258
      %v3294 = vpack.c.bf16 %v3261, %v3260
      %v3295 = vpack.c.bf16 %v3263, %v3262
      %v3296 = vpack.c.bf16 %v3265, %v3264
      %v3297 = vpack.c.bf16 %v3267, %v3266
      %v3298 = vpack.c.bf16 %v3269, %v3268
      %v3299 = vpack.c.bf16 %v3271, %v3270
      %v3300 = vpack.c.bf16 %v3273, %v3272
      %v3301 = vpack.c.bf16 %v3275, %v3274
      %v3302 = vpack.c.bf16 %v3277, %v3276
      %v3303 = vpack.c.bf16 %v3279, %v3278
      %v3304 = vpack.c.bf16 %v3281, %v3280
      %v3305 = vpack.c.bf16 %v3283, %v3282
      %v3306 = vpack.c.bf16 %v3285, %v3284
      %v3307 = vpack.c.bf16 %v3287, %v3286
      %v3308 = vpack.c.bf16 %v3289, %v3288
      %v3309 = vpack.c.bf16 %v3291, %v3290
      %s3310 = scalar_lea.vmem %s1, 384
      %v3311 = vld [vmem:[%s3310] sm:$0xf]
      %v3312 = vld [vmem:[%s3310 + $0x4] sm:$0xf]
      %v3313 = vld [vmem:[%s3310 + $0x8] sm:$0xf]
      %v3314 = vld [vmem:[%s3310 + $0xc] sm:$0xf]
      %v3315 = vld [vmem:[%s3310 + $0x10] sm:$0xf]
      %v3316 = vld [vmem:[%s3310 + $0x14] sm:$0xf]
      %v3317 = vld [vmem:[%s3310 + $0x18] sm:$0xf]
      %v3318 = vld [vmem:[%s3310 + $0x1c] sm:$0xf]
      %v3319 = vld [vmem:[%s3310 + $0x20] sm:$0xf]
      %v3320 = vld [vmem:[%s3310 + $0x24] sm:$0xf]
      %v3321 = vld [vmem:[%s3310 + $0x28] sm:$0xf]
      %v3322 = vld [vmem:[%s3310 + $0x2c] sm:$0xf]
      %v3323 = vld [vmem:[%s3310 + $0x30] sm:$0xf]
      %v3324 = vld [vmem:[%s3310 + $0x34] sm:$0xf]
      %v3325 = vld [vmem:[%s3310 + $0x38] sm:$0xf]
      %v3326 = vld [vmem:[%s3310 + $0x3c] sm:$0xf]
      %v3343 = vunpack.c.l.b16 %v3311
      %v3344 = vunpack.c.l.b16 %v3312
      %v3345 = vunpack.c.l.b16 %v3313
      %v3346 = vunpack.c.l.b16 %v3314
      %v3347 = vunpack.c.l.b16 %v3315
      %v3348 = vunpack.c.l.b16 %v3316
      %v3349 = vunpack.c.l.b16 %v3317
      %v3350 = vunpack.c.l.b16 %v3318
      %v3351 = vunpack.c.l.b16 %v3319
      %v3352 = vunpack.c.l.b16 %v3320
      %v3353 = vunpack.c.l.b16 %v3321
      %v3354 = vunpack.c.l.b16 %v3322
      %v3355 = vunpack.c.l.b16 %v3323
      %v3356 = vunpack.c.l.b16 %v3324
      %v3357 = vunpack.c.l.b16 %v3325
      %v3358 = vunpack.c.l.b16 %v3326
      %v3359 = vpack.c.b16 %v3344, %v3343
      %v3360 = vpack.c.b16 %v3346, %v3345
      %v3361 = vpack.c.b16 %v3348, %v3347
      %v3362 = vpack.c.b16 %v3350, %v3349
      %v3363 = vpack.c.b16 %v3352, %v3351
      %v3364 = vpack.c.b16 %v3354, %v3353
      %v3365 = vpack.c.b16 %v3356, %v3355
      %v3366 = vpack.c.b16 %v3358, %v3357
      %3375 = vmatprep.subr.bf16.mxu0 0
      %3376 = vmatpush1.bf16.msra.mxu0 %v3359
      %3377 = vmatprep.subr.bf16.mxu0 0
      %3378 = vmatpush1.bf16.msra.mxu0 %v3360
      %3379 = vmatprep.subr.bf16.mxu0 0
      %3380 = vmatpush1.bf16.msra.mxu0 %v3361
      %3381 = vmatprep.subr.bf16.mxu0 0
      %3382 = vmatpush1.bf16.msra.mxu0 %v3362
      %3383 = vmatprep.subr.bf16.mxu0 0
      %3384 = vmatpush1.bf16.msra.mxu0 %v3363
      %3385 = vmatprep.subr.bf16.mxu0 0
      %3386 = vmatpush1.bf16.msra.mxu0 %v3364
      %3387 = vmatprep.subr.bf16.mxu0 0
      %3388 = vmatpush1.bf16.msra.mxu0 %v3365
      %3389 = vmatprep.subr.bf16.mxu0 0
      %3390 = vmatpush1.bf16.msra.mxu0 %v3366
      %3391 = vmatprep.subr.bf16.mxu0 0
      %3392 = vmatpush1.bf16.msra.mxu0 0
      %3393 = vmatprep.subr.bf16.mxu0 0
      %3394 = vmatpush1.bf16.msra.mxu0 0
      %3395 = vmatprep.subr.bf16.mxu0 0
      %3396 = vmatpush1.bf16.msra.mxu0 0
      %3397 = vmatprep.subr.bf16.mxu0 0
      %3398 = vmatpush1.bf16.msra.mxu0 0
      %3399 = vmatprep.subr.bf16.mxu0 0
      %3400 = vmatpush1.bf16.msra.mxu0 0
      %3401 = vmatprep.subr.bf16.mxu0 0
      %3402 = vmatpush1.bf16.msra.mxu0 0
      %3403 = vmatprep.subr.bf16.mxu0 0
      %3404 = vmatpush1.bf16.msra.mxu0 0
      %3405 = vmatprep.subr.bf16.mxu0 0
      %3406 = vmatpush1.bf16.msra.mxu0 0
      %3407 = vmatprep.mubr.bf16.mxu0 0
      %3408 = vmatmul.mubr.bf16.gmra.mrb[0].mxu0 %v3292
      %v3409 = vpop.f32.mrb[0].mxu0
      %v3410 = vadd.f32 0.0, %v3409
      %v3411 = vpop.f32.mrb[0].mxu0
      %v3412 = vpop.f32.mrb[0].mxu0
      %v3413 = vadd.f32 0.0, %v3412
      %v3414 = vpop.f32.mrb[0].mxu0
      %3415 = vmatprep.mubr.bf16.mxu0 0
      %3416 = vmatmul.mubr.bf16.gmra.mrb[0].mxu0 %v3293
      %v3417 = vpop.f32.mrb[0].mxu0
      %v3418 = vadd.f32 0.0, %v3417
      %v3419 = vpop.f32.mrb[0].mxu0
      %v3420 = vpop.f32.mrb[0].mxu0
      %v3421 = vadd.f32 0.0, %v3420
      %v3422 = vpop.f32.mrb[0].mxu0
      %3423 = vmatprep.mubr.bf16.mxu0 0
      %3424 = vmatmul.mubr.bf16.gmra.mrb[0].mxu0 %v3294
      %v3425 = vpop.f32.mrb[0].mxu0
      %v3426 = vadd.f32 0.0, %v3425
      %v3427 = vpop.f32.mrb[0].mxu0
      %v3428 = vpop.f32.mrb[0].mxu0
      %v3429 = vadd.f32 0.0, %v3428
      %v3430 = vpop.f32.mrb[0].mxu0
      %3431 = vmatprep.mubr.bf16.mxu0 0
      %3432 = vmatmul.mubr.bf16.gmra.mrb[0].mxu0 %v3295
      %v3433 = vpop.f32.mrb[0].mxu0
      %v3434 = vadd.f32 0.0, %v3433
      %v3435 = vpop.f32.mrb[0].mxu0
      %v3436 = vpop.f32.mrb[0].mxu0
      %v3437 = vadd.f32 0.0, %v3436
      %v3438 = vpop.f32.mrb[0].mxu0
      %3439 = vmatprep.mubr.bf16.mxu0 0
      %3440 = vmatmul.mubr.bf16.gmra.mrb[0].mxu0 %v3296
      %v3441 = vpop.f32.mrb[0].mxu0
      %v3442 = vadd.f32 0.0, %v3441
      %v3443 = vpop.f32.mrb[0].mxu0
      %v3444 = vpop.f32.mrb[0].mxu0
      %v3445 = vadd.f32 0.0, %v3444
      %v3446 = vpop.f32.mrb[0].mxu0
      %3447 = vmatprep.mubr.bf16.mxu0 0
      %3448 = vmatmul.mubr.bf16.gmra.mrb[0].mxu0 %v3297
      %v3449 = vpop.f32.mrb[0].mxu0
      %v3450 = vadd.f32 0.0, %v3449
      %v3451 = vpop.f32.mrb[0].mxu0
      %v3452 = vpop.f32.mrb[0].mxu0
      %v3453 = vadd.f32 0.0, %v3452
      %v3454 = vpop.f32.mrb[0].mxu0
      %3455 = vmatprep.mubr.bf16.mxu0 0
      %3456 = vmatmul.mubr.bf16.gmra.mrb[0].mxu0 %v3298
      %v3457 = vpop.f32.mrb[0].mxu0
      %v3458 = vadd.f32 0.0, %v3457
      %v3459 = vpop.f32.mrb[0].mxu0
      %v3460 = vpop.f32.mrb[0].mxu0
      %v3461 = vadd.f32 0.0, %v3460
      %v3462 = vpop.f32.mrb[0].mxu0
      %3463 = vmatprep.mubr.bf16.mxu0 0
      %3464 = vmatmul.mubr.bf16.gmra.mrb[0].mxu0 %v3299
      %v3465 = vpop.f32.mrb[0].mxu0
      %v3466 = vadd.f32 0.0, %v3465
      %v3467 = vpop.f32.mrb[0].mxu0
      %v3468 = vpop.f32.mrb[0].mxu0
      %v3469 = vadd.f32 0.0, %v3468
      %v3470 = vpop.f32.mrb[0].mxu0
      %3471 = vmatprep.mubr.bf16.mxu0 0
      %3472 = vmatmul.mubr.bf16.gmra.mrb[0].mxu0 %v3300
      %v3473 = vpop.f32.mrb[0].mxu0
      %v3474 = vadd.f32 0.0, %v3473
      %v3475 = vpop.f32.mrb[0].mxu0
      %v3476 = vpop.f32.mrb[0].mxu0
      %v3477 = vadd.f32 0.0, %v3476
      %v3478 = vpop.f32.mrb[0].mxu0
      %3479 = vmatprep.mubr.bf16.mxu0 0
      %3480 = vmatmul.mubr.bf16.gmra.mrb[0].mxu0 %v3301
      %v3481 = vpop.f32.mrb[0].mxu0
      %v3482 = vadd.f32 0.0, %v3481
      %v3483 = vpop.f32.mrb[0].mxu0
      %v3484 = vpop.f32.mrb[0].mxu0
      %v3485 = vadd.f32 0.0, %v3484
      %v3486 = vpop.f32.mrb[0].mxu0
      %3487 = vmatprep.mubr.bf16.mxu0 0
      %3488 = vmatmul.mubr.bf16.gmra.mrb[0].mxu0 %v3302
      %v3489 = vpop.f32.mrb[0].mxu0
      %v3490 = vadd.f32 0.0, %v3489
      %v3491 = vpop.f32.mrb[0].mxu0
      %v3492 = vpop.f32.mrb[0].mxu0
      %v3493 = vadd.f32 0.0, %v3492
      %v3494 = vpop.f32.mrb[0].mxu0
      %3495 = vmatprep.mubr.bf16.mxu0 0
      %3496 = vmatmul.mubr.bf16.gmra.mrb[0].mxu0 %v3303
      %v3497 = vpop.f32.mrb[0].mxu0
      %v3498 = vadd.f32 0.0, %v3497
      %v3499 = vpop.f32.mrb[0].mxu0
      %v3500 = vpop.f32.mrb[0].mxu0
      %v3501 = vadd.f32 0.0, %v3500
      %v3502 = vpop.f32.mrb[0].mxu0
      %3503 = vmatprep.mubr.bf16.mxu0 0
      %3504 = vmatmul.mubr.bf16.gmra.mrb[0].mxu0 %v3304
      %v3505 = vpop.f32.mrb[0].mxu0
      %v3506 = vadd.f32 0.0, %v3505
      %v3507 = vpop.f32.mrb[0].mxu0
      %v3508 = vpop.f32.mrb[0].mxu0
      %v3509 = vadd.f32 0.0, %v3508
      %v3510 = vpop.f32.mrb[0].mxu0
      %3511 = vmatprep.mubr.bf16.mxu0 0
      %3512 = vmatmul.mubr.bf16.gmra.mrb[0].mxu0 %v3305
      %v3513 = vpop.f32.mrb[0].mxu0
      %v3514 = vadd.f32 0.0, %v3513
      %v3515 = vpop.f32.mrb[0].mxu0
      %v3516 = vpop.f32.mrb[0].mxu0
      %v3517 = vadd.f32 0.0, %v3516
      %v3518 = vpop.f32.mrb[0].mxu0
      %3519 = vmatprep.mubr.bf16.mxu0 0
      %3520 = vmatmul.mubr.bf16.gmra.mrb[0].mxu0 %v3306
      %v3521 = vpop.f32.mrb[0].mxu0
      %v3522 = vadd.f32 0.0, %v3521
      %v3523 = vpop.f32.mrb[0].mxu0
      %v3524 = vpop.f32.mrb[0].mxu0
      %v3525 = vadd.f32 0.0, %v3524
      %v3526 = vpop.f32.mrb[0].mxu0
      %3527 = vmatprep.mubr.bf16.mxu0 0
      %3528 = vmatmul.mubr.bf16.gmra.mrb[0].mxu0 %v3307
      %v3529 = vpop.f32.mrb[0].mxu0
      %v3530 = vadd.f32 0.0, %v3529
      %v3531 = vpop.f32.mrb[0].mxu0
      %v3532 = vpop.f32.mrb[0].mxu0
      %v3533 = vadd.f32 0.0, %v3532
      %v3534 = vpop.f32.mrb[0].mxu0
      %3535 = vmatprep.mubr.bf16.mxu0 0
      %3536 = vmatmul.mubr.bf16.gmra.mrb[0].mxu0 %v3308
      %v3537 = vpop.f32.mrb[0].mxu0
      %v3538 = vadd.f32 0.0, %v3537
      %v3539 = vpop.f32.mrb[0].mxu0
      %v3540 = vpop.f32.mrb[0].mxu0
      %v3541 = vadd.f32 0.0, %v3540
      %v3542 = vpop.f32.mrb[0].mxu0
      %3543 = vmatprep.mubr.bf16.mxu0 0
      %3544 = vmatmul.mubr.bf16.gmra.mrb[0].mxu0 %v3309
      %v3545 = vpop.f32.mrb[0].mxu0
      %v3546 = vadd.f32 0.0, %v3545
      %v3547 = vpop.f32.mrb[0].mxu0
      %v3548 = vpop.f32.mrb[0].mxu0
      %v3549 = vadd.f32 0.0, %v3548
      %v3550 = vpop.f32.mrb[0].mxu0
      %3551 = vdwg.mxu0
      %v3552 = vld [vmem:[#allocation3] sm:$0xff]
      %v3553 = vld [vmem:[#allocation3 + $0x8] sm:$0xff]
      %v3554 = vld [vmem:[#allocation3 + $0x10] sm:$0xff]
      %v3555 = vld [vmem:[#allocation3 + $0x18] sm:$0xff]
      %v3556 = vld [vmem:[#allocation3 + $0x20] sm:$0xff]
      %v3557 = vld [vmem:[#allocation3 + $0x28] sm:$0xff]
      %v3558 = vld [vmem:[#allocation3 + $0x30] sm:$0xff]
      %v3559 = vld [vmem:[#allocation3 + $0x38] sm:$0xff]
      %v3560 = vld [vmem:[#allocation3 + $0x40] sm:$0xff]
      %v3561 = vld [vmem:[#allocation3 + $0x48] sm:$0xff]
      %v3562 = vld [vmem:[#allocation3 + $0x50] sm:$0xff]
      %v3563 = vld [vmem:[#allocation3 + $0x58] sm:$0xff]
      %v3564 = vld [vmem:[#allocation3 + $0x60] sm:$0xff]
      %v3565 = vld [vmem:[#allocation3 + $0x68] sm:$0xff]
      %v3566 = vld [vmem:[#allocation3 + $0x70] sm:$0xff]
      %v3567 = vld [vmem:[#allocation3 + $0x78] sm:$0xff]
      %v3568 = vld [vmem:[#allocation3 + $0x80] sm:$0xff]
      %v3569 = vld [vmem:[#allocation3 + $0x88] sm:$0xff]
      %v3570 = vld [vmem:[#allocation3 + $0x90] sm:$0xff]
      %v3571 = vld [vmem:[#allocation3 + $0x98] sm:$0xff]
      %v3572 = vld [vmem:[#allocation3 + $0xa0] sm:$0xff]
      %v3573 = vld [vmem:[#allocation3 + $0xa8] sm:$0xff]
      %v3574 = vld [vmem:[#allocation3 + $0xb0] sm:$0xff]
      %v3575 = vld [vmem:[#allocation3 + $0xb8] sm:$0xff]
      %v3576 = vld [vmem:[#allocation3 + $0xc0] sm:$0xff]
      %v3577 = vld [vmem:[#allocation3 + $0xc8] sm:$0xff]
      %v3578 = vld [vmem:[#allocation3 + $0xd0] sm:$0xff]
      %v3579 = vld [vmem:[#allocation3 + $0xd8] sm:$0xff]
      %v3580 = vld [vmem:[#allocation3 + $0xe0] sm:$0xff]
      %v3581 = vld [vmem:[#allocation3 + $0xe8] sm:$0xff]
      %v3582 = vld [vmem:[#allocation3 + $0xf0] sm:$0xff]
      %v3583 = vld [vmem:[#allocation3 + $0xf8] sm:$0xff]
      %v3584 = vld [vmem:[#allocation3 + $0x100] sm:$0xff]
      %v3585 = vld [vmem:[#allocation3 + $0x108] sm:$0xff]
      %v3586 = vld [vmem:[#allocation3 + $0x110] sm:$0xff]
      %v3587 = vld [vmem:[#allocation3 + $0x118] sm:$0xff]
      %v3588 = vadd.f32 %v3552, %v3410
      %v3589 = vadd.f32 %v3553, %v3413
      %v3590 = vadd.f32 %v3554, %v3418
      %v3591 = vadd.f32 %v3555, %v3421
      %v3592 = vadd.f32 %v3556, %v3426
      %v3593 = vadd.f32 %v3557, %v3429
      %v3594 = vadd.f32 %v3558, %v3434
      %v3595 = vadd.f32 %v3559, %v3437
      %v3596 = vadd.f32 %v3560, %v3442
      %v3597 = vadd.f32 %v3561, %v3445
      %v3598 = vadd.f32 %v3562, %v3450
      %v3599 = vadd.f32 %v3563, %v3453
      %v3600 = vadd.f32 %v3564, %v3458
      %v3601 = vadd.f32 %v3565, %v3461
      %v3602 = vadd.f32 %v3566, %v3466
      %v3603 = vadd.f32 %v3567, %v3469
      %v3604 = vadd.f32 %v3568, %v3474
      %v3605 = vadd.f32 %v3569, %v3477
      %v3606 = vadd.f32 %v3570, %v3482
      %v3607 = vadd.f32 %v3571, %v3485
      %v3608 = vadd.f32 %v3572, %v3490
      %v3609 = vadd.f32 %v3573, %v3493
      %v3610 = vadd.f32 %v3574, %v3498
      %v3611 = vadd.f32 %v3575, %v3501
      %v3612 = vadd.f32 %v3576, %v3506
      %v3613 = vadd.f32 %v3577, %v3509
      %v3614 = vadd.f32 %v3578, %v3514
      %v3615 = vadd.f32 %v3579, %v3517
      %v3616 = vadd.f32 %v3580, %v3522
      %v3617 = vadd.f32 %v3581, %v3525
      %v3618 = vadd.f32 %v3582, %v3530
      %v3619 = vadd.f32 %v3583, %v3533
      %v3620 = vadd.f32 %v3584, %v3538
      %v3621 = vadd.f32 %v3585, %v3541
      %v3622 = vadd.f32 %v3586, %v3546
      %v3623 = vadd.f32 %v3587, %v3549
      %3624 = vst [vmem:[#allocation3] sm:$0xff] %v3588
      %3625 = vst [vmem:[#allocation3 + $0x8] sm:$0xff] %v3589
      %3626 = vst [vmem:[#allocation3 + $0x10] sm:$0xff] %v3590
      %3627 = vst [vmem:[#allocation3 + $0x18] sm:$0xff] %v3591
      %3628 = vst [vmem:[#allocation3 + $0x20] sm:$0xff] %v3592
      %3629 = vst [vmem:[#allocation3 + $0x28] sm:$0xff] %v3593
      %3630 = vst [vmem:[#allocation3 + $0x30] sm:$0xff] %v3594
      %3631 = vst [vmem:[#allocation3 + $0x38] sm:$0xff] %v3595
      %3632 = vst [vmem:[#allocation3 + $0x40] sm:$0xff] %v3596
      %3633 = vst [vmem:[#allocation3 + $0x48] sm:$0xff] %v3597
      %3634 = vst [vmem:[#allocation3 + $0x50] sm:$0xff] %v3598
      %3635 = vst [vmem:[#allocation3 + $0x58] sm:$0xff] %v3599
      %3636 = vst [vmem:[#allocation3 + $0x60] sm:$0xff] %v3600
      %3637 = vst [vmem:[#allocation3 + $0x68] sm:$0xff] %v3601
      %3638 = vst [vmem:[#allocation3 + $0x70] sm:$0xff] %v3602
      %3639 = vst [vmem:[#allocation3 + $0x78] sm:$0xff] %v3603
      %3640 = vst [vmem:[#allocation3 + $0x80] sm:$0xff] %v3604
      %3641 = vst [vmem:[#allocation3 + $0x88] sm:$0xff] %v3605
      %3642 = vst [vmem:[#allocation3 + $0x90] sm:$0xff] %v3606
      %3643 = vst [vmem:[#allocation3 + $0x98] sm:$0xff] %v3607
      %3644 = vst [vmem:[#allocation3 + $0xa0] sm:$0xff] %v3608
      %3645 = vst [vmem:[#allocation3 + $0xa8] sm:$0xff] %v3609
      %3646 = vst [vmem:[#allocation3 + $0xb0] sm:$0xff] %v3610
      %3647 = vst [vmem:[#allocation3 + $0xb8] sm:$0xff] %v3611
      %3648 = vst [vmem:[#allocation3 + $0xc0] sm:$0xff] %v3612
      %3649 = vst [vmem:[#allocation3 + $0xc8] sm:$0xff] %v3613
      %3650 = vst [vmem:[#allocation3 + $0xd0] sm:$0xff] %v3614
      %3651 = vst [vmem:[#allocation3 + $0xd8] sm:$0xff] %v3615
      %3652 = vst [vmem:[#allocation3 + $0xe0] sm:$0xff] %v3616
      %3653 = vst [vmem:[#allocation3 + $0xe8] sm:$0xff] %v3617
      %3654 = vst [vmem:[#allocation3 + $0xf0] sm:$0xff] %v3618
      %3655 = vst [vmem:[#allocation3 + $0xf8] sm:$0xff] %v3619
      %3656 = vst [vmem:[#allocation3 + $0x100] sm:$0xff] %v3620
      %3657 = vst [vmem:[#allocation3 + $0x108] sm:$0xff] %v3621
      %3658 = vst [vmem:[#allocation3 + $0x110] sm:$0xff] %v3622
      %3659 = vst [vmem:[#allocation3 + $0x118] sm:$0xff] %v3623
      %v3660 = vld [vmem:[#allocation2 + $0x25] sm:$0xff]
      %v3661 = vld [vmem:[#allocation2 + $0x2d] sm:$0xff]
      %v3662 = vld [vmem:[#allocation2 + $0x35] sm:$0xff]
      %v3663 = vld [vmem:[#allocation2 + $0x3d] sm:$0xff]
      %v3664 = vld [vmem:[#allocation2 + $0x45] sm:$0xff]
      %v3665 = vld [vmem:[#allocation2 + $0x4d] sm:$0xff]
      %v3666 = vld [vmem:[#allocation2 + $0x55] sm:$0xff]
      %v3667 = vld [vmem:[#allocation2 + $0x5d] sm:$0xff]
      %v3668 = vld [vmem:[#allocation2 + $0x65] sm:$0xff]
      %v3669 = vld [vmem:[#allocation2 + $0x6d] sm:$0xff]
      %v3670 = vld [vmem:[#allocation2 + $0x75] sm:$0xff]
      %v3671 = vld [vmem:[#allocation2 + $0x7d] sm:$0xff]
      %v3672 = vld [vmem:[#allocation2 + $0x85] sm:$0xff]
      %v3673 = vld [vmem:[#allocation2 + $0x8d] sm:$0xff]
      %v3674 = vld [vmem:[#allocation2 + $0x95] sm:$0xff]
      %v3675 = vld [vmem:[#allocation2 + $0x9d] sm:$0xff]
      %v3676 = vld [vmem:[#allocation2 + $0xa5] sm:$0xff]
      %v3677 = vld [vmem:[#allocation2 + $0xad] sm:$0xff]
      %v3678 = vld [vmem:[#allocation2 + $0xb5] sm:$0xff]
      %v3679 = vld [vmem:[#allocation2 + $0xbd] sm:$0xff]
      %v3680 = vld [vmem:[#allocation2 + $0xc5] sm:$0xff]
      %v3681 = vld [vmem:[#allocation2 + $0xcd] sm:$0xff]
      %v3682 = vld [vmem:[#allocation2 + $0xd5] sm:$0xff]
      %v3683 = vld [vmem:[#allocation2 + $0xdd] sm:$0xff]
      %v3684 = vld [vmem:[#allocation2 + $0xe5] sm:$0xff]
      %v3685 = vld [vmem:[#allocation2 + $0xed] sm:$0xff]
      %v3686 = vld [vmem:[#allocation2 + $0xf5] sm:$0xff]
      %v3687 = vld [vmem:[#allocation2 + $0xfd] sm:$0xff]
      %v3688 = vld [vmem:[#allocation2 + $0x105] sm:$0xff]
      %v3689 = vld [vmem:[#allocation2 + $0x10d] sm:$0xff]
      %v3690 = vld [vmem:[#allocation2 + $0x115] sm:$0xff]
      %v3691 = vld [vmem:[#allocation2 + $0x11d] sm:$0xff]
      %v3692 = vld [vmem:[#allocation2 + $0x125] sm:$0xff]
      %v3693 = vld [vmem:[#allocation2 + $0x12d] sm:$0xff]
      %v3694 = vld [vmem:[#allocation2 + $0x135] sm:$0xff]
      %v3695 = vld [vmem:[#allocation2 + $0x13d] sm:$0xff]
      %v3696 = vpack.c.bf16 %v3661, %v3660
      %v3697 = vpack.c.bf16 %v3663, %v3662
      %v3698 = vpack.c.bf16 %v3665, %v3664
      %v3699 = vpack.c.bf16 %v3667, %v3666
      %v3700 = vpack.c.bf16 %v3669, %v3668
      %v3701 = vpack.c.bf16 %v3671, %v3670
      %v3702 = vpack.c.bf16 %v3673, %v3672
      %v3703 = vpack.c.bf16 %v3675, %v3674
      %v3704 = vpack.c.bf16 %v3677, %v3676
      %v3705 = vpack.c.bf16 %v3679, %v3678
      %v3706 = vpack.c.bf16 %v3681, %v3680
      %v3707 = vpack.c.bf16 %v3683, %v3682
      %v3708 = vpack.c.bf16 %v3685, %v3684
      %v3709 = vpack.c.bf16 %v3687, %v3686
      %v3710 = vpack.c.bf16 %v3689, %v3688
      %v3711 = vpack.c.bf16 %v3691, %v3690
      %v3712 = vpack.c.bf16 %v3693, %v3692
      %v3713 = vpack.c.bf16 %v3695, %v3694
      %s3714 = scalar_lea.vmem %s1, 448
      %v3715 = vld [vmem:[%s3714] sm:$0xf]
      %v3716 = vld [vmem:[%s3714 + $0x4] sm:$0xf]
      %v3717 = vld [vmem:[%s3714 + $0x8] sm:$0xf]
      %v3718 = vld [vmem:[%s3714 + $0xc] sm:$0xf]
      %v3719 = vld [vmem:[%s3714 + $0x10] sm:$0xf]
      %v3720 = vld [vmem:[%s3714 + $0x14] sm:$0xf]
      %v3721 = vld [vmem:[%s3714 + $0x18] sm:$0xf]
      %v3722 = vld [vmem:[%s3714 + $0x1c] sm:$0xf]
      %v3723 = vld [vmem:[%s3714 + $0x20] sm:$0xf]
      %v3724 = vld [vmem:[%s3714 + $0x24] sm:$0xf]
      %v3725 = vld [vmem:[%s3714 + $0x28] sm:$0xf]
      %v3726 = vld [vmem:[%s3714 + $0x2c] sm:$0xf]
      %v3727 = vld [vmem:[%s3714 + $0x30] sm:$0xf]
      %v3728 = vld [vmem:[%s3714 + $0x34] sm:$0xf]
      %v3729 = vld [vmem:[%s3714 + $0x38] sm:$0xf]
      %v3730 = vld [vmem:[%s3714 + $0x3c] sm:$0xf]
      %v3747 = vunpack.c.l.b16 %v3715
      %v3748 = vunpack.c.l.b16 %v3716
      %v3749 = vunpack.c.l.b16 %v3717
      %v3750 = vunpack.c.l.b16 %v3718
      %v3751 = vunpack.c.l.b16 %v3719
      %v3752 = vunpack.c.l.b16 %v3720
      %v3753 = vunpack.c.l.b16 %v3721
      %v3754 = vunpack.c.l.b16 %v3722
      %v3755 = vunpack.c.l.b16 %v3723
      %v3756 = vunpack.c.l.b16 %v3724
      %v3757 = vunpack.c.l.b16 %v3725
      %v3758 = vunpack.c.l.b16 %v3726
      %v3759 = vunpack.c.l.b16 %v3727
      %v3760 = vunpack.c.l.b16 %v3728
      %v3761 = vunpack.c.l.b16 %v3729
      %v3762 = vunpack.c.l.b16 %v3730
      %v3763 = vpack.c.b16 %v3748, %v3747
      %v3764 = vpack.c.b16 %v3750, %v3749
      %v3765 = vpack.c.b16 %v3752, %v3751
      %v3766 = vpack.c.b16 %v3754, %v3753
      %v3767 = vpack.c.b16 %v3756, %v3755
      %v3768 = vpack.c.b16 %v3758, %v3757
      %v3769 = vpack.c.b16 %v3760, %v3759
      %v3770 = vpack.c.b16 %v3762, %v3761
      %3779 = vmatprep.subr.bf16.mxu0 0
      %3780 = vmatpush1.bf16.msra.mxu0 %v3763
      %3781 = vmatprep.subr.bf16.mxu0 0
      %3782 = vmatpush1.bf16.msra.mxu0 %v3764
      %3783 = vmatprep.subr.bf16.mxu0 0
      %3784 = vmatpush1.bf16.msra.mxu0 %v3765
      %3785 = vmatprep.subr.bf16.mxu0 0
      %3786 = vmatpush1.bf16.msra.mxu0 %v3766
      %3787 = vmatprep.subr.bf16.mxu0 0
      %3788 = vmatpush1.bf16.msra.mxu0 %v3767
      %3789 = vmatprep.subr.bf16.mxu0 0
      %3790 = vmatpush1.bf16.msra.mxu0 %v3768
      %3791 = vmatprep.subr.bf16.mxu0 0
      %3792 = vmatpush1.bf16.msra.mxu0 %v3769
      %3793 = vmatprep.subr.bf16.mxu0 0
      %3794 = vmatpush1.bf16.msra.mxu0 %v3770
      %3795 = vmatprep.subr.bf16.mxu0 0
      %3796 = vmatpush1.bf16.msra.mxu0 0
      %3797 = vmatprep.subr.bf16.mxu0 0
      %3798 = vmatpush1.bf16.msra.mxu0 0
      %3799 = vmatprep.subr.bf16.mxu0 0
      %3800 = vmatpush1.bf16.msra.mxu0 0
      %3801 = vmatprep.subr.bf16.mxu0 0
      %3802 = vmatpush1.bf16.msra.mxu0 0
      %3803 = vmatprep.subr.bf16.mxu0 0
      %3804 = vmatpush1.bf16.msra.mxu0 0
      %3805 = vmatprep.subr.bf16.mxu0 0
      %3806 = vmatpush1.bf16.msra.mxu0 0
      %3807 = vmatprep.subr.bf16.mxu0 0
      %3808 = vmatpush1.bf16.msra.mxu0 0
      %3809 = vmatprep.subr.bf16.mxu0 0
      %3810 = vmatpush1.bf16.msra.mxu0 0
      %3811 = vmatprep.mubr.bf16.mxu0 0
      %3812 = vmatmul.mubr.bf16.gmra.mrb[0].mxu0 %v3696
      %v3813 = vpop.f32.mrb[0].mxu0
      %v3814 = vadd.f32 0.0, %v3813
      %v3815 = vpop.f32.mrb[0].mxu0
      %v3816 = vpop.f32.mrb[0].mxu0
      %v3817 = vadd.f32 0.0, %v3816
      %v3818 = vpop.f32.mrb[0].mxu0
      %3819 = vmatprep.mubr.bf16.mxu0 0
      %3820 = vmatmul.mubr.bf16.gmra.mrb[0].mxu0 %v3697
      %v3821 = vpop.f32.mrb[0].mxu0
      %v3822 = vadd.f32 0.0, %v3821
      %v3823 = vpop.f32.mrb[0].mxu0
      %v3824 = vpop.f32.mrb[0].mxu0
      %v3825 = vadd.f32 0.0, %v3824
      %v3826 = vpop.f32.mrb[0].mxu0
      %3827 = vmatprep.mubr.bf16.mxu0 0
      %3828 = vmatmul.mubr.bf16.gmra.mrb[0].mxu0 %v3698
      %v3829 = vpop.f32.mrb[0].mxu0
      %v3830 = vadd.f32 0.0, %v3829
      %v3831 = vpop.f32.mrb[0].mxu0
      %v3832 = vpop.f32.mrb[0].mxu0
      %v3833 = vadd.f32 0.0, %v3832
      %v3834 = vpop.f32.mrb[0].mxu0
      %3835 = vmatprep.mubr.bf16.mxu0 0
      %3836 = vmatmul.mubr.bf16.gmra.mrb[0].mxu0 %v3699
      %v3837 = vpop.f32.mrb[0].mxu0
      %v3838 = vadd.f32 0.0, %v3837
      %v3839 = vpop.f32.mrb[0].mxu0
      %v3840 = vpop.f32.mrb[0].mxu0
      %v3841 = vadd.f32 0.0, %v3840
      %v3842 = vpop.f32.mrb[0].mxu0
      %3843 = vmatprep.mubr.bf16.mxu0 0
      %3844 = vmatmul.mubr.bf16.gmra.mrb[0].mxu0 %v3700
      %v3845 = vpop.f32.mrb[0].mxu0
      %v3846 = vadd.f32 0.0, %v3845
      %v3847 = vpop.f32.mrb[0].mxu0
      %v3848 = vpop.f32.mrb[0].mxu0
      %v3849 = vadd.f32 0.0, %v3848
      %v3850 = vpop.f32.mrb[0].mxu0
      %3851 = vmatprep.mubr.bf16.mxu0 0
      %3852 = vmatmul.mubr.bf16.gmra.mrb[0].mxu0 %v3701
      %v3853 = vpop.f32.mrb[0].mxu0
      %v3854 = vadd.f32 0.0, %v3853
      %v3855 = vpop.f32.mrb[0].mxu0
      %v3856 = vpop.f32.mrb[0].mxu0
      %v3857 = vadd.f32 0.0, %v3856
      %v3858 = vpop.f32.mrb[0].mxu0
      %3859 = vmatprep.mubr.bf16.mxu0 0
      %3860 = vmatmul.mubr.bf16.gmra.mrb[0].mxu0 %v3702
      %v3861 = vpop.f32.mrb[0].mxu0
      %v3862 = vadd.f32 0.0, %v3861
      %v3863 = vpop.f32.mrb[0].mxu0
      %v3864 = vpop.f32.mrb[0].mxu0
      %v3865 = vadd.f32 0.0, %v3864
      %v3866 = vpop.f32.mrb[0].mxu0
      %3867 = vmatprep.mubr.bf16.mxu0 0
      %3868 = vmatmul.mubr.bf16.gmra.mrb[0].mxu0 %v3703
      %v3869 = vpop.f32.mrb[0].mxu0
      %v3870 = vadd.f32 0.0, %v3869
      %v3871 = vpop.f32.mrb[0].mxu0
      %v3872 = vpop.f32.mrb[0].mxu0
      %v3873 = vadd.f32 0.0, %v3872
      %v3874 = vpop.f32.mrb[0].mxu0
      %3875 = vmatprep.mubr.bf16.mxu0 0
      %3876 = vmatmul.mubr.bf16.gmra.mrb[0].mxu0 %v3704
      %v3877 = vpop.f32.mrb[0].mxu0
      %v3878 = vadd.f32 0.0, %v3877
      %v3879 = vpop.f32.mrb[0].mxu0
      %v3880 = vpop.f32.mrb[0].mxu0
      %v3881 = vadd.f32 0.0, %v3880
      %v3882 = vpop.f32.mrb[0].mxu0
      %3883 = vmatprep.mubr.bf16.mxu0 0
      %3884 = vmatmul.mubr.bf16.gmra.mrb[0].mxu0 %v3705
      %v3885 = vpop.f32.mrb[0].mxu0
      %v3886 = vadd.f32 0.0, %v3885
      %v3887 = vpop.f32.mrb[0].mxu0
      %v3888 = vpop.f32.mrb[0].mxu0
      %v3889 = vadd.f32 0.0, %v3888
      %v3890 = vpop.f32.mrb[0].mxu0
      %3891 = vmatprep.mubr.bf16.mxu0 0
      %3892 = vmatmul.mubr.bf16.gmra.mrb[0].mxu0 %v3706
      %v3893 = vpop.f32.mrb[0].mxu0
      %v3894 = vadd.f32 0.0, %v3893
      %v3895 = vpop.f32.mrb[0].mxu0
      %v3896 = vpop.f32.mrb[0].mxu0
      %v3897 = vadd.f32 0.0, %v3896
      %v3898 = vpop.f32.mrb[0].mxu0
      %3899 = vmatprep.mubr.bf16.mxu0 0
      %3900 = vmatmul.mubr.bf16.gmra.mrb[0].mxu0 %v3707
      %v3901 = vpop.f32.mrb[0].mxu0
      %v3902 = vadd.f32 0.0, %v3901
      %v3903 = vpop.f32.mrb[0].mxu0
      %v3904 = vpop.f32.mrb[0].mxu0
      %v3905 = vadd.f32 0.0, %v3904
      %v3906 = vpop.f32.mrb[0].mxu0
      %3907 = vmatprep.mubr.bf16.mxu0 0
      %3908 = vmatmul.mubr.bf16.gmra.mrb[0].mxu0 %v3708
      %v3909 = vpop.f32.mrb[0].mxu0
      %v3910 = vadd.f32 0.0, %v3909
      %v3911 = vpop.f32.mrb[0].mxu0
      %v3912 = vpop.f32.mrb[0].mxu0
      %v3913 = vadd.f32 0.0, %v3912
      %v3914 = vpop.f32.mrb[0].mxu0
      %3915 = vmatprep.mubr.bf16.mxu0 0
      %3916 = vmatmul.mubr.bf16.gmra.mrb[0].mxu0 %v3709
      %v3917 = vpop.f32.mrb[0].mxu0
      %v3918 = vadd.f32 0.0, %v3917
      %v3919 = vpop.f32.mrb[0].mxu0
      %v3920 = vpop.f32.mrb[0].mxu0
      %v3921 = vadd.f32 0.0, %v3920
      %v3922 = vpop.f32.mrb[0].mxu0
      %3923 = vmatprep.mubr.bf16.mxu0 0
      %3924 = vmatmul.mubr.bf16.gmra.mrb[0].mxu0 %v3710
      %v3925 = vpop.f32.mrb[0].mxu0
      %v3926 = vadd.f32 0.0, %v3925
      %v3927 = vpop.f32.mrb[0].mxu0
      %v3928 = vpop.f32.mrb[0].mxu0
      %v3929 = vadd.f32 0.0, %v3928
      %v3930 = vpop.f32.mrb[0].mxu0
      %3931 = vmatprep.mubr.bf16.mxu0 0
      %3932 = vmatmul.mubr.bf16.gmra.mrb[0].mxu0 %v3711
      %v3933 = vpop.f32.mrb[0].mxu0
      %v3934 = vadd.f32 0.0, %v3933
      %v3935 = vpop.f32.mrb[0].mxu0
      %v3936 = vpop.f32.mrb[0].mxu0
      %v3937 = vadd.f32 0.0, %v3936
      %v3938 = vpop.f32.mrb[0].mxu0
      %3939 = vmatprep.mubr.bf16.mxu0 0
      %3940 = vmatmul.mubr.bf16.gmra.mrb[0].mxu0 %v3712
      %v3941 = vpop.f32.mrb[0].mxu0
      %v3942 = vadd.f32 0.0, %v3941
      %v3943 = vpop.f32.mrb[0].mxu0
      %v3944 = vpop.f32.mrb[0].mxu0
      %v3945 = vadd.f32 0.0, %v3944
      %v3946 = vpop.f32.mrb[0].mxu0
      %3947 = vmatprep.mubr.bf16.mxu0 0
      %3948 = vmatmul.mubr.bf16.gmra.mrb[0].mxu0 %v3713
      %v3949 = vpop.f32.mrb[0].mxu0
      %v3950 = vadd.f32 0.0, %v3949
      %v3951 = vpop.f32.mrb[0].mxu0
      %v3952 = vpop.f32.mrb[0].mxu0
      %v3953 = vadd.f32 0.0, %v3952
      %v3954 = vpop.f32.mrb[0].mxu0
      %3955 = vdwg.mxu0
      %v3956 = vld [vmem:[#allocation3] sm:$0xff]
      %v3957 = vld [vmem:[#allocation3 + $0x8] sm:$0xff]
      %v3958 = vld [vmem:[#allocation3 + $0x10] sm:$0xff]
      %v3959 = vld [vmem:[#allocation3 + $0x18] sm:$0xff]
      %v3960 = vld [vmem:[#allocation3 + $0x20] sm:$0xff]
      %v3961 = vld [vmem:[#allocation3 + $0x28] sm:$0xff]
      %v3962 = vld [vmem:[#allocation3 + $0x30] sm:$0xff]
      %v3963 = vld [vmem:[#allocation3 + $0x38] sm:$0xff]
      %v3964 = vld [vmem:[#allocation3 + $0x40] sm:$0xff]
      %v3965 = vld [vmem:[#allocation3 + $0x48] sm:$0xff]
      %v3966 = vld [vmem:[#allocation3 + $0x50] sm:$0xff]
      %v3967 = vld [vmem:[#allocation3 + $0x58] sm:$0xff]
      %v3968 = vld [vmem:[#allocation3 + $0x60] sm:$0xff]
      %v3969 = vld [vmem:[#allocation3 + $0x68] sm:$0xff]
      %v3970 = vld [vmem:[#allocation3 + $0x70] sm:$0xff]
      %v3971 = vld [vmem:[#allocation3 + $0x78] sm:$0xff]
      %v3972 = vld [vmem:[#allocation3 + $0x80] sm:$0xff]
      %v3973 = vld [vmem:[#allocation3 + $0x88] sm:$0xff]
      %v3974 = vld [vmem:[#allocation3 + $0x90] sm:$0xff]
      %v3975 = vld [vmem:[#allocation3 + $0x98] sm:$0xff]
      %v3976 = vld [vmem:[#allocation3 + $0xa0] sm:$0xff]
      %v3977 = vld [vmem:[#allocation3 + $0xa8] sm:$0xff]
      %v3978 = vld [vmem:[#allocation3 + $0xb0] sm:$0xff]
      %v3979 = vld [vmem:[#allocation3 + $0xb8] sm:$0xff]
      %v3980 = vld [vmem:[#allocation3 + $0xc0] sm:$0xff]
      %v3981 = vld [vmem:[#allocation3 + $0xc8] sm:$0xff]
      %v3982 = vld [vmem:[#allocation3 + $0xd0] sm:$0xff]
      %v3983 = vld [vmem:[#allocation3 + $0xd8] sm:$0xff]
      %v3984 = vld [vmem:[#allocation3 + $0xe0] sm:$0xff]
      %v3985 = vld [vmem:[#allocation3 + $0xe8] sm:$0xff]
      %v3986 = vld [vmem:[#allocation3 + $0xf0] sm:$0xff]
      %v3987 = vld [vmem:[#allocation3 + $0xf8] sm:$0xff]
      %v3988 = vld [vmem:[#allocation3 + $0x100] sm:$0xff]
      %v3989 = vld [vmem:[#allocation3 + $0x108] sm:$0xff]
      %v3990 = vld [vmem:[#allocation3 + $0x110] sm:$0xff]
      %v3991 = vld [vmem:[#allocation3 + $0x118] sm:$0xff]
      %v3992 = vadd.f32 %v3956, %v3814
      %v3993 = vadd.f32 %v3957, %v3817
      %v3994 = vadd.f32 %v3958, %v3822
      %v3995 = vadd.f32 %v3959, %v3825
      %v3996 = vadd.f32 %v3960, %v3830
      %v3997 = vadd.f32 %v3961, %v3833
      %v3998 = vadd.f32 %v3962, %v3838
      %v3999 = vadd.f32 %v3963, %v3841
      %v4000 = vadd.f32 %v3964, %v3846
      %v4001 = vadd.f32 %v3965, %v3849
      %v4002 = vadd.f32 %v3966, %v3854
      %v4003 = vadd.f32 %v3967, %v3857
      %v4004 = vadd.f32 %v3968, %v3862
      %v4005 = vadd.f32 %v3969, %v3865
      %v4006 = vadd.f32 %v3970, %v3870
      %v4007 = vadd.f32 %v3971, %v3873
      %v4008 = vadd.f32 %v3972, %v3878
      %v4009 = vadd.f32 %v3973, %v3881
      %v4010 = vadd.f32 %v3974, %v3886
      %v4011 = vadd.f32 %v3975, %v3889
      %v4012 = vadd.f32 %v3976, %v3894
      %v4013 = vadd.f32 %v3977, %v3897
      %v4014 = vadd.f32 %v3978, %v3902
      %v4015 = vadd.f32 %v3979, %v3905
      %v4016 = vadd.f32 %v3980, %v3910
      %v4017 = vadd.f32 %v3981, %v3913
      %v4018 = vadd.f32 %v3982, %v3918
      %v4019 = vadd.f32 %v3983, %v3921
      %v4020 = vadd.f32 %v3984, %v3926
      %v4021 = vadd.f32 %v3985, %v3929
      %v4022 = vadd.f32 %v3986, %v3934
      %v4023 = vadd.f32 %v3987, %v3937
      %v4024 = vadd.f32 %v3988, %v3942
      %v4025 = vadd.f32 %v3989, %v3945
      %v4026 = vadd.f32 %v3990, %v3950
      %v4027 = vadd.f32 %v3991, %v3953
      %4028 = vst [vmem:[#allocation3] sm:$0xff] %v3992
      %4029 = vst [vmem:[#allocation3 + $0x8] sm:$0xff] %v3993
      %4030 = vst [vmem:[#allocation3 + $0x10] sm:$0xff] %v3994
      %4031 = vst [vmem:[#allocation3 + $0x18] sm:$0xff] %v3995
      %4032 = vst [vmem:[#allocation3 + $0x20] sm:$0xff] %v3996
      %4033 = vst [vmem:[#allocation3 + $0x28] sm:$0xff] %v3997
      %4034 = vst [vmem:[#allocation3 + $0x30] sm:$0xff] %v3998
      %4035 = vst [vmem:[#allocation3 + $0x38] sm:$0xff] %v3999
      %4036 = vst [vmem:[#allocation3 + $0x40] sm:$0xff] %v4000
      %4037 = vst [vmem:[#allocation3 + $0x48] sm:$0xff] %v4001
      %4038 = vst [vmem:[#allocation3 + $0x50] sm:$0xff] %v4002
      %4039 = vst [vmem:[#allocation3 + $0x58] sm:$0xff] %v4003
      %4040 = vst [vmem:[#allocation3 + $0x60] sm:$0xff] %v4004
      %4041 = vst [vmem:[#allocation3 + $0x68] sm:$0xff] %v4005
      %4042 = vst [vmem:[#allocation3 + $0x70] sm:$0xff] %v4006
      %4043 = vst [vmem:[#allocation3 + $0x78] sm:$0xff] %v4007
      %4044 = vst [vmem:[#allocation3 + $0x80] sm:$0xff] %v4008
      %4045 = vst [vmem:[#allocation3 + $0x88] sm:$0xff] %v4009
      %4046 = vst [vmem:[#allocation3 + $0x90] sm:$0xff] %v4010
      %4047 = vst [vmem:[#allocation3 + $0x98] sm:$0xff] %v4011
      %4048 = vst [vmem:[#allocation3 + $0xa0] sm:$0xff] %v4012
      %4049 = vst [vmem:[#allocation3 + $0xa8] sm:$0xff] %v4013
      %4050 = vst [vmem:[#allocation3 + $0xb0] sm:$0xff] %v4014
      %4051 = vst [vmem:[#allocation3 + $0xb8] sm:$0xff] %v4015
      %4052 = vst [vmem:[#allocation3 + $0xc0] sm:$0xff] %v4016
      %4053 = vst [vmem:[#allocation3 + $0xc8] sm:$0xff] %v4017
      %4054 = vst [vmem:[#allocation3 + $0xd0] sm:$0xff] %v4018
      %4055 = vst [vmem:[#allocation3 + $0xd8] sm:$0xff] %v4019
      %4056 = vst [vmem:[#allocation3 + $0xe0] sm:$0xff] %v4020
      %4057 = vst [vmem:[#allocation3 + $0xe8] sm:$0xff] %v4021
      %4058 = vst [vmem:[#allocation3 + $0xf0] sm:$0xff] %v4022
      %4059 = vst [vmem:[#allocation3 + $0xf8] sm:$0xff] %v4023
      %4060 = vst [vmem:[#allocation3 + $0x100] sm:$0xff] %v4024
      %4061 = vst [vmem:[#allocation3 + $0x108] sm:$0xff] %v4025
      %4062 = vst [vmem:[#allocation3 + $0x110] sm:$0xff] %v4026
      %4063 = vst [vmem:[#allocation3 + $0x118] sm:$0xff] %v4027
      %v4064 = vld [vmem:[#allocation2 + $0x26] sm:$0xff]
      %v4065 = vld [vmem:[#allocation2 + $0x2e] sm:$0xff]
      %v4066 = vld [vmem:[#allocation2 + $0x36] sm:$0xff]
      %v4067 = vld [vmem:[#allocation2 + $0x3e] sm:$0xff]
      %v4068 = vld [vmem:[#allocation2 + $0x46] sm:$0xff]
      %v4069 = vld [vmem:[#allocation2 + $0x4e] sm:$0xff]
      %v4070 = vld [vmem:[#allocation2 + $0x56] sm:$0xff]
      %v4071 = vld [vmem:[#allocation2 + $0x5e] sm:$0xff]
      %v4072 = vld [vmem:[#allocation2 + $0x66] sm:$0xff]
      %v4073 = vld [vmem:[#allocation2 + $0x6e] sm:$0xff]
      %v4074 = vld [vmem:[#allocation2 + $0x76] sm:$0xff]
      %v4075 = vld [vmem:[#allocation2 + $0x7e] sm:$0xff]
      %v4076 = vld [vmem:[#allocation2 + $0x86] sm:$0xff]
      %v4077 = vld [vmem:[#allocation2 + $0x8e] sm:$0xff]
      %v4078 = vld [vmem:[#allocation2 + $0x96] sm:$0xff]
      %v4079 = vld [vmem:[#allocation2 + $0x9e] sm:$0xff]
      %v4080 = vld [vmem:[#allocation2 + $0xa6] sm:$0xff]
      %v4081 = vld [vmem:[#allocation2 + $0xae] sm:$0xff]
      %v4082 = vld [vmem:[#allocation2 + $0xb6] sm:$0xff]
      %v4083 = vld [vmem:[#allocation2 + $0xbe] sm:$0xff]
      %v4084 = vld [vmem:[#allocation2 + $0xc6] sm:$0xff]
      %v4085 = vld [vmem:[#allocation2 + $0xce] sm:$0xff]
      %v4086 = vld [vmem:[#allocation2 + $0xd6] sm:$0xff]
      %v4087 = vld [vmem:[#allocation2 + $0xde] sm:$0xff]
      %v4088 = vld [vmem:[#allocation2 + $0xe6] sm:$0xff]
      %v4089 = vld [vmem:[#allocation2 + $0xee] sm:$0xff]
      %v4090 = vld [vmem:[#allocation2 + $0xf6] sm:$0xff]
      %v4091 = vld [vmem:[#allocation2 + $0xfe] sm:$0xff]
      %v4092 = vld [vmem:[#allocation2 + $0x106] sm:$0xff]
      %v4093 = vld [vmem:[#allocation2 + $0x10e] sm:$0xff]
      %v4094 = vld [vmem:[#allocation2 + $0x116] sm:$0xff]
      %v4095 = vld [vmem:[#allocation2 + $0x11e] sm:$0xff]
      %v4096 = vld [vmem:[#allocation2 + $0x126] sm:$0xff]
      %v4097 = vld [vmem:[#allocation2 + $0x12e] sm:$0xff]
      %v4098 = vld [vmem:[#allocation2 + $0x136] sm:$0xff]
      %v4099 = vld [vmem:[#allocation2 + $0x13e] sm:$0xff]
      %v4100 = vpack.c.bf16 %v4065, %v4064
      %v4101 = vpack.c.bf16 %v4067, %v4066
      %v4102 = vpack.c.bf16 %v4069, %v4068
      %v4103 = vpack.c.bf16 %v4071, %v4070
      %v4104 = vpack.c.bf16 %v4073, %v4072
      %v4105 = vpack.c.bf16 %v4075, %v4074
      %v4106 = vpack.c.bf16 %v4077, %v4076
      %v4107 = vpack.c.bf16 %v4079, %v4078
      %v4108 = vpack.c.bf16 %v4081, %v4080
      %v4109 = vpack.c.bf16 %v4083, %v4082
      %v4110 = vpack.c.bf16 %v4085, %v4084
      %v4111 = vpack.c.bf16 %v4087, %v4086
      %v4112 = vpack.c.bf16 %v4089, %v4088
      %v4113 = vpack.c.bf16 %v4091, %v4090
      %v4114 = vpack.c.bf16 %v4093, %v4092
      %v4115 = vpack.c.bf16 %v4095, %v4094
      %v4116 = vpack.c.bf16 %v4097, %v4096
      %v4117 = vpack.c.bf16 %v4099, %v4098
      %s4118 = scalar_lea.vmem %s1, 512
      %v4119 = vld [vmem:[%s4118] sm:$0xf]
      %v4120 = vld [vmem:[%s4118 + $0x4] sm:$0xf]
      %v4121 = vld [vmem:[%s4118 + $0x8] sm:$0xf]
      %v4122 = vld [vmem:[%s4118 + $0xc] sm:$0xf]
      %v4123 = vld [vmem:[%s4118 + $0x10] sm:$0xf]
      %v4124 = vld [vmem:[%s4118 + $0x14] sm:$0xf]
      %v4125 = vld [vmem:[%s4118 + $0x18] sm:$0xf]
      %v4126 = vld [vmem:[%s4118 + $0x1c] sm:$0xf]
      %v4127 = vld [vmem:[%s4118 + $0x20] sm:$0xf]
      %v4128 = vld [vmem:[%s4118 + $0x24] sm:$0xf]
      %v4129 = vld [vmem:[%s4118 + $0x28] sm:$0xf]
      %v4130 = vld [vmem:[%s4118 + $0x2c] sm:$0xf]
      %v4131 = vld [vmem:[%s4118 + $0x30] sm:$0xf]
      %v4132 = vld [vmem:[%s4118 + $0x34] sm:$0xf]
      %v4133 = vld [vmem:[%s4118 + $0x38] sm:$0xf]
      %v4134 = vld [vmem:[%s4118 + $0x3c] sm:$0xf]
      %v4151 = vunpack.c.l.b16 %v4119
      %v4152 = vunpack.c.l.b16 %v4120
      %v4153 = vunpack.c.l.b16 %v4121
      %v4154 = vunpack.c.l.b16 %v4122
      %v4155 = vunpack.c.l.b16 %v4123
      %v4156 = vunpack.c.l.b16 %v4124
      %v4157 = vunpack.c.l.b16 %v4125
      %v4158 = vunpack.c.l.b16 %v4126
      %v4159 = vunpack.c.l.b16 %v4127
      %v4160 = vunpack.c.l.b16 %v4128
      %v4161 = vunpack.c.l.b16 %v4129
      %v4162 = vunpack.c.l.b16 %v4130
      %v4163 = vunpack.c.l.b16 %v4131
      %v4164 = vunpack.c.l.b16 %v4132
      %v4165 = vunpack.c.l.b16 %v4133
      %v4166 = vunpack.c.l.b16 %v4134
      %v4167 = vpack.c.b16 %v4152, %v4151
      %v4168 = vpack.c.b16 %v4154, %v4153
      %v4169 = vpack.c.b16 %v4156, %v4155
      %v4170 = vpack.c.b16 %v4158, %v4157
      %v4171 = vpack.c.b16 %v4160, %v4159
      %v4172 = vpack.c.b16 %v4162, %v4161
      %v4173 = vpack.c.b16 %v4164, %v4163
      %v4174 = vpack.c.b16 %v4166, %v4165
      %4183 = vmatprep.subr.bf16.mxu0 0
      %4184 = vmatpush1.bf16.msra.mxu0 %v4167
      %4185 = vmatprep.subr.bf16.mxu0 0
      %4186 = vmatpush1.bf16.msra.mxu0 %v4168
      %4187 = vmatprep.subr.bf16.mxu0 0
      %4188 = vmatpush1.bf16.msra.mxu0 %v4169
      %4189 = vmatprep.subr.bf16.mxu0 0
      %4190 = vmatpush1.bf16.msra.mxu0 %v4170
      %4191 = vmatprep.subr.bf16.mxu0 0
      %4192 = vmatpush1.bf16.msra.mxu0 %v4171
      %4193 = vmatprep.subr.bf16.mxu0 0
      %4194 = vmatpush1.bf16.msra.mxu0 %v4172
      %4195 = vmatprep.subr.bf16.mxu0 0
      %4196 = vmatpush1.bf16.msra.mxu0 %v4173
      %4197 = vmatprep.subr.bf16.mxu0 0
      %4198 = vmatpush1.bf16.msra.mxu0 %v4174
      %4199 = vmatprep.subr.bf16.mxu0 0
      %4200 = vmatpush1.bf16.msra.mxu0 0
      %4201 = vmatprep.subr.bf16.mxu0 0
      %4202 = vmatpush1.bf16.msra.mxu0 0
      %4203 = vmatprep.subr.bf16.mxu0 0
      %4204 = vmatpush1.bf16.msra.mxu0 0
      %4205 = vmatprep.subr.bf16.mxu0 0
      %4206 = vmatpush1.bf16.msra.mxu0 0
      %4207 = vmatprep.subr.bf16.mxu0 0
      %4208 = vmatpush1.bf16.msra.mxu0 0
      %4209 = vmatprep.subr.bf16.mxu0 0
      %4210 = vmatpush1.bf16.msra.mxu0 0
      %4211 = vmatprep.subr.bf16.mxu0 0
      %4212 = vmatpush1.bf16.msra.mxu0 0
      %4213 = vmatprep.subr.bf16.mxu0 0
      %4214 = vmatpush1.bf16.msra.mxu0 0
      %4215 = vmatprep.mubr.bf16.mxu0 0
      %4216 = vmatmul.mubr.bf16.gmra.mrb[0].mxu0 %v4100
      %v4217 = vpop.f32.mrb[0].mxu0
      %v4218 = vadd.f32 0.0, %v4217
      %v4219 = vpop.f32.mrb[0].mxu0
      %v4220 = vpop.f32.mrb[0].mxu0
      %v4221 = vadd.f32 0.0, %v4220
      %v4222 = vpop.f32.mrb[0].mxu0
      %4223 = vmatprep.mubr.bf16.mxu0 0
      %4224 = vmatmul.mubr.bf16.gmra.mrb[0].mxu0 %v4101
      %v4225 = vpop.f32.mrb[0].mxu0
      %v4226 = vadd.f32 0.0, %v4225
      %v4227 = vpop.f32.mrb[0].mxu0
      %v4228 = vpop.f32.mrb[0].mxu0
      %v4229 = vadd.f32 0.0, %v4228
      %v4230 = vpop.f32.mrb[0].mxu0
      %4231 = vmatprep.mubr.bf16.mxu0 0
      %4232 = vmatmul.mubr.bf16.gmra.mrb[0].mxu0 %v4102
      %v4233 = vpop.f32.mrb[0].mxu0
      %v4234 = vadd.f32 0.0, %v4233
      %v4235 = vpop.f32.mrb[0].mxu0
      %v4236 = vpop.f32.mrb[0].mxu0
      %v4237 = vadd.f32 0.0, %v4236
      %v4238 = vpop.f32.mrb[0].mxu0
      %4239 = vmatprep.mubr.bf16.mxu0 0
      %4240 = vmatmul.mubr.bf16.gmra.mrb[0].mxu0 %v4103
      %v4241 = vpop.f32.mrb[0].mxu0
      %v4242 = vadd.f32 0.0, %v4241
      %v4243 = vpop.f32.mrb[0].mxu0
      %v4244 = vpop.f32.mrb[0].mxu0
      %v4245 = vadd.f32 0.0, %v4244
      %v4246 = vpop.f32.mrb[0].mxu0
      %4247 = vmatprep.mubr.bf16.mxu0 0
      %4248 = vmatmul.mubr.bf16.gmra.mrb[0].mxu0 %v4104
      %v4249 = vpop.f32.mrb[0].mxu0
      %v4250 = vadd.f32 0.0, %v4249
      %v4251 = vpop.f32.mrb[0].mxu0
      %v4252 = vpop.f32.mrb[0].mxu0
      %v4253 = vadd.f32 0.0, %v4252
      %v4254 = vpop.f32.mrb[0].mxu0
      %4255 = vmatprep.mubr.bf16.mxu0 0
      %4256 = vmatmul.mubr.bf16.gmra.mrb[0].mxu0 %v4105
      %v4257 = vpop.f32.mrb[0].mxu0
      %v4258 = vadd.f32 0.0, %v4257
      %v4259 = vpop.f32.mrb[0].mxu0
      %v4260 = vpop.f32.mrb[0].mxu0
      %v4261 = vadd.f32 0.0, %v4260
      %v4262 = vpop.f32.mrb[0].mxu0
      %4263 = vmatprep.mubr.bf16.mxu0 0
      %4264 = vmatmul.mubr.bf16.gmra.mrb[0].mxu0 %v4106
      %v4265 = vpop.f32.mrb[0].mxu0
      %v4266 = vadd.f32 0.0, %v4265
      %v4267 = vpop.f32.mrb[0].mxu0
      %v4268 = vpop.f32.mrb[0].mxu0
      %v4269 = vadd.f32 0.0, %v4268
      %v4270 = vpop.f32.mrb[0].mxu0
      %4271 = vmatprep.mubr.bf16.mxu0 0
      %4272 = vmatmul.mubr.bf16.gmra.mrb[0].mxu0 %v4107
      %v4273 = vpop.f32.mrb[0].mxu0
      %v4274 = vadd.f32 0.0, %v4273
      %v4275 = vpop.f32.mrb[0].mxu0
      %v4276 = vpop.f32.mrb[0].mxu0
      %v4277 = vadd.f32 0.0, %v4276
      %v4278 = vpop.f32.mrb[0].mxu0
      %4279 = vmatprep.mubr.bf16.mxu0 0
      %4280 = vmatmul.mubr.bf16.gmra.mrb[0].mxu0 %v4108
      %v4281 = vpop.f32.mrb[0].mxu0
      %v4282 = vadd.f32 0.0, %v4281
      %v4283 = vpop.f32.mrb[0].mxu0
      %v4284 = vpop.f32.mrb[0].mxu0
      %v4285 = vadd.f32 0.0, %v4284
      %v4286 = vpop.f32.mrb[0].mxu0
      %4287 = vmatprep.mubr.bf16.mxu0 0
      %4288 = vmatmul.mubr.bf16.gmra.mrb[0].mxu0 %v4109
      %v4289 = vpop.f32.mrb[0].mxu0
      %v4290 = vadd.f32 0.0, %v4289
      %v4291 = vpop.f32.mrb[0].mxu0
      %v4292 = vpop.f32.mrb[0].mxu0
      %v4293 = vadd.f32 0.0, %v4292
      %v4294 = vpop.f32.mrb[0].mxu0
      %4295 = vmatprep.mubr.bf16.mxu0 0
      %4296 = vmatmul.mubr.bf16.gmra.mrb[0].mxu0 %v4110
      %v4297 = vpop.f32.mrb[0].mxu0
      %v4298 = vadd.f32 0.0, %v4297
      %v4299 = vpop.f32.mrb[0].mxu0
      %v4300 = vpop.f32.mrb[0].mxu0
      %v4301 = vadd.f32 0.0, %v4300
      %v4302 = vpop.f32.mrb[0].mxu0
      %4303 = vmatprep.mubr.bf16.mxu0 0
      %4304 = vmatmul.mubr.bf16.gmra.mrb[0].mxu0 %v4111
      %v4305 = vpop.f32.mrb[0].mxu0
      %v4306 = vadd.f32 0.0, %v4305
      %v4307 = vpop.f32.mrb[0].mxu0
      %v4308 = vpop.f32.mrb[0].mxu0
      %v4309 = vadd.f32 0.0, %v4308
      %v4310 = vpop.f32.mrb[0].mxu0
      %4311 = vmatprep.mubr.bf16.mxu0 0
      %4312 = vmatmul.mubr.bf16.gmra.mrb[0].mxu0 %v4112
      %v4313 = vpop.f32.mrb[0].mxu0
      %v4314 = vadd.f32 0.0, %v4313
      %v4315 = vpop.f32.mrb[0].mxu0
      %v4316 = vpop.f32.mrb[0].mxu0
      %v4317 = vadd.f32 0.0, %v4316
      %v4318 = vpop.f32.mrb[0].mxu0
      %4319 = vmatprep.mubr.bf16.mxu0 0
      %4320 = vmatmul.mubr.bf16.gmra.mrb[0].mxu0 %v4113
      %v4321 = vpop.f32.mrb[0].mxu0
      %v4322 = vadd.f32 0.0, %v4321
      %v4323 = vpop.f32.mrb[0].mxu0
      %v4324 = vpop.f32.mrb[0].mxu0
      %v4325 = vadd.f32 0.0, %v4324
      %v4326 = vpop.f32.mrb[0].mxu0
      %4327 = vmatprep.mubr.bf16.mxu0 0
      %4328 = vmatmul.mubr.bf16.gmra.mrb[0].mxu0 %v4114
      %v4329 = vpop.f32.mrb[0].mxu0
      %v4330 = vadd.f32 0.0, %v4329
      %v4331 = vpop.f32.mrb[0].mxu0
      %v4332 = vpop.f32.mrb[0].mxu0
      %v4333 = vadd.f32 0.0, %v4332
      %v4334 = vpop.f32.mrb[0].mxu0
      %4335 = vmatprep.mubr.bf16.mxu0 0
      %4336 = vmatmul.mubr.bf16.gmra.mrb[0].mxu0 %v4115
      %v4337 = vpop.f32.mrb[0].mxu0
      %v4338 = vadd.f32 0.0, %v4337
      %v4339 = vpop.f32.mrb[0].mxu0
      %v4340 = vpop.f32.mrb[0].mxu0
      %v4341 = vadd.f32 0.0, %v4340
      %v4342 = vpop.f32.mrb[0].mxu0
      %4343 = vmatprep.mubr.bf16.mxu0 0
      %4344 = vmatmul.mubr.bf16.gmra.mrb[0].mxu0 %v4116
      %v4345 = vpop.f32.mrb[0].mxu0
      %v4346 = vadd.f32 0.0, %v4345
      %v4347 = vpop.f32.mrb[0].mxu0
      %v4348 = vpop.f32.mrb[0].mxu0
      %v4349 = vadd.f32 0.0, %v4348
      %v4350 = vpop.f32.mrb[0].mxu0
      %4351 = vmatprep.mubr.bf16.mxu0 0
      %4352 = vmatmul.mubr.bf16.gmra.mrb[0].mxu0 %v4117
      %v4353 = vpop.f32.mrb[0].mxu0
      %v4354 = vadd.f32 0.0, %v4353
      %v4355 = vpop.f32.mrb[0].mxu0
      %v4356 = vpop.f32.mrb[0].mxu0
      %v4357 = vadd.f32 0.0, %v4356
      %v4358 = vpop.f32.mrb[0].mxu0
      %4359 = vdwg.mxu0
      %v4360 = vld [vmem:[#allocation3] sm:$0xff]
      %v4361 = vld [vmem:[#allocation3 + $0x8] sm:$0xff]
      %v4362 = vld [vmem:[#allocation3 + $0x10] sm:$0xff]
      %v4363 = vld [vmem:[#allocation3 + $0x18] sm:$0xff]
      %v4364 = vld [vmem:[#allocation3 + $0x20] sm:$0xff]
      %v4365 = vld [vmem:[#allocation3 + $0x28] sm:$0xff]
      %v4366 = vld [vmem:[#allocation3 + $0x30] sm:$0xff]
      %v4367 = vld [vmem:[#allocation3 + $0x38] sm:$0xff]
      %v4368 = vld [vmem:[#allocation3 + $0x40] sm:$0xff]
      %v4369 = vld [vmem:[#allocation3 + $0x48] sm:$0xff]
      %v4370 = vld [vmem:[#allocation3 + $0x50] sm:$0xff]
      %v4371 = vld [vmem:[#allocation3 + $0x58] sm:$0xff]
      %v4372 = vld [vmem:[#allocation3 + $0x60] sm:$0xff]
      %v4373 = vld [vmem:[#allocation3 + $0x68] sm:$0xff]
      %v4374 = vld [vmem:[#allocation3 + $0x70] sm:$0xff]
      %v4375 = vld [vmem:[#allocation3 + $0x78] sm:$0xff]
      %v4376 = vld [vmem:[#allocation3 + $0x80] sm:$0xff]
      %v4377 = vld [vmem:[#allocation3 + $0x88] sm:$0xff]
      %v4378 = vld [vmem:[#allocation3 + $0x90] sm:$0xff]
      %v4379 = vld [vmem:[#allocation3 + $0x98] sm:$0xff]
      %v4380 = vld [vmem:[#allocation3 + $0xa0] sm:$0xff]
      %v4381 = vld [vmem:[#allocation3 + $0xa8] sm:$0xff]
      %v4382 = vld [vmem:[#allocation3 + $0xb0] sm:$0xff]
      %v4383 = vld [vmem:[#allocation3 + $0xb8] sm:$0xff]
      %v4384 = vld [vmem:[#allocation3 + $0xc0] sm:$0xff]
      %v4385 = vld [vmem:[#allocation3 + $0xc8] sm:$0xff]
      %v4386 = vld [vmem:[#allocation3 + $0xd0] sm:$0xff]
      %v4387 = vld [vmem:[#allocation3 + $0xd8] sm:$0xff]
      %v4388 = vld [vmem:[#allocation3 + $0xe0] sm:$0xff]
      %v4389 = vld [vmem:[#allocation3 + $0xe8] sm:$0xff]
      %v4390 = vld [vmem:[#allocation3 + $0xf0] sm:$0xff]
      %v4391 = vld [vmem:[#allocation3 + $0xf8] sm:$0xff]
      %v4392 = vld [vmem:[#allocation3 + $0x100] sm:$0xff]
      %v4393 = vld [vmem:[#allocation3 + $0x108] sm:$0xff]
      %v4394 = vld [vmem:[#allocation3 + $0x110] sm:$0xff]
      %v4395 = vld [vmem:[#allocation3 + $0x118] sm:$0xff]
      %v4396 = vadd.f32 %v4360, %v4218
      %v4397 = vadd.f32 %v4361, %v4221
      %v4398 = vadd.f32 %v4362, %v4226
      %v4399 = vadd.f32 %v4363, %v4229
      %v4400 = vadd.f32 %v4364, %v4234
      %v4401 = vadd.f32 %v4365, %v4237
      %v4402 = vadd.f32 %v4366, %v4242
      %v4403 = vadd.f32 %v4367, %v4245
      %v4404 = vadd.f32 %v4368, %v4250
      %v4405 = vadd.f32 %v4369, %v4253
      %v4406 = vadd.f32 %v4370, %v4258
      %v4407 = vadd.f32 %v4371, %v4261
      %v4408 = vadd.f32 %v4372, %v4266
      %v4409 = vadd.f32 %v4373, %v4269
      %v4410 = vadd.f32 %v4374, %v4274
      %v4411 = vadd.f32 %v4375, %v4277
      %v4412 = vadd.f32 %v4376, %v4282
      %v4413 = vadd.f32 %v4377, %v4285
      %v4414 = vadd.f32 %v4378, %v4290
      %v4415 = vadd.f32 %v4379, %v4293
      %v4416 = vadd.f32 %v4380, %v4298
      %v4417 = vadd.f32 %v4381, %v4301
      %v4418 = vadd.f32 %v4382, %v4306
      %v4419 = vadd.f32 %v4383, %v4309
      %v4420 = vadd.f32 %v4384, %v4314
      %v4421 = vadd.f32 %v4385, %v4317
      %v4422 = vadd.f32 %v4386, %v4322
      %v4423 = vadd.f32 %v4387, %v4325
      %v4424 = vadd.f32 %v4388, %v4330
      %v4425 = vadd.f32 %v4389, %v4333
      %v4426 = vadd.f32 %v4390, %v4338
      %v4427 = vadd.f32 %v4391, %v4341
      %v4428 = vadd.f32 %v4392, %v4346
      %v4429 = vadd.f32 %v4393, %v4349
      %v4430 = vadd.f32 %v4394, %v4354
      %v4431 = vadd.f32 %v4395, %v4357
      %4432 = vst [vmem:[#allocation3] sm:$0xff] %v4396
      %4433 = vst [vmem:[#allocation3 + $0x8] sm:$0xff] %v4397
      %4434 = vst [vmem:[#allocation3 + $0x10] sm:$0xff] %v4398
      %4435 = vst [vmem:[#allocation3 + $0x18] sm:$0xff] %v4399
      %4436 = vst [vmem:[#allocation3 + $0x20] sm:$0xff] %v4400
      %4437 = vst [vmem:[#allocation3 + $0x28] sm:$0xff] %v4401
      %4438 = vst [vmem:[#allocation3 + $0x30] sm:$0xff] %v4402
      %4439 = vst [vmem:[#allocation3 + $0x38] sm:$0xff] %v4403
      %4440 = vst [vmem:[#allocation3 + $0x40] sm:$0xff] %v4404
      %4441 = vst [vmem:[#allocation3 + $0x48] sm:$0xff] %v4405
      %4442 = vst [vmem:[#allocation3 + $0x50] sm:$0xff] %v4406
      %4443 = vst [vmem:[#allocation3 + $0x58] sm:$0xff] %v4407
      %4444 = vst [vmem:[#allocation3 + $0x60] sm:$0xff] %v4408
      %4445 = vst [vmem:[#allocation3 + $0x68] sm:$0xff] %v4409
      %4446 = vst [vmem:[#allocation3 + $0x70] sm:$0xff] %v4410
      %4447 = vst [vmem:[#allocation3 + $0x78] sm:$0xff] %v4411
      %4448 = vst [vmem:[#allocation3 + $0x80] sm:$0xff] %v4412
      %4449 = vst [vmem:[#allocation3 + $0x88] sm:$0xff] %v4413
      %4450 = vst [vmem:[#allocation3 + $0x90] sm:$0xff] %v4414
      %4451 = vst [vmem:[#allocation3 + $0x98] sm:$0xff] %v4415
      %4452 = vst [vmem:[#allocation3 + $0xa0] sm:$0xff] %v4416
      %4453 = vst [vmem:[#allocation3 + $0xa8] sm:$0xff] %v4417
      %4454 = vst [vmem:[#allocation3 + $0xb0] sm:$0xff] %v4418
      %4455 = vst [vmem:[#allocation3 + $0xb8] sm:$0xff] %v4419
      %4456 = vst [vmem:[#allocation3 + $0xc0] sm:$0xff] %v4420
      %4457 = vst [vmem:[#allocation3 + $0xc8] sm:$0xff] %v4421
      %4458 = vst [vmem:[#allocation3 + $0xd0] sm:$0xff] %v4422
      %4459 = vst [vmem:[#allocation3 + $0xd8] sm:$0xff] %v4423
      %4460 = vst [vmem:[#allocation3 + $0xe0] sm:$0xff] %v4424
      %4461 = vst [vmem:[#allocation3 + $0xe8] sm:$0xff] %v4425
      %4462 = vst [vmem:[#allocation3 + $0xf0] sm:$0xff] %v4426
      %4463 = vst [vmem:[#allocation3 + $0xf8] sm:$0xff] %v4427
      %4464 = vst [vmem:[#allocation3 + $0x100] sm:$0xff] %v4428
      %4465 = vst [vmem:[#allocation3 + $0x108] sm:$0xff] %v4429
      %4466 = vst [vmem:[#allocation3 + $0x110] sm:$0xff] %v4430
      %4467 = vst [vmem:[#allocation3 + $0x118] sm:$0xff] %v4431
      %v4468 = vld [vmem:[#allocation3] sm:$0xff]
      %v4469 = vld [vmem:[#allocation3 + $0x8] sm:$0xff]
      %v4470 = vld [vmem:[#allocation3 + $0x10] sm:$0xff]
      %v4471 = vld [vmem:[#allocation3 + $0x18] sm:$0xff]
      %v4472 = vld [vmem:[#allocation3 + $0x20] sm:$0xff]
      %v4473 = vld [vmem:[#allocation3 + $0x28] sm:$0xff]
      %v4474 = vld [vmem:[#allocation3 + $0x30] sm:$0xff]
      %v4475 = vld [vmem:[#allocation3 + $0x38] sm:$0xff]
      %v4476 = vld [vmem:[#allocation3 + $0x40] sm:$0xff]
      %v4477 = vld [vmem:[#allocation3 + $0x48] sm:$0xff]
      %v4478 = vld [vmem:[#allocation3 + $0x50] sm:$0xff]
      %v4479 = vld [vmem:[#allocation3 + $0x58] sm:$0xff]
      %v4480 = vld [vmem:[#allocation3 + $0x60] sm:$0xff]
      %v4481 = vld [vmem:[#allocation3 + $0x68] sm:$0xff]
      %v4482 = vld [vmem:[#allocation3 + $0x70] sm:$0xff]
      %v4483 = vld [vmem:[#allocation3 + $0x78] sm:$0xff]
      %v4484 = vld [vmem:[#allocation3 + $0x80] sm:$0xff]
      %v4485 = vld [vmem:[#allocation3 + $0x88] sm:$0xff]
      %v4486 = vld [vmem:[#allocation3 + $0x90] sm:$0xff]
      %v4487 = vld [vmem:[#allocation3 + $0x98] sm:$0xff]
      %v4488 = vld [vmem:[#allocation3 + $0xa0] sm:$0xff]
      %v4489 = vld [vmem:[#allocation3 + $0xa8] sm:$0xff]
      %v4490 = vld [vmem:[#allocation3 + $0xb0] sm:$0xff]
      %v4491 = vld [vmem:[#allocation3 + $0xb8] sm:$0xff]
      %v4492 = vld [vmem:[#allocation3 + $0xc0] sm:$0xff]
      %v4493 = vld [vmem:[#allocation3 + $0xc8] sm:$0xff]
      %v4494 = vld [vmem:[#allocation3 + $0xd0] sm:$0xff]
      %v4495 = vld [vmem:[#allocation3 + $0xd8] sm:$0xff]
      %v4496 = vld [vmem:[#allocation3 + $0xe0] sm:$0xff]
      %v4497 = vld [vmem:[#allocation3 + $0xe8] sm:$0xff]
      %v4498 = vld [vmem:[#allocation3 + $0xf0] sm:$0xff]
      %v4499 = vld [vmem:[#allocation3 + $0xf8] sm:$0xff]
      %v4500 = vld [vmem:[#allocation3 + $0x100] sm:$0xff]
      %v4501 = vld [vmem:[#allocation3 + $0x108] sm:$0xff]
      %v4502 = vld [vmem:[#allocation3 + $0x110] sm:$0xff]
      %v4503 = vld [vmem:[#allocation3 + $0x118] sm:$0xff]
      %v4504 = vsel %vm785, 1, 0
      %v4505 = vsel %vm786, 1, 0
      %v4506 = vsel %vm787, 1, 0
      %v4507 = vsel %vm788, 1, 0
      %v4508 = vsel %vm789, 1, 0
      %v4509 = vsel %vm790, 1, 0
      %v4510 = vsel %vm791, 1, 0
      %v4511 = vsel %vm792, 1, 0
      %v4512 = vsel %vm793, 1, 0
      %v4513 = vsel %vm794, 1, 0
      %v4514 = vsel %vm795, 1, 0
      %v4515 = vsel %vm796, 1, 0
      %v4516 = vsel %vm797, 1, 0
      %v4517 = vsel %vm798, 1, 0
      %v4518 = vsel %vm799, 1, 0
      %v4519 = vsel %vm800, 1, 0
      %v4520 = vsel %vm801, 1, 0
      %v4521 = vsel %vm802, 1, 0
      %v4522 = vsel %vm803, 1, 0
      %v4523 = vsel %vm804, 1, 0
      %v4524 = vsel %vm805, 1, 0
      %v4525 = vsel %vm806, 1, 0
      %v4526 = vsel %vm807, 1, 0
      %v4527 = vsel %vm808, 1, 0
      %v4528 = vsel %vm809, 1, 0
      %v4529 = vsel %vm810, 1, 0
      %v4530 = vsel %vm811, 1, 0
      %v4531 = vsel %vm812, 1, 0
      %v4532 = vsel %vm813, 1, 0
      %v4533 = vsel %vm814, 1, 0
      %v4534 = vsel %vm815, 1, 0
      %v4535 = vsel %vm816, 1, 0
      %v4536 = vsel %vm817, 1, 0
      %v4537 = vsel %vm818, 1, 0
      %v4538 = vsel %vm819, 1, 0
      %v4539 = vsel %vm820, 1, 0
      %vm4540 = vcmp.eq.s32.totalorder %v4504, 1
      %vm4541 = vcmp.eq.s32.totalorder %v4505, 1
      %vm4542 = vcmp.eq.s32.totalorder %v4506, 1
      %vm4543 = vcmp.eq.s32.totalorder %v4507, 1
      %vm4544 = vcmp.eq.s32.totalorder %v4508, 1
      %vm4545 = vcmp.eq.s32.totalorder %v4509, 1
      %vm4546 = vcmp.eq.s32.totalorder %v4510, 1
      %vm4547 = vcmp.eq.s32.totalorder %v4511, 1
      %vm4548 = vcmp.eq.s32.totalorder %v4512, 1
      %vm4549 = vcmp.eq.s32.totalorder %v4513, 1
      %vm4550 = vcmp.eq.s32.totalorder %v4514, 1
      %vm4551 = vcmp.eq.s32.totalorder %v4515, 1
      %vm4552 = vcmp.eq.s32.totalorder %v4516, 1
      %vm4553 = vcmp.eq.s32.totalorder %v4517, 1
      %vm4554 = vcmp.eq.s32.totalorder %v4518, 1
      %vm4555 = vcmp.eq.s32.totalorder %v4519, 1
      %vm4556 = vcmp.eq.s32.totalorder %v4520, 1
      %vm4557 = vcmp.eq.s32.totalorder %v4521, 1
      %vm4558 = vcmp.eq.s32.totalorder %v4522, 1
      %vm4559 = vcmp.eq.s32.totalorder %v4523, 1
      %vm4560 = vcmp.eq.s32.totalorder %v4524, 1
      %vm4561 = vcmp.eq.s32.totalorder %v4525, 1
      %vm4562 = vcmp.eq.s32.totalorder %v4526, 1
      %vm4563 = vcmp.eq.s32.totalorder %v4527, 1
      %vm4564 = vcmp.eq.s32.totalorder %v4528, 1
      %vm4565 = vcmp.eq.s32.totalorder %v4529, 1
      %vm4566 = vcmp.eq.s32.totalorder %v4530, 1
      %vm4567 = vcmp.eq.s32.totalorder %v4531, 1
      %vm4568 = vcmp.eq.s32.totalorder %v4532, 1
      %vm4569 = vcmp.eq.s32.totalorder %v4533, 1
      %vm4570 = vcmp.eq.s32.totalorder %v4534, 1
      %vm4571 = vcmp.eq.s32.totalorder %v4535, 1
      %vm4572 = vcmp.eq.s32.totalorder %v4536, 1
      %vm4573 = vcmp.eq.s32.totalorder %v4537, 1
      %vm4574 = vcmp.eq.s32.totalorder %v4538, 1
      %vm4575 = vcmp.eq.s32.totalorder %v4539, 1
      %v4576 = vsel %vm4540, %v4468, 0.0
      %v4577 = vsel %vm4541, %v4469, 0.0
      %v4578 = vsel %vm4542, %v4470, 0.0
      %v4579 = vsel %vm4543, %v4471, 0.0
      %v4580 = vsel %vm4544, %v4472, 0.0
      %v4581 = vsel %vm4545, %v4473, 0.0
      %v4582 = vsel %vm4546, %v4474, 0.0
      %v4583 = vsel %vm4547, %v4475, 0.0
      %v4584 = vsel %vm4548, %v4476, 0.0
      %v4585 = vsel %vm4549, %v4477, 0.0
      %v4586 = vsel %vm4550, %v4478, 0.0
      %v4587 = vsel %vm4551, %v4479, 0.0
      %v4588 = vsel %vm4552, %v4480, 0.0
      %v4589 = vsel %vm4553, %v4481, 0.0
      %v4590 = vsel %vm4554, %v4482, 0.0
      %v4591 = vsel %vm4555, %v4483, 0.0
      %v4592 = vsel %vm4556, %v4484, 0.0
      %v4593 = vsel %vm4557, %v4485, 0.0
      %v4594 = vsel %vm4558, %v4486, 0.0
      %v4595 = vsel %vm4559, %v4487, 0.0
      %v4596 = vsel %vm4560, %v4488, 0.0
      %v4597 = vsel %vm4561, %v4489, 0.0
      %v4598 = vsel %vm4562, %v4490, 0.0
      %v4599 = vsel %vm4563, %v4491, 0.0
      %v4600 = vsel %vm4564, %v4492, 0.0
      %v4601 = vsel %vm4565, %v4493, 0.0
      %v4602 = vsel %vm4566, %v4494, 0.0
      %v4603 = vsel %vm4567, %v4495, 0.0
      %v4604 = vsel %vm4568, %v4496, 0.0
      %v4605 = vsel %vm4569, %v4497, 0.0
      %v4606 = vsel %vm4570, %v4498, 0.0
      %v4607 = vsel %vm4571, %v4499, 0.0
      %v4608 = vsel %vm4572, %v4500, 0.0
      %v4609 = vsel %vm4573, %v4501, 0.0
      %v4610 = vsel %vm4574, %v4502, 0.0
      %v4611 = vsel %vm4575, %v4503, 0.0
      %v4612 = vadd.f32 %v4576, %v4577
      %v4613 = vadd.f32 %v4612, %v4578
      %v4614 = vadd.f32 %v4613, %v4579
      %v4615 = vadd.f32 %v4614, %v4580
      %v4616 = vadd.f32 %v4615, %v4581
      %v4617 = vadd.f32 %v4616, %v4582
      %v4618 = vadd.f32 %v4617, %v4583
      %v4619 = vadd.f32 %v4618, %v4584
      %v4620 = vadd.f32 %v4619, %v4585
      %v4621 = vadd.f32 %v4620, %v4586
      %v4622 = vadd.f32 %v4621, %v4587
      %v4623 = vadd.f32 %v4622, %v4588
      %v4624 = vadd.f32 %v4623, %v4589
      %v4625 = vadd.f32 %v4624, %v4590
      %v4626 = vadd.f32 %v4625, %v4591
      %v4627 = vadd.f32 %v4626, %v4592
      %v4628 = vadd.f32 %v4627, %v4593
      %v4629 = vadd.f32 %v4628, %v4594
      %v4630 = vadd.f32 %v4629, %v4595
      %v4631 = vadd.f32 %v4630, %v4596
      %v4632 = vadd.f32 %v4631, %v4597
      %v4633 = vadd.f32 %v4632, %v4598
      %v4634 = vadd.f32 %v4633, %v4599
      %v4635 = vadd.f32 %v4634, %v4600
      %v4636 = vadd.f32 %v4635, %v4601
      %v4637 = vadd.f32 %v4636, %v4602
      %v4638 = vadd.f32 %v4637, %v4603
      %v4639 = vadd.f32 %v4638, %v4604
      %v4640 = vadd.f32 %v4639, %v4605
      %v4641 = vadd.f32 %v4640, %v4606
      %v4642 = vadd.f32 %v4641, %v4607
      %v4643 = vadd.f32 %v4642, %v4608
      %v4644 = vadd.f32 %v4643, %v4609
      %v4645 = vadd.f32 %v4644, %v4610
      %v4646 = vadd.f32 %v4645, %v4611
      %v4647 = vrot.slane %v4646, 4
      %v4648 = vadd.f32 %v4646, %v4647
      %v4649 = vrot.slane %v4648, 2
      %v4650 = vadd.f32 %v4648, %v4649
      %v4651 = vrot.slane %v4650, 1
      %v4652 = vadd.f32 %v4650, %v4651
      %v4653 = vmul.f32 %v4468, %v4468
      %v4654 = vmul.f32 %v4469, %v4469
      %v4655 = vmul.f32 %v4470, %v4470
      %v4656 = vmul.f32 %v4471, %v4471
      %v4657 = vmul.f32 %v4472, %v4472
      %v4658 = vmul.f32 %v4473, %v4473
      %v4659 = vmul.f32 %v4474, %v4474
      %v4660 = vmul.f32 %v4475, %v4475
      %v4661 = vmul.f32 %v4476, %v4476
      %v4662 = vmul.f32 %v4477, %v4477
      %v4663 = vmul.f32 %v4478, %v4478
      %v4664 = vmul.f32 %v4479, %v4479
      %v4665 = vmul.f32 %v4480, %v4480
      %v4666 = vmul.f32 %v4481, %v4481
      %v4667 = vmul.f32 %v4482, %v4482
      %v4668 = vmul.f32 %v4483, %v4483
      %v4669 = vmul.f32 %v4484, %v4484
      %v4670 = vmul.f32 %v4485, %v4485
      %v4671 = vmul.f32 %v4486, %v4486
      %v4672 = vmul.f32 %v4487, %v4487
      %v4673 = vmul.f32 %v4488, %v4488
      %v4674 = vmul.f32 %v4489, %v4489
      %v4675 = vmul.f32 %v4490, %v4490
      %v4676 = vmul.f32 %v4491, %v4491
      %v4677 = vmul.f32 %v4492, %v4492
      %v4678 = vmul.f32 %v4493, %v4493
      %v4679 = vmul.f32 %v4494, %v4494
      %v4680 = vmul.f32 %v4495, %v4495
      %v4681 = vmul.f32 %v4496, %v4496
      %v4682 = vmul.f32 %v4497, %v4497
      %v4683 = vmul.f32 %v4498, %v4498
      %v4684 = vmul.f32 %v4499, %v4499
      %v4685 = vmul.f32 %v4500, %v4500
      %v4686 = vmul.f32 %v4501, %v4501
      %v4687 = vmul.f32 %v4502, %v4502
      %v4688 = vmul.f32 %v4503, %v4503
      %v4689 = vsel %vm4540, %v4653, 0.0
      %v4690 = vsel %vm4541, %v4654, 0.0
      %v4691 = vsel %vm4542, %v4655, 0.0
      %v4692 = vsel %vm4543, %v4656, 0.0
      %v4693 = vsel %vm4544, %v4657, 0.0
      %v4694 = vsel %vm4545, %v4658, 0.0
      %v4695 = vsel %vm4546, %v4659, 0.0
      %v4696 = vsel %vm4547, %v4660, 0.0
      %v4697 = vsel %vm4548, %v4661, 0.0
      %v4698 = vsel %vm4549, %v4662, 0.0
      %v4699 = vsel %vm4550, %v4663, 0.0
      %v4700 = vsel %vm4551, %v4664, 0.0
      %v4701 = vsel %vm4552, %v4665, 0.0
      %v4702 = vsel %vm4553, %v4666, 0.0
      %v4703 = vsel %vm4554, %v4667, 0.0
      %v4704 = vsel %vm4555, %v4668, 0.0
      %v4705 = vsel %vm4556, %v4669, 0.0
      %v4706 = vsel %vm4557, %v4670, 0.0
      %v4707 = vsel %vm4558, %v4671, 0.0
      %v4708 = vsel %vm4559, %v4672, 0.0
      %v4709 = vsel %vm4560, %v4673, 0.0
      %v4710 = vsel %vm4561, %v4674, 0.0
      %v4711 = vsel %vm4562, %v4675, 0.0
      %v4712 = vsel %vm4563, %v4676, 0.0
      %v4713 = vsel %vm4564, %v4677, 0.0
      %v4714 = vsel %vm4565, %v4678, 0.0
      %v4715 = vsel %vm4566, %v4679, 0.0
      %v4716 = vsel %vm4567, %v4680, 0.0
      %v4717 = vsel %vm4568, %v4681, 0.0
      %v4718 = vsel %vm4569, %v4682, 0.0
      %v4719 = vsel %vm4570, %v4683, 0.0
      %v4720 = vsel %vm4571, %v4684, 0.0
      %v4721 = vsel %vm4572, %v4685, 0.0
      %v4722 = vsel %vm4573, %v4686, 0.0
      %v4723 = vsel %vm4574, %v4687, 0.0
      %v4724 = vsel %vm4575, %v4688, 0.0
      %v4725 = vadd.f32 %v4689, %v4690
      %v4726 = vadd.f32 %v4725, %v4691
      %v4727 = vadd.f32 %v4726, %v4692
      %v4728 = vadd.f32 %v4727, %v4693
      %v4729 = vadd.f32 %v4728, %v4694
      %v4730 = vadd.f32 %v4729, %v4695
      %v4731 = vadd.f32 %v4730, %v4696
      %v4732 = vadd.f32 %v4731, %v4697
      %v4733 = vadd.f32 %v4732, %v4698
      %v4734 = vadd.f32 %v4733, %v4699
      %v4735 = vadd.f32 %v4734, %v4700
      %v4736 = vadd.f32 %v4735, %v4701
      %v4737 = vadd.f32 %v4736, %v4702
      %v4738 = vadd.f32 %v4737, %v4703
      %v4739 = vadd.f32 %v4738, %v4704
      %v4740 = vadd.f32 %v4739, %v4705
      %v4741 = vadd.f32 %v4740, %v4706
      %v4742 = vadd.f32 %v4741, %v4707
      %v4743 = vadd.f32 %v4742, %v4708
      %v4744 = vadd.f32 %v4743, %v4709
      %v4745 = vadd.f32 %v4744, %v4710
      %v4746 = vadd.f32 %v4745, %v4711
      %v4747 = vadd.f32 %v4746, %v4712
      %v4748 = vadd.f32 %v4747, %v4713
      %v4749 = vadd.f32 %v4748, %v4714
      %v4750 = vadd.f32 %v4749, %v4715
      %v4751 = vadd.f32 %v4750, %v4716
      %v4752 = vadd.f32 %v4751, %v4717
      %v4753 = vadd.f32 %v4752, %v4718
      %v4754 = vadd.f32 %v4753, %v4719
      %v4755 = vadd.f32 %v4754, %v4720
      %v4756 = vadd.f32 %v4755, %v4721
      %v4757 = vadd.f32 %v4756, %v4722
      %v4758 = vadd.f32 %v4757, %v4723
      %v4759 = vadd.f32 %v4758, %v4724
      %v4760 = vrot.slane %v4759, 4
      %v4761 = vadd.f32 %v4759, %v4760
      %v4762 = vrot.slane %v4761, 2
      %v4763 = vadd.f32 %v4761, %v4762
      %v4764 = vrot.slane %v4763, 1
      %v4765 = vadd.f32 %v4763, %v4764
      %v4766 = vmul.f32 %v4652, 0.00390625
      %v4767 = vmul.f32 %v4765, 0.00390625
      %v4768 = vmul.f32 %v4766, %v4766
      %v4769 = vsub.f32 %v4767, %v4768
      %v4770 = vadd.f32 %v4769, 1e-05
      %v4771 = vrsqrt.pop %v4770
      %v4772 = vsub.f32 %v4468, %v4766
      %v4773 = vsub.f32 %v4469, %v4766
      %v4774 = vsub.f32 %v4470, %v4766
      %v4775 = vsub.f32 %v4471, %v4766
      %v4776 = vsub.f32 %v4472, %v4766
      %v4777 = vsub.f32 %v4473, %v4766
      %v4778 = vsub.f32 %v4474, %v4766
      %v4779 = vsub.f32 %v4475, %v4766
      %v4780 = vsub.f32 %v4476, %v4766
      %v4781 = vsub.f32 %v4477, %v4766
      %v4782 = vsub.f32 %v4478, %v4766
      %v4783 = vsub.f32 %v4479, %v4766
      %v4784 = vsub.f32 %v4480, %v4766
      %v4785 = vsub.f32 %v4481, %v4766
      %v4786 = vsub.f32 %v4482, %v4766
      %v4787 = vsub.f32 %v4483, %v4766
      %v4788 = vsub.f32 %v4484, %v4766
      %v4789 = vsub.f32 %v4485, %v4766
      %v4790 = vsub.f32 %v4486, %v4766
      %v4791 = vsub.f32 %v4487, %v4766
      %v4792 = vsub.f32 %v4488, %v4766
      %v4793 = vsub.f32 %v4489, %v4766
      %v4794 = vsub.f32 %v4490, %v4766
      %v4795 = vsub.f32 %v4491, %v4766
      %v4796 = vsub.f32 %v4492, %v4766
      %v4797 = vsub.f32 %v4493, %v4766
      %v4798 = vsub.f32 %v4494, %v4766
      %v4799 = vsub.f32 %v4495, %v4766
      %v4800 = vsub.f32 %v4496, %v4766
      %v4801 = vsub.f32 %v4497, %v4766
      %v4802 = vsub.f32 %v4498, %v4766
      %v4803 = vsub.f32 %v4499, %v4766
      %v4804 = vsub.f32 %v4500, %v4766
      %v4805 = vsub.f32 %v4501, %v4766
      %v4806 = vsub.f32 %v4502, %v4766
      %v4807 = vsub.f32 %v4503, %v4766
      %v4808 = vmul.f32 %v4772, %v4771
      %v4809 = vmul.f32 %v4773, %v4771
      %v4810 = vmul.f32 %v4774, %v4771
      %v4811 = vmul.f32 %v4775, %v4771
      %v4812 = vmul.f32 %v4776, %v4771
      %v4813 = vmul.f32 %v4777, %v4771
      %v4814 = vmul.f32 %v4778, %v4771
      %v4815 = vmul.f32 %v4779, %v4771
      %v4816 = vmul.f32 %v4780, %v4771
      %v4817 = vmul.f32 %v4781, %v4771
      %v4818 = vmul.f32 %v4782, %v4771
      %v4819 = vmul.f32 %v4783, %v4771
      %v4820 = vmul.f32 %v4784, %v4771
      %v4821 = vmul.f32 %v4785, %v4771
      %v4822 = vmul.f32 %v4786, %v4771
      %v4823 = vmul.f32 %v4787, %v4771
      %v4824 = vmul.f32 %v4788, %v4771
      %v4825 = vmul.f32 %v4789, %v4771
      %v4826 = vmul.f32 %v4790, %v4771
      %v4827 = vmul.f32 %v4791, %v4771
      %v4828 = vmul.f32 %v4792, %v4771
      %v4829 = vmul.f32 %v4793, %v4771
      %v4830 = vmul.f32 %v4794, %v4771
      %v4831 = vmul.f32 %v4795, %v4771
      %v4832 = vmul.f32 %v4796, %v4771
      %v4833 = vmul.f32 %v4797, %v4771
      %v4834 = vmul.f32 %v4798, %v4771
      %v4835 = vmul.f32 %v4799, %v4771
      %v4836 = vmul.f32 %v4800, %v4771
      %v4837 = vmul.f32 %v4801, %v4771
      %v4838 = vmul.f32 %v4802, %v4771
      %v4839 = vmul.f32 %v4803, %v4771
      %v4840 = vmul.f32 %v4804, %v4771
      %v4841 = vmul.f32 %v4805, %v4771
      %v4842 = vmul.f32 %v4806, %v4771
      %v4843 = vmul.f32 %v4807, %v4771
      %v4844 = vmax.f32 %v4808, 0.0
      %v4845 = vmax.f32 %v4809, 0.0
      %v4846 = vmax.f32 %v4810, 0.0
      %v4847 = vmax.f32 %v4811, 0.0
      %v4848 = vmax.f32 %v4812, 0.0
      %v4849 = vmax.f32 %v4813, 0.0
      %v4850 = vmax.f32 %v4814, 0.0
      %v4851 = vmax.f32 %v4815, 0.0
      %v4852 = vmax.f32 %v4816, 0.0
      %v4853 = vmax.f32 %v4817, 0.0
      %v4854 = vmax.f32 %v4818, 0.0
      %v4855 = vmax.f32 %v4819, 0.0
      %v4856 = vmax.f32 %v4820, 0.0
      %v4857 = vmax.f32 %v4821, 0.0
      %v4858 = vmax.f32 %v4822, 0.0
      %v4859 = vmax.f32 %v4823, 0.0
      %v4860 = vmax.f32 %v4824, 0.0
      %v4861 = vmax.f32 %v4825, 0.0
      %v4862 = vmax.f32 %v4826, 0.0
      %v4863 = vmax.f32 %v4827, 0.0
      %v4864 = vmax.f32 %v4828, 0.0
      %v4865 = vmax.f32 %v4829, 0.0
      %v4866 = vmax.f32 %v4830, 0.0
      %v4867 = vmax.f32 %v4831, 0.0
      %v4868 = vmax.f32 %v4832, 0.0
      %v4869 = vmax.f32 %v4833, 0.0
      %v4870 = vmax.f32 %v4834, 0.0
      %v4871 = vmax.f32 %v4835, 0.0
      %v4872 = vmax.f32 %v4836, 0.0
      %v4873 = vmax.f32 %v4837, 0.0
      %v4874 = vmax.f32 %v4838, 0.0
      %v4875 = vmax.f32 %v4839, 0.0
      %v4876 = vmax.f32 %v4840, 0.0
      %v4877 = vmax.f32 %v4841, 0.0
      %v4878 = vmax.f32 %v4842, 0.0
      %v4879 = vmax.f32 %v4843, 0.0
      %4880 = vst [vmem:[#allocation2 + $0x13] sm:$0xff] %v4844
      %4881 = vst [vmem:[#allocation2 + $0x1b] sm:$0xff] %v4845
      %4882 = vst [vmem:[#allocation2 + $0x23] sm:$0xff] %v4846
      %4883 = vst [vmem:[#allocation2 + $0x2b] sm:$0xff] %v4847
      %4884 = vst [vmem:[#allocation2 + $0x33] sm:$0xff] %v4848
      %4885 = vst [vmem:[#allocation2 + $0x3b] sm:$0xff] %v4849
      %4886 = vst [vmem:[#allocation2 + $0x43] sm:$0xff] %v4850
      %4887 = vst [vmem:[#allocation2 + $0x4b] sm:$0xff] %v4851
      %4888 = vst [vmem:[#allocation2 + $0x53] sm:$0xff] %v4852
      %4889 = vst [vmem:[#allocation2 + $0x5b] sm:$0xff] %v4853
      %4890 = vst [vmem:[#allocation2 + $0x63] sm:$0xff] %v4854
      %4891 = vst [vmem:[#allocation2 + $0x6b] sm:$0xff] %v4855
      %4892 = vst [vmem:[#allocation2 + $0x73] sm:$0xff] %v4856
      %4893 = vst [vmem:[#allocation2 + $0x7b] sm:$0xff] %v4857
      %4894 = vst [vmem:[#allocation2 + $0x83] sm:$0xff] %v4858
      %4895 = vst [vmem:[#allocation2 + $0x8b] sm:$0xff] %v4859
      %4896 = vst [vmem:[#allocation2 + $0x93] sm:$0xff] %v4860
      %4897 = vst [vmem:[#allocation2 + $0x9b] sm:$0xff] %v4861
      %4898 = vst [vmem:[#allocation2 + $0xa3] sm:$0xff] %v4862
      %4899 = vst [vmem:[#allocation2 + $0xab] sm:$0xff] %v4863
      %4900 = vst [vmem:[#allocation2 + $0xb3] sm:$0xff] %v4864
      %4901 = vst [vmem:[#allocation2 + $0xbb] sm:$0xff] %v4865
      %4902 = vst [vmem:[#allocation2 + $0xc3] sm:$0xff] %v4866
      %4903 = vst [vmem:[#allocation2 + $0xcb] sm:$0xff] %v4867
      %4904 = vst [vmem:[#allocation2 + $0xd3] sm:$0xff] %v4868
      %4905 = vst [vmem:[#allocation2 + $0xdb] sm:$0xff] %v4869
      %4906 = vst [vmem:[#allocation2 + $0xe3] sm:$0xff] %v4870
      %4907 = vst [vmem:[#allocation2 + $0xeb] sm:$0xff] %v4871
      %4908 = vst [vmem:[#allocation2 + $0xf3] sm:$0xff] %v4872
      %4909 = vst [vmem:[#allocation2 + $0xfb] sm:$0xff] %v4873
      %4910 = vst [vmem:[#allocation2 + $0x103] sm:$0xff] %v4874
      %4911 = vst [vmem:[#allocation2 + $0x10b] sm:$0xff] %v4875
      %4912 = vst [vmem:[#allocation2 + $0x113] sm:$0xff] %v4876
      %4913 = vst [vmem:[#allocation2 + $0x11b] sm:$0xff] %v4877
      %4914 = vst [vmem:[#allocation2 + $0x123] sm:$0xff] %v4878
      %4915 = vst [vmem:[#allocation2 + $0x12b] sm:$0xff] %v4879
      %v4916 = vld [vmem:[#allocation3 + $0x1] sm:$0x1]
      %v4917 = vsub.f32 %v4916, %v4766
      %v4918 = vmul.f32 %v4917, %v4771
      %v4919 = vmax.f32 %v4918, 0.0
      %4920 = vst [vmem:[#allocation2 + $0x12] sm:$0x1] %v4919
      %v4921 = vld [vmem:[#allocation3 + $0xe] sm:$0x1]
      %v4922 = vsub.f32 %v4921, %v4766
      %v4923 = vmul.f32 %v4922, %v4771
      %v4924 = vmax.f32 %v4923, 0.0
      %4925 = vst [vmem:[#allocation2 + $0x23] sm:$0x1] %v4924
      %v4926 = vld [vmem:[#allocation3 + $0x13] sm:$0x1]
      %v4927 = vsub.f32 %v4926, %v4766
      %v4928 = vmul.f32 %v4927, %v4771
      %v4929 = vmax.f32 %v4928, 0.0
      %4930 = vst [vmem:[#allocation2 + $0x24] sm:$0x1] %v4929
      %v4931 = vld [vmem:[#allocation3 + $0x20] sm:$0x1]
      %v4932 = vsub.f32 %v4931, %v4766
      %v4933 = vmul.f32 %v4932, %v4771
      %v4934 = vmax.f32 %v4933, 0.0
      %4935 = vst [vmem:[#allocation2 + $0x35] sm:$0x1] %v4934
      %v4936 = vld [vmem:[#allocation3 + $0x25] sm:$0x1]
      %v4937 = vsub.f32 %v4936, %v4766
      %v4938 = vmul.f32 %v4937, %v4771
      %v4939 = vmax.f32 %v4938, 0.0
      %4940 = vst [vmem:[#allocation2 + $0x36] sm:$0x1] %v4939
      %v4941 = vld [vmem:[#allocation3 + $0x32] sm:$0x1]
      %v4942 = vsub.f32 %v4941, %v4766
      %v4943 = vmul.f32 %v4942, %v4771
      %v4944 = vmax.f32 %v4943, 0.0
      %4945 = vst [vmem:[#allocation2 + $0x47] sm:$0x1] %v4944
      %v4946 = vld [vmem:[#allocation3 + $0x37] sm:$0x1]
      %v4947 = vsub.f32 %v4946, %v4766
      %v4948 = vmul.f32 %v4947, %v4771
      %v4949 = vmax.f32 %v4948, 0.0
      %4950 = vst [vmem:[#allocation2 + $0x48] sm:$0x1] %v4949
      %v4951 = vld [vmem:[#allocation3 + $0x44] sm:$0x1]
      %v4952 = vsub.f32 %v4951, %v4766
      %v4953 = vmul.f32 %v4952, %v4771
      %v4954 = vmax.f32 %v4953, 0.0
      %4955 = vst [vmem:[#allocation2 + $0x59] sm:$0x1] %v4954
      %v4956 = vld [vmem:[#allocation3 + $0x49] sm:$0x1]
      %v4957 = vsub.f32 %v4956, %v4766
      %v4958 = vmul.f32 %v4957, %v4771
      %v4959 = vmax.f32 %v4958, 0.0
      %4960 = vst [vmem:[#allocation2 + $0x5a] sm:$0x1] %v4959
      %v4961 = vld [vmem:[#allocation3 + $0x56] sm:$0x1]
      %v4962 = vsub.f32 %v4961, %v4766
      %v4963 = vmul.f32 %v4962, %v4771
      %v4964 = vmax.f32 %v4963, 0.0
      %4965 = vst [vmem:[#allocation2 + $0x6b] sm:$0x1] %v4964
      %v4966 = vld [vmem:[#allocation3 + $0x5b] sm:$0x1]
      %v4967 = vsub.f32 %v4966, %v4766
      %v4968 = vmul.f32 %v4967, %v4771
      %v4969 = vmax.f32 %v4968, 0.0
      %4970 = vst [vmem:[#allocation2 + $0x6c] sm:$0x1] %v4969
      %v4971 = vld [vmem:[#allocation3 + $0x68] sm:$0x1]
      %v4972 = vsub.f32 %v4971, %v4766
      %v4973 = vmul.f32 %v4972, %v4771
      %v4974 = vmax.f32 %v4973, 0.0
      %4975 = vst [vmem:[#allocation2 + $0x7d] sm:$0x1] %v4974
      %v4976 = vld [vmem:[#allocation3 + $0x6d] sm:$0x1]
      %v4977 = vsub.f32 %v4976, %v4766
      %v4978 = vmul.f32 %v4977, %v4771
      %v4979 = vmax.f32 %v4978, 0.0
      %4980 = vst [vmem:[#allocation2 + $0x7e] sm:$0x1] %v4979
      %v4981 = vld [vmem:[#allocation3 + $0x7a] sm:$0x1]
      %v4982 = vsub.f32 %v4981, %v4766
      %v4983 = vmul.f32 %v4982, %v4771
      %v4984 = vmax.f32 %v4983, 0.0
      %4985 = vst [vmem:[#allocation2 + $0x8f] sm:$0x1] %v4984
      %v4986 = vld [vmem:[#allocation3 + $0x7f] sm:$0x1]
      %v4987 = vsub.f32 %v4986, %v4766
      %v4988 = vmul.f32 %v4987, %v4771
      %v4989 = vmax.f32 %v4988, 0.0
      %4990 = vst [vmem:[#allocation2 + $0x90] sm:$0x1] %v4989
      %v4991 = vld [vmem:[#allocation3 + $0x8c] sm:$0x1]
      %v4992 = vsub.f32 %v4991, %v4766
      %v4993 = vmul.f32 %v4992, %v4771
      %v4994 = vmax.f32 %v4993, 0.0
      %4995 = vst [vmem:[#allocation2 + $0xa1] sm:$0x1] %v4994
      %v4996 = vld [vmem:[#allocation3 + $0x91] sm:$0x1]
      %v4997 = vsub.f32 %v4996, %v4766
      %v4998 = vmul.f32 %v4997, %v4771
      %v4999 = vmax.f32 %v4998, 0.0
      %5000 = vst [vmem:[#allocation2 + $0xa2] sm:$0x1] %v4999
      %v5001 = vld [vmem:[#allocation3 + $0x9e] sm:$0x1]
      %v5002 = vsub.f32 %v5001, %v4766
      %v5003 = vmul.f32 %v5002, %v4771
      %v5004 = vmax.f32 %v5003, 0.0
      %5005 = vst [vmem:[#allocation2 + $0xb3] sm:$0x1] %v5004
      %v5006 = vld [vmem:[#allocation3 + $0xa3] sm:$0x1]
      %v5007 = vsub.f32 %v5006, %v4766
      %v5008 = vmul.f32 %v5007, %v4771
      %v5009 = vmax.f32 %v5008, 0.0
      %5010 = vst [vmem:[#allocation2 + $0xb4] sm:$0x1] %v5009
      %v5011 = vld [vmem:[#allocation3 + $0xb0] sm:$0x1]
      %v5012 = vsub.f32 %v5011, %v4766
      %v5013 = vmul.f32 %v5012, %v4771
      %v5014 = vmax.f32 %v5013, 0.0
      %5015 = vst [vmem:[#allocation2 + $0xc5] sm:$0x1] %v5014
      %v5016 = vld [vmem:[#allocation3 + $0xb5] sm:$0x1]
      %v5017 = vsub.f32 %v5016, %v4766
      %v5018 = vmul.f32 %v5017, %v4771
      %v5019 = vmax.f32 %v5018, 0.0
      %5020 = vst [vmem:[#allocation2 + $0xc6] sm:$0x1] %v5019
      %v5021 = vld [vmem:[#allocation3 + $0xc2] sm:$0x1]
      %v5022 = vsub.f32 %v5021, %v4766
      %v5023 = vmul.f32 %v5022, %v4771
      %v5024 = vmax.f32 %v5023, 0.0
      %5025 = vst [vmem:[#allocation2 + $0xd7] sm:$0x1] %v5024
      %v5026 = vld [vmem:[#allocation3 + $0xc7] sm:$0x1]
      %v5027 = vsub.f32 %v5026, %v4766
      %v5028 = vmul.f32 %v5027, %v4771
      %v5029 = vmax.f32 %v5028, 0.0
      %5030 = vst [vmem:[#allocation2 + $0xd8] sm:$0x1] %v5029
      %v5031 = vld [vmem:[#allocation3 + $0xd4] sm:$0x1]
      %v5032 = vsub.f32 %v5031, %v4766
      %v5033 = vmul.f32 %v5032, %v4771
      %v5034 = vmax.f32 %v5033, 0.0
      %5035 = vst [vmem:[#allocation2 + $0xe9] sm:$0x1] %v5034
      %v5036 = vld [vmem:[#allocation3 + $0xd9] sm:$0x1]
      %v5037 = vsub.f32 %v5036, %v4766
      %v5038 = vmul.f32 %v5037, %v4771
      %v5039 = vmax.f32 %v5038, 0.0
      %5040 = vst [vmem:[#allocation2 + $0xea] sm:$0x1] %v5039
      %v5041 = vld [vmem:[#allocation3 + $0xe6] sm:$0x1]
      %v5042 = vsub.f32 %v5041, %v4766
      %v5043 = vmul.f32 %v5042, %v4771
      %v5044 = vmax.f32 %v5043, 0.0
      %5045 = vst [vmem:[#allocation2 + $0xfb] sm:$0x1] %v5044
      %v5046 = vld [vmem:[#allocation3 + $0xeb] sm:$0x1]
      %v5047 = vsub.f32 %v5046, %v4766
      %v5048 = vmul.f32 %v5047, %v4771
      %v5049 = vmax.f32 %v5048, 0.0
      %5050 = vst [vmem:[#allocation2 + $0xfc] sm:$0x1] %v5049
      %v5051 = vld [vmem:[#allocation3 + $0xf8] sm:$0x1]
      %v5052 = vsub.f32 %v5051, %v4766
      %v5053 = vmul.f32 %v5052, %v4771
      %v5054 = vmax.f32 %v5053, 0.0
      %5055 = vst [vmem:[#allocation2 + $0x10d] sm:$0x1] %v5054
      %v5056 = vld [vmem:[#allocation3 + $0xfd] sm:$0x1]
      %v5057 = vsub.f32 %v5056, %v4766
      %v5058 = vmul.f32 %v5057, %v4771
      %v5059 = vmax.f32 %v5058, 0.0
      %5060 = vst [vmem:[#allocation2 + $0x10e] sm:$0x1] %v5059
      %v5061 = vld [vmem:[#allocation3 + $0x10a] sm:$0x1]
      %v5062 = vsub.f32 %v5061, %v4766
      %v5063 = vmul.f32 %v5062, %v4771
      %v5064 = vmax.f32 %v5063, 0.0
      %5065 = vst [vmem:[#allocation2 + $0x11f] sm:$0x1] %v5064
      %v5066 = vld [vmem:[#allocation3 + $0x10f] sm:$0x1]
      %v5067 = vsub.f32 %v5066, %v4766
      %v5068 = vmul.f32 %v5067, %v4771
      %v5069 = vmax.f32 %v5068, 0.0
      %5070 = vst [vmem:[#allocation2 + $0x120] sm:$0x1] %v5069
      %v5071 = vld [vmem:[#allocation3 + $0x11c] sm:$0x1]
      %v5072 = vsub.f32 %v5071, %v4766
      %v5073 = vmul.f32 %v5072, %v4771
      %v5074 = vmax.f32 %v5073, 0.0
      %5075 = vst [vmem:[#allocation2 + $0x131] sm:$0x1] %v5074
      %v5076 = vld [vmem:[#allocation3 + $0x13] sm:$0x1]
      %v5077 = vsub.f32 %v5076, %v4766
      %v5078 = vmul.f32 %v5077, %v4771
      %v5079 = vmax.f32 %v5078, 0.0
      %5080 = vst [vmem:[#allocation2] sm:$0x1] %v5079
      %v5081 = vld [vmem:[#allocation3 + $0x12] sm:$0xff]
      %v5082 = vld [vmem:[#allocation3 + $0x1a] sm:$0xff]
      %v5083 = vsub.f32 %v5081, %v4766
      %v5084 = vsub.f32 %v5082, %v4766
      %v5085 = vmul.f32 %v5083, %v4771
      %v5086 = vmul.f32 %v5084, %v4771
      %v5087 = vmax.f32 %v5085, 0.0
      %v5088 = vmax.f32 %v5086, 0.0
      %5089 = vst [vmem:[#allocation2 + $0x1] sm:$0xff] %v5087
      %5090 = vst [vmem:[#allocation2 + $0x9] sm:$0xff] %v5088
      %v5091 = vld [vmem:[#allocation3 + $0x20] sm:$0x1]
      %v5092 = vsub.f32 %v5091, %v4766
      %v5093 = vmul.f32 %v5092, %v4771
      %v5094 = vmax.f32 %v5093, 0.0
      %5095 = vst [vmem:[#allocation2 + $0x11] sm:$0x1] %v5094
      %v5096 = vld [vmem:[#allocation3 + $0xfd] sm:$0x1]
      %v5097 = vsub.f32 %v5096, %v4766
      %v5098 = vmul.f32 %v5097, %v4771
      %v5099 = vmax.f32 %v5098, 0.0
      %5100 = vst [vmem:[#allocation2 + $0x132] sm:$0x1] %v5099
      %v5101 = vld [vmem:[#allocation3 + $0xfc] sm:$0xff]
      %v5102 = vld [vmem:[#allocation3 + $0x104] sm:$0xff]
      %v5103 = vsub.f32 %v5101, %v4766
      %v5104 = vsub.f32 %v5102, %v4766
      %v5105 = vmul.f32 %v5103, %v4771
      %v5106 = vmul.f32 %v5104, %v4771
      %v5107 = vmax.f32 %v5105, 0.0
      %v5108 = vmax.f32 %v5106, 0.0
      %5109 = vst [vmem:[#allocation2 + $0x133] sm:$0xff] %v5107
      %5110 = vst [vmem:[#allocation2 + $0x13b] sm:$0xff] %v5108
      %v5111 = vld [vmem:[#allocation3 + $0x10a] sm:$0x1]
      %v5112 = vsub.f32 %v5111, %v4766
      %v5113 = vmul.f32 %v5112, %v4771
      %v5114 = vmax.f32 %v5113, 0.0
      %5115 = vst [vmem:[#allocation2 + $0x143] sm:$0x1] %v5114
      %v5116 = vld [vmem:[#allocation2] sm:$0xff]
      %v5117 = vld [vmem:[#allocation2 + $0x8] sm:$0xff]
      %v5118 = vld [vmem:[#allocation2 + $0x10] sm:$0xff]
      %v5119 = vld [vmem:[#allocation2 + $0x18] sm:$0xff]
      %v5120 = vld [vmem:[#allocation2 + $0x20] sm:$0xff]
      %v5121 = vld [vmem:[#allocation2 + $0x28] sm:$0xff]
      %v5122 = vld [vmem:[#allocation2 + $0x30] sm:$0xff]
      %v5123 = vld [vmem:[#allocation2 + $0x38] sm:$0xff]
      %v5124 = vld [vmem:[#allocation2 + $0x40] sm:$0xff]
      %v5125 = vld [vmem:[#allocation2 + $0x48] sm:$0xff]
      %v5126 = vld [vmem:[#allocation2 + $0x50] sm:$0xff]
      %v5127 = vld [vmem:[#allocation2 + $0x58] sm:$0xff]
      %v5128 = vld [vmem:[#allocation2 + $0x60] sm:$0xff]
      %v5129 = vld [vmem:[#allocation2 + $0x68] sm:$0xff]
      %v5130 = vld [vmem:[#allocation2 + $0x70] sm:$0xff]
      %v5131 = vld [vmem:[#allocation2 + $0x78] sm:$0xff]
      %v5132 = vld [vmem:[#allocation2 + $0x80] sm:$0xff]
      %v5133 = vld [vmem:[#allocation2 + $0x88] sm:$0xff]
      %v5134 = vld [vmem:[#allocation2 + $0x90] sm:$0xff]
      %v5135 = vld [vmem:[#allocation2 + $0x98] sm:$0xff]
      %v5136 = vld [vmem:[#allocation2 + $0xa0] sm:$0xff]
      %v5137 = vld [vmem:[#allocation2 + $0xa8] sm:$0xff]
      %v5138 = vld [vmem:[#allocation2 + $0xb0] sm:$0xff]
      %v5139 = vld [vmem:[#allocation2 + $0xb8] sm:$0xff]
      %v5140 = vld [vmem:[#allocation2 + $0xc0] sm:$0xff]
      %v5141 = vld [vmem:[#allocation2 + $0xc8] sm:$0xff]
      %v5142 = vld [vmem:[#allocation2 + $0xd0] sm:$0xff]
      %v5143 = vld [vmem:[#allocation2 + $0xd8] sm:$0xff]
      %v5144 = vld [vmem:[#allocation2 + $0xe0] sm:$0xff]
      %v5145 = vld [vmem:[#allocation2 + $0xe8] sm:$0xff]
      %v5146 = vld [vmem:[#allocation2 + $0xf0] sm:$0xff]
      %v5147 = vld [vmem:[#allocation2 + $0xf8] sm:$0xff]
      %v5148 = vld [vmem:[#allocation2 + $0x100] sm:$0xff]
      %v5149 = vld [vmem:[#allocation2 + $0x108] sm:$0xff]
      %v5150 = vld [vmem:[#allocation2 + $0x110] sm:$0xff]
      %v5151 = vld [vmem:[#allocation2 + $0x118] sm:$0xff]
      %v5152 = vpack.c.bf16 %v5117, %v5116
      %v5153 = vpack.c.bf16 %v5119, %v5118
      %v5154 = vpack.c.bf16 %v5121, %v5120
      %v5155 = vpack.c.bf16 %v5123, %v5122
      %v5156 = vpack.c.bf16 %v5125, %v5124
      %v5157 = vpack.c.bf16 %v5127, %v5126
      %v5158 = vpack.c.bf16 %v5129, %v5128
      %v5159 = vpack.c.bf16 %v5131, %v5130
      %v5160 = vpack.c.bf16 %v5133, %v5132
      %v5161 = vpack.c.bf16 %v5135, %v5134
      %v5162 = vpack.c.bf16 %v5137, %v5136
      %v5163 = vpack.c.bf16 %v5139, %v5138
      %v5164 = vpack.c.bf16 %v5141, %v5140
      %v5165 = vpack.c.bf16 %v5143, %v5142
      %v5166 = vpack.c.bf16 %v5145, %v5144
      %v5167 = vpack.c.bf16 %v5147, %v5146
      %v5168 = vpack.c.bf16 %v5149, %v5148
      %v5169 = vpack.c.bf16 %v5151, %v5150
      %v5170 = vld [vmem:[%s2] sm:$0xf]
      %v5171 = vld [vmem:[%s2 + $0x4] sm:$0xf]
      %v5172 = vld [vmem:[%s2 + $0x8] sm:$0xf]
      %v5173 = vld [vmem:[%s2 + $0xc] sm:$0xf]
      %v5174 = vld [vmem:[%s2 + $0x10] sm:$0xf]
      %v5175 = vld [vmem:[%s2 + $0x14] sm:$0xf]
      %v5176 = vld [vmem:[%s2 + $0x18] sm:$0xf]
      %v5177 = vld [vmem:[%s2 + $0x1c] sm:$0xf]
      %v5178 = vld [vmem:[%s2 + $0x20] sm:$0xf]
      %v5179 = vld [vmem:[%s2 + $0x24] sm:$0xf]
      %v5180 = vld [vmem:[%s2 + $0x28] sm:$0xf]
      %v5181 = vld [vmem:[%s2 + $0x2c] sm:$0xf]
      %v5182 = vld [vmem:[%s2 + $0x30] sm:$0xf]
      %v5183 = vld [vmem:[%s2 + $0x34] sm:$0xf]
      %v5184 = vld [vmem:[%s2 + $0x38] sm:$0xf]
      %v5185 = vld [vmem:[%s2 + $0x3c] sm:$0xf]
      %v5202 = vunpack.c.l.b16 %v5170
      %v5203 = vunpack.c.l.b16 %v5171
      %v5204 = vunpack.c.l.b16 %v5172
      %v5205 = vunpack.c.l.b16 %v5173
      %v5206 = vunpack.c.l.b16 %v5174
      %v5207 = vunpack.c.l.b16 %v5175
      %v5208 = vunpack.c.l.b16 %v5176
      %v5209 = vunpack.c.l.b16 %v5177
      %v5210 = vunpack.c.l.b16 %v5178
      %v5211 = vunpack.c.l.b16 %v5179
      %v5212 = vunpack.c.l.b16 %v5180
      %v5213 = vunpack.c.l.b16 %v5181
      %v5214 = vunpack.c.l.b16 %v5182
      %v5215 = vunpack.c.l.b16 %v5183
      %v5216 = vunpack.c.l.b16 %v5184
      %v5217 = vunpack.c.l.b16 %v5185
      %v5218 = vpack.c.b16 %v5203, %v5202
      %v5219 = vpack.c.b16 %v5205, %v5204
      %v5220 = vpack.c.b16 %v5207, %v5206
      %v5221 = vpack.c.b16 %v5209, %v5208
      %v5222 = vpack.c.b16 %v5211, %v5210
      %v5223 = vpack.c.b16 %v5213, %v5212
      %v5224 = vpack.c.b16 %v5215, %v5214
      %v5225 = vpack.c.b16 %v5217, %v5216
      %5234 = vmatprep.subr.bf16.mxu0 0
      %5235 = vmatpush1.bf16.msra.mxu0 %v5218
      %5236 = vmatprep.subr.bf16.mxu0 0
      %5237 = vmatpush1.bf16.msra.mxu0 %v5219
      %5238 = vmatprep.subr.bf16.mxu0 0
      %5239 = vmatpush1.bf16.msra.mxu0 %v5220
      %5240 = vmatprep.subr.bf16.mxu0 0
      %5241 = vmatpush1.bf16.msra.mxu0 %v5221
      %5242 = vmatprep.subr.bf16.mxu0 0
      %5243 = vmatpush1.bf16.msra.mxu0 %v5222
      %5244 = vmatprep.subr.bf16.mxu0 0
      %5245 = vmatpush1.bf16.msra.mxu0 %v5223
      %5246 = vmatprep.subr.bf16.mxu0 0
      %5247 = vmatpush1.bf16.msra.mxu0 %v5224
      %5248 = vmatprep.subr.bf16.mxu0 0
      %5249 = vmatpush1.bf16.msra.mxu0 %v5225
      %5250 = vmatprep.subr.bf16.mxu0 0
      %5251 = vmatpush1.bf16.msra.mxu0 0
      %5252 = vmatprep.subr.bf16.mxu0 0
      %5253 = vmatpush1.bf16.msra.mxu0 0
      %5254 = vmatprep.subr.bf16.mxu0 0
      %5255 = vmatpush1.bf16.msra.mxu0 0
      %5256 = vmatprep.subr.bf16.mxu0 0
      %5257 = vmatpush1.bf16.msra.mxu0 0
      %5258 = vmatprep.subr.bf16.mxu0 0
      %5259 = vmatpush1.bf16.msra.mxu0 0
      %5260 = vmatprep.subr.bf16.mxu0 0
      %5261 = vmatpush1.bf16.msra.mxu0 0
      %5262 = vmatprep.subr.bf16.mxu0 0
      %5263 = vmatpush1.bf16.msra.mxu0 0
      %5264 = vmatprep.subr.bf16.mxu0 0
      %5265 = vmatpush1.bf16.msra.mxu0 0
      %5266 = vmatprep.mubr.bf16.mxu0 0
      %5267 = vmatmul.mubr.bf16.gmra.mrb[0].mxu0 %v5152
      %v5268 = vpop.f32.mrb[0].mxu0
      %v5269 = vadd.f32 0.0, %v5268
      %v5270 = vpop.f32.mrb[0].mxu0
      %v5271 = vpop.f32.mrb[0].mxu0
      %v5272 = vadd.f32 0.0, %v5271
      %v5273 = vpop.f32.mrb[0].mxu0
      %5274 = vmatprep.mubr.bf16.mxu0 0
      %5275 = vmatmul.mubr.bf16.gmra.mrb[0].mxu0 %v5153
      %v5276 = vpop.f32.mrb[0].mxu0
      %v5277 = vadd.f32 0.0, %v5276
      %v5278 = vpop.f32.mrb[0].mxu0
      %v5279 = vpop.f32.mrb[0].mxu0
      %v5280 = vadd.f32 0.0, %v5279
      %v5281 = vpop.f32.mrb[0].mxu0
      %5282 = vmatprep.mubr.bf16.mxu0 0
      %5283 = vmatmul.mubr.bf16.gmra.mrb[0].mxu0 %v5154
      %v5284 = vpop.f32.mrb[0].mxu0
      %v5285 = vadd.f32 0.0, %v5284
      %v5286 = vpop.f32.mrb[0].mxu0
      %v5287 = vpop.f32.mrb[0].mxu0
      %v5288 = vadd.f32 0.0, %v5287
      %v5289 = vpop.f32.mrb[0].mxu0
      %5290 = vmatprep.mubr.bf16.mxu0 0
      %5291 = vmatmul.mubr.bf16.gmra.mrb[0].mxu0 %v5155
      %v5292 = vpop.f32.mrb[0].mxu0
      %v5293 = vadd.f32 0.0, %v5292
      %v5294 = vpop.f32.mrb[0].mxu0
      %v5295 = vpop.f32.mrb[0].mxu0
      %v5296 = vadd.f32 0.0, %v5295
      %v5297 = vpop.f32.mrb[0].mxu0
      %5298 = vmatprep.mubr.bf16.mxu0 0
      %5299 = vmatmul.mubr.bf16.gmra.mrb[0].mxu0 %v5156
      %v5300 = vpop.f32.mrb[0].mxu0
      %v5301 = vadd.f32 0.0, %v5300
      %v5302 = vpop.f32.mrb[0].mxu0
      %v5303 = vpop.f32.mrb[0].mxu0
      %v5304 = vadd.f32 0.0, %v5303
      %v5305 = vpop.f32.mrb[0].mxu0
      %5306 = vmatprep.mubr.bf16.mxu0 0
      %5307 = vmatmul.mubr.bf16.gmra.mrb[0].mxu0 %v5157
      %v5308 = vpop.f32.mrb[0].mxu0
      %v5309 = vadd.f32 0.0, %v5308
      %v5310 = vpop.f32.mrb[0].mxu0
      %v5311 = vpop.f32.mrb[0].mxu0
      %v5312 = vadd.f32 0.0, %v5311
      %v5313 = vpop.f32.mrb[0].mxu0
      %5314 = vmatprep.mubr.bf16.mxu0 0
      %5315 = vmatmul.mubr.bf16.gmra.mrb[0].mxu0 %v5158
      %v5316 = vpop.f32.mrb[0].mxu0
      %v5317 = vadd.f32 0.0, %v5316
      %v5318 = vpop.f32.mrb[0].mxu0
      %v5319 = vpop.f32.mrb[0].mxu0
      %v5320 = vadd.f32 0.0, %v5319
      %v5321 = vpop.f32.mrb[0].mxu0
      %5322 = vmatprep.mubr.bf16.mxu0 0
      %5323 = vmatmul.mubr.bf16.gmra.mrb[0].mxu0 %v5159
      %v5324 = vpop.f32.mrb[0].mxu0
      %v5325 = vadd.f32 0.0, %v5324
      %v5326 = vpop.f32.mrb[0].mxu0
      %v5327 = vpop.f32.mrb[0].mxu0
      %v5328 = vadd.f32 0.0, %v5327
      %v5329 = vpop.f32.mrb[0].mxu0
      %5330 = vmatprep.mubr.bf16.mxu0 0
      %5331 = vmatmul.mubr.bf16.gmra.mrb[0].mxu0 %v5160
      %v5332 = vpop.f32.mrb[0].mxu0
      %v5333 = vadd.f32 0.0, %v5332
      %v5334 = vpop.f32.mrb[0].mxu0
      %v5335 = vpop.f32.mrb[0].mxu0
      %v5336 = vadd.f32 0.0, %v5335
      %v5337 = vpop.f32.mrb[0].mxu0
      %5338 = vmatprep.mubr.bf16.mxu0 0
      %5339 = vmatmul.mubr.bf16.gmra.mrb[0].mxu0 %v5161
      %v5340 = vpop.f32.mrb[0].mxu0
      %v5341 = vadd.f32 0.0, %v5340
      %v5342 = vpop.f32.mrb[0].mxu0
      %v5343 = vpop.f32.mrb[0].mxu0
      %v5344 = vadd.f32 0.0, %v5343
      %v5345 = vpop.f32.mrb[0].mxu0
      %5346 = vmatprep.mubr.bf16.mxu0 0
      %5347 = vmatmul.mubr.bf16.gmra.mrb[0].mxu0 %v5162
      %v5348 = vpop.f32.mrb[0].mxu0
      %v5349 = vadd.f32 0.0, %v5348
      %v5350 = vpop.f32.mrb[0].mxu0
      %v5351 = vpop.f32.mrb[0].mxu0
      %v5352 = vadd.f32 0.0, %v5351
      %v5353 = vpop.f32.mrb[0].mxu0
      %5354 = vmatprep.mubr.bf16.mxu0 0
      %5355 = vmatmul.mubr.bf16.gmra.mrb[0].mxu0 %v5163
      %v5356 = vpop.f32.mrb[0].mxu0
      %v5357 = vadd.f32 0.0, %v5356
      %v5358 = vpop.f32.mrb[0].mxu0
      %v5359 = vpop.f32.mrb[0].mxu0
      %v5360 = vadd.f32 0.0, %v5359
      %v5361 = vpop.f32.mrb[0].mxu0
      %5362 = vmatprep.mubr.bf16.mxu0 0
      %5363 = vmatmul.mubr.bf16.gmra.mrb[0].mxu0 %v5164
      %v5364 = vpop.f32.mrb[0].mxu0
      %v5365 = vadd.f32 0.0, %v5364
      %v5366 = vpop.f32.mrb[0].mxu0
      %v5367 = vpop.f32.mrb[0].mxu0
      %v5368 = vadd.f32 0.0, %v5367
      %v5369 = vpop.f32.mrb[0].mxu0
      %5370 = vmatprep.mubr.bf16.mxu0 0
      %5371 = vmatmul.mubr.bf16.gmra.mrb[0].mxu0 %v5165
      %v5372 = vpop.f32.mrb[0].mxu0
      %v5373 = vadd.f32 0.0, %v5372
      %v5374 = vpop.f32.mrb[0].mxu0
      %v5375 = vpop.f32.mrb[0].mxu0
      %v5376 = vadd.f32 0.0, %v5375
      %v5377 = vpop.f32.mrb[0].mxu0
      %5378 = vmatprep.mubr.bf16.mxu0 0
      %5379 = vmatmul.mubr.bf16.gmra.mrb[0].mxu0 %v5166
      %v5380 = vpop.f32.mrb[0].mxu0
      %v5381 = vadd.f32 0.0, %v5380
      %v5382 = vpop.f32.mrb[0].mxu0
      %v5383 = vpop.f32.mrb[0].mxu0
      %v5384 = vadd.f32 0.0, %v5383
      %v5385 = vpop.f32.mrb[0].mxu0
      %5386 = vmatprep.mubr.bf16.mxu0 0
      %5387 = vmatmul.mubr.bf16.gmra.mrb[0].mxu0 %v5167
      %v5388 = vpop.f32.mrb[0].mxu0
      %v5389 = vadd.f32 0.0, %v5388
      %v5390 = vpop.f32.mrb[0].mxu0
      %v5391 = vpop.f32.mrb[0].mxu0
      %v5392 = vadd.f32 0.0, %v5391
      %v5393 = vpop.f32.mrb[0].mxu0
      %5394 = vmatprep.mubr.bf16.mxu0 0
      %5395 = vmatmul.mubr.bf16.gmra.mrb[0].mxu0 %v5168
      %v5396 = vpop.f32.mrb[0].mxu0
      %v5397 = vadd.f32 0.0, %v5396
      %v5398 = vpop.f32.mrb[0].mxu0
      %v5399 = vpop.f32.mrb[0].mxu0
      %v5400 = vadd.f32 0.0, %v5399
      %v5401 = vpop.f32.mrb[0].mxu0
      %5402 = vmatprep.mubr.bf16.mxu0 0
      %5403 = vmatmul.mubr.bf16.gmra.mrb[0].mxu0 %v5169
      %v5404 = vpop.f32.mrb[0].mxu0
      %v5405 = vadd.f32 0.0, %v5404
      %v5406 = vpop.f32.mrb[0].mxu0
      %v5407 = vpop.f32.mrb[0].mxu0
      %v5408 = vadd.f32 0.0, %v5407
      %v5409 = vpop.f32.mrb[0].mxu0
      %5410 = vdwg.mxu0
      %5411 = vst [vmem:[#allocation3] sm:$0xff] %v5269
      %5412 = vst [vmem:[#allocation3 + $0x8] sm:$0xff] %v5272
      %5413 = vst [vmem:[#allocation3 + $0x10] sm:$0xff] %v5277
      %5414 = vst [vmem:[#allocation3 + $0x18] sm:$0xff] %v5280
      %5415 = vst [vmem:[#allocation3 + $0x20] sm:$0xff] %v5285
      %5416 = vst [vmem:[#allocation3 + $0x28] sm:$0xff] %v5288
      %5417 = vst [vmem:[#allocation3 + $0x30] sm:$0xff] %v5293
      %5418 = vst [vmem:[#allocation3 + $0x38] sm:$0xff] %v5296
      %5419 = vst [vmem:[#allocation3 + $0x40] sm:$0xff] %v5301
      %5420 = vst [vmem:[#allocation3 + $0x48] sm:$0xff] %v5304
      %5421 = vst [vmem:[#allocation3 + $0x50] sm:$0xff] %v5309
      %5422 = vst [vmem:[#allocation3 + $0x58] sm:$0xff] %v5312
      %5423 = vst [vmem:[#allocation3 + $0x60] sm:$0xff] %v5317
      %5424 = vst [vmem:[#allocation3 + $0x68] sm:$0xff] %v5320
      %5425 = vst [vmem:[#allocation3 + $0x70] sm:$0xff] %v5325
      %5426 = vst [vmem:[#allocation3 + $0x78] sm:$0xff] %v5328
      %5427 = vst [vmem:[#allocation3 + $0x80] sm:$0xff] %v5333
      %5428 = vst [vmem:[#allocation3 + $0x88] sm:$0xff] %v5336
      %5429 = vst [vmem:[#allocation3 + $0x90] sm:$0xff] %v5341
      %5430 = vst [vmem:[#allocation3 + $0x98] sm:$0xff] %v5344
      %5431 = vst [vmem:[#allocation3 + $0xa0] sm:$0xff] %v5349
      %5432 = vst [vmem:[#allocation3 + $0xa8] sm:$0xff] %v5352
      %5433 = vst [vmem:[#allocation3 + $0xb0] sm:$0xff] %v5357
      %5434 = vst [vmem:[#allocation3 + $0xb8] sm:$0xff] %v5360
      %5435 = vst [vmem:[#allocation3 + $0xc0] sm:$0xff] %v5365
      %5436 = vst [vmem:[#allocation3 + $0xc8] sm:$0xff] %v5368
      %5437 = vst [vmem:[#allocation3 + $0xd0] sm:$0xff] %v5373
      %5438 = vst [vmem:[#allocation3 + $0xd8] sm:$0xff] %v5376
      %5439 = vst [vmem:[#allocation3 + $0xe0] sm:$0xff] %v5381
      %5440 = vst [vmem:[#allocation3 + $0xe8] sm:$0xff] %v5384
      %5441 = vst [vmem:[#allocation3 + $0xf0] sm:$0xff] %v5389
      %5442 = vst [vmem:[#allocation3 + $0xf8] sm:$0xff] %v5392
      %5443 = vst [vmem:[#allocation3 + $0x100] sm:$0xff] %v5397
      %5444 = vst [vmem:[#allocation3 + $0x108] sm:$0xff] %v5400
      %5445 = vst [vmem:[#allocation3 + $0x110] sm:$0xff] %v5405
      %5446 = vst [vmem:[#allocation3 + $0x118] sm:$0xff] %v5408
      %v5447 = vld [vmem:[#allocation2 + $0x1] sm:$0xff]
      %v5448 = vld [vmem:[#allocation2 + $0x9] sm:$0xff]
      %v5449 = vld [vmem:[#allocation2 + $0x11] sm:$0xff]
      %v5450 = vld [vmem:[#allocation2 + $0x19] sm:$0xff]
      %v5451 = vld [vmem:[#allocation2 + $0x21] sm:$0xff]
      %v5452 = vld [vmem:[#allocation2 + $0x29] sm:$0xff]
      %v5453 = vld [vmem:[#allocation2 + $0x31] sm:$0xff]
      %v5454 = vld [vmem:[#allocation2 + $0x39] sm:$0xff]
      %v5455 = vld [vmem:[#allocation2 + $0x41] sm:$0xff]
      %v5456 = vld [vmem:[#allocation2 + $0x49] sm:$0xff]
      %v5457 = vld [vmem:[#allocation2 + $0x51] sm:$0xff]
      %v5458 = vld [vmem:[#allocation2 + $0x59] sm:$0xff]
      %v5459 = vld [vmem:[#allocation2 + $0x61] sm:$0xff]
      %v5460 = vld [vmem:[#allocation2 + $0x69] sm:$0xff]
      %v5461 = vld [vmem:[#allocation2 + $0x71] sm:$0xff]
      %v5462 = vld [vmem:[#allocation2 + $0x79] sm:$0xff]
      %v5463 = vld [vmem:[#allocation2 + $0x81] sm:$0xff]
      %v5464 = vld [vmem:[#allocation2 + $0x89] sm:$0xff]
      %v5465 = vld [vmem:[#allocation2 + $0x91] sm:$0xff]
      %v5466 = vld [vmem:[#allocation2 + $0x99] sm:$0xff]
      %v5467 = vld [vmem:[#allocation2 + $0xa1] sm:$0xff]
      %v5468 = vld [vmem:[#allocation2 + $0xa9] sm:$0xff]
      %v5469 = vld [vmem:[#allocation2 + $0xb1] sm:$0xff]
      %v5470 = vld [vmem:[#allocation2 + $0xb9] sm:$0xff]
      %v5471 = vld [vmem:[#allocation2 + $0xc1] sm:$0xff]
      %v5472 = vld [vmem:[#allocation2 + $0xc9] sm:$0xff]
      %v5473 = vld [vmem:[#allocation2 + $0xd1] sm:$0xff]
      %v5474 = vld [vmem:[#allocation2 + $0xd9] sm:$0xff]
      %v5475 = vld [vmem:[#allocation2 + $0xe1] sm:$0xff]
      %v5476 = vld [vmem:[#allocation2 + $0xe9] sm:$0xff]
      %v5477 = vld [vmem:[#allocation2 + $0xf1] sm:$0xff]
      %v5478 = vld [vmem:[#allocation2 + $0xf9] sm:$0xff]
      %v5479 = vld [vmem:[#allocation2 + $0x101] sm:$0xff]
      %v5480 = vld [vmem:[#allocation2 + $0x109] sm:$0xff]
      %v5481 = vld [vmem:[#allocation2 + $0x111] sm:$0xff]
      %v5482 = vld [vmem:[#allocation2 + $0x119] sm:$0xff]
      %v5483 = vpack.c.bf16 %v5448, %v5447
      %v5484 = vpack.c.bf16 %v5450, %v5449
      %v5485 = vpack.c.bf16 %v5452, %v5451
      %v5486 = vpack.c.bf16 %v5454, %v5453
      %v5487 = vpack.c.bf16 %v5456, %v5455
      %v5488 = vpack.c.bf16 %v5458, %v5457
      %v5489 = vpack.c.bf16 %v5460, %v5459
      %v5490 = vpack.c.bf16 %v5462, %v5461
      %v5491 = vpack.c.bf16 %v5464, %v5463
      %v5492 = vpack.c.bf16 %v5466, %v5465
      %v5493 = vpack.c.bf16 %v5468, %v5467
      %v5494 = vpack.c.bf16 %v5470, %v5469
      %v5495 = vpack.c.bf16 %v5472, %v5471
      %v5496 = vpack.c.bf16 %v5474, %v5473
      %v5497 = vpack.c.bf16 %v5476, %v5475
      %v5498 = vpack.c.bf16 %v5478, %v5477
      %v5499 = vpack.c.bf16 %v5480, %v5479
      %v5500 = vpack.c.bf16 %v5482, %v5481
      %s5501 = scalar_lea.vmem %s2, 64
      %v5502 = vld [vmem:[%s5501] sm:$0xf]
      %v5503 = vld [vmem:[%s5501 + $0x4] sm:$0xf]
      %v5504 = vld [vmem:[%s5501 + $0x8] sm:$0xf]
      %v5505 = vld [vmem:[%s5501 + $0xc] sm:$0xf]
      %v5506 = vld [vmem:[%s5501 + $0x10] sm:$0xf]
      %v5507 = vld [vmem:[%s5501 + $0x14] sm:$0xf]
      %v5508 = vld [vmem:[%s5501 + $0x18] sm:$0xf]
      %v5509 = vld [vmem:[%s5501 + $0x1c] sm:$0xf]
      %v5510 = vld [vmem:[%s5501 + $0x20] sm:$0xf]
      %v5511 = vld [vmem:[%s5501 + $0x24] sm:$0xf]
      %v5512 = vld [vmem:[%s5501 + $0x28] sm:$0xf]
      %v5513 = vld [vmem:[%s5501 + $0x2c] sm:$0xf]
      %v5514 = vld [vmem:[%s5501 + $0x30] sm:$0xf]
      %v5515 = vld [vmem:[%s5501 + $0x34] sm:$0xf]
      %v5516 = vld [vmem:[%s5501 + $0x38] sm:$0xf]
      %v5517 = vld [vmem:[%s5501 + $0x3c] sm:$0xf]
      %v5534 = vunpack.c.l.b16 %v5502
      %v5535 = vunpack.c.l.b16 %v5503
      %v5536 = vunpack.c.l.b16 %v5504
      %v5537 = vunpack.c.l.b16 %v5505
      %v5538 = vunpack.c.l.b16 %v5506
      %v5539 = vunpack.c.l.b16 %v5507
      %v5540 = vunpack.c.l.b16 %v5508
      %v5541 = vunpack.c.l.b16 %v5509
      %v5542 = vunpack.c.l.b16 %v5510
      %v5543 = vunpack.c.l.b16 %v5511
      %v5544 = vunpack.c.l.b16 %v5512
      %v5545 = vunpack.c.l.b16 %v5513
      %v5546 = vunpack.c.l.b16 %v5514
      %v5547 = vunpack.c.l.b16 %v5515
      %v5548 = vunpack.c.l.b16 %v5516
      %v5549 = vunpack.c.l.b16 %v5517
      %v5550 = vpack.c.b16 %v5535, %v5534
      %v5551 = vpack.c.b16 %v5537, %v5536
      %v5552 = vpack.c.b16 %v5539, %v5538
      %v5553 = vpack.c.b16 %v5541, %v5540
      %v5554 = vpack.c.b16 %v5543, %v5542
      %v5555 = vpack.c.b16 %v5545, %v5544
      %v5556 = vpack.c.b16 %v5547, %v5546
      %v5557 = vpack.c.b16 %v5549, %v5548
      %5566 = vmatprep.subr.bf16.mxu0 0
      %5567 = vmatpush1.bf16.msra.mxu0 %v5550
      %5568 = vmatprep.subr.bf16.mxu0 0
      %5569 = vmatpush1.bf16.msra.mxu0 %v5551
      %5570 = vmatprep.subr.bf16.mxu0 0
      %5571 = vmatpush1.bf16.msra.mxu0 %v5552
      %5572 = vmatprep.subr.bf16.mxu0 0
      %5573 = vmatpush1.bf16.msra.mxu0 %v5553
      %5574 = vmatprep.subr.bf16.mxu0 0
      %5575 = vmatpush1.bf16.msra.mxu0 %v5554
      %5576 = vmatprep.subr.bf16.mxu0 0
      %5577 = vmatpush1.bf16.msra.mxu0 %v5555
      %5578 = vmatprep.subr.bf16.mxu0 0
      %5579 = vmatpush1.bf16.msra.mxu0 %v5556
      %5580 = vmatprep.subr.bf16.mxu0 0
      %5581 = vmatpush1.bf16.msra.mxu0 %v5557
      %5582 = vmatprep.subr.bf16.mxu0 0
      %5583 = vmatpush1.bf16.msra.mxu0 0
      %5584 = vmatprep.subr.bf16.mxu0 0
      %5585 = vmatpush1.bf16.msra.mxu0 0
      %5586 = vmatprep.subr.bf16.mxu0 0
      %5587 = vmatpush1.bf16.msra.mxu0 0
      %5588 = vmatprep.subr.bf16.mxu0 0
      %5589 = vmatpush1.bf16.msra.mxu0 0
      %5590 = vmatprep.subr.bf16.mxu0 0
      %5591 = vmatpush1.bf16.msra.mxu0 0
      %5592 = vmatprep.subr.bf16.mxu0 0
      %5593 = vmatpush1.bf16.msra.mxu0 0
      %5594 = vmatprep.subr.bf16.mxu0 0
      %5595 = vmatpush1.bf16.msra.mxu0 0
      %5596 = vmatprep.subr.bf16.mxu0 0
      %5597 = vmatpush1.bf16.msra.mxu0 0
      %5598 = vmatprep.mubr.bf16.mxu0 0
      %5599 = vmatmul.mubr.bf16.gmra.mrb[0].mxu0 %v5483
      %v5600 = vpop.f32.mrb[0].mxu0
      %v5601 = vadd.f32 0.0, %v5600
      %v5602 = vpop.f32.mrb[0].mxu0
      %v5603 = vpop.f32.mrb[0].mxu0
      %v5604 = vadd.f32 0.0, %v5603
      %v5605 = vpop.f32.mrb[0].mxu0
      %5606 = vmatprep.mubr.bf16.mxu0 0
      %5607 = vmatmul.mubr.bf16.gmra.mrb[0].mxu0 %v5484
      %v5608 = vpop.f32.mrb[0].mxu0
      %v5609 = vadd.f32 0.0, %v5608
      %v5610 = vpop.f32.mrb[0].mxu0
      %v5611 = vpop.f32.mrb[0].mxu0
      %v5612 = vadd.f32 0.0, %v5611
      %v5613 = vpop.f32.mrb[0].mxu0
      %5614 = vmatprep.mubr.bf16.mxu0 0
      %5615 = vmatmul.mubr.bf16.gmra.mrb[0].mxu0 %v5485
      %v5616 = vpop.f32.mrb[0].mxu0
      %v5617 = vadd.f32 0.0, %v5616
      %v5618 = vpop.f32.mrb[0].mxu0
      %v5619 = vpop.f32.mrb[0].mxu0
      %v5620 = vadd.f32 0.0, %v5619
      %v5621 = vpop.f32.mrb[0].mxu0
      %5622 = vmatprep.mubr.bf16.mxu0 0
      %5623 = vmatmul.mubr.bf16.gmra.mrb[0].mxu0 %v5486
      %v5624 = vpop.f32.mrb[0].mxu0
      %v5625 = vadd.f32 0.0, %v5624
      %v5626 = vpop.f32.mrb[0].mxu0
      %v5627 = vpop.f32.mrb[0].mxu0
      %v5628 = vadd.f32 0.0, %v5627
      %v5629 = vpop.f32.mrb[0].mxu0
      %5630 = vmatprep.mubr.bf16.mxu0 0
      %5631 = vmatmul.mubr.bf16.gmra.mrb[0].mxu0 %v5487
      %v5632 = vpop.f32.mrb[0].mxu0
      %v5633 = vadd.f32 0.0, %v5632
      %v5634 = vpop.f32.mrb[0].mxu0
      %v5635 = vpop.f32.mrb[0].mxu0
      %v5636 = vadd.f32 0.0, %v5635
      %v5637 = vpop.f32.mrb[0].mxu0
      %5638 = vmatprep.mubr.bf16.mxu0 0
      %5639 = vmatmul.mubr.bf16.gmra.mrb[0].mxu0 %v5488
      %v5640 = vpop.f32.mrb[0].mxu0
      %v5641 = vadd.f32 0.0, %v5640
      %v5642 = vpop.f32.mrb[0].mxu0
      %v5643 = vpop.f32.mrb[0].mxu0
      %v5644 = vadd.f32 0.0, %v5643
      %v5645 = vpop.f32.mrb[0].mxu0
      %5646 = vmatprep.mubr.bf16.mxu0 0
      %5647 = vmatmul.mubr.bf16.gmra.mrb[0].mxu0 %v5489
      %v5648 = vpop.f32.mrb[0].mxu0
      %v5649 = vadd.f32 0.0, %v5648
      %v5650 = vpop.f32.mrb[0].mxu0
      %v5651 = vpop.f32.mrb[0].mxu0
      %v5652 = vadd.f32 0.0, %v5651
      %v5653 = vpop.f32.mrb[0].mxu0
      %5654 = vmatprep.mubr.bf16.mxu0 0
      %5655 = vmatmul.mubr.bf16.gmra.mrb[0].mxu0 %v5490
      %v5656 = vpop.f32.mrb[0].mxu0
      %v5657 = vadd.f32 0.0, %v5656
      %v5658 = vpop.f32.mrb[0].mxu0
      %v5659 = vpop.f32.mrb[0].mxu0
      %v5660 = vadd.f32 0.0, %v5659
      %v5661 = vpop.f32.mrb[0].mxu0
      %5662 = vmatprep.mubr.bf16.mxu0 0
      %5663 = vmatmul.mubr.bf16.gmra.mrb[0].mxu0 %v5491
      %v5664 = vpop.f32.mrb[0].mxu0
      %v5665 = vadd.f32 0.0, %v5664
      %v5666 = vpop.f32.mrb[0].mxu0
      %v5667 = vpop.f32.mrb[0].mxu0
      %v5668 = vadd.f32 0.0, %v5667
      %v5669 = vpop.f32.mrb[0].mxu0
      %5670 = vmatprep.mubr.bf16.mxu0 0
      %5671 = vmatmul.mubr.bf16.gmra.mrb[0].mxu0 %v5492
      %v5672 = vpop.f32.mrb[0].mxu0
      %v5673 = vadd.f32 0.0, %v5672
      %v5674 = vpop.f32.mrb[0].mxu0
      %v5675 = vpop.f32.mrb[0].mxu0
      %v5676 = vadd.f32 0.0, %v5675
      %v5677 = vpop.f32.mrb[0].mxu0
      %5678 = vmatprep.mubr.bf16.mxu0 0
      %5679 = vmatmul.mubr.bf16.gmra.mrb[0].mxu0 %v5493
      %v5680 = vpop.f32.mrb[0].mxu0
      %v5681 = vadd.f32 0.0, %v5680
      %v5682 = vpop.f32.mrb[0].mxu0
      %v5683 = vpop.f32.mrb[0].mxu0
      %v5684 = vadd.f32 0.0, %v5683
      %v5685 = vpop.f32.mrb[0].mxu0
      %5686 = vmatprep.mubr.bf16.mxu0 0
      %5687 = vmatmul.mubr.bf16.gmra.mrb[0].mxu0 %v5494
      %v5688 = vpop.f32.mrb[0].mxu0
      %v5689 = vadd.f32 0.0, %v5688
      %v5690 = vpop.f32.mrb[0].mxu0
      %v5691 = vpop.f32.mrb[0].mxu0
      %v5692 = vadd.f32 0.0, %v5691
      %v5693 = vpop.f32.mrb[0].mxu0
      %5694 = vmatprep.mubr.bf16.mxu0 0
      %5695 = vmatmul.mubr.bf16.gmra.mrb[0].mxu0 %v5495
      %v5696 = vpop.f32.mrb[0].mxu0
      %v5697 = vadd.f32 0.0, %v5696
      %v5698 = vpop.f32.mrb[0].mxu0
      %v5699 = vpop.f32.mrb[0].mxu0
      %v5700 = vadd.f32 0.0, %v5699
      %v5701 = vpop.f32.mrb[0].mxu0
      %5702 = vmatprep.mubr.bf16.mxu0 0
      %5703 = vmatmul.mubr.bf16.gmra.mrb[0].mxu0 %v5496
      %v5704 = vpop.f32.mrb[0].mxu0
      %v5705 = vadd.f32 0.0, %v5704
      %v5706 = vpop.f32.mrb[0].mxu0
      %v5707 = vpop.f32.mrb[0].mxu0
      %v5708 = vadd.f32 0.0, %v5707
      %v5709 = vpop.f32.mrb[0].mxu0
      %5710 = vmatprep.mubr.bf16.mxu0 0
      %5711 = vmatmul.mubr.bf16.gmra.mrb[0].mxu0 %v5497
      %v5712 = vpop.f32.mrb[0].mxu0
      %v5713 = vadd.f32 0.0, %v5712
      %v5714 = vpop.f32.mrb[0].mxu0
      %v5715 = vpop.f32.mrb[0].mxu0
      %v5716 = vadd.f32 0.0, %v5715
      %v5717 = vpop.f32.mrb[0].mxu0
      %5718 = vmatprep.mubr.bf16.mxu0 0
      %5719 = vmatmul.mubr.bf16.gmra.mrb[0].mxu0 %v5498
      %v5720 = vpop.f32.mrb[0].mxu0
      %v5721 = vadd.f32 0.0, %v5720
      %v5722 = vpop.f32.mrb[0].mxu0
      %v5723 = vpop.f32.mrb[0].mxu0
      %v5724 = vadd.f32 0.0, %v5723
      %v5725 = vpop.f32.mrb[0].mxu0
      %5726 = vmatprep.mubr.bf16.mxu0 0
      %5727 = vmatmul.mubr.bf16.gmra.mrb[0].mxu0 %v5499
      %v5728 = vpop.f32.mrb[0].mxu0
      %v5729 = vadd.f32 0.0, %v5728
      %v5730 = vpop.f32.mrb[0].mxu0
      %v5731 = vpop.f32.mrb[0].mxu0
      %v5732 = vadd.f32 0.0, %v5731
      %v5733 = vpop.f32.mrb[0].mxu0
      %5734 = vmatprep.mubr.bf16.mxu0 0
      %5735 = vmatmul.mubr.bf16.gmra.mrb[0].mxu0 %v5500
      %v5736 = vpop.f32.mrb[0].mxu0
      %v5737 = vadd.f32 0.0, %v5736
      %v5738 = vpop.f32.mrb[0].mxu0
      %v5739 = vpop.f32.mrb[0].mxu0
      %v5740 = vadd.f32 0.0, %v5739
      %v5741 = vpop.f32.mrb[0].mxu0
      %5742 = vdwg.mxu0
      %v5743 = vld [vmem:[#allocation3] sm:$0xff]
      %v5744 = vld [vmem:[#allocation3 + $0x8] sm:$0xff]
      %v5745 = vld [vmem:[#allocation3 + $0x10] sm:$0xff]
      %v5746 = vld [vmem:[#allocation3 + $0x18] sm:$0xff]
      %v5747 = vld [vmem:[#allocation3 + $0x20] sm:$0xff]
      %v5748 = vld [vmem:[#allocation3 + $0x28] sm:$0xff]
      %v5749 = vld [vmem:[#allocation3 + $0x30] sm:$0xff]
      %v5750 = vld [vmem:[#allocation3 + $0x38] sm:$0xff]
      %v5751 = vld [vmem:[#allocation3 + $0x40] sm:$0xff]
      %v5752 = vld [vmem:[#allocation3 + $0x48] sm:$0xff]
      %v5753 = vld [vmem:[#allocation3 + $0x50] sm:$0xff]
      %v5754 = vld [vmem:[#allocation3 + $0x58] sm:$0xff]
      %v5755 = vld [vmem:[#allocation3 + $0x60] sm:$0xff]
      %v5756 = vld [vmem:[#allocation3 + $0x68] sm:$0xff]
      %v5757 = vld [vmem:[#allocation3 + $0x70] sm:$0xff]
      %v5758 = vld [vmem:[#allocation3 + $0x78] sm:$0xff]
      %v5759 = vld [vmem:[#allocation3 + $0x80] sm:$0xff]
      %v5760 = vld [vmem:[#allocation3 + $0x88] sm:$0xff]
      %v5761 = vld [vmem:[#allocation3 + $0x90] sm:$0xff]
      %v5762 = vld [vmem:[#allocation3 + $0x98] sm:$0xff]
      %v5763 = vld [vmem:[#allocation3 + $0xa0] sm:$0xff]
      %v5764 = vld [vmem:[#allocation3 + $0xa8] sm:$0xff]
      %v5765 = vld [vmem:[#allocation3 + $0xb0] sm:$0xff]
      %v5766 = vld [vmem:[#allocation3 + $0xb8] sm:$0xff]
      %v5767 = vld [vmem:[#allocation3 + $0xc0] sm:$0xff]
      %v5768 = vld [vmem:[#allocation3 + $0xc8] sm:$0xff]
      %v5769 = vld [vmem:[#allocation3 + $0xd0] sm:$0xff]
      %v5770 = vld [vmem:[#allocation3 + $0xd8] sm:$0xff]
      %v5771 = vld [vmem:[#allocation3 + $0xe0] sm:$0xff]
      %v5772 = vld [vmem:[#allocation3 + $0xe8] sm:$0xff]
      %v5773 = vld [vmem:[#allocation3 + $0xf0] sm:$0xff]
      %v5774 = vld [vmem:[#allocation3 + $0xf8] sm:$0xff]
      %v5775 = vld [vmem:[#allocation3 + $0x100] sm:$0xff]
      %v5776 = vld [vmem:[#allocation3 + $0x108] sm:$0xff]
      %v5777 = vld [vmem:[#allocation3 + $0x110] sm:$0xff]
      %v5778 = vld [vmem:[#allocation3 + $0x118] sm:$0xff]
      %v5779 = vadd.f32 %v5743, %v5601
      %v5780 = vadd.f32 %v5744, %v5604
      %v5781 = vadd.f32 %v5745, %v5609
      %v5782 = vadd.f32 %v5746, %v5612
      %v5783 = vadd.f32 %v5747, %v5617
      %v5784 = vadd.f32 %v5748, %v5620
      %v5785 = vadd.f32 %v5749, %v5625
      %v5786 = vadd.f32 %v5750, %v5628
      %v5787 = vadd.f32 %v5751, %v5633
      %v5788 = vadd.f32 %v5752, %v5636
      %v5789 = vadd.f32 %v5753, %v5641
      %v5790 = vadd.f32 %v5754, %v5644
      %v5791 = vadd.f32 %v5755, %v5649
      %v5792 = vadd.f32 %v5756, %v5652
      %v5793 = vadd.f32 %v5757, %v5657
      %v5794 = vadd.f32 %v5758, %v5660
      %v5795 = vadd.f32 %v5759, %v5665
      %v5796 = vadd.f32 %v5760, %v5668
      %v5797 = vadd.f32 %v5761, %v5673
      %v5798 = vadd.f32 %v5762, %v5676
      %v5799 = vadd.f32 %v5763, %v5681
      %v5800 = vadd.f32 %v5764, %v5684
      %v5801 = vadd.f32 %v5765, %v5689
      %v5802 = vadd.f32 %v5766, %v5692
      %v5803 = vadd.f32 %v5767, %v5697
      %v5804 = vadd.f32 %v5768, %v5700
      %v5805 = vadd.f32 %v5769, %v5705
      %v5806 = vadd.f32 %v5770, %v5708
      %v5807 = vadd.f32 %v5771, %v5713
      %v5808 = vadd.f32 %v5772, %v5716
      %v5809 = vadd.f32 %v5773, %v5721
      %v5810 = vadd.f32 %v5774, %v5724
      %v5811 = vadd.f32 %v5775, %v5729
      %v5812 = vadd.f32 %v5776, %v5732
      %v5813 = vadd.f32 %v5777, %v5737
      %v5814 = vadd.f32 %v5778, %v5740
      %5815 = vst [vmem:[#allocation3] sm:$0xff] %v5779
      %5816 = vst [vmem:[#allocation3 + $0x8] sm:$0xff] %v5780
      %5817 = vst [vmem:[#allocation3 + $0x10] sm:$0xff] %v5781
      %5818 = vst [vmem:[#allocation3 + $0x18] sm:$0xff] %v5782
      %5819 = vst [vmem:[#allocation3 + $0x20] sm:$0xff] %v5783
      %5820 = vst [vmem:[#allocation3 + $0x28] sm:$0xff] %v5784
      %5821 = vst [vmem:[#allocation3 + $0x30] sm:$0xff] %v5785
      %5822 = vst [vmem:[#allocation3 + $0x38] sm:$0xff] %v5786
      %5823 = vst [vmem:[#allocation3 + $0x40] sm:$0xff] %v5787
      %5824 = vst [vmem:[#allocation3 + $0x48] sm:$0xff] %v5788
      %5825 = vst [vmem:[#allocation3 + $0x50] sm:$0xff] %v5789
      %5826 = vst [vmem:[#allocation3 + $0x58] sm:$0xff] %v5790
      %5827 = vst [vmem:[#allocation3 + $0x60] sm:$0xff] %v5791
      %5828 = vst [vmem:[#allocation3 + $0x68] sm:$0xff] %v5792
      %5829 = vst [vmem:[#allocation3 + $0x70] sm:$0xff] %v5793
      %5830 = vst [vmem:[#allocation3 + $0x78] sm:$0xff] %v5794
      %5831 = vst [vmem:[#allocation3 + $0x80] sm:$0xff] %v5795
      %5832 = vst [vmem:[#allocation3 + $0x88] sm:$0xff] %v5796
      %5833 = vst [vmem:[#allocation3 + $0x90] sm:$0xff] %v5797
      %5834 = vst [vmem:[#allocation3 + $0x98] sm:$0xff] %v5798
      %5835 = vst [vmem:[#allocation3 + $0xa0] sm:$0xff] %v5799
      %5836 = vst [vmem:[#allocation3 + $0xa8] sm:$0xff] %v5800
      %5837 = vst [vmem:[#allocation3 + $0xb0] sm:$0xff] %v5801
      %5838 = vst [vmem:[#allocation3 + $0xb8] sm:$0xff] %v5802
      %5839 = vst [vmem:[#allocation3 + $0xc0] sm:$0xff] %v5803
      %5840 = vst [vmem:[#allocation3 + $0xc8] sm:$0xff] %v5804
      %5841 = vst [vmem:[#allocation3 + $0xd0] sm:$0xff] %v5805
      %5842 = vst [vmem:[#allocation3 + $0xd8] sm:$0xff] %v5806
      %5843 = vst [vmem:[#allocation3 + $0xe0] sm:$0xff] %v5807
      %5844 = vst [vmem:[#allocation3 + $0xe8] sm:$0xff] %v5808
      %5845 = vst [vmem:[#allocation3 + $0xf0] sm:$0xff] %v5809
      %5846 = vst [vmem:[#allocation3 + $0xf8] sm:$0xff] %v5810
      %5847 = vst [vmem:[#allocation3 + $0x100] sm:$0xff] %v5811
      %5848 = vst [vmem:[#allocation3 + $0x108] sm:$0xff] %v5812
      %5849 = vst [vmem:[#allocation3 + $0x110] sm:$0xff] %v5813
      %5850 = vst [vmem:[#allocation3 + $0x118] sm:$0xff] %v5814
      %v5851 = vld [vmem:[#allocation2 + $0x2] sm:$0xff]
      %v5852 = vld [vmem:[#allocation2 + $0xa] sm:$0xff]
      %v5853 = vld [vmem:[#allocation2 + $0x12] sm:$0xff]
      %v5854 = vld [vmem:[#allocation2 + $0x1a] sm:$0xff]
      %v5855 = vld [vmem:[#allocation2 + $0x22] sm:$0xff]
      %v5856 = vld [vmem:[#allocation2 + $0x2a] sm:$0xff]
      %v5857 = vld [vmem:[#allocation2 + $0x32] sm:$0xff]
      %v5858 = vld [vmem:[#allocation2 + $0x3a] sm:$0xff]
      %v5859 = vld [vmem:[#allocation2 + $0x42] sm:$0xff]
      %v5860 = vld [vmem:[#allocation2 + $0x4a] sm:$0xff]
      %v5861 = vld [vmem:[#allocation2 + $0x52] sm:$0xff]
      %v5862 = vld [vmem:[#allocation2 + $0x5a] sm:$0xff]
      %v5863 = vld [vmem:[#allocation2 + $0x62] sm:$0xff]
      %v5864 = vld [vmem:[#allocation2 + $0x6a] sm:$0xff]
      %v5865 = vld [vmem:[#allocation2 + $0x72] sm:$0xff]
      %v5866 = vld [vmem:[#allocation2 + $0x7a] sm:$0xff]
      %v5867 = vld [vmem:[#allocation2 + $0x82] sm:$0xff]
      %v5868 = vld [vmem:[#allocation2 + $0x8a] sm:$0xff]
      %v5869 = vld [vmem:[#allocation2 + $0x92] sm:$0xff]
      %v5870 = vld [vmem:[#allocation2 + $0x9a] sm:$0xff]
      %v5871 = vld [vmem:[#allocation2 + $0xa2] sm:$0xff]
      %v5872 = vld [vmem:[#allocation2 + $0xaa] sm:$0xff]
      %v5873 = vld [vmem:[#allocation2 + $0xb2] sm:$0xff]
      %v5874 = vld [vmem:[#allocation2 + $0xba] sm:$0xff]
      %v5875 = vld [vmem:[#allocation2 + $0xc2] sm:$0xff]
      %v5876 = vld [vmem:[#allocation2 + $0xca] sm:$0xff]
      %v5877 = vld [vmem:[#allocation2 + $0xd2] sm:$0xff]
      %v5878 = vld [vmem:[#allocation2 + $0xda] sm:$0xff]
      %v5879 = vld [vmem:[#allocation2 + $0xe2] sm:$0xff]
      %v5880 = vld [vmem:[#allocation2 + $0xea] sm:$0xff]
      %v5881 = vld [vmem:[#allocation2 + $0xf2] sm:$0xff]
      %v5882 = vld [vmem:[#allocation2 + $0xfa] sm:$0xff]
      %v5883 = vld [vmem:[#allocation2 + $0x102] sm:$0xff]
      %v5884 = vld [vmem:[#allocation2 + $0x10a] sm:$0xff]
      %v5885 = vld [vmem:[#allocation2 + $0x112] sm:$0xff]
      %v5886 = vld [vmem:[#allocation2 + $0x11a] sm:$0xff]
      %v5887 = vpack.c.bf16 %v5852, %v5851
      %v5888 = vpack.c.bf16 %v5854, %v5853
      %v5889 = vpack.c.bf16 %v5856, %v5855
      %v5890 = vpack.c.bf16 %v5858, %v5857
      %v5891 = vpack.c.bf16 %v5860, %v5859
      %v5892 = vpack.c.bf16 %v5862, %v5861
      %v5893 = vpack.c.bf16 %v5864, %v5863
      %v5894 = vpack.c.bf16 %v5866, %v5865
      %v5895 = vpack.c.bf16 %v5868, %v5867
      %v5896 = vpack.c.bf16 %v5870, %v5869
      %v5897 = vpack.c.bf16 %v5872, %v5871
      %v5898 = vpack.c.bf16 %v5874, %v5873
      %v5899 = vpack.c.bf16 %v5876, %v5875
      %v5900 = vpack.c.bf16 %v5878, %v5877
      %v5901 = vpack.c.bf16 %v5880, %v5879
      %v5902 = vpack.c.bf16 %v5882, %v5881
      %v5903 = vpack.c.bf16 %v5884, %v5883
      %v5904 = vpack.c.bf16 %v5886, %v5885
      %s5905 = scalar_lea.vmem %s2, 128
      %v5906 = vld [vmem:[%s5905] sm:$0xf]
      %v5907 = vld [vmem:[%s5905 + $0x4] sm:$0xf]
      %v5908 = vld [vmem:[%s5905 + $0x8] sm:$0xf]
      %v5909 = vld [vmem:[%s5905 + $0xc] sm:$0xf]
      %v5910 = vld [vmem:[%s5905 + $0x10] sm:$0xf]
      %v5911 = vld [vmem:[%s5905 + $0x14] sm:$0xf]
      %v5912 = vld [vmem:[%s5905 + $0x18] sm:$0xf]
      %v5913 = vld [vmem:[%s5905 + $0x1c] sm:$0xf]
      %v5914 = vld [vmem:[%s5905 + $0x20] sm:$0xf]
      %v5915 = vld [vmem:[%s5905 + $0x24] sm:$0xf]
      %v5916 = vld [vmem:[%s5905 + $0x28] sm:$0xf]
      %v5917 = vld [vmem:[%s5905 + $0x2c] sm:$0xf]
      %v5918 = vld [vmem:[%s5905 + $0x30] sm:$0xf]
      %v5919 = vld [vmem:[%s5905 + $0x34] sm:$0xf]
      %v5920 = vld [vmem:[%s5905 + $0x38] sm:$0xf]
      %v5921 = vld [vmem:[%s5905 + $0x3c] sm:$0xf]
      %v5938 = vunpack.c.l.b16 %v5906
      %v5939 = vunpack.c.l.b16 %v5907
      %v5940 = vunpack.c.l.b16 %v5908
      %v5941 = vunpack.c.l.b16 %v5909
      %v5942 = vunpack.c.l.b16 %v5910
      %v5943 = vunpack.c.l.b16 %v5911
      %v5944 = vunpack.c.l.b16 %v5912
      %v5945 = vunpack.c.l.b16 %v5913
      %v5946 = vunpack.c.l.b16 %v5914
      %v5947 = vunpack.c.l.b16 %v5915
      %v5948 = vunpack.c.l.b16 %v5916
      %v5949 = vunpack.c.l.b16 %v5917
      %v5950 = vunpack.c.l.b16 %v5918
      %v5951 = vunpack.c.l.b16 %v5919
      %v5952 = vunpack.c.l.b16 %v5920
      %v5953 = vunpack.c.l.b16 %v5921
      %v5954 = vpack.c.b16 %v5939, %v5938
      %v5955 = vpack.c.b16 %v5941, %v5940
      %v5956 = vpack.c.b16 %v5943, %v5942
      %v5957 = vpack.c.b16 %v5945, %v5944
      %v5958 = vpack.c.b16 %v5947, %v5946
      %v5959 = vpack.c.b16 %v5949, %v5948
      %v5960 = vpack.c.b16 %v5951, %v5950
      %v5961 = vpack.c.b16 %v5953, %v5952
      %5970 = vmatprep.subr.bf16.mxu0 0
      %5971 = vmatpush1.bf16.msra.mxu0 %v5954
      %5972 = vmatprep.subr.bf16.mxu0 0
      %5973 = vmatpush1.bf16.msra.mxu0 %v5955
      %5974 = vmatprep.subr.bf16.mxu0 0
      %5975 = vmatpush1.bf16.msra.mxu0 %v5956
      %5976 = vmatprep.subr.bf16.mxu0 0
      %5977 = vmatpush1.bf16.msra.mxu0 %v5957
      %5978 = vmatprep.subr.bf16.mxu0 0
      %5979 = vmatpush1.bf16.msra.mxu0 %v5958
      %5980 = vmatprep.subr.bf16.mxu0 0
      %5981 = vmatpush1.bf16.msra.mxu0 %v5959
      %5982 = vmatprep.subr.bf16.mxu0 0
      %5983 = vmatpush1.bf16.msra.mxu0 %v5960
      %5984 = vmatprep.subr.bf16.mxu0 0
      %5985 = vmatpush1.bf16.msra.mxu0 %v5961
      %5986 = vmatprep.subr.bf16.mxu0 0
      %5987 = vmatpush1.bf16.msra.mxu0 0
      %5988 = vmatprep.subr.bf16.mxu0 0
      %5989 = vmatpush1.bf16.msra.mxu0 0
      %5990 = vmatprep.subr.bf16.mxu0 0
      %5991 = vmatpush1.bf16.msra.mxu0 0
      %5992 = vmatprep.subr.bf16.mxu0 0
      %5993 = vmatpush1.bf16.msra.mxu0 0
      %5994 = vmatprep.subr.bf16.mxu0 0
      %5995 = vmatpush1.bf16.msra.mxu0 0
      %5996 = vmatprep.subr.bf16.mxu0 0
      %5997 = vmatpush1.bf16.msra.mxu0 0
      %5998 = vmatprep.subr.bf16.mxu0 0
      %5999 = vmatpush1.bf16.msra.mxu0 0
      %6000 = vmatprep.subr.bf16.mxu0 0
      %6001 = vmatpush1.bf16.msra.mxu0 0
      %6002 = vmatprep.mubr.bf16.mxu0 0
      %6003 = vmatmul.mubr.bf16.gmra.mrb[0].mxu0 %v5887
      %v6004 = vpop.f32.mrb[0].mxu0
      %v6005 = vadd.f32 0.0, %v6004
      %v6006 = vpop.f32.mrb[0].mxu0
      %v6007 = vpop.f32.mrb[0].mxu0
      %v6008 = vadd.f32 0.0, %v6007
      %v6009 = vpop.f32.mrb[0].mxu0
      %6010 = vmatprep.mubr.bf16.mxu0 0
      %6011 = vmatmul.mubr.bf16.gmra.mrb[0].mxu0 %v5888
      %v6012 = vpop.f32.mrb[0].mxu0
      %v6013 = vadd.f32 0.0, %v6012
      %v6014 = vpop.f32.mrb[0].mxu0
      %v6015 = vpop.f32.mrb[0].mxu0
      %v6016 = vadd.f32 0.0, %v6015
      %v6017 = vpop.f32.mrb[0].mxu0
      %6018 = vmatprep.mubr.bf16.mxu0 0
      %6019 = vmatmul.mubr.bf16.gmra.mrb[0].mxu0 %v5889
      %v6020 = vpop.f32.mrb[0].mxu0
      %v6021 = vadd.f32 0.0, %v6020
      %v6022 = vpop.f32.mrb[0].mxu0
      %v6023 = vpop.f32.mrb[0].mxu0
      %v6024 = vadd.f32 0.0, %v6023
      %v6025 = vpop.f32.mrb[0].mxu0
      %6026 = vmatprep.mubr.bf16.mxu0 0
      %6027 = vmatmul.mubr.bf16.gmra.mrb[0].mxu0 %v5890
      %v6028 = vpop.f32.mrb[0].mxu0
      %v6029 = vadd.f32 0.0, %v6028
      %v6030 = vpop.f32.mrb[0].mxu0
      %v6031 = vpop.f32.mrb[0].mxu0
      %v6032 = vadd.f32 0.0, %v6031
      %v6033 = vpop.f32.mrb[0].mxu0
      %6034 = vmatprep.mubr.bf16.mxu0 0
      %6035 = vmatmul.mubr.bf16.gmra.mrb[0].mxu0 %v5891
      %v6036 = vpop.f32.mrb[0].mxu0
      %v6037 = vadd.f32 0.0, %v6036
      %v6038 = vpop.f32.mrb[0].mxu0
      %v6039 = vpop.f32.mrb[0].mxu0
      %v6040 = vadd.f32 0.0, %v6039
      %v6041 = vpop.f32.mrb[0].mxu0
      %6042 = vmatprep.mubr.bf16.mxu0 0
      %6043 = vmatmul.mubr.bf16.gmra.mrb[0].mxu0 %v5892
      %v6044 = vpop.f32.mrb[0].mxu0
      %v6045 = vadd.f32 0.0, %v6044
      %v6046 = vpop.f32.mrb[0].mxu0
      %v6047 = vpop.f32.mrb[0].mxu0
      %v6048 = vadd.f32 0.0, %v6047
      %v6049 = vpop.f32.mrb[0].mxu0
      %6050 = vmatprep.mubr.bf16.mxu0 0
      %6051 = vmatmul.mubr.bf16.gmra.mrb[0].mxu0 %v5893
      %v6052 = vpop.f32.mrb[0].mxu0
      %v6053 = vadd.f32 0.0, %v6052
      %v6054 = vpop.f32.mrb[0].mxu0
      %v6055 = vpop.f32.mrb[0].mxu0
      %v6056 = vadd.f32 0.0, %v6055
      %v6057 = vpop.f32.mrb[0].mxu0
      %6058 = vmatprep.mubr.bf16.mxu0 0
      %6059 = vmatmul.mubr.bf16.gmra.mrb[0].mxu0 %v5894
      %v6060 = vpop.f32.mrb[0].mxu0
      %v6061 = vadd.f32 0.0, %v6060
      %v6062 = vpop.f32.mrb[0].mxu0
      %v6063 = vpop.f32.mrb[0].mxu0
      %v6064 = vadd.f32 0.0, %v6063
      %v6065 = vpop.f32.mrb[0].mxu0
      %6066 = vmatprep.mubr.bf16.mxu0 0
      %6067 = vmatmul.mubr.bf16.gmra.mrb[0].mxu0 %v5895
      %v6068 = vpop.f32.mrb[0].mxu0
      %v6069 = vadd.f32 0.0, %v6068
      %v6070 = vpop.f32.mrb[0].mxu0
      %v6071 = vpop.f32.mrb[0].mxu0
      %v6072 = vadd.f32 0.0, %v6071
      %v6073 = vpop.f32.mrb[0].mxu0
      %6074 = vmatprep.mubr.bf16.mxu0 0
      %6075 = vmatmul.mubr.bf16.gmra.mrb[0].mxu0 %v5896
      %v6076 = vpop.f32.mrb[0].mxu0
      %v6077 = vadd.f32 0.0, %v6076
      %v6078 = vpop.f32.mrb[0].mxu0
      %v6079 = vpop.f32.mrb[0].mxu0
      %v6080 = vadd.f32 0.0, %v6079
      %v6081 = vpop.f32.mrb[0].mxu0
      %6082 = vmatprep.mubr.bf16.mxu0 0
      %6083 = vmatmul.mubr.bf16.gmra.mrb[0].mxu0 %v5897
      %v6084 = vpop.f32.mrb[0].mxu0
      %v6085 = vadd.f32 0.0, %v6084
      %v6086 = vpop.f32.mrb[0].mxu0
      %v6087 = vpop.f32.mrb[0].mxu0
      %v6088 = vadd.f32 0.0, %v6087
      %v6089 = vpop.f32.mrb[0].mxu0
      %6090 = vmatprep.mubr.bf16.mxu0 0
      %6091 = vmatmul.mubr.bf16.gmra.mrb[0].mxu0 %v5898
      %v6092 = vpop.f32.mrb[0].mxu0
      %v6093 = vadd.f32 0.0, %v6092
      %v6094 = vpop.f32.mrb[0].mxu0
      %v6095 = vpop.f32.mrb[0].mxu0
      %v6096 = vadd.f32 0.0, %v6095
      %v6097 = vpop.f32.mrb[0].mxu0
      %6098 = vmatprep.mubr.bf16.mxu0 0
      %6099 = vmatmul.mubr.bf16.gmra.mrb[0].mxu0 %v5899
      %v6100 = vpop.f32.mrb[0].mxu0
      %v6101 = vadd.f32 0.0, %v6100
      %v6102 = vpop.f32.mrb[0].mxu0
      %v6103 = vpop.f32.mrb[0].mxu0
      %v6104 = vadd.f32 0.0, %v6103
      %v6105 = vpop.f32.mrb[0].mxu0
      %6106 = vmatprep.mubr.bf16.mxu0 0
      %6107 = vmatmul.mubr.bf16.gmra.mrb[0].mxu0 %v5900
      %v6108 = vpop.f32.mrb[0].mxu0
      %v6109 = vadd.f32 0.0, %v6108
      %v6110 = vpop.f32.mrb[0].mxu0
      %v6111 = vpop.f32.mrb[0].mxu0
      %v6112 = vadd.f32 0.0, %v6111
      %v6113 = vpop.f32.mrb[0].mxu0
      %6114 = vmatprep.mubr.bf16.mxu0 0
      %6115 = vmatmul.mubr.bf16.gmra.mrb[0].mxu0 %v5901
      %v6116 = vpop.f32.mrb[0].mxu0
      %v6117 = vadd.f32 0.0, %v6116
      %v6118 = vpop.f32.mrb[0].mxu0
      %v6119 = vpop.f32.mrb[0].mxu0
      %v6120 = vadd.f32 0.0, %v6119
      %v6121 = vpop.f32.mrb[0].mxu0
      %6122 = vmatprep.mubr.bf16.mxu0 0
      %6123 = vmatmul.mubr.bf16.gmra.mrb[0].mxu0 %v5902
      %v6124 = vpop.f32.mrb[0].mxu0
      %v6125 = vadd.f32 0.0, %v6124
      %v6126 = vpop.f32.mrb[0].mxu0
      %v6127 = vpop.f32.mrb[0].mxu0
      %v6128 = vadd.f32 0.0, %v6127
      %v6129 = vpop.f32.mrb[0].mxu0
      %6130 = vmatprep.mubr.bf16.mxu0 0
      %6131 = vmatmul.mubr.bf16.gmra.mrb[0].mxu0 %v5903
      %v6132 = vpop.f32.mrb[0].mxu0
      %v6133 = vadd.f32 0.0, %v6132
      %v6134 = vpop.f32.mrb[0].mxu0
      %v6135 = vpop.f32.mrb[0].mxu0
      %v6136 = vadd.f32 0.0, %v6135
      %v6137 = vpop.f32.mrb[0].mxu0
      %6138 = vmatprep.mubr.bf16.mxu0 0
      %6139 = vmatmul.mubr.bf16.gmra.mrb[0].mxu0 %v5904
      %v6140 = vpop.f32.mrb[0].mxu0
      %v6141 = vadd.f32 0.0, %v6140
      %v6142 = vpop.f32.mrb[0].mxu0
      %v6143 = vpop.f32.mrb[0].mxu0
      %v6144 = vadd.f32 0.0, %v6143
      %v6145 = vpop.f32.mrb[0].mxu0
      %6146 = vdwg.mxu0
      %v6147 = vld [vmem:[#allocation3] sm:$0xff]
      %v6148 = vld [vmem:[#allocation3 + $0x8] sm:$0xff]
      %v6149 = vld [vmem:[#allocation3 + $0x10] sm:$0xff]
      %v6150 = vld [vmem:[#allocation3 + $0x18] sm:$0xff]
      %v6151 = vld [vmem:[#allocation3 + $0x20] sm:$0xff]
      %v6152 = vld [vmem:[#allocation3 + $0x28] sm:$0xff]
      %v6153 = vld [vmem:[#allocation3 + $0x30] sm:$0xff]
      %v6154 = vld [vmem:[#allocation3 + $0x38] sm:$0xff]
      %v6155 = vld [vmem:[#allocation3 + $0x40] sm:$0xff]
      %v6156 = vld [vmem:[#allocation3 + $0x48] sm:$0xff]
      %v6157 = vld [vmem:[#allocation3 + $0x50] sm:$0xff]
      %v6158 = vld [vmem:[#allocation3 + $0x58] sm:$0xff]
      %v6159 = vld [vmem:[#allocation3 + $0x60] sm:$0xff]
      %v6160 = vld [vmem:[#allocation3 + $0x68] sm:$0xff]
      %v6161 = vld [vmem:[#allocation3 + $0x70] sm:$0xff]
      %v6162 = vld [vmem:[#allocation3 + $0x78] sm:$0xff]
      %v6163 = vld [vmem:[#allocation3 + $0x80] sm:$0xff]
      %v6164 = vld [vmem:[#allocation3 + $0x88] sm:$0xff]
      %v6165 = vld [vmem:[#allocation3 + $0x90] sm:$0xff]
      %v6166 = vld [vmem:[#allocation3 + $0x98] sm:$0xff]
      %v6167 = vld [vmem:[#allocation3 + $0xa0] sm:$0xff]
      %v6168 = vld [vmem:[#allocation3 + $0xa8] sm:$0xff]
      %v6169 = vld [vmem:[#allocation3 + $0xb0] sm:$0xff]
      %v6170 = vld [vmem:[#allocation3 + $0xb8] sm:$0xff]
      %v6171 = vld [vmem:[#allocation3 + $0xc0] sm:$0xff]
      %v6172 = vld [vmem:[#allocation3 + $0xc8] sm:$0xff]
      %v6173 = vld [vmem:[#allocation3 + $0xd0] sm:$0xff]
      %v6174 = vld [vmem:[#allocation3 + $0xd8] sm:$0xff]
      %v6175 = vld [vmem:[#allocation3 + $0xe0] sm:$0xff]
      %v6176 = vld [vmem:[#allocation3 + $0xe8] sm:$0xff]
      %v6177 = vld [vmem:[#allocation3 + $0xf0] sm:$0xff]
      %v6178 = vld [vmem:[#allocation3 + $0xf8] sm:$0xff]
      %v6179 = vld [vmem:[#allocation3 + $0x100] sm:$0xff]
      %v6180 = vld [vmem:[#allocation3 + $0x108] sm:$0xff]
      %v6181 = vld [vmem:[#allocation3 + $0x110] sm:$0xff]
      %v6182 = vld [vmem:[#allocation3 + $0x118] sm:$0xff]
      %v6183 = vadd.f32 %v6147, %v6005
      %v6184 = vadd.f32 %v6148, %v6008
      %v6185 = vadd.f32 %v6149, %v6013
      %v6186 = vadd.f32 %v6150, %v6016
      %v6187 = vadd.f32 %v6151, %v6021
      %v6188 = vadd.f32 %v6152, %v6024
      %v6189 = vadd.f32 %v6153, %v6029
      %v6190 = vadd.f32 %v6154, %v6032
      %v6191 = vadd.f32 %v6155, %v6037
      %v6192 = vadd.f32 %v6156, %v6040
      %v6193 = vadd.f32 %v6157, %v6045
      %v6194 = vadd.f32 %v6158, %v6048
      %v6195 = vadd.f32 %v6159, %v6053
      %v6196 = vadd.f32 %v6160, %v6056
      %v6197 = vadd.f32 %v6161, %v6061
      %v6198 = vadd.f32 %v6162, %v6064
      %v6199 = vadd.f32 %v6163, %v6069
      %v6200 = vadd.f32 %v6164, %v6072
      %v6201 = vadd.f32 %v6165, %v6077
      %v6202 = vadd.f32 %v6166, %v6080
      %v6203 = vadd.f32 %v6167, %v6085
      %v6204 = vadd.f32 %v6168, %v6088
      %v6205 = vadd.f32 %v6169, %v6093
      %v6206 = vadd.f32 %v6170, %v6096
      %v6207 = vadd.f32 %v6171, %v6101
      %v6208 = vadd.f32 %v6172, %v6104
      %v6209 = vadd.f32 %v6173, %v6109
      %v6210 = vadd.f32 %v6174, %v6112
      %v6211 = vadd.f32 %v6175, %v6117
      %v6212 = vadd.f32 %v6176, %v6120
      %v6213 = vadd.f32 %v6177, %v6125
      %v6214 = vadd.f32 %v6178, %v6128
      %v6215 = vadd.f32 %v6179, %v6133
      %v6216 = vadd.f32 %v6180, %v6136
      %v6217 = vadd.f32 %v6181, %v6141
      %v6218 = vadd.f32 %v6182, %v6144
      %6219 = vst [vmem:[#allocation3] sm:$0xff] %v6183
      %6220 = vst [vmem:[#allocation3 + $0x8] sm:$0xff] %v6184
      %6221 = vst [vmem:[#allocation3 + $0x10] sm:$0xff] %v6185
      %6222 = vst [vmem:[#allocation3 + $0x18] sm:$0xff] %v6186
      %6223 = vst [vmem:[#allocation3 + $0x20] sm:$0xff] %v6187
      %6224 = vst [vmem:[#allocation3 + $0x28] sm:$0xff] %v6188
      %6225 = vst [vmem:[#allocation3 + $0x30] sm:$0xff] %v6189
      %6226 = vst [vmem:[#allocation3 + $0x38] sm:$0xff] %v6190
      %6227 = vst [vmem:[#allocation3 + $0x40] sm:$0xff] %v6191
      %6228 = vst [vmem:[#allocation3 + $0x48] sm:$0xff] %v6192
      %6229 = vst [vmem:[#allocation3 + $0x50] sm:$0xff] %v6193
      %6230 = vst [vmem:[#allocation3 + $0x58] sm:$0xff] %v6194
      %6231 = vst [vmem:[#allocation3 + $0x60] sm:$0xff] %v6195
      %6232 = vst [vmem:[#allocation3 + $0x68] sm:$0xff] %v6196
      %6233 = vst [vmem:[#allocation3 + $0x70] sm:$0xff] %v6197
      %6234 = vst [vmem:[#allocation3 + $0x78] sm:$0xff] %v6198
      %6235 = vst [vmem:[#allocation3 + $0x80] sm:$0xff] %v6199
      %6236 = vst [vmem:[#allocation3 + $0x88] sm:$0xff] %v6200
      %6237 = vst [vmem:[#allocation3 + $0x90] sm:$0xff] %v6201
      %6238 = vst [vmem:[#allocation3 + $0x98] sm:$0xff] %v6202
      %6239 = vst [vmem:[#allocation3 + $0xa0] sm:$0xff] %v6203
      %6240 = vst [vmem:[#allocation3 + $0xa8] sm:$0xff] %v6204
      %6241 = vst [vmem:[#allocation3 + $0xb0] sm:$0xff] %v6205
      %6242 = vst [vmem:[#allocation3 + $0xb8] sm:$0xff] %v6206
      %6243 = vst [vmem:[#allocation3 + $0xc0] sm:$0xff] %v6207
      %6244 = vst [vmem:[#allocation3 + $0xc8] sm:$0xff] %v6208
      %6245 = vst [vmem:[#allocation3 + $0xd0] sm:$0xff] %v6209
      %6246 = vst [vmem:[#allocation3 + $0xd8] sm:$0xff] %v6210
      %6247 = vst [vmem:[#allocation3 + $0xe0] sm:$0xff] %v6211
      %6248 = vst [vmem:[#allocation3 + $0xe8] sm:$0xff] %v6212
      %6249 = vst [vmem:[#allocation3 + $0xf0] sm:$0xff] %v6213
      %6250 = vst [vmem:[#allocation3 + $0xf8] sm:$0xff] %v6214
      %6251 = vst [vmem:[#allocation3 + $0x100] sm:$0xff] %v6215
      %6252 = vst [vmem:[#allocation3 + $0x108] sm:$0xff] %v6216
      %6253 = vst [vmem:[#allocation3 + $0x110] sm:$0xff] %v6217
      %6254 = vst [vmem:[#allocation3 + $0x118] sm:$0xff] %v6218
      %v6255 = vld [vmem:[#allocation2 + $0x12] sm:$0xff]
      %v6256 = vld [vmem:[#allocation2 + $0x1a] sm:$0xff]
      %v6257 = vld [vmem:[#allocation2 + $0x22] sm:$0xff]
      %v6258 = vld [vmem:[#allocation2 + $0x2a] sm:$0xff]
      %v6259 = vld [vmem:[#allocation2 + $0x32] sm:$0xff]
      %v6260 = vld [vmem:[#allocation2 + $0x3a] sm:$0xff]
      %v6261 = vld [vmem:[#allocation2 + $0x42] sm:$0xff]
      %v6262 = vld [vmem:[#allocation2 + $0x4a] sm:$0xff]
      %v6263 = vld [vmem:[#allocation2 + $0x52] sm:$0xff]
      %v6264 = vld [vmem:[#allocation2 + $0x5a] sm:$0xff]
      %v6265 = vld [vmem:[#allocation2 + $0x62] sm:$0xff]
      %v6266 = vld [vmem:[#allocation2 + $0x6a] sm:$0xff]
      %v6267 = vld [vmem:[#allocation2 + $0x72] sm:$0xff]
      %v6268 = vld [vmem:[#allocation2 + $0x7a] sm:$0xff]
      %v6269 = vld [vmem:[#allocation2 + $0x82] sm:$0xff]
      %v6270 = vld [vmem:[#allocation2 + $0x8a] sm:$0xff]
      %v6271 = vld [vmem:[#allocation2 + $0x92] sm:$0xff]
      %v6272 = vld [vmem:[#allocation2 + $0x9a] sm:$0xff]
      %v6273 = vld [vmem:[#allocation2 + $0xa2] sm:$0xff]
      %v6274 = vld [vmem:[#allocation2 + $0xaa] sm:$0xff]
      %v6275 = vld [vmem:[#allocation2 + $0xb2] sm:$0xff]
      %v6276 = vld [vmem:[#allocation2 + $0xba] sm:$0xff]
      %v6277 = vld [vmem:[#allocation2 + $0xc2] sm:$0xff]
      %v6278 = vld [vmem:[#allocation2 + $0xca] sm:$0xff]
      %v6279 = vld [vmem:[#allocation2 + $0xd2] sm:$0xff]
      %v6280 = vld [vmem:[#allocation2 + $0xda] sm:$0xff]
      %v6281 = vld [vmem:[#allocation2 + $0xe2] sm:$0xff]
      %v6282 = vld [vmem:[#allocation2 + $0xea] sm:$0xff]
      %v6283 = vld [vmem:[#allocation2 + $0xf2] sm:$0xff]
      %v6284 = vld [vmem:[#allocation2 + $0xfa] sm:$0xff]
      %v6285 = vld [vmem:[#allocation2 + $0x102] sm:$0xff]
      %v6286 = vld [vmem:[#allocation2 + $0x10a] sm:$0xff]
      %v6287 = vld [vmem:[#allocation2 + $0x112] sm:$0xff]
      %v6288 = vld [vmem:[#allocation2 + $0x11a] sm:$0xff]
      %v6289 = vld [vmem:[#allocation2 + $0x122] sm:$0xff]
      %v6290 = vld [vmem:[#allocation2 + $0x12a] sm:$0xff]
      %v6291 = vpack.c.bf16 %v6256, %v6255
      %v6292 = vpack.c.bf16 %v6258, %v6257
      %v6293 = vpack.c.bf16 %v6260, %v6259
      %v6294 = vpack.c.bf16 %v6262, %v6261
      %v6295 = vpack.c.bf16 %v6264, %v6263
      %v6296 = vpack.c.bf16 %v6266, %v6265
      %v6297 = vpack.c.bf16 %v6268, %v6267
      %v6298 = vpack.c.bf16 %v6270, %v6269
      %v6299 = vpack.c.bf16 %v6272, %v6271
      %v6300 = vpack.c.bf16 %v6274, %v6273
      %v6301 = vpack.c.bf16 %v6276, %v6275
      %v6302 = vpack.c.bf16 %v6278, %v6277
      %v6303 = vpack.c.bf16 %v6280, %v6279
      %v6304 = vpack.c.bf16 %v6282, %v6281
      %v6305 = vpack.c.bf16 %v6284, %v6283
      %v6306 = vpack.c.bf16 %v6286, %v6285
      %v6307 = vpack.c.bf16 %v6288, %v6287
      %v6308 = vpack.c.bf16 %v6290, %v6289
      %s6309 = scalar_lea.vmem %s2, 192
      %v6310 = vld [vmem:[%s6309] sm:$0xf]
      %v6311 = vld [vmem:[%s6309 + $0x4] sm:$0xf]
      %v6312 = vld [vmem:[%s6309 + $0x8] sm:$0xf]
      %v6313 = vld [vmem:[%s6309 + $0xc] sm:$0xf]
      %v6314 = vld [vmem:[%s6309 + $0x10] sm:$0xf]
      %v6315 = vld [vmem:[%s6309 + $0x14] sm:$0xf]
      %v6316 = vld [vmem:[%s6309 + $0x18] sm:$0xf]
      %v6317 = vld [vmem:[%s6309 + $0x1c] sm:$0xf]
      %v6318 = vld [vmem:[%s6309 + $0x20] sm:$0xf]
      %v6319 = vld [vmem:[%s6309 + $0x24] sm:$0xf]
      %v6320 = vld [vmem:[%s6309 + $0x28] sm:$0xf]
      %v6321 = vld [vmem:[%s6309 + $0x2c] sm:$0xf]
      %v6322 = vld [vmem:[%s6309 + $0x30] sm:$0xf]
      %v6323 = vld [vmem:[%s6309 + $0x34] sm:$0xf]
      %v6324 = vld [vmem:[%s6309 + $0x38] sm:$0xf]
      %v6325 = vld [vmem:[%s6309 + $0x3c] sm:$0xf]
      %v6342 = vunpack.c.l.b16 %v6310
      %v6343 = vunpack.c.l.b16 %v6311
      %v6344 = vunpack.c.l.b16 %v6312
      %v6345 = vunpack.c.l.b16 %v6313
      %v6346 = vunpack.c.l.b16 %v6314
      %v6347 = vunpack.c.l.b16 %v6315
      %v6348 = vunpack.c.l.b16 %v6316
      %v6349 = vunpack.c.l.b16 %v6317
      %v6350 = vunpack.c.l.b16 %v6318
      %v6351 = vunpack.c.l.b16 %v6319
      %v6352 = vunpack.c.l.b16 %v6320
      %v6353 = vunpack.c.l.b16 %v6321
      %v6354 = vunpack.c.l.b16 %v6322
      %v6355 = vunpack.c.l.b16 %v6323
      %v6356 = vunpack.c.l.b16 %v6324
      %v6357 = vunpack.c.l.b16 %v6325
      %v6358 = vpack.c.b16 %v6343, %v6342
      %v6359 = vpack.c.b16 %v6345, %v6344
      %v6360 = vpack.c.b16 %v6347, %v6346
      %v6361 = vpack.c.b16 %v6349, %v6348
      %v6362 = vpack.c.b16 %v6351, %v6350
      %v6363 = vpack.c.b16 %v6353, %v6352
      %v6364 = vpack.c.b16 %v6355, %v6354
      %v6365 = vpack.c.b16 %v6357, %v6356
      %6374 = vmatprep.subr.bf16.mxu0 0
      %6375 = vmatpush1.bf16.msra.mxu0 %v6358
      %6376 = vmatprep.subr.bf16.mxu0 0
      %6377 = vmatpush1.bf16.msra.mxu0 %v6359
      %6378 = vmatprep.subr.bf16.mxu0 0
      %6379 = vmatpush1.bf16.msra.mxu0 %v6360
      %6380 = vmatprep.subr.bf16.mxu0 0
      %6381 = vmatpush1.bf16.msra.mxu0 %v6361
      %6382 = vmatprep.subr.bf16.mxu0 0
      %6383 = vmatpush1.bf16.msra.mxu0 %v6362
      %6384 = vmatprep.subr.bf16.mxu0 0
      %6385 = vmatpush1.bf16.msra.mxu0 %v6363
      %6386 = vmatprep.subr.bf16.mxu0 0
      %6387 = vmatpush1.bf16.msra.mxu0 %v6364
      %6388 = vmatprep.subr.bf16.mxu0 0
      %6389 = vmatpush1.bf16.msra.mxu0 %v6365
      %6390 = vmatprep.subr.bf16.mxu0 0
      %6391 = vmatpush1.bf16.msra.mxu0 0
      %6392 = vmatprep.subr.bf16.mxu0 0
      %6393 = vmatpush1.bf16.msra.mxu0 0
      %6394 = vmatprep.subr.bf16.mxu0 0
      %6395 = vmatpush1.bf16.msra.mxu0 0
      %6396 = vmatprep.subr.bf16.mxu0 0
      %6397 = vmatpush1.bf16.msra.mxu0 0
      %6398 = vmatprep.subr.bf16.mxu0 0
      %6399 = vmatpush1.bf16.msra.mxu0 0
      %6400 = vmatprep.subr.bf16.mxu0 0
      %6401 = vmatpush1.bf16.msra.mxu0 0
      %6402 = vmatprep.subr.bf16.mxu0 0
      %6403 = vmatpush1.bf16.msra.mxu0 0
      %6404 = vmatprep.subr.bf16.mxu0 0
      %6405 = vmatpush1.bf16.msra.mxu0 0
      %6406 = vmatprep.mubr.bf16.mxu0 0
      %6407 = vmatmul.mubr.bf16.gmra.mrb[0].mxu0 %v6291
      %v6408 = vpop.f32.mrb[0].mxu0
      %v6409 = vadd.f32 0.0, %v6408
      %v6410 = vpop.f32.mrb[0].mxu0
      %v6411 = vpop.f32.mrb[0].mxu0
      %v6412 = vadd.f32 0.0, %v6411
      %v6413 = vpop.f32.mrb[0].mxu0
      %6414 = vmatprep.mubr.bf16.mxu0 0
      %6415 = vmatmul.mubr.bf16.gmra.mrb[0].mxu0 %v6292
      %v6416 = vpop.f32.mrb[0].mxu0
      %v6417 = vadd.f32 0.0, %v6416
      %v6418 = vpop.f32.mrb[0].mxu0
      %v6419 = vpop.f32.mrb[0].mxu0
      %v6420 = vadd.f32 0.0, %v6419
      %v6421 = vpop.f32.mrb[0].mxu0
      %6422 = vmatprep.mubr.bf16.mxu0 0
      %6423 = vmatmul.mubr.bf16.gmra.mrb[0].mxu0 %v6293
      %v6424 = vpop.f32.mrb[0].mxu0
      %v6425 = vadd.f32 0.0, %v6424
      %v6426 = vpop.f32.mrb[0].mxu0
      %v6427 = vpop.f32.mrb[0].mxu0
      %v6428 = vadd.f32 0.0, %v6427
      %v6429 = vpop.f32.mrb[0].mxu0
      %6430 = vmatprep.mubr.bf16.mxu0 0
      %6431 = vmatmul.mubr.bf16.gmra.mrb[0].mxu0 %v6294
      %v6432 = vpop.f32.mrb[0].mxu0
      %v6433 = vadd.f32 0.0, %v6432
      %v6434 = vpop.f32.mrb[0].mxu0
      %v6435 = vpop.f32.mrb[0].mxu0
      %v6436 = vadd.f32 0.0, %v6435
      %v6437 = vpop.f32.mrb[0].mxu0
      %6438 = vmatprep.mubr.bf16.mxu0 0
      %6439 = vmatmul.mubr.bf16.gmra.mrb[0].mxu0 %v6295
      %v6440 = vpop.f32.mrb[0].mxu0
      %v6441 = vadd.f32 0.0, %v6440
      %v6442 = vpop.f32.mrb[0].mxu0
      %v6443 = vpop.f32.mrb[0].mxu0
      %v6444 = vadd.f32 0.0, %v6443
      %v6445 = vpop.f32.mrb[0].mxu0
      %6446 = vmatprep.mubr.bf16.mxu0 0
      %6447 = vmatmul.mubr.bf16.gmra.mrb[0].mxu0 %v6296
      %v6448 = vpop.f32.mrb[0].mxu0
      %v6449 = vadd.f32 0.0, %v6448
      %v6450 = vpop.f32.mrb[0].mxu0
      %v6451 = vpop.f32.mrb[0].mxu0
      %v6452 = vadd.f32 0.0, %v6451
      %v6453 = vpop.f32.mrb[0].mxu0
      %6454 = vmatprep.mubr.bf16.mxu0 0
      %6455 = vmatmul.mubr.bf16.gmra.mrb[0].mxu0 %v6297
      %v6456 = vpop.f32.mrb[0].mxu0
      %v6457 = vadd.f32 0.0, %v6456
      %v6458 = vpop.f32.mrb[0].mxu0
      %v6459 = vpop.f32.mrb[0].mxu0
      %v6460 = vadd.f32 0.0, %v6459
      %v6461 = vpop.f32.mrb[0].mxu0
      %6462 = vmatprep.mubr.bf16.mxu0 0
      %6463 = vmatmul.mubr.bf16.gmra.mrb[0].mxu0 %v6298
      %v6464 = vpop.f32.mrb[0].mxu0
      %v6465 = vadd.f32 0.0, %v6464
      %v6466 = vpop.f32.mrb[0].mxu0
      %v6467 = vpop.f32.mrb[0].mxu0
      %v6468 = vadd.f32 0.0, %v6467
      %v6469 = vpop.f32.mrb[0].mxu0
      %6470 = vmatprep.mubr.bf16.mxu0 0
      %6471 = vmatmul.mubr.bf16.gmra.mrb[0].mxu0 %v6299
      %v6472 = vpop.f32.mrb[0].mxu0
      %v6473 = vadd.f32 0.0, %v6472
      %v6474 = vpop.f32.mrb[0].mxu0
      %v6475 = vpop.f32.mrb[0].mxu0
      %v6476 = vadd.f32 0.0, %v6475
      %v6477 = vpop.f32.mrb[0].mxu0
      %6478 = vmatprep.mubr.bf16.mxu0 0
      %6479 = vmatmul.mubr.bf16.gmra.mrb[0].mxu0 %v6300
      %v6480 = vpop.f32.mrb[0].mxu0
      %v6481 = vadd.f32 0.0, %v6480
      %v6482 = vpop.f32.mrb[0].mxu0
      %v6483 = vpop.f32.mrb[0].mxu0
      %v6484 = vadd.f32 0.0, %v6483
      %v6485 = vpop.f32.mrb[0].mxu0
      %6486 = vmatprep.mubr.bf16.mxu0 0
      %6487 = vmatmul.mubr.bf16.gmra.mrb[0].mxu0 %v6301
      %v6488 = vpop.f32.mrb[0].mxu0
      %v6489 = vadd.f32 0.0, %v6488
      %v6490 = vpop.f32.mrb[0].mxu0
      %v6491 = vpop.f32.mrb[0].mxu0
      %v6492 = vadd.f32 0.0, %v6491
      %v6493 = vpop.f32.mrb[0].mxu0
      %6494 = vmatprep.mubr.bf16.mxu0 0
      %6495 = vmatmul.mubr.bf16.gmra.mrb[0].mxu0 %v6302
      %v6496 = vpop.f32.mrb[0].mxu0
      %v6497 = vadd.f32 0.0, %v6496
      %v6498 = vpop.f32.mrb[0].mxu0
      %v6499 = vpop.f32.mrb[0].mxu0
      %v6500 = vadd.f32 0.0, %v6499
      %v6501 = vpop.f32.mrb[0].mxu0
      %6502 = vmatprep.mubr.bf16.mxu0 0
      %6503 = vmatmul.mubr.bf16.gmra.mrb[0].mxu0 %v6303
      %v6504 = vpop.f32.mrb[0].mxu0
      %v6505 = vadd.f32 0.0, %v6504
      %v6506 = vpop.f32.mrb[0].mxu0
      %v6507 = vpop.f32.mrb[0].mxu0
      %v6508 = vadd.f32 0.0, %v6507
      %v6509 = vpop.f32.mrb[0].mxu0
      %6510 = vmatprep.mubr.bf16.mxu0 0
      %6511 = vmatmul.mubr.bf16.gmra.mrb[0].mxu0 %v6304
      %v6512 = vpop.f32.mrb[0].mxu0
      %v6513 = vadd.f32 0.0, %v6512
      %v6514 = vpop.f32.mrb[0].mxu0
      %v6515 = vpop.f32.mrb[0].mxu0
      %v6516 = vadd.f32 0.0, %v6515
      %v6517 = vpop.f32.mrb[0].mxu0
      %6518 = vmatprep.mubr.bf16.mxu0 0
      %6519 = vmatmul.mubr.bf16.gmra.mrb[0].mxu0 %v6305
      %v6520 = vpop.f32.mrb[0].mxu0
      %v6521 = vadd.f32 0.0, %v6520
      %v6522 = vpop.f32.mrb[0].mxu0
      %v6523 = vpop.f32.mrb[0].mxu0
      %v6524 = vadd.f32 0.0, %v6523
      %v6525 = vpop.f32.mrb[0].mxu0
      %6526 = vmatprep.mubr.bf16.mxu0 0
      %6527 = vmatmul.mubr.bf16.gmra.mrb[0].mxu0 %v6306
      %v6528 = vpop.f32.mrb[0].mxu0
      %v6529 = vadd.f32 0.0, %v6528
      %v6530 = vpop.f32.mrb[0].mxu0
      %v6531 = vpop.f32.mrb[0].mxu0
      %v6532 = vadd.f32 0.0, %v6531
      %v6533 = vpop.f32.mrb[0].mxu0
      %6534 = vmatprep.mubr.bf16.mxu0 0
      %6535 = vmatmul.mubr.bf16.gmra.mrb[0].mxu0 %v6307
      %v6536 = vpop.f32.mrb[0].mxu0
      %v6537 = vadd.f32 0.0, %v6536
      %v6538 = vpop.f32.mrb[0].mxu0
      %v6539 = vpop.f32.mrb[0].mxu0
      %v6540 = vadd.f32 0.0, %v6539
      %v6541 = vpop.f32.mrb[0].mxu0
      %6542 = vmatprep.mubr.bf16.mxu0 0
      %6543 = vmatmul.mubr.bf16.gmra.mrb[0].mxu0 %v6308
      %v6544 = vpop.f32.mrb[0].mxu0
      %v6545 = vadd.f32 0.0, %v6544
      %v6546 = vpop.f32.mrb[0].mxu0
      %v6547 = vpop.f32.mrb[0].mxu0
      %v6548 = vadd.f32 0.0, %v6547
      %v6549 = vpop.f32.mrb[0].mxu0
      %6550 = vdwg.mxu0
      %v6551 = vld [vmem:[#allocation3] sm:$0xff]
      %v6552 = vld [vmem:[#allocation3 + $0x8] sm:$0xff]
      %v6553 = vld [vmem:[#allocation3 + $0x10] sm:$0xff]
      %v6554 = vld [vmem:[#allocation3 + $0x18] sm:$0xff]
      %v6555 = vld [vmem:[#allocation3 + $0x20] sm:$0xff]
      %v6556 = vld [vmem:[#allocation3 + $0x28] sm:$0xff]
      %v6557 = vld [vmem:[#allocation3 + $0x30] sm:$0xff]
      %v6558 = vld [vmem:[#allocation3 + $0x38] sm:$0xff]
      %v6559 = vld [vmem:[#allocation3 + $0x40] sm:$0xff]
      %v6560 = vld [vmem:[#allocation3 + $0x48] sm:$0xff]
      %v6561 = vld [vmem:[#allocation3 + $0x50] sm:$0xff]
      %v6562 = vld [vmem:[#allocation3 + $0x58] sm:$0xff]
      %v6563 = vld [vmem:[#allocation3 + $0x60] sm:$0xff]
      %v6564 = vld [vmem:[#allocation3 + $0x68] sm:$0xff]
      %v6565 = vld [vmem:[#allocation3 + $0x70] sm:$0xff]
      %v6566 = vld [vmem:[#allocation3 + $0x78] sm:$0xff]
      %v6567 = vld [vmem:[#allocation3 + $0x80] sm:$0xff]
      %v6568 = vld [vmem:[#allocation3 + $0x88] sm:$0xff]
      %v6569 = vld [vmem:[#allocation3 + $0x90] sm:$0xff]
      %v6570 = vld [vmem:[#allocation3 + $0x98] sm:$0xff]
      %v6571 = vld [vmem:[#allocation3 + $0xa0] sm:$0xff]
      %v6572 = vld [vmem:[#allocation3 + $0xa8] sm:$0xff]
      %v6573 = vld [vmem:[#allocation3 + $0xb0] sm:$0xff]
      %v6574 = vld [vmem:[#allocation3 + $0xb8] sm:$0xff]
      %v6575 = vld [vmem:[#allocation3 + $0xc0] sm:$0xff]
      %v6576 = vld [vmem:[#allocation3 + $0xc8] sm:$0xff]
      %v6577 = vld [vmem:[#allocation3 + $0xd0] sm:$0xff]
      %v6578 = vld [vmem:[#allocation3 + $0xd8] sm:$0xff]
      %v6579 = vld [vmem:[#allocation3 + $0xe0] sm:$0xff]
      %v6580 = vld [vmem:[#allocation3 + $0xe8] sm:$0xff]
      %v6581 = vld [vmem:[#allocation3 + $0xf0] sm:$0xff]
      %v6582 = vld [vmem:[#allocation3 + $0xf8] sm:$0xff]
      %v6583 = vld [vmem:[#allocation3 + $0x100] sm:$0xff]
      %v6584 = vld [vmem:[#allocation3 + $0x108] sm:$0xff]
      %v6585 = vld [vmem:[#allocation3 + $0x110] sm:$0xff]
      %v6586 = vld [vmem:[#allocation3 + $0x118] sm:$0xff]
      %v6587 = vadd.f32 %v6551, %v6409
      %v6588 = vadd.f32 %v6552, %v6412
      %v6589 = vadd.f32 %v6553, %v6417
      %v6590 = vadd.f32 %v6554, %v6420
      %v6591 = vadd.f32 %v6555, %v6425
      %v6592 = vadd.f32 %v6556, %v6428
      %v6593 = vadd.f32 %v6557, %v6433
      %v6594 = vadd.f32 %v6558, %v6436
      %v6595 = vadd.f32 %v6559, %v6441
      %v6596 = vadd.f32 %v6560, %v6444
      %v6597 = vadd.f32 %v6561, %v6449
      %v6598 = vadd.f32 %v6562, %v6452
      %v6599 = vadd.f32 %v6563, %v6457
      %v6600 = vadd.f32 %v6564, %v6460
      %v6601 = vadd.f32 %v6565, %v6465
      %v6602 = vadd.f32 %v6566, %v6468
      %v6603 = vadd.f32 %v6567, %v6473
      %v6604 = vadd.f32 %v6568, %v6476
      %v6605 = vadd.f32 %v6569, %v6481
      %v6606 = vadd.f32 %v6570, %v6484
      %v6607 = vadd.f32 %v6571, %v6489
      %v6608 = vadd.f32 %v6572, %v6492
      %v6609 = vadd.f32 %v6573, %v6497
      %v6610 = vadd.f32 %v6574, %v6500
      %v6611 = vadd.f32 %v6575, %v6505
      %v6612 = vadd.f32 %v6576, %v6508
      %v6613 = vadd.f32 %v6577, %v6513
      %v6614 = vadd.f32 %v6578, %v6516
      %v6615 = vadd.f32 %v6579, %v6521
      %v6616 = vadd.f32 %v6580, %v6524
      %v6617 = vadd.f32 %v6581, %v6529
      %v6618 = vadd.f32 %v6582, %v6532
      %v6619 = vadd.f32 %v6583, %v6537
      %v6620 = vadd.f32 %v6584, %v6540
      %v6621 = vadd.f32 %v6585, %v6545
      %v6622 = vadd.f32 %v6586, %v6548
      %6623 = vst [vmem:[#allocation3] sm:$0xff] %v6587
      %6624 = vst [vmem:[#allocation3 + $0x8] sm:$0xff] %v6588
      %6625 = vst [vmem:[#allocation3 + $0x10] sm:$0xff] %v6589
      %6626 = vst [vmem:[#allocation3 + $0x18] sm:$0xff] %v6590
      %6627 = vst [vmem:[#allocation3 + $0x20] sm:$0xff] %v6591
      %6628 = vst [vmem:[#allocation3 + $0x28] sm:$0xff] %v6592
      %6629 = vst [vmem:[#allocation3 + $0x30] sm:$0xff] %v6593
      %6630 = vst [vmem:[#allocation3 + $0x38] sm:$0xff] %v6594
      %6631 = vst [vmem:[#allocation3 + $0x40] sm:$0xff] %v6595
      %6632 = vst [vmem:[#allocation3 + $0x48] sm:$0xff] %v6596
      %6633 = vst [vmem:[#allocation3 + $0x50] sm:$0xff] %v6597
      %6634 = vst [vmem:[#allocation3 + $0x58] sm:$0xff] %v6598
      %6635 = vst [vmem:[#allocation3 + $0x60] sm:$0xff] %v6599
      %6636 = vst [vmem:[#allocation3 + $0x68] sm:$0xff] %v6600
      %6637 = vst [vmem:[#allocation3 + $0x70] sm:$0xff] %v6601
      %6638 = vst [vmem:[#allocation3 + $0x78] sm:$0xff] %v6602
      %6639 = vst [vmem:[#allocation3 + $0x80] sm:$0xff] %v6603
      %6640 = vst [vmem:[#allocation3 + $0x88] sm:$0xff] %v6604
      %6641 = vst [vmem:[#allocation3 + $0x90] sm:$0xff] %v6605
      %6642 = vst [vmem:[#allocation3 + $0x98] sm:$0xff] %v6606
      %6643 = vst [vmem:[#allocation3 + $0xa0] sm:$0xff] %v6607
      %6644 = vst [vmem:[#allocation3 + $0xa8] sm:$0xff] %v6608
      %6645 = vst [vmem:[#allocation3 + $0xb0] sm:$0xff] %v6609
      %6646 = vst [vmem:[#allocation3 + $0xb8] sm:$0xff] %v6610
      %6647 = vst [vmem:[#allocation3 + $0xc0] sm:$0xff] %v6611
      %6648 = vst [vmem:[#allocation3 + $0xc8] sm:$0xff] %v6612
      %6649 = vst [vmem:[#allocation3 + $0xd0] sm:$0xff] %v6613
      %6650 = vst [vmem:[#allocation3 + $0xd8] sm:$0xff] %v6614
      %6651 = vst [vmem:[#allocation3 + $0xe0] sm:$0xff] %v6615
      %6652 = vst [vmem:[#allocation3 + $0xe8] sm:$0xff] %v6616
      %6653 = vst [vmem:[#allocation3 + $0xf0] sm:$0xff] %v6617
      %6654 = vst [vmem:[#allocation3 + $0xf8] sm:$0xff] %v6618
      %6655 = vst [vmem:[#allocation3 + $0x100] sm:$0xff] %v6619
      %6656 = vst [vmem:[#allocation3 + $0x108] sm:$0xff] %v6620
      %6657 = vst [vmem:[#allocation3 + $0x110] sm:$0xff] %v6621
      %6658 = vst [vmem:[#allocation3 + $0x118] sm:$0xff] %v6622
      %v6659 = vld [vmem:[#allocation2 + $0x13] sm:$0xff]
      %v6660 = vld [vmem:[#allocation2 + $0x1b] sm:$0xff]
      %v6661 = vld [vmem:[#allocation2 + $0x23] sm:$0xff]
      %v6662 = vld [vmem:[#allocation2 + $0x2b] sm:$0xff]
      %v6663 = vld [vmem:[#allocation2 + $0x33] sm:$0xff]
      %v6664 = vld [vmem:[#allocation2 + $0x3b] sm:$0xff]
      %v6665 = vld [vmem:[#allocation2 + $0x43] sm:$0xff]
      %v6666 = vld [vmem:[#allocation2 + $0x4b] sm:$0xff]
      %v6667 = vld [vmem:[#allocation2 + $0x53] sm:$0xff]
      %v6668 = vld [vmem:[#allocation2 + $0x5b] sm:$0xff]
      %v6669 = vld [vmem:[#allocation2 + $0x63] sm:$0xff]
      %v6670 = vld [vmem:[#allocation2 + $0x6b] sm:$0xff]
      %v6671 = vld [vmem:[#allocation2 + $0x73] sm:$0xff]
      %v6672 = vld [vmem:[#allocation2 + $0x7b] sm:$0xff]
      %v6673 = vld [vmem:[#allocation2 + $0x83] sm:$0xff]
      %v6674 = vld [vmem:[#allocation2 + $0x8b] sm:$0xff]
      %v6675 = vld [vmem:[#allocation2 + $0x93] sm:$0xff]
      %v6676 = vld [vmem:[#allocation2 + $0x9b] sm:$0xff]
      %v6677 = vld [vmem:[#allocation2 + $0xa3] sm:$0xff]
      %v6678 = vld [vmem:[#allocation2 + $0xab] sm:$0xff]
      %v6679 = vld [vmem:[#allocation2 + $0xb3] sm:$0xff]
      %v6680 = vld [vmem:[#allocation2 + $0xbb] sm:$0xff]
      %v6681 = vld [vmem:[#allocation2 + $0xc3] sm:$0xff]
      %v6682 = vld [vmem:[#allocation2 + $0xcb] sm:$0xff]
      %v6683 = vld [vmem:[#allocation2 + $0xd3] sm:$0xff]
      %v6684 = vld [vmem:[#allocation2 + $0xdb] sm:$0xff]
      %v6685 = vld [vmem:[#allocation2 + $0xe3] sm:$0xff]
      %v6686 = vld [vmem:[#allocation2 + $0xeb] sm:$0xff]
      %v6687 = vld [vmem:[#allocation2 + $0xf3] sm:$0xff]
      %v6688 = vld [vmem:[#allocation2 + $0xfb] sm:$0xff]
      %v6689 = vld [vmem:[#allocation2 + $0x103] sm:$0xff]
      %v6690 = vld [vmem:[#allocation2 + $0x10b] sm:$0xff]
      %v6691 = vld [vmem:[#allocation2 + $0x113] sm:$0xff]
      %v6692 = vld [vmem:[#allocation2 + $0x11b] sm:$0xff]
      %v6693 = vld [vmem:[#allocation2 + $0x123] sm:$0xff]
      %v6694 = vld [vmem:[#allocation2 + $0x12b] sm:$0xff]
      %v6695 = vpack.c.bf16 %v6660, %v6659
      %v6696 = vpack.c.bf16 %v6662, %v6661
      %v6697 = vpack.c.bf16 %v6664, %v6663
      %v6698 = vpack.c.bf16 %v6666, %v6665
      %v6699 = vpack.c.bf16 %v6668, %v6667
      %v6700 = vpack.c.bf16 %v6670, %v6669
      %v6701 = vpack.c.bf16 %v6672, %v6671
      %v6702 = vpack.c.bf16 %v6674, %v6673
      %v6703 = vpack.c.bf16 %v6676, %v6675
      %v6704 = vpack.c.bf16 %v6678, %v6677
      %v6705 = vpack.c.bf16 %v6680, %v6679
      %v6706 = vpack.c.bf16 %v6682, %v6681
      %v6707 = vpack.c.bf16 %v6684, %v6683
      %v6708 = vpack.c.bf16 %v6686, %v6685
      %v6709 = vpack.c.bf16 %v6688, %v6687
      %v6710 = vpack.c.bf16 %v6690, %v6689
      %v6711 = vpack.c.bf16 %v6692, %v6691
      %v6712 = vpack.c.bf16 %v6694, %v6693
      %s6713 = scalar_lea.vmem %s2, 256
      %v6714 = vld [vmem:[%s6713] sm:$0xf]
      %v6715 = vld [vmem:[%s6713 + $0x4] sm:$0xf]
      %v6716 = vld [vmem:[%s6713 + $0x8] sm:$0xf]
      %v6717 = vld [vmem:[%s6713 + $0xc] sm:$0xf]
      %v6718 = vld [vmem:[%s6713 + $0x10] sm:$0xf]
      %v6719 = vld [vmem:[%s6713 + $0x14] sm:$0xf]
      %v6720 = vld [vmem:[%s6713 + $0x18] sm:$0xf]
      %v6721 = vld [vmem:[%s6713 + $0x1c] sm:$0xf]
      %v6722 = vld [vmem:[%s6713 + $0x20] sm:$0xf]
      %v6723 = vld [vmem:[%s6713 + $0x24] sm:$0xf]
      %v6724 = vld [vmem:[%s6713 + $0x28] sm:$0xf]
      %v6725 = vld [vmem:[%s6713 + $0x2c] sm:$0xf]
      %v6726 = vld [vmem:[%s6713 + $0x30] sm:$0xf]
      %v6727 = vld [vmem:[%s6713 + $0x34] sm:$0xf]
      %v6728 = vld [vmem:[%s6713 + $0x38] sm:$0xf]
      %v6729 = vld [vmem:[%s6713 + $0x3c] sm:$0xf]
      %v6746 = vunpack.c.l.b16 %v6714
      %v6747 = vunpack.c.l.b16 %v6715
      %v6748 = vunpack.c.l.b16 %v6716
      %v6749 = vunpack.c.l.b16 %v6717
      %v6750 = vunpack.c.l.b16 %v6718
      %v6751 = vunpack.c.l.b16 %v6719
      %v6752 = vunpack.c.l.b16 %v6720
      %v6753 = vunpack.c.l.b16 %v6721
      %v6754 = vunpack.c.l.b16 %v6722
      %v6755 = vunpack.c.l.b16 %v6723
      %v6756 = vunpack.c.l.b16 %v6724
      %v6757 = vunpack.c.l.b16 %v6725
      %v6758 = vunpack.c.l.b16 %v6726
      %v6759 = vunpack.c.l.b16 %v6727
      %v6760 = vunpack.c.l.b16 %v6728
      %v6761 = vunpack.c.l.b16 %v6729
      %v6762 = vpack.c.b16 %v6747, %v6746
      %v6763 = vpack.c.b16 %v6749, %v6748
      %v6764 = vpack.c.b16 %v6751, %v6750
      %v6765 = vpack.c.b16 %v6753, %v6752
      %v6766 = vpack.c.b16 %v6755, %v6754
      %v6767 = vpack.c.b16 %v6757, %v6756
      %v6768 = vpack.c.b16 %v6759, %v6758
      %v6769 = vpack.c.b16 %v6761, %v6760
      %6778 = vmatprep.subr.bf16.mxu0 0
      %6779 = vmatpush1.bf16.msra.mxu0 %v6762
      %6780 = vmatprep.subr.bf16.mxu0 0
      %6781 = vmatpush1.bf16.msra.mxu0 %v6763
      %6782 = vmatprep.subr.bf16.mxu0 0
      %6783 = vmatpush1.bf16.msra.mxu0 %v6764
      %6784 = vmatprep.subr.bf16.mxu0 0
      %6785 = vmatpush1.bf16.msra.mxu0 %v6765
      %6786 = vmatprep.subr.bf16.mxu0 0
      %6787 = vmatpush1.bf16.msra.mxu0 %v6766
      %6788 = vmatprep.subr.bf16.mxu0 0
      %6789 = vmatpush1.bf16.msra.mxu0 %v6767
      %6790 = vmatprep.subr.bf16.mxu0 0
      %6791 = vmatpush1.bf16.msra.mxu0 %v6768
      %6792 = vmatprep.subr.bf16.mxu0 0
      %6793 = vmatpush1.bf16.msra.mxu0 %v6769
      %6794 = vmatprep.subr.bf16.mxu0 0
      %6795 = vmatpush1.bf16.msra.mxu0 0
      %6796 = vmatprep.subr.bf16.mxu0 0
      %6797 = vmatpush1.bf16.msra.mxu0 0
      %6798 = vmatprep.subr.bf16.mxu0 0
      %6799 = vmatpush1.bf16.msra.mxu0 0
      %6800 = vmatprep.subr.bf16.mxu0 0
      %6801 = vmatpush1.bf16.msra.mxu0 0
      %6802 = vmatprep.subr.bf16.mxu0 0
      %6803 = vmatpush1.bf16.msra.mxu0 0
      %6804 = vmatprep.subr.bf16.mxu0 0
      %6805 = vmatpush1.bf16.msra.mxu0 0
      %6806 = vmatprep.subr.bf16.mxu0 0
      %6807 = vmatpush1.bf16.msra.mxu0 0
      %6808 = vmatprep.subr.bf16.mxu0 0
      %6809 = vmatpush1.bf16.msra.mxu0 0
      %6810 = vmatprep.mubr.bf16.mxu0 0
      %6811 = vmatmul.mubr.bf16.gmra.mrb[0].mxu0 %v6695
      %v6812 = vpop.f32.mrb[0].mxu0
      %v6813 = vadd.f32 0.0, %v6812
      %v6814 = vpop.f32.mrb[0].mxu0
      %v6815 = vpop.f32.mrb[0].mxu0
      %v6816 = vadd.f32 0.0, %v6815
      %v6817 = vpop.f32.mrb[0].mxu0
      %6818 = vmatprep.mubr.bf16.mxu0 0
      %6819 = vmatmul.mubr.bf16.gmra.mrb[0].mxu0 %v6696
      %v6820 = vpop.f32.mrb[0].mxu0
      %v6821 = vadd.f32 0.0, %v6820
      %v6822 = vpop.f32.mrb[0].mxu0
      %v6823 = vpop.f32.mrb[0].mxu0
      %v6824 = vadd.f32 0.0, %v6823
      %v6825 = vpop.f32.mrb[0].mxu0
      %6826 = vmatprep.mubr.bf16.mxu0 0
      %6827 = vmatmul.mubr.bf16.gmra.mrb[0].mxu0 %v6697
      %v6828 = vpop.f32.mrb[0].mxu0
      %v6829 = vadd.f32 0.0, %v6828
      %v6830 = vpop.f32.mrb[0].mxu0
      %v6831 = vpop.f32.mrb[0].mxu0
      %v6832 = vadd.f32 0.0, %v6831
      %v6833 = vpop.f32.mrb[0].mxu0
      %6834 = vmatprep.mubr.bf16.mxu0 0
      %6835 = vmatmul.mubr.bf16.gmra.mrb[0].mxu0 %v6698
      %v6836 = vpop.f32.mrb[0].mxu0
      %v6837 = vadd.f32 0.0, %v6836
      %v6838 = vpop.f32.mrb[0].mxu0
      %v6839 = vpop.f32.mrb[0].mxu0
      %v6840 = vadd.f32 0.0, %v6839
      %v6841 = vpop.f32.mrb[0].mxu0
      %6842 = vmatprep.mubr.bf16.mxu0 0
      %6843 = vmatmul.mubr.bf16.gmra.mrb[0].mxu0 %v6699
      %v6844 = vpop.f32.mrb[0].mxu0
      %v6845 = vadd.f32 0.0, %v6844
      %v6846 = vpop.f32.mrb[0].mxu0
      %v6847 = vpop.f32.mrb[0].mxu0
      %v6848 = vadd.f32 0.0, %v6847
      %v6849 = vpop.f32.mrb[0].mxu0
      %6850 = vmatprep.mubr.bf16.mxu0 0
      %6851 = vmatmul.mubr.bf16.gmra.mrb[0].mxu0 %v6700
      %v6852 = vpop.f32.mrb[0].mxu0
      %v6853 = vadd.f32 0.0, %v6852
      %v6854 = vpop.f32.mrb[0].mxu0
      %v6855 = vpop.f32.mrb[0].mxu0
      %v6856 = vadd.f32 0.0, %v6855
      %v6857 = vpop.f32.mrb[0].mxu0
      %6858 = vmatprep.mubr.bf16.mxu0 0
      %6859 = vmatmul.mubr.bf16.gmra.mrb[0].mxu0 %v6701
      %v6860 = vpop.f32.mrb[0].mxu0
      %v6861 = vadd.f32 0.0, %v6860
      %v6862 = vpop.f32.mrb[0].mxu0
      %v6863 = vpop.f32.mrb[0].mxu0
      %v6864 = vadd.f32 0.0, %v6863
      %v6865 = vpop.f32.mrb[0].mxu0
      %6866 = vmatprep.mubr.bf16.mxu0 0
      %6867 = vmatmul.mubr.bf16.gmra.mrb[0].mxu0 %v6702
      %v6868 = vpop.f32.mrb[0].mxu0
      %v6869 = vadd.f32 0.0, %v6868
      %v6870 = vpop.f32.mrb[0].mxu0
      %v6871 = vpop.f32.mrb[0].mxu0
      %v6872 = vadd.f32 0.0, %v6871
      %v6873 = vpop.f32.mrb[0].mxu0
      %6874 = vmatprep.mubr.bf16.mxu0 0
      %6875 = vmatmul.mubr.bf16.gmra.mrb[0].mxu0 %v6703
      %v6876 = vpop.f32.mrb[0].mxu0
      %v6877 = vadd.f32 0.0, %v6876
      %v6878 = vpop.f32.mrb[0].mxu0
      %v6879 = vpop.f32.mrb[0].mxu0
      %v6880 = vadd.f32 0.0, %v6879
      %v6881 = vpop.f32.mrb[0].mxu0
      %6882 = vmatprep.mubr.bf16.mxu0 0
      %6883 = vmatmul.mubr.bf16.gmra.mrb[0].mxu0 %v6704
      %v6884 = vpop.f32.mrb[0].mxu0
      %v6885 = vadd.f32 0.0, %v6884
      %v6886 = vpop.f32.mrb[0].mxu0
      %v6887 = vpop.f32.mrb[0].mxu0
      %v6888 = vadd.f32 0.0, %v6887
      %v6889 = vpop.f32.mrb[0].mxu0
      %6890 = vmatprep.mubr.bf16.mxu0 0
      %6891 = vmatmul.mubr.bf16.gmra.mrb[0].mxu0 %v6705
      %v6892 = vpop.f32.mrb[0].mxu0
      %v6893 = vadd.f32 0.0, %v6892
      %v6894 = vpop.f32.mrb[0].mxu0
      %v6895 = vpop.f32.mrb[0].mxu0
      %v6896 = vadd.f32 0.0, %v6895
      %v6897 = vpop.f32.mrb[0].mxu0
      %6898 = vmatprep.mubr.bf16.mxu0 0
      %6899 = vmatmul.mubr.bf16.gmra.mrb[0].mxu0 %v6706
      %v6900 = vpop.f32.mrb[0].mxu0
      %v6901 = vadd.f32 0.0, %v6900
      %v6902 = vpop.f32.mrb[0].mxu0
      %v6903 = vpop.f32.mrb[0].mxu0
      %v6904 = vadd.f32 0.0, %v6903
      %v6905 = vpop.f32.mrb[0].mxu0
      %6906 = vmatprep.mubr.bf16.mxu0 0
      %6907 = vmatmul.mubr.bf16.gmra.mrb[0].mxu0 %v6707
      %v6908 = vpop.f32.mrb[0].mxu0
      %v6909 = vadd.f32 0.0, %v6908
      %v6910 = vpop.f32.mrb[0].mxu0
      %v6911 = vpop.f32.mrb[0].mxu0
      %v6912 = vadd.f32 0.0, %v6911
      %v6913 = vpop.f32.mrb[0].mxu0
      %6914 = vmatprep.mubr.bf16.mxu0 0
      %6915 = vmatmul.mubr.bf16.gmra.mrb[0].mxu0 %v6708
      %v6916 = vpop.f32.mrb[0].mxu0
      %v6917 = vadd.f32 0.0, %v6916
      %v6918 = vpop.f32.mrb[0].mxu0
      %v6919 = vpop.f32.mrb[0].mxu0
      %v6920 = vadd.f32 0.0, %v6919
      %v6921 = vpop.f32.mrb[0].mxu0
      %6922 = vmatprep.mubr.bf16.mxu0 0
      %6923 = vmatmul.mubr.bf16.gmra.mrb[0].mxu0 %v6709
      %v6924 = vpop.f32.mrb[0].mxu0
      %v6925 = vadd.f32 0.0, %v6924
      %v6926 = vpop.f32.mrb[0].mxu0
      %v6927 = vpop.f32.mrb[0].mxu0
      %v6928 = vadd.f32 0.0, %v6927
      %v6929 = vpop.f32.mrb[0].mxu0
      %6930 = vmatprep.mubr.bf16.mxu0 0
      %6931 = vmatmul.mubr.bf16.gmra.mrb[0].mxu0 %v6710
      %v6932 = vpop.f32.mrb[0].mxu0
      %v6933 = vadd.f32 0.0, %v6932
      %v6934 = vpop.f32.mrb[0].mxu0
      %v6935 = vpop.f32.mrb[0].mxu0
      %v6936 = vadd.f32 0.0, %v6935
      %v6937 = vpop.f32.mrb[0].mxu0
      %6938 = vmatprep.mubr.bf16.mxu0 0
      %6939 = vmatmul.mubr.bf16.gmra.mrb[0].mxu0 %v6711
      %v6940 = vpop.f32.mrb[0].mxu0
      %v6941 = vadd.f32 0.0, %v6940
      %v6942 = vpop.f32.mrb[0].mxu0
      %v6943 = vpop.f32.mrb[0].mxu0
      %v6944 = vadd.f32 0.0, %v6943
      %v6945 = vpop.f32.mrb[0].mxu0
      %6946 = vmatprep.mubr.bf16.mxu0 0
      %6947 = vmatmul.mubr.bf16.gmra.mrb[0].mxu0 %v6712
      %v6948 = vpop.f32.mrb[0].mxu0
      %v6949 = vadd.f32 0.0, %v6948
      %v6950 = vpop.f32.mrb[0].mxu0
      %v6951 = vpop.f32.mrb[0].mxu0
      %v6952 = vadd.f32 0.0, %v6951
      %v6953 = vpop.f32.mrb[0].mxu0
      %6954 = vdwg.mxu0
      %v6955 = vld [vmem:[#allocation3] sm:$0xff]
      %v6956 = vld [vmem:[#allocation3 + $0x8] sm:$0xff]
      %v6957 = vld [vmem:[#allocation3 + $0x10] sm:$0xff]
      %v6958 = vld [vmem:[#allocation3 + $0x18] sm:$0xff]
      %v6959 = vld [vmem:[#allocation3 + $0x20] sm:$0xff]
      %v6960 = vld [vmem:[#allocation3 + $0x28] sm:$0xff]
      %v6961 = vld [vmem:[#allocation3 + $0x30] sm:$0xff]
      %v6962 = vld [vmem:[#allocation3 + $0x38] sm:$0xff]
      %v6963 = vld [vmem:[#allocation3 + $0x40] sm:$0xff]
      %v6964 = vld [vmem:[#allocation3 + $0x48] sm:$0xff]
      %v6965 = vld [vmem:[#allocation3 + $0x50] sm:$0xff]
      %v6966 = vld [vmem:[#allocation3 + $0x58] sm:$0xff]
      %v6967 = vld [vmem:[#allocation3 + $0x60] sm:$0xff]
      %v6968 = vld [vmem:[#allocation3 + $0x68] sm:$0xff]
      %v6969 = vld [vmem:[#allocation3 + $0x70] sm:$0xff]
      %v6970 = vld [vmem:[#allocation3 + $0x78] sm:$0xff]
      %v6971 = vld [vmem:[#allocation3 + $0x80] sm:$0xff]
      %v6972 = vld [vmem:[#allocation3 + $0x88] sm:$0xff]
      %v6973 = vld [vmem:[#allocation3 + $0x90] sm:$0xff]
      %v6974 = vld [vmem:[#allocation3 + $0x98] sm:$0xff]
      %v6975 = vld [vmem:[#allocation3 + $0xa0] sm:$0xff]
      %v6976 = vld [vmem:[#allocation3 + $0xa8] sm:$0xff]
      %v6977 = vld [vmem:[#allocation3 + $0xb0] sm:$0xff]
      %v6978 = vld [vmem:[#allocation3 + $0xb8] sm:$0xff]
      %v6979 = vld [vmem:[#allocation3 + $0xc0] sm:$0xff]
      %v6980 = vld [vmem:[#allocation3 + $0xc8] sm:$0xff]
      %v6981 = vld [vmem:[#allocation3 + $0xd0] sm:$0xff]
      %v6982 = vld [vmem:[#allocation3 + $0xd8] sm:$0xff]
      %v6983 = vld [vmem:[#allocation3 + $0xe0] sm:$0xff]
      %v6984 = vld [vmem:[#allocation3 + $0xe8] sm:$0xff]
      %v6985 = vld [vmem:[#allocation3 + $0xf0] sm:$0xff]
      %v6986 = vld [vmem:[#allocation3 + $0xf8] sm:$0xff]
      %v6987 = vld [vmem:[#allocation3 + $0x100] sm:$0xff]
      %v6988 = vld [vmem:[#allocation3 + $0x108] sm:$0xff]
      %v6989 = vld [vmem:[#allocation3 + $0x110] sm:$0xff]
      %v6990 = vld [vmem:[#allocation3 + $0x118] sm:$0xff]
      %v6991 = vadd.f32 %v6955, %v6813
      %v6992 = vadd.f32 %v6956, %v6816
      %v6993 = vadd.f32 %v6957, %v6821
      %v6994 = vadd.f32 %v6958, %v6824
      %v6995 = vadd.f32 %v6959, %v6829
      %v6996 = vadd.f32 %v6960, %v6832
      %v6997 = vadd.f32 %v6961, %v6837
      %v6998 = vadd.f32 %v6962, %v6840
      %v6999 = vadd.f32 %v6963, %v6845
      %v7000 = vadd.f32 %v6964, %v6848
      %v7001 = vadd.f32 %v6965, %v6853
      %v7002 = vadd.f32 %v6966, %v6856
      %v7003 = vadd.f32 %v6967, %v6861
      %v7004 = vadd.f32 %v6968, %v6864
      %v7005 = vadd.f32 %v6969, %v6869
      %v7006 = vadd.f32 %v6970, %v6872
      %v7007 = vadd.f32 %v6971, %v6877
      %v7008 = vadd.f32 %v6972, %v6880
      %v7009 = vadd.f32 %v6973, %v6885
      %v7010 = vadd.f32 %v6974, %v6888
      %v7011 = vadd.f32 %v6975, %v6893
      %v7012 = vadd.f32 %v6976, %v6896
      %v7013 = vadd.f32 %v6977, %v6901
      %v7014 = vadd.f32 %v6978, %v6904
      %v7015 = vadd.f32 %v6979, %v6909
      %v7016 = vadd.f32 %v6980, %v6912
      %v7017 = vadd.f32 %v6981, %v6917
      %v7018 = vadd.f32 %v6982, %v6920
      %v7019 = vadd.f32 %v6983, %v6925
      %v7020 = vadd.f32 %v6984, %v6928
      %v7021 = vadd.f32 %v6985, %v6933
      %v7022 = vadd.f32 %v6986, %v6936
      %v7023 = vadd.f32 %v6987, %v6941
      %v7024 = vadd.f32 %v6988, %v6944
      %v7025 = vadd.f32 %v6989, %v6949
      %v7026 = vadd.f32 %v6990, %v6952
      %7027 = vst [vmem:[#allocation3] sm:$0xff] %v6991
      %7028 = vst [vmem:[#allocation3 + $0x8] sm:$0xff] %v6992
      %7029 = vst [vmem:[#allocation3 + $0x10] sm:$0xff] %v6993
      %7030 = vst [vmem:[#allocation3 + $0x18] sm:$0xff] %v6994
      %7031 = vst [vmem:[#allocation3 + $0x20] sm:$0xff] %v6995
      %7032 = vst [vmem:[#allocation3 + $0x28] sm:$0xff] %v6996
      %7033 = vst [vmem:[#allocation3 + $0x30] sm:$0xff] %v6997
      %7034 = vst [vmem:[#allocation3 + $0x38] sm:$0xff] %v6998
      %7035 = vst [vmem:[#allocation3 + $0x40] sm:$0xff] %v6999
      %7036 = vst [vmem:[#allocation3 + $0x48] sm:$0xff] %v7000
      %7037 = vst [vmem:[#allocation3 + $0x50] sm:$0xff] %v7001
      %7038 = vst [vmem:[#allocation3 + $0x58] sm:$0xff] %v7002
      %7039 = vst [vmem:[#allocation3 + $0x60] sm:$0xff] %v7003
      %7040 = vst [vmem:[#allocation3 + $0x68] sm:$0xff] %v7004
      %7041 = vst [vmem:[#allocation3 + $0x70] sm:$0xff] %v7005
      %7042 = vst [vmem:[#allocation3 + $0x78] sm:$0xff] %v7006
      %7043 = vst [vmem:[#allocation3 + $0x80] sm:$0xff] %v7007
      %7044 = vst [vmem:[#allocation3 + $0x88] sm:$0xff] %v7008
      %7045 = vst [vmem:[#allocation3 + $0x90] sm:$0xff] %v7009
      %7046 = vst [vmem:[#allocation3 + $0x98] sm:$0xff] %v7010
      %7047 = vst [vmem:[#allocation3 + $0xa0] sm:$0xff] %v7011
      %7048 = vst [vmem:[#allocation3 + $0xa8] sm:$0xff] %v7012
      %7049 = vst [vmem:[#allocation3 + $0xb0] sm:$0xff] %v7013
      %7050 = vst [vmem:[#allocation3 + $0xb8] sm:$0xff] %v7014
      %7051 = vst [vmem:[#allocation3 + $0xc0] sm:$0xff] %v7015
      %7052 = vst [vmem:[#allocation3 + $0xc8] sm:$0xff] %v7016
      %7053 = vst [vmem:[#allocation3 + $0xd0] sm:$0xff] %v7017
      %7054 = vst [vmem:[#allocation3 + $0xd8] sm:$0xff] %v7018
      %7055 = vst [vmem:[#allocation3 + $0xe0] sm:$0xff] %v7019
      %7056 = vst [vmem:[#allocation3 + $0xe8] sm:$0xff] %v7020
      %7057 = vst [vmem:[#allocation3 + $0xf0] sm:$0xff] %v7021
      %7058 = vst [vmem:[#allocation3 + $0xf8] sm:$0xff] %v7022
      %7059 = vst [vmem:[#allocation3 + $0x100] sm:$0xff] %v7023
      %7060 = vst [vmem:[#allocation3 + $0x108] sm:$0xff] %v7024
      %7061 = vst [vmem:[#allocation3 + $0x110] sm:$0xff] %v7025
      %7062 = vst [vmem:[#allocation3 + $0x118] sm:$0xff] %v7026
      %v7063 = vld [vmem:[#allocation2 + $0x14] sm:$0xff]
      %v7064 = vld [vmem:[#allocation2 + $0x1c] sm:$0xff]
      %v7065 = vld [vmem:[#allocation2 + $0x24] sm:$0xff]
      %v7066 = vld [vmem:[#allocation2 + $0x2c] sm:$0xff]
      %v7067 = vld [vmem:[#allocation2 + $0x34] sm:$0xff]
      %v7068 = vld [vmem:[#allocation2 + $0x3c] sm:$0xff]
      %v7069 = vld [vmem:[#allocation2 + $0x44] sm:$0xff]
      %v7070 = vld [vmem:[#allocation2 + $0x4c] sm:$0xff]
      %v7071 = vld [vmem:[#allocation2 + $0x54] sm:$0xff]
      %v7072 = vld [vmem:[#allocation2 + $0x5c] sm:$0xff]
      %v7073 = vld [vmem:[#allocation2 + $0x64] sm:$0xff]
      %v7074 = vld [vmem:[#allocation2 + $0x6c] sm:$0xff]
      %v7075 = vld [vmem:[#allocation2 + $0x74] sm:$0xff]
      %v7076 = vld [vmem:[#allocation2 + $0x7c] sm:$0xff]
      %v7077 = vld [vmem:[#allocation2 + $0x84] sm:$0xff]
      %v7078 = vld [vmem:[#allocation2 + $0x8c] sm:$0xff]
      %v7079 = vld [vmem:[#allocation2 + $0x94] sm:$0xff]
      %v7080 = vld [vmem:[#allocation2 + $0x9c] sm:$0xff]
      %v7081 = vld [vmem:[#allocation2 + $0xa4] sm:$0xff]
      %v7082 = vld [vmem:[#allocation2 + $0xac] sm:$0xff]
      %v7083 = vld [vmem:[#allocation2 + $0xb4] sm:$0xff]
      %v7084 = vld [vmem:[#allocation2 + $0xbc] sm:$0xff]
      %v7085 = vld [vmem:[#allocation2 + $0xc4] sm:$0xff]
      %v7086 = vld [vmem:[#allocation2 + $0xcc] sm:$0xff]
      %v7087 = vld [vmem:[#allocation2 + $0xd4] sm:$0xff]
      %v7088 = vld [vmem:[#allocation2 + $0xdc] sm:$0xff]
      %v7089 = vld [vmem:[#allocation2 + $0xe4] sm:$0xff]
      %v7090 = vld [vmem:[#allocation2 + $0xec] sm:$0xff]
      %v7091 = vld [vmem:[#allocation2 + $0xf4] sm:$0xff]
      %v7092 = vld [vmem:[#allocation2 + $0xfc] sm:$0xff]
      %v7093 = vld [vmem:[#allocation2 + $0x104] sm:$0xff]
      %v7094 = vld [vmem:[#allocation2 + $0x10c] sm:$0xff]
      %v7095 = vld [vmem:[#allocation2 + $0x114] sm:$0xff]
      %v7096 = vld [vmem:[#allocation2 + $0x11c] sm:$0xff]
      %v7097 = vld [vmem:[#allocation2 + $0x124] sm:$0xff]
      %v7098 = vld [vmem:[#allocation2 + $0x12c] sm:$0xff]
      %v7099 = vpack.c.bf16 %v7064, %v7063
      %v7100 = vpack.c.bf16 %v7066, %v7065
      %v7101 = vpack.c.bf16 %v7068, %v7067
      %v7102 = vpack.c.bf16 %v7070, %v7069
      %v7103 = vpack.c.bf16 %v7072, %v7071
      %v7104 = vpack.c.bf16 %v7074, %v7073
      %v7105 = vpack.c.bf16 %v7076, %v7075
      %v7106 = vpack.c.bf16 %v7078, %v7077
      %v7107 = vpack.c.bf16 %v7080, %v7079
      %v7108 = vpack.c.bf16 %v7082, %v7081
      %v7109 = vpack.c.bf16 %v7084, %v7083
      %v7110 = vpack.c.bf16 %v7086, %v7085
      %v7111 = vpack.c.bf16 %v7088, %v7087
      %v7112 = vpack.c.bf16 %v7090, %v7089
      %v7113 = vpack.c.bf16 %v7092, %v7091
      %v7114 = vpack.c.bf16 %v7094, %v7093
      %v7115 = vpack.c.bf16 %v7096, %v7095
      %v7116 = vpack.c.bf16 %v7098, %v7097
      %s7117 = scalar_lea.vmem %s2, 320
      %v7118 = vld [vmem:[%s7117] sm:$0xf]
      %v7119 = vld [vmem:[%s7117 + $0x4] sm:$0xf]
      %v7120 = vld [vmem:[%s7117 + $0x8] sm:$0xf]
      %v7121 = vld [vmem:[%s7117 + $0xc] sm:$0xf]
      %v7122 = vld [vmem:[%s7117 + $0x10] sm:$0xf]
      %v7123 = vld [vmem:[%s7117 + $0x14] sm:$0xf]
      %v7124 = vld [vmem:[%s7117 + $0x18] sm:$0xf]
      %v7125 = vld [vmem:[%s7117 + $0x1c] sm:$0xf]
      %v7126 = vld [vmem:[%s7117 + $0x20] sm:$0xf]
      %v7127 = vld [vmem:[%s7117 + $0x24] sm:$0xf]
      %v7128 = vld [vmem:[%s7117 + $0x28] sm:$0xf]
      %v7129 = vld [vmem:[%s7117 + $0x2c] sm:$0xf]
      %v7130 = vld [vmem:[%s7117 + $0x30] sm:$0xf]
      %v7131 = vld [vmem:[%s7117 + $0x34] sm:$0xf]
      %v7132 = vld [vmem:[%s7117 + $0x38] sm:$0xf]
      %v7133 = vld [vmem:[%s7117 + $0x3c] sm:$0xf]
      %v7150 = vunpack.c.l.b16 %v7118
      %v7151 = vunpack.c.l.b16 %v7119
      %v7152 = vunpack.c.l.b16 %v7120
      %v7153 = vunpack.c.l.b16 %v7121
      %v7154 = vunpack.c.l.b16 %v7122
      %v7155 = vunpack.c.l.b16 %v7123
      %v7156 = vunpack.c.l.b16 %v7124
      %v7157 = vunpack.c.l.b16 %v7125
      %v7158 = vunpack.c.l.b16 %v7126
      %v7159 = vunpack.c.l.b16 %v7127
      %v7160 = vunpack.c.l.b16 %v7128
      %v7161 = vunpack.c.l.b16 %v7129
      %v7162 = vunpack.c.l.b16 %v7130
      %v7163 = vunpack.c.l.b16 %v7131
      %v7164 = vunpack.c.l.b16 %v7132
      %v7165 = vunpack.c.l.b16 %v7133
      %v7166 = vpack.c.b16 %v7151, %v7150
      %v7167 = vpack.c.b16 %v7153, %v7152
      %v7168 = vpack.c.b16 %v7155, %v7154
      %v7169 = vpack.c.b16 %v7157, %v7156
      %v7170 = vpack.c.b16 %v7159, %v7158
      %v7171 = vpack.c.b16 %v7161, %v7160
      %v7172 = vpack.c.b16 %v7163, %v7162
      %v7173 = vpack.c.b16 %v7165, %v7164
      %7182 = vmatprep.subr.bf16.mxu0 0
      %7183 = vmatpush1.bf16.msra.mxu0 %v7166
      %7184 = vmatprep.subr.bf16.mxu0 0
      %7185 = vmatpush1.bf16.msra.mxu0 %v7167
      %7186 = vmatprep.subr.bf16.mxu0 0
      %7187 = vmatpush1.bf16.msra.mxu0 %v7168
      %7188 = vmatprep.subr.bf16.mxu0 0
      %7189 = vmatpush1.bf16.msra.mxu0 %v7169
      %7190 = vmatprep.subr.bf16.mxu0 0
      %7191 = vmatpush1.bf16.msra.mxu0 %v7170
      %7192 = vmatprep.subr.bf16.mxu0 0
      %7193 = vmatpush1.bf16.msra.mxu0 %v7171
      %7194 = vmatprep.subr.bf16.mxu0 0
      %7195 = vmatpush1.bf16.msra.mxu0 %v7172
      %7196 = vmatprep.subr.bf16.mxu0 0
      %7197 = vmatpush1.bf16.msra.mxu0 %v7173
      %7198 = vmatprep.subr.bf16.mxu0 0
      %7199 = vmatpush1.bf16.msra.mxu0 0
      %7200 = vmatprep.subr.bf16.mxu0 0
      %7201 = vmatpush1.bf16.msra.mxu0 0
      %7202 = vmatprep.subr.bf16.mxu0 0
      %7203 = vmatpush1.bf16.msra.mxu0 0
      %7204 = vmatprep.subr.bf16.mxu0 0
      %7205 = vmatpush1.bf16.msra.mxu0 0
      %7206 = vmatprep.subr.bf16.mxu0 0
      %7207 = vmatpush1.bf16.msra.mxu0 0
      %7208 = vmatprep.subr.bf16.mxu0 0
      %7209 = vmatpush1.bf16.msra.mxu0 0
      %7210 = vmatprep.subr.bf16.mxu0 0
      %7211 = vmatpush1.bf16.msra.mxu0 0
      %7212 = vmatprep.subr.bf16.mxu0 0
      %7213 = vmatpush1.bf16.msra.mxu0 0
      %7214 = vmatprep.mubr.bf16.mxu0 0
      %7215 = vmatmul.mubr.bf16.gmra.mrb[0].mxu0 %v7099
      %v7216 = vpop.f32.mrb[0].mxu0
      %v7217 = vadd.f32 0.0, %v7216
      %v7218 = vpop.f32.mrb[0].mxu0
      %v7219 = vpop.f32.mrb[0].mxu0
      %v7220 = vadd.f32 0.0, %v7219
      %v7221 = vpop.f32.mrb[0].mxu0
      %7222 = vmatprep.mubr.bf16.mxu0 0
      %7223 = vmatmul.mubr.bf16.gmra.mrb[0].mxu0 %v7100
      %v7224 = vpop.f32.mrb[0].mxu0
      %v7225 = vadd.f32 0.0, %v7224
      %v7226 = vpop.f32.mrb[0].mxu0
      %v7227 = vpop.f32.mrb[0].mxu0
      %v7228 = vadd.f32 0.0, %v7227
      %v7229 = vpop.f32.mrb[0].mxu0
      %7230 = vmatprep.mubr.bf16.mxu0 0
      %7231 = vmatmul.mubr.bf16.gmra.mrb[0].mxu0 %v7101
      %v7232 = vpop.f32.mrb[0].mxu0
      %v7233 = vadd.f32 0.0, %v7232
      %v7234 = vpop.f32.mrb[0].mxu0
      %v7235 = vpop.f32.mrb[0].mxu0
      %v7236 = vadd.f32 0.0, %v7235
      %v7237 = vpop.f32.mrb[0].mxu0
      %7238 = vmatprep.mubr.bf16.mxu0 0
      %7239 = vmatmul.mubr.bf16.gmra.mrb[0].mxu0 %v7102
      %v7240 = vpop.f32.mrb[0].mxu0
      %v7241 = vadd.f32 0.0, %v7240
      %v7242 = vpop.f32.mrb[0].mxu0
      %v7243 = vpop.f32.mrb[0].mxu0
      %v7244 = vadd.f32 0.0, %v7243
      %v7245 = vpop.f32.mrb[0].mxu0
      %7246 = vmatprep.mubr.bf16.mxu0 0
      %7247 = vmatmul.mubr.bf16.gmra.mrb[0].mxu0 %v7103
      %v7248 = vpop.f32.mrb[0].mxu0
      %v7249 = vadd.f32 0.0, %v7248
      %v7250 = vpop.f32.mrb[0].mxu0
      %v7251 = vpop.f32.mrb[0].mxu0
      %v7252 = vadd.f32 0.0, %v7251
      %v7253 = vpop.f32.mrb[0].mxu0
      %7254 = vmatprep.mubr.bf16.mxu0 0
      %7255 = vmatmul.mubr.bf16.gmra.mrb[0].mxu0 %v7104
      %v7256 = vpop.f32.mrb[0].mxu0
      %v7257 = vadd.f32 0.0, %v7256
      %v7258 = vpop.f32.mrb[0].mxu0
      %v7259 = vpop.f32.mrb[0].mxu0
      %v7260 = vadd.f32 0.0, %v7259
      %v7261 = vpop.f32.mrb[0].mxu0
      %7262 = vmatprep.mubr.bf16.mxu0 0
      %7263 = vmatmul.mubr.bf16.gmra.mrb[0].mxu0 %v7105
      %v7264 = vpop.f32.mrb[0].mxu0
      %v7265 = vadd.f32 0.0, %v7264
      %v7266 = vpop.f32.mrb[0].mxu0
      %v7267 = vpop.f32.mrb[0].mxu0
      %v7268 = vadd.f32 0.0, %v7267
      %v7269 = vpop.f32.mrb[0].mxu0
      %7270 = vmatprep.mubr.bf16.mxu0 0
      %7271 = vmatmul.mubr.bf16.gmra.mrb[0].mxu0 %v7106
      %v7272 = vpop.f32.mrb[0].mxu0
      %v7273 = vadd.f32 0.0, %v7272
      %v7274 = vpop.f32.mrb[0].mxu0
      %v7275 = vpop.f32.mrb[0].mxu0
      %v7276 = vadd.f32 0.0, %v7275
      %v7277 = vpop.f32.mrb[0].mxu0
      %7278 = vmatprep.mubr.bf16.mxu0 0
      %7279 = vmatmul.mubr.bf16.gmra.mrb[0].mxu0 %v7107
      %v7280 = vpop.f32.mrb[0].mxu0
      %v7281 = vadd.f32 0.0, %v7280
      %v7282 = vpop.f32.mrb[0].mxu0
      %v7283 = vpop.f32.mrb[0].mxu0
      %v7284 = vadd.f32 0.0, %v7283
      %v7285 = vpop.f32.mrb[0].mxu0
      %7286 = vmatprep.mubr.bf16.mxu0 0
      %7287 = vmatmul.mubr.bf16.gmra.mrb[0].mxu0 %v7108
      %v7288 = vpop.f32.mrb[0].mxu0
      %v7289 = vadd.f32 0.0, %v7288
      %v7290 = vpop.f32.mrb[0].mxu0
      %v7291 = vpop.f32.mrb[0].mxu0
      %v7292 = vadd.f32 0.0, %v7291
      %v7293 = vpop.f32.mrb[0].mxu0
      %7294 = vmatprep.mubr.bf16.mxu0 0
      %7295 = vmatmul.mubr.bf16.gmra.mrb[0].mxu0 %v7109
      %v7296 = vpop.f32.mrb[0].mxu0
      %v7297 = vadd.f32 0.0, %v7296
      %v7298 = vpop.f32.mrb[0].mxu0
      %v7299 = vpop.f32.mrb[0].mxu0
      %v7300 = vadd.f32 0.0, %v7299
      %v7301 = vpop.f32.mrb[0].mxu0
      %7302 = vmatprep.mubr.bf16.mxu0 0
      %7303 = vmatmul.mubr.bf16.gmra.mrb[0].mxu0 %v7110
      %v7304 = vpop.f32.mrb[0].mxu0
      %v7305 = vadd.f32 0.0, %v7304
      %v7306 = vpop.f32.mrb[0].mxu0
      %v7307 = vpop.f32.mrb[0].mxu0
      %v7308 = vadd.f32 0.0, %v7307
      %v7309 = vpop.f32.mrb[0].mxu0
      %7310 = vmatprep.mubr.bf16.mxu0 0
      %7311 = vmatmul.mubr.bf16.gmra.mrb[0].mxu0 %v7111
      %v7312 = vpop.f32.mrb[0].mxu0
      %v7313 = vadd.f32 0.0, %v7312
      %v7314 = vpop.f32.mrb[0].mxu0
      %v7315 = vpop.f32.mrb[0].mxu0
      %v7316 = vadd.f32 0.0, %v7315
      %v7317 = vpop.f32.mrb[0].mxu0
      %7318 = vmatprep.mubr.bf16.mxu0 0
      %7319 = vmatmul.mubr.bf16.gmra.mrb[0].mxu0 %v7112
      %v7320 = vpop.f32.mrb[0].mxu0
      %v7321 = vadd.f32 0.0, %v7320
      %v7322 = vpop.f32.mrb[0].mxu0
      %v7323 = vpop.f32.mrb[0].mxu0
      %v7324 = vadd.f32 0.0, %v7323
      %v7325 = vpop.f32.mrb[0].mxu0
      %7326 = vmatprep.mubr.bf16.mxu0 0
      %7327 = vmatmul.mubr.bf16.gmra.mrb[0].mxu0 %v7113
      %v7328 = vpop.f32.mrb[0].mxu0
      %v7329 = vadd.f32 0.0, %v7328
      %v7330 = vpop.f32.mrb[0].mxu0
      %v7331 = vpop.f32.mrb[0].mxu0
      %v7332 = vadd.f32 0.0, %v7331
      %v7333 = vpop.f32.mrb[0].mxu0
      %7334 = vmatprep.mubr.bf16.mxu0 0
      %7335 = vmatmul.mubr.bf16.gmra.mrb[0].mxu0 %v7114
      %v7336 = vpop.f32.mrb[0].mxu0
      %v7337 = vadd.f32 0.0, %v7336
      %v7338 = vpop.f32.mrb[0].mxu0
      %v7339 = vpop.f32.mrb[0].mxu0
      %v7340 = vadd.f32 0.0, %v7339
      %v7341 = vpop.f32.mrb[0].mxu0
      %7342 = vmatprep.mubr.bf16.mxu0 0
      %7343 = vmatmul.mubr.bf16.gmra.mrb[0].mxu0 %v7115
      %v7344 = vpop.f32.mrb[0].mxu0
      %v7345 = vadd.f32 0.0, %v7344
      %v7346 = vpop.f32.mrb[0].mxu0
      %v7347 = vpop.f32.mrb[0].mxu0
      %v7348 = vadd.f32 0.0, %v7347
      %v7349 = vpop.f32.mrb[0].mxu0
      %7350 = vmatprep.mubr.bf16.mxu0 0
      %7351 = vmatmul.mubr.bf16.gmra.mrb[0].mxu0 %v7116
      %v7352 = vpop.f32.mrb[0].mxu0
      %v7353 = vadd.f32 0.0, %v7352
      %v7354 = vpop.f32.mrb[0].mxu0
      %v7355 = vpop.f32.mrb[0].mxu0
      %v7356 = vadd.f32 0.0, %v7355
      %v7357 = vpop.f32.mrb[0].mxu0
      %7358 = vdwg.mxu0
      %v7359 = vld [vmem:[#allocation3] sm:$0xff]
      %v7360 = vld [vmem:[#allocation3 + $0x8] sm:$0xff]
      %v7361 = vld [vmem:[#allocation3 + $0x10] sm:$0xff]
      %v7362 = vld [vmem:[#allocation3 + $0x18] sm:$0xff]
      %v7363 = vld [vmem:[#allocation3 + $0x20] sm:$0xff]
      %v7364 = vld [vmem:[#allocation3 + $0x28] sm:$0xff]
      %v7365 = vld [vmem:[#allocation3 + $0x30] sm:$0xff]
      %v7366 = vld [vmem:[#allocation3 + $0x38] sm:$0xff]
      %v7367 = vld [vmem:[#allocation3 + $0x40] sm:$0xff]
      %v7368 = vld [vmem:[#allocation3 + $0x48] sm:$0xff]
      %v7369 = vld [vmem:[#allocation3 + $0x50] sm:$0xff]
      %v7370 = vld [vmem:[#allocation3 + $0x58] sm:$0xff]
      %v7371 = vld [vmem:[#allocation3 + $0x60] sm:$0xff]
      %v7372 = vld [vmem:[#allocation3 + $0x68] sm:$0xff]
      %v7373 = vld [vmem:[#allocation3 + $0x70] sm:$0xff]
      %v7374 = vld [vmem:[#allocation3 + $0x78] sm:$0xff]
      %v7375 = vld [vmem:[#allocation3 + $0x80] sm:$0xff]
      %v7376 = vld [vmem:[#allocation3 + $0x88] sm:$0xff]
      %v7377 = vld [vmem:[#allocation3 + $0x90] sm:$0xff]
      %v7378 = vld [vmem:[#allocation3 + $0x98] sm:$0xff]
      %v7379 = vld [vmem:[#allocation3 + $0xa0] sm:$0xff]
      %v7380 = vld [vmem:[#allocation3 + $0xa8] sm:$0xff]
      %v7381 = vld [vmem:[#allocation3 + $0xb0] sm:$0xff]
      %v7382 = vld [vmem:[#allocation3 + $0xb8] sm:$0xff]
      %v7383 = vld [vmem:[#allocation3 + $0xc0] sm:$0xff]
      %v7384 = vld [vmem:[#allocation3 + $0xc8] sm:$0xff]
      %v7385 = vld [vmem:[#allocation3 + $0xd0] sm:$0xff]
      %v7386 = vld [vmem:[#allocation3 + $0xd8] sm:$0xff]
      %v7387 = vld [vmem:[#allocation3 + $0xe0] sm:$0xff]
      %v7388 = vld [vmem:[#allocation3 + $0xe8] sm:$0xff]
      %v7389 = vld [vmem:[#allocation3 + $0xf0] sm:$0xff]
      %v7390 = vld [vmem:[#allocation3 + $0xf8] sm:$0xff]
      %v7391 = vld [vmem:[#allocation3 + $0x100] sm:$0xff]
      %v7392 = vld [vmem:[#allocation3 + $0x108] sm:$0xff]
      %v7393 = vld [vmem:[#allocation3 + $0x110] sm:$0xff]
      %v7394 = vld [vmem:[#allocation3 + $0x118] sm:$0xff]
      %v7395 = vadd.f32 %v7359, %v7217
      %v7396 = vadd.f32 %v7360, %v7220
      %v7397 = vadd.f32 %v7361, %v7225
      %v7398 = vadd.f32 %v7362, %v7228
      %v7399 = vadd.f32 %v7363, %v7233
      %v7400 = vadd.f32 %v7364, %v7236
      %v7401 = vadd.f32 %v7365, %v7241
      %v7402 = vadd.f32 %v7366, %v7244
      %v7403 = vadd.f32 %v7367, %v7249
      %v7404 = vadd.f32 %v7368, %v7252
      %v7405 = vadd.f32 %v7369, %v7257
      %v7406 = vadd.f32 %v7370, %v7260
      %v7407 = vadd.f32 %v7371, %v7265
      %v7408 = vadd.f32 %v7372, %v7268
      %v7409 = vadd.f32 %v7373, %v7273
      %v7410 = vadd.f32 %v7374, %v7276
      %v7411 = vadd.f32 %v7375, %v7281
      %v7412 = vadd.f32 %v7376, %v7284
      %v7413 = vadd.f32 %v7377, %v7289
      %v7414 = vadd.f32 %v7378, %v7292
      %v7415 = vadd.f32 %v7379, %v7297
      %v7416 = vadd.f32 %v7380, %v7300
      %v7417 = vadd.f32 %v7381, %v7305
      %v7418 = vadd.f32 %v7382, %v7308
      %v7419 = vadd.f32 %v7383, %v7313
      %v7420 = vadd.f32 %v7384, %v7316
      %v7421 = vadd.f32 %v7385, %v7321
      %v7422 = vadd.f32 %v7386, %v7324
      %v7423 = vadd.f32 %v7387, %v7329
      %v7424 = vadd.f32 %v7388, %v7332
      %v7425 = vadd.f32 %v7389, %v7337
      %v7426 = vadd.f32 %v7390, %v7340
      %v7427 = vadd.f32 %v7391, %v7345
      %v7428 = vadd.f32 %v7392, %v7348
      %v7429 = vadd.f32 %v7393, %v7353
      %v7430 = vadd.f32 %v7394, %v7356
      %7431 = vst [vmem:[#allocation3] sm:$0xff] %v7395
      %7432 = vst [vmem:[#allocation3 + $0x8] sm:$0xff] %v7396
      %7433 = vst [vmem:[#allocation3 + $0x10] sm:$0xff] %v7397
      %7434 = vst [vmem:[#allocation3 + $0x18] sm:$0xff] %v7398
      %7435 = vst [vmem:[#allocation3 + $0x20] sm:$0xff] %v7399
      %7436 = vst [vmem:[#allocation3 + $0x28] sm:$0xff] %v7400
      %7437 = vst [vmem:[#allocation3 + $0x30] sm:$0xff] %v7401
      %7438 = vst [vmem:[#allocation3 + $0x38] sm:$0xff] %v7402
      %7439 = vst [vmem:[#allocation3 + $0x40] sm:$0xff] %v7403
      %7440 = vst [vmem:[#allocation3 + $0x48] sm:$0xff] %v7404
      %7441 = vst [vmem:[#allocation3 + $0x50] sm:$0xff] %v7405
      %7442 = vst [vmem:[#allocation3 + $0x58] sm:$0xff] %v7406
      %7443 = vst [vmem:[#allocation3 + $0x60] sm:$0xff] %v7407
      %7444 = vst [vmem:[#allocation3 + $0x68] sm:$0xff] %v7408
      %7445 = vst [vmem:[#allocation3 + $0x70] sm:$0xff] %v7409
      %7446 = vst [vmem:[#allocation3 + $0x78] sm:$0xff] %v7410
      %7447 = vst [vmem:[#allocation3 + $0x80] sm:$0xff] %v7411
      %7448 = vst [vmem:[#allocation3 + $0x88] sm:$0xff] %v7412
      %7449 = vst [vmem:[#allocation3 + $0x90] sm:$0xff] %v7413
      %7450 = vst [vmem:[#allocation3 + $0x98] sm:$0xff] %v7414
      %7451 = vst [vmem:[#allocation3 + $0xa0] sm:$0xff] %v7415
      %7452 = vst [vmem:[#allocation3 + $0xa8] sm:$0xff] %v7416
      %7453 = vst [vmem:[#allocation3 + $0xb0] sm:$0xff] %v7417
      %7454 = vst [vmem:[#allocation3 + $0xb8] sm:$0xff] %v7418
      %7455 = vst [vmem:[#allocation3 + $0xc0] sm:$0xff] %v7419
      %7456 = vst [vmem:[#allocation3 + $0xc8] sm:$0xff] %v7420
      %7457 = vst [vmem:[#allocation3 + $0xd0] sm:$0xff] %v7421
      %7458 = vst [vmem:[#allocation3 + $0xd8] sm:$0xff] %v7422
      %7459 = vst [vmem:[#allocation3 + $0xe0] sm:$0xff] %v7423
      %7460 = vst [vmem:[#allocation3 + $0xe8] sm:$0xff] %v7424
      %7461 = vst [vmem:[#allocation3 + $0xf0] sm:$0xff] %v7425
      %7462 = vst [vmem:[#allocation3 + $0xf8] sm:$0xff] %v7426
      %7463 = vst [vmem:[#allocation3 + $0x100] sm:$0xff] %v7427
      %7464 = vst [vmem:[#allocation3 + $0x108] sm:$0xff] %v7428
      %7465 = vst [vmem:[#allocation3 + $0x110] sm:$0xff] %v7429
      %7466 = vst [vmem:[#allocation3 + $0x118] sm:$0xff] %v7430
      %v7467 = vld [vmem:[#allocation2 + $0x24] sm:$0xff]
      %v7468 = vld [vmem:[#allocation2 + $0x2c] sm:$0xff]
      %v7469 = vld [vmem:[#allocation2 + $0x34] sm:$0xff]
      %v7470 = vld [vmem:[#allocation2 + $0x3c] sm:$0xff]
      %v7471 = vld [vmem:[#allocation2 + $0x44] sm:$0xff]
      %v7472 = vld [vmem:[#allocation2 + $0x4c] sm:$0xff]
      %v7473 = vld [vmem:[#allocation2 + $0x54] sm:$0xff]
      %v7474 = vld [vmem:[#allocation2 + $0x5c] sm:$0xff]
      %v7475 = vld [vmem:[#allocation2 + $0x64] sm:$0xff]
      %v7476 = vld [vmem:[#allocation2 + $0x6c] sm:$0xff]
      %v7477 = vld [vmem:[#allocation2 + $0x74] sm:$0xff]
      %v7478 = vld [vmem:[#allocation2 + $0x7c] sm:$0xff]
      %v7479 = vld [vmem:[#allocation2 + $0x84] sm:$0xff]
      %v7480 = vld [vmem:[#allocation2 + $0x8c] sm:$0xff]
      %v7481 = vld [vmem:[#allocation2 + $0x94] sm:$0xff]
      %v7482 = vld [vmem:[#allocation2 + $0x9c] sm:$0xff]
      %v7483 = vld [vmem:[#allocation2 + $0xa4] sm:$0xff]
      %v7484 = vld [vmem:[#allocation2 + $0xac] sm:$0xff]
      %v7485 = vld [vmem:[#allocation2 + $0xb4] sm:$0xff]
      %v7486 = vld [vmem:[#allocation2 + $0xbc] sm:$0xff]
      %v7487 = vld [vmem:[#allocation2 + $0xc4] sm:$0xff]
      %v7488 = vld [vmem:[#allocation2 + $0xcc] sm:$0xff]
      %v7489 = vld [vmem:[#allocation2 + $0xd4] sm:$0xff]
      %v7490 = vld [vmem:[#allocation2 + $0xdc] sm:$0xff]
      %v7491 = vld [vmem:[#allocation2 + $0xe4] sm:$0xff]
      %v7492 = vld [vmem:[#allocation2 + $0xec] sm:$0xff]
      %v7493 = vld [vmem:[#allocation2 + $0xf4] sm:$0xff]
      %v7494 = vld [vmem:[#allocation2 + $0xfc] sm:$0xff]
      %v7495 = vld [vmem:[#allocation2 + $0x104] sm:$0xff]
      %v7496 = vld [vmem:[#allocation2 + $0x10c] sm:$0xff]
      %v7497 = vld [vmem:[#allocation2 + $0x114] sm:$0xff]
      %v7498 = vld [vmem:[#allocation2 + $0x11c] sm:$0xff]
      %v7499 = vld [vmem:[#allocation2 + $0x124] sm:$0xff]
      %v7500 = vld [vmem:[#allocation2 + $0x12c] sm:$0xff]
      %v7501 = vld [vmem:[#allocation2 + $0x134] sm:$0xff]
      %v7502 = vld [vmem:[#allocation2 + $0x13c] sm:$0xff]
      %v7503 = vpack.c.bf16 %v7468, %v7467
      %v7504 = vpack.c.bf16 %v7470, %v7469
      %v7505 = vpack.c.bf16 %v7472, %v7471
      %v7506 = vpack.c.bf16 %v7474, %v7473
      %v7507 = vpack.c.bf16 %v7476, %v7475
      %v7508 = vpack.c.bf16 %v7478, %v7477
      %v7509 = vpack.c.bf16 %v7480, %v7479
      %v7510 = vpack.c.bf16 %v7482, %v7481
      %v7511 = vpack.c.bf16 %v7484, %v7483
      %v7512 = vpack.c.bf16 %v7486, %v7485
      %v7513 = vpack.c.bf16 %v7488, %v7487
      %v7514 = vpack.c.bf16 %v7490, %v7489
      %v7515 = vpack.c.bf16 %v7492, %v7491
      %v7516 = vpack.c.bf16 %v7494, %v7493
      %v7517 = vpack.c.bf16 %v7496, %v7495
      %v7518 = vpack.c.bf16 %v7498, %v7497
      %v7519 = vpack.c.bf16 %v7500, %v7499
      %v7520 = vpack.c.bf16 %v7502, %v7501
      %s7521 = scalar_lea.vmem %s2, 384
      %v7522 = vld [vmem:[%s7521] sm:$0xf]
      %v7523 = vld [vmem:[%s7521 + $0x4] sm:$0xf]
      %v7524 = vld [vmem:[%s7521 + $0x8] sm:$0xf]
      %v7525 = vld [vmem:[%s7521 + $0xc] sm:$0xf]
      %v7526 = vld [vmem:[%s7521 + $0x10] sm:$0xf]
      %v7527 = vld [vmem:[%s7521 + $0x14] sm:$0xf]
      %v7528 = vld [vmem:[%s7521 + $0x18] sm:$0xf]
      %v7529 = vld [vmem:[%s7521 + $0x1c] sm:$0xf]
      %v7530 = vld [vmem:[%s7521 + $0x20] sm:$0xf]
      %v7531 = vld [vmem:[%s7521 + $0x24] sm:$0xf]
      %v7532 = vld [vmem:[%s7521 + $0x28] sm:$0xf]
      %v7533 = vld [vmem:[%s7521 + $0x2c] sm:$0xf]
      %v7534 = vld [vmem:[%s7521 + $0x30] sm:$0xf]
      %v7535 = vld [vmem:[%s7521 + $0x34] sm:$0xf]
      %v7536 = vld [vmem:[%s7521 + $0x38] sm:$0xf]
      %v7537 = vld [vmem:[%s7521 + $0x3c] sm:$0xf]
      %v7554 = vunpack.c.l.b16 %v7522
      %v7555 = vunpack.c.l.b16 %v7523
      %v7556 = vunpack.c.l.b16 %v7524
      %v7557 = vunpack.c.l.b16 %v7525
      %v7558 = vunpack.c.l.b16 %v7526
      %v7559 = vunpack.c.l.b16 %v7527
      %v7560 = vunpack.c.l.b16 %v7528
      %v7561 = vunpack.c.l.b16 %v7529
      %v7562 = vunpack.c.l.b16 %v7530
      %v7563 = vunpack.c.l.b16 %v7531
      %v7564 = vunpack.c.l.b16 %v7532
      %v7565 = vunpack.c.l.b16 %v7533
      %v7566 = vunpack.c.l.b16 %v7534
      %v7567 = vunpack.c.l.b16 %v7535
      %v7568 = vunpack.c.l.b16 %v7536
      %v7569 = vunpack.c.l.b16 %v7537
      %v7570 = vpack.c.b16 %v7555, %v7554
      %v7571 = vpack.c.b16 %v7557, %v7556
      %v7572 = vpack.c.b16 %v7559, %v7558
      %v7573 = vpack.c.b16 %v7561, %v7560
      %v7574 = vpack.c.b16 %v7563, %v7562
      %v7575 = vpack.c.b16 %v7565, %v7564
      %v7576 = vpack.c.b16 %v7567, %v7566
      %v7577 = vpack.c.b16 %v7569, %v7568
      %7586 = vmatprep.subr.bf16.mxu0 0
      %7587 = vmatpush1.bf16.msra.mxu0 %v7570
      %7588 = vmatprep.subr.bf16.mxu0 0
      %7589 = vmatpush1.bf16.msra.mxu0 %v7571
      %7590 = vmatprep.subr.bf16.mxu0 0
      %7591 = vmatpush1.bf16.msra.mxu0 %v7572
      %7592 = vmatprep.subr.bf16.mxu0 0
      %7593 = vmatpush1.bf16.msra.mxu0 %v7573
      %7594 = vmatprep.subr.bf16.mxu0 0
      %7595 = vmatpush1.bf16.msra.mxu0 %v7574
      %7596 = vmatprep.subr.bf16.mxu0 0
      %7597 = vmatpush1.bf16.msra.mxu0 %v7575
      %7598 = vmatprep.subr.bf16.mxu0 0
      %7599 = vmatpush1.bf16.msra.mxu0 %v7576
      %7600 = vmatprep.subr.bf16.mxu0 0
      %7601 = vmatpush1.bf16.msra.mxu0 %v7577
      %7602 = vmatprep.subr.bf16.mxu0 0
      %7603 = vmatpush1.bf16.msra.mxu0 0
      %7604 = vmatprep.subr.bf16.mxu0 0
      %7605 = vmatpush1.bf16.msra.mxu0 0
      %7606 = vmatprep.subr.bf16.mxu0 0
      %7607 = vmatpush1.bf16.msra.mxu0 0
      %7608 = vmatprep.subr.bf16.mxu0 0
      %7609 = vmatpush1.bf16.msra.mxu0 0
      %7610 = vmatprep.subr.bf16.mxu0 0
      %7611 = vmatpush1.bf16.msra.mxu0 0
      %7612 = vmatprep.subr.bf16.mxu0 0
      %7613 = vmatpush1.bf16.msra.mxu0 0
      %7614 = vmatprep.subr.bf16.mxu0 0
      %7615 = vmatpush1.bf16.msra.mxu0 0
      %7616 = vmatprep.subr.bf16.mxu0 0
      %7617 = vmatpush1.bf16.msra.mxu0 0
      %7618 = vmatprep.mubr.bf16.mxu0 0
      %7619 = vmatmul.mubr.bf16.gmra.mrb[0].mxu0 %v7503
      %v7620 = vpop.f32.mrb[0].mxu0
      %v7621 = vadd.f32 0.0, %v7620
      %v7622 = vpop.f32.mrb[0].mxu0
      %v7623 = vpop.f32.mrb[0].mxu0
      %v7624 = vadd.f32 0.0, %v7623
      %v7625 = vpop.f32.mrb[0].mxu0
      %7626 = vmatprep.mubr.bf16.mxu0 0
      %7627 = vmatmul.mubr.bf16.gmra.mrb[0].mxu0 %v7504
      %v7628 = vpop.f32.mrb[0].mxu0
      %v7629 = vadd.f32 0.0, %v7628
      %v7630 = vpop.f32.mrb[0].mxu0
      %v7631 = vpop.f32.mrb[0].mxu0
      %v7632 = vadd.f32 0.0, %v7631
      %v7633 = vpop.f32.mrb[0].mxu0
      %7634 = vmatprep.mubr.bf16.mxu0 0
      %7635 = vmatmul.mubr.bf16.gmra.mrb[0].mxu0 %v7505
      %v7636 = vpop.f32.mrb[0].mxu0
      %v7637 = vadd.f32 0.0, %v7636
      %v7638 = vpop.f32.mrb[0].mxu0
      %v7639 = vpop.f32.mrb[0].mxu0
      %v7640 = vadd.f32 0.0, %v7639
      %v7641 = vpop.f32.mrb[0].mxu0
      %7642 = vmatprep.mubr.bf16.mxu0 0
      %7643 = vmatmul.mubr.bf16.gmra.mrb[0].mxu0 %v7506
      %v7644 = vpop.f32.mrb[0].mxu0
      %v7645 = vadd.f32 0.0, %v7644
      %v7646 = vpop.f32.mrb[0].mxu0
      %v7647 = vpop.f32.mrb[0].mxu0
      %v7648 = vadd.f32 0.0, %v7647
      %v7649 = vpop.f32.mrb[0].mxu0
      %7650 = vmatprep.mubr.bf16.mxu0 0
      %7651 = vmatmul.mubr.bf16.gmra.mrb[0].mxu0 %v7507
      %v7652 = vpop.f32.mrb[0].mxu0
      %v7653 = vadd.f32 0.0, %v7652
      %v7654 = vpop.f32.mrb[0].mxu0
      %v7655 = vpop.f32.mrb[0].mxu0
      %v7656 = vadd.f32 0.0, %v7655
      %v7657 = vpop.f32.mrb[0].mxu0
      %7658 = vmatprep.mubr.bf16.mxu0 0
      %7659 = vmatmul.mubr.bf16.gmra.mrb[0].mxu0 %v7508
      %v7660 = vpop.f32.mrb[0].mxu0
      %v7661 = vadd.f32 0.0, %v7660
      %v7662 = vpop.f32.mrb[0].mxu0
      %v7663 = vpop.f32.mrb[0].mxu0
      %v7664 = vadd.f32 0.0, %v7663
      %v7665 = vpop.f32.mrb[0].mxu0
      %7666 = vmatprep.mubr.bf16.mxu0 0
      %7667 = vmatmul.mubr.bf16.gmra.mrb[0].mxu0 %v7509
      %v7668 = vpop.f32.mrb[0].mxu0
      %v7669 = vadd.f32 0.0, %v7668
      %v7670 = vpop.f32.mrb[0].mxu0
      %v7671 = vpop.f32.mrb[0].mxu0
      %v7672 = vadd.f32 0.0, %v7671
      %v7673 = vpop.f32.mrb[0].mxu0
      %7674 = vmatprep.mubr.bf16.mxu0 0
      %7675 = vmatmul.mubr.bf16.gmra.mrb[0].mxu0 %v7510
      %v7676 = vpop.f32.mrb[0].mxu0
      %v7677 = vadd.f32 0.0, %v7676
      %v7678 = vpop.f32.mrb[0].mxu0
      %v7679 = vpop.f32.mrb[0].mxu0
      %v7680 = vadd.f32 0.0, %v7679
      %v7681 = vpop.f32.mrb[0].mxu0
      %7682 = vmatprep.mubr.bf16.mxu0 0
      %7683 = vmatmul.mubr.bf16.gmra.mrb[0].mxu0 %v7511
      %v7684 = vpop.f32.mrb[0].mxu0
      %v7685 = vadd.f32 0.0, %v7684
      %v7686 = vpop.f32.mrb[0].mxu0
      %v7687 = vpop.f32.mrb[0].mxu0
      %v7688 = vadd.f32 0.0, %v7687
      %v7689 = vpop.f32.mrb[0].mxu0
      %7690 = vmatprep.mubr.bf16.mxu0 0
      %7691 = vmatmul.mubr.bf16.gmra.mrb[0].mxu0 %v7512
      %v7692 = vpop.f32.mrb[0].mxu0
      %v7693 = vadd.f32 0.0, %v7692
      %v7694 = vpop.f32.mrb[0].mxu0
      %v7695 = vpop.f32.mrb[0].mxu0
      %v7696 = vadd.f32 0.0, %v7695
      %v7697 = vpop.f32.mrb[0].mxu0
      %7698 = vmatprep.mubr.bf16.mxu0 0
      %7699 = vmatmul.mubr.bf16.gmra.mrb[0].mxu0 %v7513
      %v7700 = vpop.f32.mrb[0].mxu0
      %v7701 = vadd.f32 0.0, %v7700
      %v7702 = vpop.f32.mrb[0].mxu0
      %v7703 = vpop.f32.mrb[0].mxu0
      %v7704 = vadd.f32 0.0, %v7703
      %v7705 = vpop.f32.mrb[0].mxu0
      %7706 = vmatprep.mubr.bf16.mxu0 0
      %7707 = vmatmul.mubr.bf16.gmra.mrb[0].mxu0 %v7514
      %v7708 = vpop.f32.mrb[0].mxu0
      %v7709 = vadd.f32 0.0, %v7708
      %v7710 = vpop.f32.mrb[0].mxu0
      %v7711 = vpop.f32.mrb[0].mxu0
      %v7712 = vadd.f32 0.0, %v7711
      %v7713 = vpop.f32.mrb[0].mxu0
      %7714 = vmatprep.mubr.bf16.mxu0 0
      %7715 = vmatmul.mubr.bf16.gmra.mrb[0].mxu0 %v7515
      %v7716 = vpop.f32.mrb[0].mxu0
      %v7717 = vadd.f32 0.0, %v7716
      %v7718 = vpop.f32.mrb[0].mxu0
      %v7719 = vpop.f32.mrb[0].mxu0
      %v7720 = vadd.f32 0.0, %v7719
      %v7721 = vpop.f32.mrb[0].mxu0
      %7722 = vmatprep.mubr.bf16.mxu0 0
      %7723 = vmatmul.mubr.bf16.gmra.mrb[0].mxu0 %v7516
      %v7724 = vpop.f32.mrb[0].mxu0
      %v7725 = vadd.f32 0.0, %v7724
      %v7726 = vpop.f32.mrb[0].mxu0
      %v7727 = vpop.f32.mrb[0].mxu0
      %v7728 = vadd.f32 0.0, %v7727
      %v7729 = vpop.f32.mrb[0].mxu0
      %7730 = vmatprep.mubr.bf16.mxu0 0
      %7731 = vmatmul.mubr.bf16.gmra.mrb[0].mxu0 %v7517
      %v7732 = vpop.f32.mrb[0].mxu0
      %v7733 = vadd.f32 0.0, %v7732
      %v7734 = vpop.f32.mrb[0].mxu0
      %v7735 = vpop.f32.mrb[0].mxu0
      %v7736 = vadd.f32 0.0, %v7735
      %v7737 = vpop.f32.mrb[0].mxu0
      %7738 = vmatprep.mubr.bf16.mxu0 0
      %7739 = vmatmul.mubr.bf16.gmra.mrb[0].mxu0 %v7518
      %v7740 = vpop.f32.mrb[0].mxu0
      %v7741 = vadd.f32 0.0, %v7740
      %v7742 = vpop.f32.mrb[0].mxu0
      %v7743 = vpop.f32.mrb[0].mxu0
      %v7744 = vadd.f32 0.0, %v7743
      %v7745 = vpop.f32.mrb[0].mxu0
      %7746 = vmatprep.mubr.bf16.mxu0 0
      %7747 = vmatmul.mubr.bf16.gmra.mrb[0].mxu0 %v7519
      %v7748 = vpop.f32.mrb[0].mxu0
      %v7749 = vadd.f32 0.0, %v7748
      %v7750 = vpop.f32.mrb[0].mxu0
      %v7751 = vpop.f32.mrb[0].mxu0
      %v7752 = vadd.f32 0.0, %v7751
      %v7753 = vpop.f32.mrb[0].mxu0
      %7754 = vmatprep.mubr.bf16.mxu0 0
      %7755 = vmatmul.mubr.bf16.gmra.mrb[0].mxu0 %v7520
      %v7756 = vpop.f32.mrb[0].mxu0
      %v7757 = vadd.f32 0.0, %v7756
      %v7758 = vpop.f32.mrb[0].mxu0
      %v7759 = vpop.f32.mrb[0].mxu0
      %v7760 = vadd.f32 0.0, %v7759
      %v7761 = vpop.f32.mrb[0].mxu0
      %7762 = vdwg.mxu0
      %v7763 = vld [vmem:[#allocation3] sm:$0xff]
      %v7764 = vld [vmem:[#allocation3 + $0x8] sm:$0xff]
      %v7765 = vld [vmem:[#allocation3 + $0x10] sm:$0xff]
      %v7766 = vld [vmem:[#allocation3 + $0x18] sm:$0xff]
      %v7767 = vld [vmem:[#allocation3 + $0x20] sm:$0xff]
      %v7768 = vld [vmem:[#allocation3 + $0x28] sm:$0xff]
      %v7769 = vld [vmem:[#allocation3 + $0x30] sm:$0xff]
      %v7770 = vld [vmem:[#allocation3 + $0x38] sm:$0xff]
      %v7771 = vld [vmem:[#allocation3 + $0x40] sm:$0xff]
      %v7772 = vld [vmem:[#allocation3 + $0x48] sm:$0xff]
      %v7773 = vld [vmem:[#allocation3 + $0x50] sm:$0xff]
      %v7774 = vld [vmem:[#allocation3 + $0x58] sm:$0xff]
      %v7775 = vld [vmem:[#allocation3 + $0x60] sm:$0xff]
      %v7776 = vld [vmem:[#allocation3 + $0x68] sm:$0xff]
      %v7777 = vld [vmem:[#allocation3 + $0x70] sm:$0xff]
      %v7778 = vld [vmem:[#allocation3 + $0x78] sm:$0xff]
      %v7779 = vld [vmem:[#allocation3 + $0x80] sm:$0xff]
      %v7780 = vld [vmem:[#allocation3 + $0x88] sm:$0xff]
      %v7781 = vld [vmem:[#allocation3 + $0x90] sm:$0xff]
      %v7782 = vld [vmem:[#allocation3 + $0x98] sm:$0xff]
      %v7783 = vld [vmem:[#allocation3 + $0xa0] sm:$0xff]
      %v7784 = vld [vmem:[#allocation3 + $0xa8] sm:$0xff]
      %v7785 = vld [vmem:[#allocation3 + $0xb0] sm:$0xff]
      %v7786 = vld [vmem:[#allocation3 + $0xb8] sm:$0xff]
      %v7787 = vld [vmem:[#allocation3 + $0xc0] sm:$0xff]
      %v7788 = vld [vmem:[#allocation3 + $0xc8] sm:$0xff]
      %v7789 = vld [vmem:[#allocation3 + $0xd0] sm:$0xff]
      %v7790 = vld [vmem:[#allocation3 + $0xd8] sm:$0xff]
      %v7791 = vld [vmem:[#allocation3 + $0xe0] sm:$0xff]
      %v7792 = vld [vmem:[#allocation3 + $0xe8] sm:$0xff]
      %v7793 = vld [vmem:[#allocation3 + $0xf0] sm:$0xff]
      %v7794 = vld [vmem:[#allocation3 + $0xf8] sm:$0xff]
      %v7795 = vld [vmem:[#allocation3 + $0x100] sm:$0xff]
      %v7796 = vld [vmem:[#allocation3 + $0x108] sm:$0xff]
      %v7797 = vld [vmem:[#allocation3 + $0x110] sm:$0xff]
      %v7798 = vld [vmem:[#allocation3 + $0x118] sm:$0xff]
      %v7799 = vadd.f32 %v7763, %v7621
      %v7800 = vadd.f32 %v7764, %v7624
      %v7801 = vadd.f32 %v7765, %v7629
      %v7802 = vadd.f32 %v7766, %v7632
      %v7803 = vadd.f32 %v7767, %v7637
      %v7804 = vadd.f32 %v7768, %v7640
      %v7805 = vadd.f32 %v7769, %v7645
      %v7806 = vadd.f32 %v7770, %v7648
      %v7807 = vadd.f32 %v7771, %v7653
      %v7808 = vadd.f32 %v7772, %v7656
      %v7809 = vadd.f32 %v7773, %v7661
      %v7810 = vadd.f32 %v7774, %v7664
      %v7811 = vadd.f32 %v7775, %v7669
      %v7812 = vadd.f32 %v7776, %v7672
      %v7813 = vadd.f32 %v7777, %v7677
      %v7814 = vadd.f32 %v7778, %v7680
      %v7815 = vadd.f32 %v7779, %v7685
      %v7816 = vadd.f32 %v7780, %v7688
      %v7817 = vadd.f32 %v7781, %v7693
      %v7818 = vadd.f32 %v7782, %v7696
      %v7819 = vadd.f32 %v7783, %v7701
      %v7820 = vadd.f32 %v7784, %v7704
      %v7821 = vadd.f32 %v7785, %v7709
      %v7822 = vadd.f32 %v7786, %v7712
      %v7823 = vadd.f32 %v7787, %v7717
      %v7824 = vadd.f32 %v7788, %v7720
      %v7825 = vadd.f32 %v7789, %v7725
      %v7826 = vadd.f32 %v7790, %v7728
      %v7827 = vadd.f32 %v7791, %v7733
      %v7828 = vadd.f32 %v7792, %v7736
      %v7829 = vadd.f32 %v7793, %v7741
      %v7830 = vadd.f32 %v7794, %v7744
      %v7831 = vadd.f32 %v7795, %v7749
      %v7832 = vadd.f32 %v7796, %v7752
      %v7833 = vadd.f32 %v7797, %v7757
      %v7834 = vadd.f32 %v7798, %v7760
      %7835 = vst [vmem:[#allocation3] sm:$0xff] %v7799
      %7836 = vst [vmem:[#allocation3 + $0x8] sm:$0xff] %v7800
      %7837 = vst [vmem:[#allocation3 + $0x10] sm:$0xff] %v7801
      %7838 = vst [vmem:[#allocation3 + $0x18] sm:$0xff] %v7802
      %7839 = vst [vmem:[#allocation3 + $0x20] sm:$0xff] %v7803
      %7840 = vst [vmem:[#allocation3 + $0x28] sm:$0xff] %v7804
      %7841 = vst [vmem:[#allocation3 + $0x30] sm:$0xff] %v7805
      %7842 = vst [vmem:[#allocation3 + $0x38] sm:$0xff] %v7806
      %7843 = vst [vmem:[#allocation3 + $0x40] sm:$0xff] %v7807
      %7844 = vst [vmem:[#allocation3 + $0x48] sm:$0xff] %v7808
      %7845 = vst [vmem:[#allocation3 + $0x50] sm:$0xff] %v7809
      %7846 = vst [vmem:[#allocation3 + $0x58] sm:$0xff] %v7810
      %7847 = vst [vmem:[#allocation3 + $0x60] sm:$0xff] %v7811
      %7848 = vst [vmem:[#allocation3 + $0x68] sm:$0xff] %v7812
      %7849 = vst [vmem:[#allocation3 + $0x70] sm:$0xff] %v7813
      %7850 = vst [vmem:[#allocation3 + $0x78] sm:$0xff] %v7814
      %7851 = vst [vmem:[#allocation3 + $0x80] sm:$0xff] %v7815
      %7852 = vst [vmem:[#allocation3 + $0x88] sm:$0xff] %v7816
      %7853 = vst [vmem:[#allocation3 + $0x90] sm:$0xff] %v7817
      %7854 = vst [vmem:[#allocation3 + $0x98] sm:$0xff] %v7818
      %7855 = vst [vmem:[#allocation3 + $0xa0] sm:$0xff] %v7819
      %7856 = vst [vmem:[#allocation3 + $0xa8] sm:$0xff] %v7820
      %7857 = vst [vmem:[#allocation3 + $0xb0] sm:$0xff] %v7821
      %7858 = vst [vmem:[#allocation3 + $0xb8] sm:$0xff] %v7822
      %7859 = vst [vmem:[#allocation3 + $0xc0] sm:$0xff] %v7823
      %7860 = vst [vmem:[#allocation3 + $0xc8] sm:$0xff] %v7824
      %7861 = vst [vmem:[#allocation3 + $0xd0] sm:$0xff] %v7825
      %7862 = vst [vmem:[#allocation3 + $0xd8] sm:$0xff] %v7826
      %7863 = vst [vmem:[#allocation3 + $0xe0] sm:$0xff] %v7827
      %7864 = vst [vmem:[#allocation3 + $0xe8] sm:$0xff] %v7828
      %7865 = vst [vmem:[#allocation3 + $0xf0] sm:$0xff] %v7829
      %7866 = vst [vmem:[#allocation3 + $0xf8] sm:$0xff] %v7830
      %7867 = vst [vmem:[#allocation3 + $0x100] sm:$0xff] %v7831
      %7868 = vst [vmem:[#allocation3 + $0x108] sm:$0xff] %v7832
      %7869 = vst [vmem:[#allocation3 + $0x110] sm:$0xff] %v7833
      %7870 = vst [vmem:[#allocation3 + $0x118] sm:$0xff] %v7834
      %v7871 = vld [vmem:[#allocation2 + $0x25] sm:$0xff]
      %v7872 = vld [vmem:[#allocation2 + $0x2d] sm:$0xff]
      %v7873 = vld [vmem:[#allocation2 + $0x35] sm:$0xff]
      %v7874 = vld [vmem:[#allocation2 + $0x3d] sm:$0xff]
      %v7875 = vld [vmem:[#allocation2 + $0x45] sm:$0xff]
      %v7876 = vld [vmem:[#allocation2 + $0x4d] sm:$0xff]
      %v7877 = vld [vmem:[#allocation2 + $0x55] sm:$0xff]
      %v7878 = vld [vmem:[#allocation2 + $0x5d] sm:$0xff]
      %v7879 = vld [vmem:[#allocation2 + $0x65] sm:$0xff]
      %v7880 = vld [vmem:[#allocation2 + $0x6d] sm:$0xff]
      %v7881 = vld [vmem:[#allocation2 + $0x75] sm:$0xff]
      %v7882 = vld [vmem:[#allocation2 + $0x7d] sm:$0xff]
      %v7883 = vld [vmem:[#allocation2 + $0x85] sm:$0xff]
      %v7884 = vld [vmem:[#allocation2 + $0x8d] sm:$0xff]
      %v7885 = vld [vmem:[#allocation2 + $0x95] sm:$0xff]
      %v7886 = vld [vmem:[#allocation2 + $0x9d] sm:$0xff]
      %v7887 = vld [vmem:[#allocation2 + $0xa5] sm:$0xff]
      %v7888 = vld [vmem:[#allocation2 + $0xad] sm:$0xff]
      %v7889 = vld [vmem:[#allocation2 + $0xb5] sm:$0xff]
      %v7890 = vld [vmem:[#allocation2 + $0xbd] sm:$0xff]
      %v7891 = vld [vmem:[#allocation2 + $0xc5] sm:$0xff]
      %v7892 = vld [vmem:[#allocation2 + $0xcd] sm:$0xff]
      %v7893 = vld [vmem:[#allocation2 + $0xd5] sm:$0xff]
      %v7894 = vld [vmem:[#allocation2 + $0xdd] sm:$0xff]
      %v7895 = vld [vmem:[#allocation2 + $0xe5] sm:$0xff]
      %v7896 = vld [vmem:[#allocation2 + $0xed] sm:$0xff]
      %v7897 = vld [vmem:[#allocation2 + $0xf5] sm:$0xff]
      %v7898 = vld [vmem:[#allocation2 + $0xfd] sm:$0xff]
      %v7899 = vld [vmem:[#allocation2 + $0x105] sm:$0xff]
      %v7900 = vld [vmem:[#allocation2 + $0x10d] sm:$0xff]
      %v7901 = vld [vmem:[#allocation2 + $0x115] sm:$0xff]
      %v7902 = vld [vmem:[#allocation2 + $0x11d] sm:$0xff]
      %v7903 = vld [vmem:[#allocation2 + $0x125] sm:$0xff]
      %v7904 = vld [vmem:[#allocation2 + $0x12d] sm:$0xff]
      %v7905 = vld [vmem:[#allocation2 + $0x135] sm:$0xff]
      %v7906 = vld [vmem:[#allocation2 + $0x13d] sm:$0xff]
      %v7907 = vpack.c.bf16 %v7872, %v7871
      %v7908 = vpack.c.bf16 %v7874, %v7873
      %v7909 = vpack.c.bf16 %v7876, %v7875
      %v7910 = vpack.c.bf16 %v7878, %v7877
      %v7911 = vpack.c.bf16 %v7880, %v7879
      %v7912 = vpack.c.bf16 %v7882, %v7881
      %v7913 = vpack.c.bf16 %v7884, %v7883
      %v7914 = vpack.c.bf16 %v7886, %v7885
      %v7915 = vpack.c.bf16 %v7888, %v7887
      %v7916 = vpack.c.bf16 %v7890, %v7889
      %v7917 = vpack.c.bf16 %v7892, %v7891
      %v7918 = vpack.c.bf16 %v7894, %v7893
      %v7919 = vpack.c.bf16 %v7896, %v7895
      %v7920 = vpack.c.bf16 %v7898, %v7897
      %v7921 = vpack.c.bf16 %v7900, %v7899
      %v7922 = vpack.c.bf16 %v7902, %v7901
      %v7923 = vpack.c.bf16 %v7904, %v7903
      %v7924 = vpack.c.bf16 %v7906, %v7905
      %s7925 = scalar_lea.vmem %s2, 448
      %v7926 = vld [vmem:[%s7925] sm:$0xf]
      %v7927 = vld [vmem:[%s7925 + $0x4] sm:$0xf]
      %v7928 = vld [vmem:[%s7925 + $0x8] sm:$0xf]
      %v7929 = vld [vmem:[%s7925 + $0xc] sm:$0xf]
      %v7930 = vld [vmem:[%s7925 + $0x10] sm:$0xf]
      %v7931 = vld [vmem:[%s7925 + $0x14] sm:$0xf]
      %v7932 = vld [vmem:[%s7925 + $0x18] sm:$0xf]
      %v7933 = vld [vmem:[%s7925 + $0x1c] sm:$0xf]
      %v7934 = vld [vmem:[%s7925 + $0x20] sm:$0xf]
      %v7935 = vld [vmem:[%s7925 + $0x24] sm:$0xf]
      %v7936 = vld [vmem:[%s7925 + $0x28] sm:$0xf]
      %v7937 = vld [vmem:[%s7925 + $0x2c] sm:$0xf]
      %v7938 = vld [vmem:[%s7925 + $0x30] sm:$0xf]
      %v7939 = vld [vmem:[%s7925 + $0x34] sm:$0xf]
      %v7940 = vld [vmem:[%s7925 + $0x38] sm:$0xf]
      %v7941 = vld [vmem:[%s7925 + $0x3c] sm:$0xf]
      %v7958 = vunpack.c.l.b16 %v7926
      %v7959 = vunpack.c.l.b16 %v7927
      %v7960 = vunpack.c.l.b16 %v7928
      %v7961 = vunpack.c.l.b16 %v7929
      %v7962 = vunpack.c.l.b16 %v7930
      %v7963 = vunpack.c.l.b16 %v7931
      %v7964 = vunpack.c.l.b16 %v7932
      %v7965 = vunpack.c.l.b16 %v7933
      %v7966 = vunpack.c.l.b16 %v7934
      %v7967 = vunpack.c.l.b16 %v7935
      %v7968 = vunpack.c.l.b16 %v7936
      %v7969 = vunpack.c.l.b16 %v7937
      %v7970 = vunpack.c.l.b16 %v7938
      %v7971 = vunpack.c.l.b16 %v7939
      %v7972 = vunpack.c.l.b16 %v7940
      %v7973 = vunpack.c.l.b16 %v7941
      %v7974 = vpack.c.b16 %v7959, %v7958
      %v7975 = vpack.c.b16 %v7961, %v7960
      %v7976 = vpack.c.b16 %v7963, %v7962
      %v7977 = vpack.c.b16 %v7965, %v7964
      %v7978 = vpack.c.b16 %v7967, %v7966
      %v7979 = vpack.c.b16 %v7969, %v7968
      %v7980 = vpack.c.b16 %v7971, %v7970
      %v7981 = vpack.c.b16 %v7973, %v7972
      %7990 = vmatprep.subr.bf16.mxu0 0
      %7991 = vmatpush1.bf16.msra.mxu0 %v7974
      %7992 = vmatprep.subr.bf16.mxu0 0
      %7993 = vmatpush1.bf16.msra.mxu0 %v7975
      %7994 = vmatprep.subr.bf16.mxu0 0
      %7995 = vmatpush1.bf16.msra.mxu0 %v7976
      %7996 = vmatprep.subr.bf16.mxu0 0
      %7997 = vmatpush1.bf16.msra.mxu0 %v7977
      %7998 = vmatprep.subr.bf16.mxu0 0
      %7999 = vmatpush1.bf16.msra.mxu0 %v7978
      %8000 = vmatprep.subr.bf16.mxu0 0
      %8001 = vmatpush1.bf16.msra.mxu0 %v7979
      %8002 = vmatprep.subr.bf16.mxu0 0
      %8003 = vmatpush1.bf16.msra.mxu0 %v7980
      %8004 = vmatprep.subr.bf16.mxu0 0
      %8005 = vmatpush1.bf16.msra.mxu0 %v7981
      %8006 = vmatprep.subr.bf16.mxu0 0
      %8007 = vmatpush1.bf16.msra.mxu0 0
      %8008 = vmatprep.subr.bf16.mxu0 0
      %8009 = vmatpush1.bf16.msra.mxu0 0
      %8010 = vmatprep.subr.bf16.mxu0 0
      %8011 = vmatpush1.bf16.msra.mxu0 0
      %8012 = vmatprep.subr.bf16.mxu0 0
      %8013 = vmatpush1.bf16.msra.mxu0 0
      %8014 = vmatprep.subr.bf16.mxu0 0
      %8015 = vmatpush1.bf16.msra.mxu0 0
      %8016 = vmatprep.subr.bf16.mxu0 0
      %8017 = vmatpush1.bf16.msra.mxu0 0
      %8018 = vmatprep.subr.bf16.mxu0 0
      %8019 = vmatpush1.bf16.msra.mxu0 0
      %8020 = vmatprep.subr.bf16.mxu0 0
      %8021 = vmatpush1.bf16.msra.mxu0 0
      %8022 = vmatprep.mubr.bf16.mxu0 0
      %8023 = vmatmul.mubr.bf16.gmra.mrb[0].mxu0 %v7907
      %v8024 = vpop.f32.mrb[0].mxu0
      %v8025 = vadd.f32 0.0, %v8024
      %v8026 = vpop.f32.mrb[0].mxu0
      %v8027 = vpop.f32.mrb[0].mxu0
      %v8028 = vadd.f32 0.0, %v8027
      %v8029 = vpop.f32.mrb[0].mxu0
      %8030 = vmatprep.mubr.bf16.mxu0 0
      %8031 = vmatmul.mubr.bf16.gmra.mrb[0].mxu0 %v7908
      %v8032 = vpop.f32.mrb[0].mxu0
      %v8033 = vadd.f32 0.0, %v8032
      %v8034 = vpop.f32.mrb[0].mxu0
      %v8035 = vpop.f32.mrb[0].mxu0
      %v8036 = vadd.f32 0.0, %v8035
      %v8037 = vpop.f32.mrb[0].mxu0
      %8038 = vmatprep.mubr.bf16.mxu0 0
      %8039 = vmatmul.mubr.bf16.gmra.mrb[0].mxu0 %v7909
      %v8040 = vpop.f32.mrb[0].mxu0
      %v8041 = vadd.f32 0.0, %v8040
      %v8042 = vpop.f32.mrb[0].mxu0
      %v8043 = vpop.f32.mrb[0].mxu0
      %v8044 = vadd.f32 0.0, %v8043
      %v8045 = vpop.f32.mrb[0].mxu0
      %8046 = vmatprep.mubr.bf16.mxu0 0
      %8047 = vmatmul.mubr.bf16.gmra.mrb[0].mxu0 %v7910
      %v8048 = vpop.f32.mrb[0].mxu0
      %v8049 = vadd.f32 0.0, %v8048
      %v8050 = vpop.f32.mrb[0].mxu0
      %v8051 = vpop.f32.mrb[0].mxu0
      %v8052 = vadd.f32 0.0, %v8051
      %v8053 = vpop.f32.mrb[0].mxu0
      %8054 = vmatprep.mubr.bf16.mxu0 0
      %8055 = vmatmul.mubr.bf16.gmra.mrb[0].mxu0 %v7911
      %v8056 = vpop.f32.mrb[0].mxu0
      %v8057 = vadd.f32 0.0, %v8056
      %v8058 = vpop.f32.mrb[0].mxu0
      %v8059 = vpop.f32.mrb[0].mxu0
      %v8060 = vadd.f32 0.0, %v8059
      %v8061 = vpop.f32.mrb[0].mxu0
      %8062 = vmatprep.mubr.bf16.mxu0 0
      %8063 = vmatmul.mubr.bf16.gmra.mrb[0].mxu0 %v7912
      %v8064 = vpop.f32.mrb[0].mxu0
      %v8065 = vadd.f32 0.0, %v8064
      %v8066 = vpop.f32.mrb[0].mxu0
      %v8067 = vpop.f32.mrb[0].mxu0
      %v8068 = vadd.f32 0.0, %v8067
      %v8069 = vpop.f32.mrb[0].mxu0
      %8070 = vmatprep.mubr.bf16.mxu0 0
      %8071 = vmatmul.mubr.bf16.gmra.mrb[0].mxu0 %v7913
      %v8072 = vpop.f32.mrb[0].mxu0
      %v8073 = vadd.f32 0.0, %v8072
      %v8074 = vpop.f32.mrb[0].mxu0
      %v8075 = vpop.f32.mrb[0].mxu0
      %v8076 = vadd.f32 0.0, %v8075
      %v8077 = vpop.f32.mrb[0].mxu0
      %8078 = vmatprep.mubr.bf16.mxu0 0
      %8079 = vmatmul.mubr.bf16.gmra.mrb[0].mxu0 %v7914
      %v8080 = vpop.f32.mrb[0].mxu0
      %v8081 = vadd.f32 0.0, %v8080
      %v8082 = vpop.f32.mrb[0].mxu0
      %v8083 = vpop.f32.mrb[0].mxu0
      %v8084 = vadd.f32 0.0, %v8083
      %v8085 = vpop.f32.mrb[0].mxu0
      %8086 = vmatprep.mubr.bf16.mxu0 0
      %8087 = vmatmul.mubr.bf16.gmra.mrb[0].mxu0 %v7915
      %v8088 = vpop.f32.mrb[0].mxu0
      %v8089 = vadd.f32 0.0, %v8088
      %v8090 = vpop.f32.mrb[0].mxu0
      %v8091 = vpop.f32.mrb[0].mxu0
      %v8092 = vadd.f32 0.0, %v8091
      %v8093 = vpop.f32.mrb[0].mxu0
      %8094 = vmatprep.mubr.bf16.mxu0 0
      %8095 = vmatmul.mubr.bf16.gmra.mrb[0].mxu0 %v7916
      %v8096 = vpop.f32.mrb[0].mxu0
      %v8097 = vadd.f32 0.0, %v8096
      %v8098 = vpop.f32.mrb[0].mxu0
      %v8099 = vpop.f32.mrb[0].mxu0
      %v8100 = vadd.f32 0.0, %v8099
      %v8101 = vpop.f32.mrb[0].mxu0
      %8102 = vmatprep.mubr.bf16.mxu0 0
      %8103 = vmatmul.mubr.bf16.gmra.mrb[0].mxu0 %v7917
      %v8104 = vpop.f32.mrb[0].mxu0
      %v8105 = vadd.f32 0.0, %v8104
      %v8106 = vpop.f32.mrb[0].mxu0
      %v8107 = vpop.f32.mrb[0].mxu0
      %v8108 = vadd.f32 0.0, %v8107
      %v8109 = vpop.f32.mrb[0].mxu0
      %8110 = vmatprep.mubr.bf16.mxu0 0
      %8111 = vmatmul.mubr.bf16.gmra.mrb[0].mxu0 %v7918
      %v8112 = vpop.f32.mrb[0].mxu0
      %v8113 = vadd.f32 0.0, %v8112
      %v8114 = vpop.f32.mrb[0].mxu0
      %v8115 = vpop.f32.mrb[0].mxu0
      %v8116 = vadd.f32 0.0, %v8115
      %v8117 = vpop.f32.mrb[0].mxu0
      %8118 = vmatprep.mubr.bf16.mxu0 0
      %8119 = vmatmul.mubr.bf16.gmra.mrb[0].mxu0 %v7919
      %v8120 = vpop.f32.mrb[0].mxu0
      %v8121 = vadd.f32 0.0, %v8120
      %v8122 = vpop.f32.mrb[0].mxu0
      %v8123 = vpop.f32.mrb[0].mxu0
      %v8124 = vadd.f32 0.0, %v8123
      %v8125 = vpop.f32.mrb[0].mxu0
      %8126 = vmatprep.mubr.bf16.mxu0 0
      %8127 = vmatmul.mubr.bf16.gmra.mrb[0].mxu0 %v7920
      %v8128 = vpop.f32.mrb[0].mxu0
      %v8129 = vadd.f32 0.0, %v8128
      %v8130 = vpop.f32.mrb[0].mxu0
      %v8131 = vpop.f32.mrb[0].mxu0
      %v8132 = vadd.f32 0.0, %v8131
      %v8133 = vpop.f32.mrb[0].mxu0
      %8134 = vmatprep.mubr.bf16.mxu0 0
      %8135 = vmatmul.mubr.bf16.gmra.mrb[0].mxu0 %v7921
      %v8136 = vpop.f32.mrb[0].mxu0
      %v8137 = vadd.f32 0.0, %v8136
      %v8138 = vpop.f32.mrb[0].mxu0
      %v8139 = vpop.f32.mrb[0].mxu0
      %v8140 = vadd.f32 0.0, %v8139
      %v8141 = vpop.f32.mrb[0].mxu0
      %8142 = vmatprep.mubr.bf16.mxu0 0
      %8143 = vmatmul.mubr.bf16.gmra.mrb[0].mxu0 %v7922
      %v8144 = vpop.f32.mrb[0].mxu0
      %v8145 = vadd.f32 0.0, %v8144
      %v8146 = vpop.f32.mrb[0].mxu0
      %v8147 = vpop.f32.mrb[0].mxu0
      %v8148 = vadd.f32 0.0, %v8147
      %v8149 = vpop.f32.mrb[0].mxu0
      %8150 = vmatprep.mubr.bf16.mxu0 0
      %8151 = vmatmul.mubr.bf16.gmra.mrb[0].mxu0 %v7923
      %v8152 = vpop.f32.mrb[0].mxu0
      %v8153 = vadd.f32 0.0, %v8152
      %v8154 = vpop.f32.mrb[0].mxu0
      %v8155 = vpop.f32.mrb[0].mxu0
      %v8156 = vadd.f32 0.0, %v8155
      %v8157 = vpop.f32.mrb[0].mxu0
      %8158 = vmatprep.mubr.bf16.mxu0 0
      %8159 = vmatmul.mubr.bf16.gmra.mrb[0].mxu0 %v7924
      %v8160 = vpop.f32.mrb[0].mxu0
      %v8161 = vadd.f32 0.0, %v8160
      %v8162 = vpop.f32.mrb[0].mxu0
      %v8163 = vpop.f32.mrb[0].mxu0
      %v8164 = vadd.f32 0.0, %v8163
      %v8165 = vpop.f32.mrb[0].mxu0
      %8166 = vdwg.mxu0
      %v8167 = vld [vmem:[#allocation3] sm:$0xff]
      %v8168 = vld [vmem:[#allocation3 + $0x8] sm:$0xff]
      %v8169 = vld [vmem:[#allocation3 + $0x10] sm:$0xff]
      %v8170 = vld [vmem:[#allocation3 + $0x18] sm:$0xff]
      %v8171 = vld [vmem:[#allocation3 + $0x20] sm:$0xff]
      %v8172 = vld [vmem:[#allocation3 + $0x28] sm:$0xff]
      %v8173 = vld [vmem:[#allocation3 + $0x30] sm:$0xff]
      %v8174 = vld [vmem:[#allocation3 + $0x38] sm:$0xff]
      %v8175 = vld [vmem:[#allocation3 + $0x40] sm:$0xff]
      %v8176 = vld [vmem:[#allocation3 + $0x48] sm:$0xff]
      %v8177 = vld [vmem:[#allocation3 + $0x50] sm:$0xff]
      %v8178 = vld [vmem:[#allocation3 + $0x58] sm:$0xff]
      %v8179 = vld [vmem:[#allocation3 + $0x60] sm:$0xff]
      %v8180 = vld [vmem:[#allocation3 + $0x68] sm:$0xff]
      %v8181 = vld [vmem:[#allocation3 + $0x70] sm:$0xff]
      %v8182 = vld [vmem:[#allocation3 + $0x78] sm:$0xff]
      %v8183 = vld [vmem:[#allocation3 + $0x80] sm:$0xff]
      %v8184 = vld [vmem:[#allocation3 + $0x88] sm:$0xff]
      %v8185 = vld [vmem:[#allocation3 + $0x90] sm:$0xff]
      %v8186 = vld [vmem:[#allocation3 + $0x98] sm:$0xff]
      %v8187 = vld [vmem:[#allocation3 + $0xa0] sm:$0xff]
      %v8188 = vld [vmem:[#allocation3 + $0xa8] sm:$0xff]
      %v8189 = vld [vmem:[#allocation3 + $0xb0] sm:$0xff]
      %v8190 = vld [vmem:[#allocation3 + $0xb8] sm:$0xff]
      %v8191 = vld [vmem:[#allocation3 + $0xc0] sm:$0xff]
      %v8192 = vld [vmem:[#allocation3 + $0xc8] sm:$0xff]
      %v8193 = vld [vmem:[#allocation3 + $0xd0] sm:$0xff]
      %v8194 = vld [vmem:[#allocation3 + $0xd8] sm:$0xff]
      %v8195 = vld [vmem:[#allocation3 + $0xe0] sm:$0xff]
      %v8196 = vld [vmem:[#allocation3 + $0xe8] sm:$0xff]
      %v8197 = vld [vmem:[#allocation3 + $0xf0] sm:$0xff]
      %v8198 = vld [vmem:[#allocation3 + $0xf8] sm:$0xff]
      %v8199 = vld [vmem:[#allocation3 + $0x100] sm:$0xff]
      %v8200 = vld [vmem:[#allocation3 + $0x108] sm:$0xff]
      %v8201 = vld [vmem:[#allocation3 + $0x110] sm:$0xff]
      %v8202 = vld [vmem:[#allocation3 + $0x118] sm:$0xff]
      %v8203 = vadd.f32 %v8167, %v8025
      %v8204 = vadd.f32 %v8168, %v8028
      %v8205 = vadd.f32 %v8169, %v8033
      %v8206 = vadd.f32 %v8170, %v8036
      %v8207 = vadd.f32 %v8171, %v8041
      %v8208 = vadd.f32 %v8172, %v8044
      %v8209 = vadd.f32 %v8173, %v8049
      %v8210 = vadd.f32 %v8174, %v8052
      %v8211 = vadd.f32 %v8175, %v8057
      %v8212 = vadd.f32 %v8176, %v8060
      %v8213 = vadd.f32 %v8177, %v8065
      %v8214 = vadd.f32 %v8178, %v8068
      %v8215 = vadd.f32 %v8179, %v8073
      %v8216 = vadd.f32 %v8180, %v8076
      %v8217 = vadd.f32 %v8181, %v8081
      %v8218 = vadd.f32 %v8182, %v8084
      %v8219 = vadd.f32 %v8183, %v8089
      %v8220 = vadd.f32 %v8184, %v8092
      %v8221 = vadd.f32 %v8185, %v8097
      %v8222 = vadd.f32 %v8186, %v8100
      %v8223 = vadd.f32 %v8187, %v8105
      %v8224 = vadd.f32 %v8188, %v8108
      %v8225 = vadd.f32 %v8189, %v8113
      %v8226 = vadd.f32 %v8190, %v8116
      %v8227 = vadd.f32 %v8191, %v8121
      %v8228 = vadd.f32 %v8192, %v8124
      %v8229 = vadd.f32 %v8193, %v8129
      %v8230 = vadd.f32 %v8194, %v8132
      %v8231 = vadd.f32 %v8195, %v8137
      %v8232 = vadd.f32 %v8196, %v8140
      %v8233 = vadd.f32 %v8197, %v8145
      %v8234 = vadd.f32 %v8198, %v8148
      %v8235 = vadd.f32 %v8199, %v8153
      %v8236 = vadd.f32 %v8200, %v8156
      %v8237 = vadd.f32 %v8201, %v8161
      %v8238 = vadd.f32 %v8202, %v8164
      %8239 = vst [vmem:[#allocation3] sm:$0xff] %v8203
      %8240 = vst [vmem:[#allocation3 + $0x8] sm:$0xff] %v8204
      %8241 = vst [vmem:[#allocation3 + $0x10] sm:$0xff] %v8205
      %8242 = vst [vmem:[#allocation3 + $0x18] sm:$0xff] %v8206
      %8243 = vst [vmem:[#allocation3 + $0x20] sm:$0xff] %v8207
      %8244 = vst [vmem:[#allocation3 + $0x28] sm:$0xff] %v8208
      %8245 = vst [vmem:[#allocation3 + $0x30] sm:$0xff] %v8209
      %8246 = vst [vmem:[#allocation3 + $0x38] sm:$0xff] %v8210
      %8247 = vst [vmem:[#allocation3 + $0x40] sm:$0xff] %v8211
      %8248 = vst [vmem:[#allocation3 + $0x48] sm:$0xff] %v8212
      %8249 = vst [vmem:[#allocation3 + $0x50] sm:$0xff] %v8213
      %8250 = vst [vmem:[#allocation3 + $0x58] sm:$0xff] %v8214
      %8251 = vst [vmem:[#allocation3 + $0x60] sm:$0xff] %v8215
      %8252 = vst [vmem:[#allocation3 + $0x68] sm:$0xff] %v8216
      %8253 = vst [vmem:[#allocation3 + $0x70] sm:$0xff] %v8217
      %8254 = vst [vmem:[#allocation3 + $0x78] sm:$0xff] %v8218
      %8255 = vst [vmem:[#allocation3 + $0x80] sm:$0xff] %v8219
      %8256 = vst [vmem:[#allocation3 + $0x88] sm:$0xff] %v8220
      %8257 = vst [vmem:[#allocation3 + $0x90] sm:$0xff] %v8221
      %8258 = vst [vmem:[#allocation3 + $0x98] sm:$0xff] %v8222
      %8259 = vst [vmem:[#allocation3 + $0xa0] sm:$0xff] %v8223
      %8260 = vst [vmem:[#allocation3 + $0xa8] sm:$0xff] %v8224
      %8261 = vst [vmem:[#allocation3 + $0xb0] sm:$0xff] %v8225
      %8262 = vst [vmem:[#allocation3 + $0xb8] sm:$0xff] %v8226
      %8263 = vst [vmem:[#allocation3 + $0xc0] sm:$0xff] %v8227
      %8264 = vst [vmem:[#allocation3 + $0xc8] sm:$0xff] %v8228
      %8265 = vst [vmem:[#allocation3 + $0xd0] sm:$0xff] %v8229
      %8266 = vst [vmem:[#allocation3 + $0xd8] sm:$0xff] %v8230
      %8267 = vst [vmem:[#allocation3 + $0xe0] sm:$0xff] %v8231
      %8268 = vst [vmem:[#allocation3 + $0xe8] sm:$0xff] %v8232
      %8269 = vst [vmem:[#allocation3 + $0xf0] sm:$0xff] %v8233
      %8270 = vst [vmem:[#allocation3 + $0xf8] sm:$0xff] %v8234
      %8271 = vst [vmem:[#allocation3 + $0x100] sm:$0xff] %v8235
      %8272 = vst [vmem:[#allocation3 + $0x108] sm:$0xff] %v8236
      %8273 = vst [vmem:[#allocation3 + $0x110] sm:$0xff] %v8237
      %8274 = vst [vmem:[#allocation3 + $0x118] sm:$0xff] %v8238
      %v8275 = vld [vmem:[#allocation2 + $0x26] sm:$0xff]
      %v8276 = vld [vmem:[#allocation2 + $0x2e] sm:$0xff]
      %v8277 = vld [vmem:[#allocation2 + $0x36] sm:$0xff]
      %v8278 = vld [vmem:[#allocation2 + $0x3e] sm:$0xff]
      %v8279 = vld [vmem:[#allocation2 + $0x46] sm:$0xff]
      %v8280 = vld [vmem:[#allocation2 + $0x4e] sm:$0xff]
      %v8281 = vld [vmem:[#allocation2 + $0x56] sm:$0xff]
      %v8282 = vld [vmem:[#allocation2 + $0x5e] sm:$0xff]
      %v8283 = vld [vmem:[#allocation2 + $0x66] sm:$0xff]
      %v8284 = vld [vmem:[#allocation2 + $0x6e] sm:$0xff]
      %v8285 = vld [vmem:[#allocation2 + $0x76] sm:$0xff]
      %v8286 = vld [vmem:[#allocation2 + $0x7e] sm:$0xff]
      %v8287 = vld [vmem:[#allocation2 + $0x86] sm:$0xff]
      %v8288 = vld [vmem:[#allocation2 + $0x8e] sm:$0xff]
      %v8289 = vld [vmem:[#allocation2 + $0x96] sm:$0xff]
      %v8290 = vld [vmem:[#allocation2 + $0x9e] sm:$0xff]
      %v8291 = vld [vmem:[#allocation2 + $0xa6] sm:$0xff]
      %v8292 = vld [vmem:[#allocation2 + $0xae] sm:$0xff]
      %v8293 = vld [vmem:[#allocation2 + $0xb6] sm:$0xff]
      %v8294 = vld [vmem:[#allocation2 + $0xbe] sm:$0xff]
      %v8295 = vld [vmem:[#allocation2 + $0xc6] sm:$0xff]
      %v8296 = vld [vmem:[#allocation2 + $0xce] sm:$0xff]
      %v8297 = vld [vmem:[#allocation2 + $0xd6] sm:$0xff]
      %v8298 = vld [vmem:[#allocation2 + $0xde] sm:$0xff]
      %v8299 = vld [vmem:[#allocation2 + $0xe6] sm:$0xff]
      %v8300 = vld [vmem:[#allocation2 + $0xee] sm:$0xff]
      %v8301 = vld [vmem:[#allocation2 + $0xf6] sm:$0xff]
      %v8302 = vld [vmem:[#allocation2 + $0xfe] sm:$0xff]
      %v8303 = vld [vmem:[#allocation2 + $0x106] sm:$0xff]
      %v8304 = vld [vmem:[#allocation2 + $0x10e] sm:$0xff]
      %v8305 = vld [vmem:[#allocation2 + $0x116] sm:$0xff]
      %v8306 = vld [vmem:[#allocation2 + $0x11e] sm:$0xff]
      %v8307 = vld [vmem:[#allocation2 + $0x126] sm:$0xff]
      %v8308 = vld [vmem:[#allocation2 + $0x12e] sm:$0xff]
      %v8309 = vld [vmem:[#allocation2 + $0x136] sm:$0xff]
      %v8310 = vld [vmem:[#allocation2 + $0x13e] sm:$0xff]
      %v8311 = vpack.c.bf16 %v8276, %v8275
      %v8312 = vpack.c.bf16 %v8278, %v8277
      %v8313 = vpack.c.bf16 %v8280, %v8279
      %v8314 = vpack.c.bf16 %v8282, %v8281
      %v8315 = vpack.c.bf16 %v8284, %v8283
      %v8316 = vpack.c.bf16 %v8286, %v8285
      %v8317 = vpack.c.bf16 %v8288, %v8287
      %v8318 = vpack.c.bf16 %v8290, %v8289
      %v8319 = vpack.c.bf16 %v8292, %v8291
      %v8320 = vpack.c.bf16 %v8294, %v8293
      %v8321 = vpack.c.bf16 %v8296, %v8295
      %v8322 = vpack.c.bf16 %v8298, %v8297
      %v8323 = vpack.c.bf16 %v8300, %v8299
      %v8324 = vpack.c.bf16 %v8302, %v8301
      %v8325 = vpack.c.bf16 %v8304, %v8303
      %v8326 = vpack.c.bf16 %v8306, %v8305
      %v8327 = vpack.c.bf16 %v8308, %v8307
      %v8328 = vpack.c.bf16 %v8310, %v8309
      %s8329 = scalar_lea.vmem %s2, 512
      %v8330 = vld [vmem:[%s8329] sm:$0xf]
      %v8331 = vld [vmem:[%s8329 + $0x4] sm:$0xf]
      %v8332 = vld [vmem:[%s8329 + $0x8] sm:$0xf]
      %v8333 = vld [vmem:[%s8329 + $0xc] sm:$0xf]
      %v8334 = vld [vmem:[%s8329 + $0x10] sm:$0xf]
      %v8335 = vld [vmem:[%s8329 + $0x14] sm:$0xf]
      %v8336 = vld [vmem:[%s8329 + $0x18] sm:$0xf]
      %v8337 = vld [vmem:[%s8329 + $0x1c] sm:$0xf]
      %v8338 = vld [vmem:[%s8329 + $0x20] sm:$0xf]
      %v8339 = vld [vmem:[%s8329 + $0x24] sm:$0xf]
      %v8340 = vld [vmem:[%s8329 + $0x28] sm:$0xf]
      %v8341 = vld [vmem:[%s8329 + $0x2c] sm:$0xf]
      %v8342 = vld [vmem:[%s8329 + $0x30] sm:$0xf]
      %v8343 = vld [vmem:[%s8329 + $0x34] sm:$0xf]
      %v8344 = vld [vmem:[%s8329 + $0x38] sm:$0xf]
      %v8345 = vld [vmem:[%s8329 + $0x3c] sm:$0xf]
      %v8362 = vunpack.c.l.b16 %v8330
      %v8363 = vunpack.c.l.b16 %v8331
      %v8364 = vunpack.c.l.b16 %v8332
      %v8365 = vunpack.c.l.b16 %v8333
      %v8366 = vunpack.c.l.b16 %v8334
      %v8367 = vunpack.c.l.b16 %v8335
      %v8368 = vunpack.c.l.b16 %v8336
      %v8369 = vunpack.c.l.b16 %v8337
      %v8370 = vunpack.c.l.b16 %v8338
      %v8371 = vunpack.c.l.b16 %v8339
      %v8372 = vunpack.c.l.b16 %v8340
      %v8373 = vunpack.c.l.b16 %v8341
      %v8374 = vunpack.c.l.b16 %v8342
      %v8375 = vunpack.c.l.b16 %v8343
      %v8376 = vunpack.c.l.b16 %v8344
      %v8377 = vunpack.c.l.b16 %v8345
      %v8378 = vpack.c.b16 %v8363, %v8362
      %v8379 = vpack.c.b16 %v8365, %v8364
      %v8380 = vpack.c.b16 %v8367, %v8366
      %v8381 = vpack.c.b16 %v8369, %v8368
      %v8382 = vpack.c.b16 %v8371, %v8370
      %v8383 = vpack.c.b16 %v8373, %v8372
      %v8384 = vpack.c.b16 %v8375, %v8374
      %v8385 = vpack.c.b16 %v8377, %v8376
      %8394 = vmatprep.subr.bf16.mxu0 0
      %8395 = vmatpush1.bf16.msra.mxu0 %v8378
      %8396 = vmatprep.subr.bf16.mxu0 0
      %8397 = vmatpush1.bf16.msra.mxu0 %v8379
      %8398 = vmatprep.subr.bf16.mxu0 0
      %8399 = vmatpush1.bf16.msra.mxu0 %v8380
      %8400 = vmatprep.subr.bf16.mxu0 0
      %8401 = vmatpush1.bf16.msra.mxu0 %v8381
      %8402 = vmatprep.subr.bf16.mxu0 0
      %8403 = vmatpush1.bf16.msra.mxu0 %v8382
      %8404 = vmatprep.subr.bf16.mxu0 0
      %8405 = vmatpush1.bf16.msra.mxu0 %v8383
      %8406 = vmatprep.subr.bf16.mxu0 0
      %8407 = vmatpush1.bf16.msra.mxu0 %v8384
      %8408 = vmatprep.subr.bf16.mxu0 0
      %8409 = vmatpush1.bf16.msra.mxu0 %v8385
      %8410 = vmatprep.subr.bf16.mxu0 0
      %8411 = vmatpush1.bf16.msra.mxu0 0
      %8412 = vmatprep.subr.bf16.mxu0 0
      %8413 = vmatpush1.bf16.msra.mxu0 0
      %8414 = vmatprep.subr.bf16.mxu0 0
      %8415 = vmatpush1.bf16.msra.mxu0 0
      %8416 = vmatprep.subr.bf16.mxu0 0
      %8417 = vmatpush1.bf16.msra.mxu0 0
      %8418 = vmatprep.subr.bf16.mxu0 0
      %8419 = vmatpush1.bf16.msra.mxu0 0
      %8420 = vmatprep.subr.bf16.mxu0 0
      %8421 = vmatpush1.bf16.msra.mxu0 0
      %8422 = vmatprep.subr.bf16.mxu0 0
      %8423 = vmatpush1.bf16.msra.mxu0 0
      %8424 = vmatprep.subr.bf16.mxu0 0
      %8425 = vmatpush1.bf16.msra.mxu0 0
      %8426 = vmatprep.mubr.bf16.mxu0 0
      %8427 = vmatmul.mubr.bf16.gmra.mrb[0].mxu0 %v8311
      %v8428 = vpop.f32.mrb[0].mxu0
      %v8429 = vadd.f32 0.0, %v8428
      %v8430 = vpop.f32.mrb[0].mxu0
      %v8431 = vpop.f32.mrb[0].mxu0
      %v8432 = vadd.f32 0.0, %v8431
      %v8433 = vpop.f32.mrb[0].mxu0
      %8434 = vmatprep.mubr.bf16.mxu0 0
      %8435 = vmatmul.mubr.bf16.gmra.mrb[0].mxu0 %v8312
      %v8436 = vpop.f32.mrb[0].mxu0
      %v8437 = vadd.f32 0.0, %v8436
      %v8438 = vpop.f32.mrb[0].mxu0
      %v8439 = vpop.f32.mrb[0].mxu0
      %v8440 = vadd.f32 0.0, %v8439
      %v8441 = vpop.f32.mrb[0].mxu0
      %8442 = vmatprep.mubr.bf16.mxu0 0
      %8443 = vmatmul.mubr.bf16.gmra.mrb[0].mxu0 %v8313
      %v8444 = vpop.f32.mrb[0].mxu0
      %v8445 = vadd.f32 0.0, %v8444
      %v8446 = vpop.f32.mrb[0].mxu0
      %v8447 = vpop.f32.mrb[0].mxu0
      %v8448 = vadd.f32 0.0, %v8447
      %v8449 = vpop.f32.mrb[0].mxu0
      %8450 = vmatprep.mubr.bf16.mxu0 0
      %8451 = vmatmul.mubr.bf16.gmra.mrb[0].mxu0 %v8314
      %v8452 = vpop.f32.mrb[0].mxu0
      %v8453 = vadd.f32 0.0, %v8452
      %v8454 = vpop.f32.mrb[0].mxu0
      %v8455 = vpop.f32.mrb[0].mxu0
      %v8456 = vadd.f32 0.0, %v8455
      %v8457 = vpop.f32.mrb[0].mxu0
      %8458 = vmatprep.mubr.bf16.mxu0 0
      %8459 = vmatmul.mubr.bf16.gmra.mrb[0].mxu0 %v8315
      %v8460 = vpop.f32.mrb[0].mxu0
      %v8461 = vadd.f32 0.0, %v8460
      %v8462 = vpop.f32.mrb[0].mxu0
      %v8463 = vpop.f32.mrb[0].mxu0
      %v8464 = vadd.f32 0.0, %v8463
      %v8465 = vpop.f32.mrb[0].mxu0
      %8466 = vmatprep.mubr.bf16.mxu0 0
      %8467 = vmatmul.mubr.bf16.gmra.mrb[0].mxu0 %v8316
      %v8468 = vpop.f32.mrb[0].mxu0
      %v8469 = vadd.f32 0.0, %v8468
      %v8470 = vpop.f32.mrb[0].mxu0
      %v8471 = vpop.f32.mrb[0].mxu0
      %v8472 = vadd.f32 0.0, %v8471
      %v8473 = vpop.f32.mrb[0].mxu0
      %8474 = vmatprep.mubr.bf16.mxu0 0
      %8475 = vmatmul.mubr.bf16.gmra.mrb[0].mxu0 %v8317
      %v8476 = vpop.f32.mrb[0].mxu0
      %v8477 = vadd.f32 0.0, %v8476
      %v8478 = vpop.f32.mrb[0].mxu0
      %v8479 = vpop.f32.mrb[0].mxu0
      %v8480 = vadd.f32 0.0, %v8479
      %v8481 = vpop.f32.mrb[0].mxu0
      %8482 = vmatprep.mubr.bf16.mxu0 0
      %8483 = vmatmul.mubr.bf16.gmra.mrb[0].mxu0 %v8318
      %v8484 = vpop.f32.mrb[0].mxu0
      %v8485 = vadd.f32 0.0, %v8484
      %v8486 = vpop.f32.mrb[0].mxu0
      %v8487 = vpop.f32.mrb[0].mxu0
      %v8488 = vadd.f32 0.0, %v8487
      %v8489 = vpop.f32.mrb[0].mxu0
      %8490 = vmatprep.mubr.bf16.mxu0 0
      %8491 = vmatmul.mubr.bf16.gmra.mrb[0].mxu0 %v8319
      %v8492 = vpop.f32.mrb[0].mxu0
      %v8493 = vadd.f32 0.0, %v8492
      %v8494 = vpop.f32.mrb[0].mxu0
      %v8495 = vpop.f32.mrb[0].mxu0
      %v8496 = vadd.f32 0.0, %v8495
      %v8497 = vpop.f32.mrb[0].mxu0
      %8498 = vmatprep.mubr.bf16.mxu0 0
      %8499 = vmatmul.mubr.bf16.gmra.mrb[0].mxu0 %v8320
      %v8500 = vpop.f32.mrb[0].mxu0
      %v8501 = vadd.f32 0.0, %v8500
      %v8502 = vpop.f32.mrb[0].mxu0
      %v8503 = vpop.f32.mrb[0].mxu0
      %v8504 = vadd.f32 0.0, %v8503
      %v8505 = vpop.f32.mrb[0].mxu0
      %8506 = vmatprep.mubr.bf16.mxu0 0
      %8507 = vmatmul.mubr.bf16.gmra.mrb[0].mxu0 %v8321
      %v8508 = vpop.f32.mrb[0].mxu0
      %v8509 = vadd.f32 0.0, %v8508
      %v8510 = vpop.f32.mrb[0].mxu0
      %v8511 = vpop.f32.mrb[0].mxu0
      %v8512 = vadd.f32 0.0, %v8511
      %v8513 = vpop.f32.mrb[0].mxu0
      %8514 = vmatprep.mubr.bf16.mxu0 0
      %8515 = vmatmul.mubr.bf16.gmra.mrb[0].mxu0 %v8322
      %v8516 = vpop.f32.mrb[0].mxu0
      %v8517 = vadd.f32 0.0, %v8516
      %v8518 = vpop.f32.mrb[0].mxu0
      %v8519 = vpop.f32.mrb[0].mxu0
      %v8520 = vadd.f32 0.0, %v8519
      %v8521 = vpop.f32.mrb[0].mxu0
      %8522 = vmatprep.mubr.bf16.mxu0 0
      %8523 = vmatmul.mubr.bf16.gmra.mrb[0].mxu0 %v8323
      %v8524 = vpop.f32.mrb[0].mxu0
      %v8525 = vadd.f32 0.0, %v8524
      %v8526 = vpop.f32.mrb[0].mxu0
      %v8527 = vpop.f32.mrb[0].mxu0
      %v8528 = vadd.f32 0.0, %v8527
      %v8529 = vpop.f32.mrb[0].mxu0
      %8530 = vmatprep.mubr.bf16.mxu0 0
      %8531 = vmatmul.mubr.bf16.gmra.mrb[0].mxu0 %v8324
      %v8532 = vpop.f32.mrb[0].mxu0
      %v8533 = vadd.f32 0.0, %v8532
      %v8534 = vpop.f32.mrb[0].mxu0
      %v8535 = vpop.f32.mrb[0].mxu0
      %v8536 = vadd.f32 0.0, %v8535
      %v8537 = vpop.f32.mrb[0].mxu0
      %8538 = vmatprep.mubr.bf16.mxu0 0
      %8539 = vmatmul.mubr.bf16.gmra.mrb[0].mxu0 %v8325
      %v8540 = vpop.f32.mrb[0].mxu0
      %v8541 = vadd.f32 0.0, %v8540
      %v8542 = vpop.f32.mrb[0].mxu0
      %v8543 = vpop.f32.mrb[0].mxu0
      %v8544 = vadd.f32 0.0, %v8543
      %v8545 = vpop.f32.mrb[0].mxu0
      %8546 = vmatprep.mubr.bf16.mxu0 0
      %8547 = vmatmul.mubr.bf16.gmra.mrb[0].mxu0 %v8326
      %v8548 = vpop.f32.mrb[0].mxu0
      %v8549 = vadd.f32 0.0, %v8548
      %v8550 = vpop.f32.mrb[0].mxu0
      %v8551 = vpop.f32.mrb[0].mxu0
      %v8552 = vadd.f32 0.0, %v8551
      %v8553 = vpop.f32.mrb[0].mxu0
      %8554 = vmatprep.mubr.bf16.mxu0 0
      %8555 = vmatmul.mubr.bf16.gmra.mrb[0].mxu0 %v8327
      %v8556 = vpop.f32.mrb[0].mxu0
      %v8557 = vadd.f32 0.0, %v8556
      %v8558 = vpop.f32.mrb[0].mxu0
      %v8559 = vpop.f32.mrb[0].mxu0
      %v8560 = vadd.f32 0.0, %v8559
      %v8561 = vpop.f32.mrb[0].mxu0
      %8562 = vmatprep.mubr.bf16.mxu0 0
      %8563 = vmatmul.mubr.bf16.gmra.mrb[0].mxu0 %v8328
      %v8564 = vpop.f32.mrb[0].mxu0
      %v8565 = vadd.f32 0.0, %v8564
      %v8566 = vpop.f32.mrb[0].mxu0
      %v8567 = vpop.f32.mrb[0].mxu0
      %v8568 = vadd.f32 0.0, %v8567
      %v8569 = vpop.f32.mrb[0].mxu0
      %8570 = vdwg.mxu0
      %v8571 = vld [vmem:[#allocation3] sm:$0xff]
      %v8572 = vld [vmem:[#allocation3 + $0x8] sm:$0xff]
      %v8573 = vld [vmem:[#allocation3 + $0x10] sm:$0xff]
      %v8574 = vld [vmem:[#allocation3 + $0x18] sm:$0xff]
      %v8575 = vld [vmem:[#allocation3 + $0x20] sm:$0xff]
      %v8576 = vld [vmem:[#allocation3 + $0x28] sm:$0xff]
      %v8577 = vld [vmem:[#allocation3 + $0x30] sm:$0xff]
      %v8578 = vld [vmem:[#allocation3 + $0x38] sm:$0xff]
      %v8579 = vld [vmem:[#allocation3 + $0x40] sm:$0xff]
      %v8580 = vld [vmem:[#allocation3 + $0x48] sm:$0xff]
      %v8581 = vld [vmem:[#allocation3 + $0x50] sm:$0xff]
      %v8582 = vld [vmem:[#allocation3 + $0x58] sm:$0xff]
      %v8583 = vld [vmem:[#allocation3 + $0x60] sm:$0xff]
      %v8584 = vld [vmem:[#allocation3 + $0x68] sm:$0xff]
      %v8585 = vld [vmem:[#allocation3 + $0x70] sm:$0xff]
      %v8586 = vld [vmem:[#allocation3 + $0x78] sm:$0xff]
      %v8587 = vld [vmem:[#allocation3 + $0x80] sm:$0xff]
      %v8588 = vld [vmem:[#allocation3 + $0x88] sm:$0xff]
      %v8589 = vld [vmem:[#allocation3 + $0x90] sm:$0xff]
      %v8590 = vld [vmem:[#allocation3 + $0x98] sm:$0xff]
      %v8591 = vld [vmem:[#allocation3 + $0xa0] sm:$0xff]
      %v8592 = vld [vmem:[#allocation3 + $0xa8] sm:$0xff]
      %v8593 = vld [vmem:[#allocation3 + $0xb0] sm:$0xff]
      %v8594 = vld [vmem:[#allocation3 + $0xb8] sm:$0xff]
      %v8595 = vld [vmem:[#allocation3 + $0xc0] sm:$0xff]
      %v8596 = vld [vmem:[#allocation3 + $0xc8] sm:$0xff]
      %v8597 = vld [vmem:[#allocation3 + $0xd0] sm:$0xff]
      %v8598 = vld [vmem:[#allocation3 + $0xd8] sm:$0xff]
      %v8599 = vld [vmem:[#allocation3 + $0xe0] sm:$0xff]
      %v8600 = vld [vmem:[#allocation3 + $0xe8] sm:$0xff]
      %v8601 = vld [vmem:[#allocation3 + $0xf0] sm:$0xff]
      %v8602 = vld [vmem:[#allocation3 + $0xf8] sm:$0xff]
      %v8603 = vld [vmem:[#allocation3 + $0x100] sm:$0xff]
      %v8604 = vld [vmem:[#allocation3 + $0x108] sm:$0xff]
      %v8605 = vld [vmem:[#allocation3 + $0x110] sm:$0xff]
      %v8606 = vld [vmem:[#allocation3 + $0x118] sm:$0xff]
      %v8607 = vadd.f32 %v8571, %v8429
      %v8608 = vadd.f32 %v8572, %v8432
      %v8609 = vadd.f32 %v8573, %v8437
      %v8610 = vadd.f32 %v8574, %v8440
      %v8611 = vadd.f32 %v8575, %v8445
      %v8612 = vadd.f32 %v8576, %v8448
      %v8613 = vadd.f32 %v8577, %v8453
      %v8614 = vadd.f32 %v8578, %v8456
      %v8615 = vadd.f32 %v8579, %v8461
      %v8616 = vadd.f32 %v8580, %v8464
      %v8617 = vadd.f32 %v8581, %v8469
      %v8618 = vadd.f32 %v8582, %v8472
      %v8619 = vadd.f32 %v8583, %v8477
      %v8620 = vadd.f32 %v8584, %v8480
      %v8621 = vadd.f32 %v8585, %v8485
      %v8622 = vadd.f32 %v8586, %v8488
      %v8623 = vadd.f32 %v8587, %v8493
      %v8624 = vadd.f32 %v8588, %v8496
      %v8625 = vadd.f32 %v8589, %v8501
      %v8626 = vadd.f32 %v8590, %v8504
      %v8627 = vadd.f32 %v8591, %v8509
      %v8628 = vadd.f32 %v8592, %v8512
      %v8629 = vadd.f32 %v8593, %v8517
      %v8630 = vadd.f32 %v8594, %v8520
      %v8631 = vadd.f32 %v8595, %v8525
      %v8632 = vadd.f32 %v8596, %v8528
      %v8633 = vadd.f32 %v8597, %v8533
      %v8634 = vadd.f32 %v8598, %v8536
      %v8635 = vadd.f32 %v8599, %v8541
      %v8636 = vadd.f32 %v8600, %v8544
      %v8637 = vadd.f32 %v8601, %v8549
      %v8638 = vadd.f32 %v8602, %v8552
      %v8639 = vadd.f32 %v8603, %v8557
      %v8640 = vadd.f32 %v8604, %v8560
      %v8641 = vadd.f32 %v8605, %v8565
      %v8642 = vadd.f32 %v8606, %v8568
      %8643 = vst [vmem:[#allocation3] sm:$0xff] %v8607
      %8644 = vst [vmem:[#allocation3 + $0x8] sm:$0xff] %v8608
      %8645 = vst [vmem:[#allocation3 + $0x10] sm:$0xff] %v8609
      %8646 = vst [vmem:[#allocation3 + $0x18] sm:$0xff] %v8610
      %8647 = vst [vmem:[#allocation3 + $0x20] sm:$0xff] %v8611
      %8648 = vst [vmem:[#allocation3 + $0x28] sm:$0xff] %v8612
      %8649 = vst [vmem:[#allocation3 + $0x30] sm:$0xff] %v8613
      %8650 = vst [vmem:[#allocation3 + $0x38] sm:$0xff] %v8614
      %8651 = vst [vmem:[#allocation3 + $0x40] sm:$0xff] %v8615
      %8652 = vst [vmem:[#allocation3 + $0x48] sm:$0xff] %v8616
      %8653 = vst [vmem:[#allocation3 + $0x50] sm:$0xff] %v8617
      %8654 = vst [vmem:[#allocation3 + $0x58] sm:$0xff] %v8618
      %8655 = vst [vmem:[#allocation3 + $0x60] sm:$0xff] %v8619
      %8656 = vst [vmem:[#allocation3 + $0x68] sm:$0xff] %v8620
      %8657 = vst [vmem:[#allocation3 + $0x70] sm:$0xff] %v8621
      %8658 = vst [vmem:[#allocation3 + $0x78] sm:$0xff] %v8622
      %8659 = vst [vmem:[#allocation3 + $0x80] sm:$0xff] %v8623
      %8660 = vst [vmem:[#allocation3 + $0x88] sm:$0xff] %v8624
      %8661 = vst [vmem:[#allocation3 + $0x90] sm:$0xff] %v8625
      %8662 = vst [vmem:[#allocation3 + $0x98] sm:$0xff] %v8626
      %8663 = vst [vmem:[#allocation3 + $0xa0] sm:$0xff] %v8627
      %8664 = vst [vmem:[#allocation3 + $0xa8] sm:$0xff] %v8628
      %8665 = vst [vmem:[#allocation3 + $0xb0] sm:$0xff] %v8629
      %8666 = vst [vmem:[#allocation3 + $0xb8] sm:$0xff] %v8630
      %8667 = vst [vmem:[#allocation3 + $0xc0] sm:$0xff] %v8631
      %8668 = vst [vmem:[#allocation3 + $0xc8] sm:$0xff] %v8632
      %8669 = vst [vmem:[#allocation3 + $0xd0] sm:$0xff] %v8633
      %8670 = vst [vmem:[#allocation3 + $0xd8] sm:$0xff] %v8634
      %8671 = vst [vmem:[#allocation3 + $0xe0] sm:$0xff] %v8635
      %8672 = vst [vmem:[#allocation3 + $0xe8] sm:$0xff] %v8636
      %8673 = vst [vmem:[#allocation3 + $0xf0] sm:$0xff] %v8637
      %8674 = vst [vmem:[#allocation3 + $0xf8] sm:$0xff] %v8638
      %8675 = vst [vmem:[#allocation3 + $0x100] sm:$0xff] %v8639
      %8676 = vst [vmem:[#allocation3 + $0x108] sm:$0xff] %v8640
      %8677 = vst [vmem:[#allocation3 + $0x110] sm:$0xff] %v8641
      %8678 = vst [vmem:[#allocation3 + $0x118] sm:$0xff] %v8642
      %v8679 = vld [vmem:[#allocation3] sm:$0xff]
      %v8680 = vld [vmem:[#allocation3 + $0x8] sm:$0xff]
      %v8681 = vld [vmem:[#allocation3 + $0x10] sm:$0xff]
      %v8682 = vld [vmem:[#allocation3 + $0x18] sm:$0xff]
      %v8683 = vld [vmem:[#allocation3 + $0x20] sm:$0xff]
      %v8684 = vld [vmem:[#allocation3 + $0x28] sm:$0xff]
      %v8685 = vld [vmem:[#allocation3 + $0x30] sm:$0xff]
      %v8686 = vld [vmem:[#allocation3 + $0x38] sm:$0xff]
      %v8687 = vld [vmem:[#allocation3 + $0x40] sm:$0xff]
      %v8688 = vld [vmem:[#allocation3 + $0x48] sm:$0xff]
      %v8689 = vld [vmem:[#allocation3 + $0x50] sm:$0xff]
      %v8690 = vld [vmem:[#allocation3 + $0x58] sm:$0xff]
      %v8691 = vld [vmem:[#allocation3 + $0x60] sm:$0xff]
      %v8692 = vld [vmem:[#allocation3 + $0x68] sm:$0xff]
      %v8693 = vld [vmem:[#allocation3 + $0x70] sm:$0xff]
      %v8694 = vld [vmem:[#allocation3 + $0x78] sm:$0xff]
      %v8695 = vld [vmem:[#allocation3 + $0x80] sm:$0xff]
      %v8696 = vld [vmem:[#allocation3 + $0x88] sm:$0xff]
      %v8697 = vld [vmem:[#allocation3 + $0x90] sm:$0xff]
      %v8698 = vld [vmem:[#allocation3 + $0x98] sm:$0xff]
      %v8699 = vld [vmem:[#allocation3 + $0xa0] sm:$0xff]
      %v8700 = vld [vmem:[#allocation3 + $0xa8] sm:$0xff]
      %v8701 = vld [vmem:[#allocation3 + $0xb0] sm:$0xff]
      %v8702 = vld [vmem:[#allocation3 + $0xb8] sm:$0xff]
      %v8703 = vld [vmem:[#allocation3 + $0xc0] sm:$0xff]
      %v8704 = vld [vmem:[#allocation3 + $0xc8] sm:$0xff]
      %v8705 = vld [vmem:[#allocation3 + $0xd0] sm:$0xff]
      %v8706 = vld [vmem:[#allocation3 + $0xd8] sm:$0xff]
      %v8707 = vld [vmem:[#allocation3 + $0xe0] sm:$0xff]
      %v8708 = vld [vmem:[#allocation3 + $0xe8] sm:$0xff]
      %v8709 = vld [vmem:[#allocation3 + $0xf0] sm:$0xff]
      %v8710 = vld [vmem:[#allocation3 + $0xf8] sm:$0xff]
      %v8711 = vld [vmem:[#allocation3 + $0x100] sm:$0xff]
      %v8712 = vld [vmem:[#allocation3 + $0x108] sm:$0xff]
      %v8713 = vld [vmem:[#allocation3 + $0x110] sm:$0xff]
      %v8714 = vld [vmem:[#allocation3 + $0x118] sm:$0xff]
      %v8715 = vsel %vm4540, %v8679, 0.0
      %v8716 = vsel %vm4541, %v8680, 0.0
      %v8717 = vsel %vm4542, %v8681, 0.0
      %v8718 = vsel %vm4543, %v8682, 0.0
      %v8719 = vsel %vm4544, %v8683, 0.0
      %v8720 = vsel %vm4545, %v8684, 0.0
      %v8721 = vsel %vm4546, %v8685, 0.0
      %v8722 = vsel %vm4547, %v8686, 0.0
      %v8723 = vsel %vm4548, %v8687, 0.0
      %v8724 = vsel %vm4549, %v8688, 0.0
      %v8725 = vsel %vm4550, %v8689, 0.0
      %v8726 = vsel %vm4551, %v8690, 0.0
      %v8727 = vsel %vm4552, %v8691, 0.0
      %v8728 = vsel %vm4553, %v8692, 0.0
      %v8729 = vsel %vm4554, %v8693, 0.0
      %v8730 = vsel %vm4555, %v8694, 0.0
      %v8731 = vsel %vm4556, %v8695, 0.0
      %v8732 = vsel %vm4557, %v8696, 0.0
      %v8733 = vsel %vm4558, %v8697, 0.0
      %v8734 = vsel %vm4559, %v8698, 0.0
      %v8735 = vsel %vm4560, %v8699, 0.0
      %v8736 = vsel %vm4561, %v8700, 0.0
      %v8737 = vsel %vm4562, %v8701, 0.0
      %v8738 = vsel %vm4563, %v8702, 0.0
      %v8739 = vsel %vm4564, %v8703, 0.0
      %v8740 = vsel %vm4565, %v8704, 0.0
      %v8741 = vsel %vm4566, %v8705, 0.0
      %v8742 = vsel %vm4567, %v8706, 0.0
      %v8743 = vsel %vm4568, %v8707, 0.0
      %v8744 = vsel %vm4569, %v8708, 0.0
      %v8745 = vsel %vm4570, %v8709, 0.0
      %v8746 = vsel %vm4571, %v8710, 0.0
      %v8747 = vsel %vm4572, %v8711, 0.0
      %v8748 = vsel %vm4573, %v8712, 0.0
      %v8749 = vsel %vm4574, %v8713, 0.0
      %v8750 = vsel %vm4575, %v8714, 0.0
      %v8751 = vadd.f32 %v8715, %v8716
      %v8752 = vadd.f32 %v8751, %v8717
      %v8753 = vadd.f32 %v8752, %v8718
      %v8754 = vadd.f32 %v8753, %v8719
      %v8755 = vadd.f32 %v8754, %v8720
      %v8756 = vadd.f32 %v8755, %v8721
      %v8757 = vadd.f32 %v8756, %v8722
      %v8758 = vadd.f32 %v8757, %v8723
      %v8759 = vadd.f32 %v8758, %v8724
      %v8760 = vadd.f32 %v8759, %v8725
      %v8761 = vadd.f32 %v8760, %v8726
      %v8762 = vadd.f32 %v8761, %v8727
      %v8763 = vadd.f32 %v8762, %v8728
      %v8764 = vadd.f32 %v8763, %v8729
      %v8765 = vadd.f32 %v8764, %v8730
      %v8766 = vadd.f32 %v8765, %v8731
      %v8767 = vadd.f32 %v8766, %v8732
      %v8768 = vadd.f32 %v8767, %v8733
      %v8769 = vadd.f32 %v8768, %v8734
      %v8770 = vadd.f32 %v8769, %v8735
      %v8771 = vadd.f32 %v8770, %v8736
      %v8772 = vadd.f32 %v8771, %v8737
      %v8773 = vadd.f32 %v8772, %v8738
      %v8774 = vadd.f32 %v8773, %v8739
      %v8775 = vadd.f32 %v8774, %v8740
      %v8776 = vadd.f32 %v8775, %v8741
      %v8777 = vadd.f32 %v8776, %v8742
      %v8778 = vadd.f32 %v8777, %v8743
      %v8779 = vadd.f32 %v8778, %v8744
      %v8780 = vadd.f32 %v8779, %v8745
      %v8781 = vadd.f32 %v8780, %v8746
      %v8782 = vadd.f32 %v8781, %v8747
      %v8783 = vadd.f32 %v8782, %v8748
      %v8784 = vadd.f32 %v8783, %v8749
      %v8785 = vadd.f32 %v8784, %v8750
      %v8786 = vrot.slane %v8785, 4
      %v8787 = vadd.f32 %v8785, %v8786
      %v8788 = vrot.slane %v8787, 2
      %v8789 = vadd.f32 %v8787, %v8788
      %v8790 = vrot.slane %v8789, 1
      %v8791 = vadd.f32 %v8789, %v8790
      %v8792 = vmul.f32 %v8679, %v8679
      %v8793 = vmul.f32 %v8680, %v8680
      %v8794 = vmul.f32 %v8681, %v8681
      %v8795 = vmul.f32 %v8682, %v8682
      %v8796 = vmul.f32 %v8683, %v8683
      %v8797 = vmul.f32 %v8684, %v8684
      %v8798 = vmul.f32 %v8685, %v8685
      %v8799 = vmul.f32 %v8686, %v8686
      %v8800 = vmul.f32 %v8687, %v8687
      %v8801 = vmul.f32 %v8688, %v8688
      %v8802 = vmul.f32 %v8689, %v8689
      %v8803 = vmul.f32 %v8690, %v8690
      %v8804 = vmul.f32 %v8691, %v8691
      %v8805 = vmul.f32 %v8692, %v8692
      %v8806 = vmul.f32 %v8693, %v8693
      %v8807 = vmul.f32 %v8694, %v8694
      %v8808 = vmul.f32 %v8695, %v8695
      %v8809 = vmul.f32 %v8696, %v8696
      %v8810 = vmul.f32 %v8697, %v8697
      %v8811 = vmul.f32 %v8698, %v8698
      %v8812 = vmul.f32 %v8699, %v8699
      %v8813 = vmul.f32 %v8700, %v8700
      %v8814 = vmul.f32 %v8701, %v8701
      %v8815 = vmul.f32 %v8702, %v8702
      %v8816 = vmul.f32 %v8703, %v8703
      %v8817 = vmul.f32 %v8704, %v8704
      %v8818 = vmul.f32 %v8705, %v8705
      %v8819 = vmul.f32 %v8706, %v8706
      %v8820 = vmul.f32 %v8707, %v8707
      %v8821 = vmul.f32 %v8708, %v8708
      %v8822 = vmul.f32 %v8709, %v8709
      %v8823 = vmul.f32 %v8710, %v8710
      %v8824 = vmul.f32 %v8711, %v8711
      %v8825 = vmul.f32 %v8712, %v8712
      %v8826 = vmul.f32 %v8713, %v8713
      %v8827 = vmul.f32 %v8714, %v8714
      %v8828 = vsel %vm4540, %v8792, 0.0
      %v8829 = vsel %vm4541, %v8793, 0.0
      %v8830 = vsel %vm4542, %v8794, 0.0
      %v8831 = vsel %vm4543, %v8795, 0.0
      %v8832 = vsel %vm4544, %v8796, 0.0
      %v8833 = vsel %vm4545, %v8797, 0.0
      %v8834 = vsel %vm4546, %v8798, 0.0
      %v8835 = vsel %vm4547, %v8799, 0.0
      %v8836 = vsel %vm4548, %v8800, 0.0
      %v8837 = vsel %vm4549, %v8801, 0.0
      %v8838 = vsel %vm4550, %v8802, 0.0
      %v8839 = vsel %vm4551, %v8803, 0.0
      %v8840 = vsel %vm4552, %v8804, 0.0
      %v8841 = vsel %vm4553, %v8805, 0.0
      %v8842 = vsel %vm4554, %v8806, 0.0
      %v8843 = vsel %vm4555, %v8807, 0.0
      %v8844 = vsel %vm4556, %v8808, 0.0
      %v8845 = vsel %vm4557, %v8809, 0.0
      %v8846 = vsel %vm4558, %v8810, 0.0
      %v8847 = vsel %vm4559, %v8811, 0.0
      %v8848 = vsel %vm4560, %v8812, 0.0
      %v8849 = vsel %vm4561, %v8813, 0.0
      %v8850 = vsel %vm4562, %v8814, 0.0
      %v8851 = vsel %vm4563, %v8815, 0.0
      %v8852 = vsel %vm4564, %v8816, 0.0
      %v8853 = vsel %vm4565, %v8817, 0.0
      %v8854 = vsel %vm4566, %v8818, 0.0
      %v8855 = vsel %vm4567, %v8819, 0.0
      %v8856 = vsel %vm4568, %v8820, 0.0
      %v8857 = vsel %vm4569, %v8821, 0.0
      %v8858 = vsel %vm4570, %v8822, 0.0
      %v8859 = vsel %vm4571, %v8823, 0.0
      %v8860 = vsel %vm4572, %v8824, 0.0
      %v8861 = vsel %vm4573, %v8825, 0.0
      %v8862 = vsel %vm4574, %v8826, 0.0
      %v8863 = vsel %vm4575, %v8827, 0.0
      %v8864 = vadd.f32 %v8828, %v8829
      %v8865 = vadd.f32 %v8864, %v8830
      %v8866 = vadd.f32 %v8865, %v8831
      %v8867 = vadd.f32 %v8866, %v8832
      %v8868 = vadd.f32 %v8867, %v8833
      %v8869 = vadd.f32 %v8868, %v8834
      %v8870 = vadd.f32 %v8869, %v8835
      %v8871 = vadd.f32 %v8870, %v8836
      %v8872 = vadd.f32 %v8871, %v8837
      %v8873 = vadd.f32 %v8872, %v8838
      %v8874 = vadd.f32 %v8873, %v8839
      %v8875 = vadd.f32 %v8874, %v8840
      %v8876 = vadd.f32 %v8875, %v8841
      %v8877 = vadd.f32 %v8876, %v8842
      %v8878 = vadd.f32 %v8877, %v8843
      %v8879 = vadd.f32 %v8878, %v8844
      %v8880 = vadd.f32 %v8879, %v8845
      %v8881 = vadd.f32 %v8880, %v8846
      %v8882 = vadd.f32 %v8881, %v8847
      %v8883 = vadd.f32 %v8882, %v8848
      %v8884 = vadd.f32 %v8883, %v8849
      %v8885 = vadd.f32 %v8884, %v8850
      %v8886 = vadd.f32 %v8885, %v8851
      %v8887 = vadd.f32 %v8886, %v8852
      %v8888 = vadd.f32 %v8887, %v8853
      %v8889 = vadd.f32 %v8888, %v8854
      %v8890 = vadd.f32 %v8889, %v8855
      %v8891 = vadd.f32 %v8890, %v8856
      %v8892 = vadd.f32 %v8891, %v8857
      %v8893 = vadd.f32 %v8892, %v8858
      %v8894 = vadd.f32 %v8893, %v8859
      %v8895 = vadd.f32 %v8894, %v8860
      %v8896 = vadd.f32 %v8895, %v8861
      %v8897 = vadd.f32 %v8896, %v8862
      %v8898 = vadd.f32 %v8897, %v8863
      %v8899 = vrot.slane %v8898, 4
      %v8900 = vadd.f32 %v8898, %v8899
      %v8901 = vrot.slane %v8900, 2
      %v8902 = vadd.f32 %v8900, %v8901
      %v8903 = vrot.slane %v8902, 1
      %v8904 = vadd.f32 %v8902, %v8903
      %v8905 = vmul.f32 %v8791, 0.00390625
      %v8906 = vmul.f32 %v8904, 0.00390625
      %v8907 = vmul.f32 %v8905, %v8905
      %v8908 = vsub.f32 %v8906, %v8907
      %v8909 = vadd.f32 %v8908, 1e-05
      %v8910 = vrsqrt.pop %v8909
      %v8911 = vld [vmem:[%s165 + $0x13] sm:$0xff]
      %v8912 = vld [vmem:[%s165 + $0x1b] sm:$0xff]
      %v8913 = vld [vmem:[%s165 + $0x23] sm:$0xff]
      %v8914 = vld [vmem:[%s165 + $0x2b] sm:$0xff]
      %v8915 = vld [vmem:[%s165 + $0x33] sm:$0xff]
      %v8916 = vld [vmem:[%s165 + $0x3b] sm:$0xff]
      %v8917 = vld [vmem:[%s165 + $0x43] sm:$0xff]
      %v8918 = vld [vmem:[%s165 + $0x4b] sm:$0xff]
      %v8919 = vld [vmem:[%s165 + $0x53] sm:$0xff]
      %v8920 = vld [vmem:[%s165 + $0x5b] sm:$0xff]
      %v8921 = vld [vmem:[%s165 + $0x63] sm:$0xff]
      %v8922 = vld [vmem:[%s165 + $0x6b] sm:$0xff]
      %v8923 = vld [vmem:[%s165 + $0x73] sm:$0xff]
      %v8924 = vld [vmem:[%s165 + $0x7b] sm:$0xff]
      %v8925 = vld [vmem:[%s165 + $0x83] sm:$0xff]
      %v8926 = vld [vmem:[%s165 + $0x8b] sm:$0xff]
      %v8927 = vld [vmem:[%s165 + $0x93] sm:$0xff]
      %v8928 = vld [vmem:[%s165 + $0x9b] sm:$0xff]
      %v8929 = vld [vmem:[%s165 + $0xa3] sm:$0xff]
      %v8930 = vld [vmem:[%s165 + $0xab] sm:$0xff]
      %v8931 = vld [vmem:[%s165 + $0xb3] sm:$0xff]
      %v8932 = vld [vmem:[%s165 + $0xbb] sm:$0xff]
      %v8933 = vld [vmem:[%s165 + $0xc3] sm:$0xff]
      %v8934 = vld [vmem:[%s165 + $0xcb] sm:$0xff]
      %v8935 = vld [vmem:[%s165 + $0xd3] sm:$0xff]
      %v8936 = vld [vmem:[%s165 + $0xdb] sm:$0xff]
      %v8937 = vld [vmem:[%s165 + $0xe3] sm:$0xff]
      %v8938 = vld [vmem:[%s165 + $0xeb] sm:$0xff]
      %v8939 = vld [vmem:[%s165 + $0xf3] sm:$0xff]
      %v8940 = vld [vmem:[%s165 + $0xfb] sm:$0xff]
      %v8941 = vld [vmem:[%s165 + $0x103] sm:$0xff]
      %v8942 = vld [vmem:[%s165 + $0x10b] sm:$0xff]
      %v8943 = vld [vmem:[%s165 + $0x113] sm:$0xff]
      %v8944 = vld [vmem:[%s165 + $0x11b] sm:$0xff]
      %v8945 = vld [vmem:[%s165 + $0x123] sm:$0xff]
      %v8946 = vld [vmem:[%s165 + $0x12b] sm:$0xff]
      %v8947 = vsub.f32 %v8679, %v8905
      %v8948 = vsub.f32 %v8680, %v8905
      %v8949 = vsub.f32 %v8681, %v8905
      %v8950 = vsub.f32 %v8682, %v8905
      %v8951 = vsub.f32 %v8683, %v8905
      %v8952 = vsub.f32 %v8684, %v8905
      %v8953 = vsub.f32 %v8685, %v8905
      %v8954 = vsub.f32 %v8686, %v8905
      %v8955 = vsub.f32 %v8687, %v8905
      %v8956 = vsub.f32 %v8688, %v8905
      %v8957 = vsub.f32 %v8689, %v8905
      %v8958 = vsub.f32 %v8690, %v8905
      %v8959 = vsub.f32 %v8691, %v8905
      %v8960 = vsub.f32 %v8692, %v8905
      %v8961 = vsub.f32 %v8693, %v8905
      %v8962 = vsub.f32 %v8694, %v8905
      %v8963 = vsub.f32 %v8695, %v8905
      %v8964 = vsub.f32 %v8696, %v8905
      %v8965 = vsub.f32 %v8697, %v8905
      %v8966 = vsub.f32 %v8698, %v8905
      %v8967 = vsub.f32 %v8699, %v8905
      %v8968 = vsub.f32 %v8700, %v8905
      %v8969 = vsub.f32 %v8701, %v8905
      %v8970 = vsub.f32 %v8702, %v8905
      %v8971 = vsub.f32 %v8703, %v8905
      %v8972 = vsub.f32 %v8704, %v8905
      %v8973 = vsub.f32 %v8705, %v8905
      %v8974 = vsub.f32 %v8706, %v8905
      %v8975 = vsub.f32 %v8707, %v8905
      %v8976 = vsub.f32 %v8708, %v8905
      %v8977 = vsub.f32 %v8709, %v8905
      %v8978 = vsub.f32 %v8710, %v8905
      %v8979 = vsub.f32 %v8711, %v8905
      %v8980 = vsub.f32 %v8712, %v8905
      %v8981 = vsub.f32 %v8713, %v8905
      %v8982 = vsub.f32 %v8714, %v8905
      %v8983 = vmul.f32 %v8947, %v8910
      %v8984 = vmul.f32 %v8948, %v8910
      %v8985 = vmul.f32 %v8949, %v8910
      %v8986 = vmul.f32 %v8950, %v8910
      %v8987 = vmul.f32 %v8951, %v8910
      %v8988 = vmul.f32 %v8952, %v8910
      %v8989 = vmul.f32 %v8953, %v8910
      %v8990 = vmul.f32 %v8954, %v8910
      %v8991 = vmul.f32 %v8955, %v8910
      %v8992 = vmul.f32 %v8956, %v8910
      %v8993 = vmul.f32 %v8957, %v8910
      %v8994 = vmul.f32 %v8958, %v8910
      %v8995 = vmul.f32 %v8959, %v8910
      %v8996 = vmul.f32 %v8960, %v8910
      %v8997 = vmul.f32 %v8961, %v8910
      %v8998 = vmul.f32 %v8962, %v8910
      %v8999 = vmul.f32 %v8963, %v8910
      %v9000 = vmul.f32 %v8964, %v8910
      %v9001 = vmul.f32 %v8965, %v8910
      %v9002 = vmul.f32 %v8966, %v8910
      %v9003 = vmul.f32 %v8967, %v8910
      %v9004 = vmul.f32 %v8968, %v8910
      %v9005 = vmul.f32 %v8969, %v8910
      %v9006 = vmul.f32 %v8970, %v8910
      %v9007 = vmul.f32 %v8971, %v8910
      %v9008 = vmul.f32 %v8972, %v8910
      %v9009 = vmul.f32 %v8973, %v8910
      %v9010 = vmul.f32 %v8974, %v8910
      %v9011 = vmul.f32 %v8975, %v8910
      %v9012 = vmul.f32 %v8976, %v8910
      %v9013 = vmul.f32 %v8977, %v8910
      %v9014 = vmul.f32 %v8978, %v8910
      %v9015 = vmul.f32 %v8979, %v8910
      %v9016 = vmul.f32 %v8980, %v8910
      %v9017 = vmul.f32 %v8981, %v8910
      %v9018 = vmul.f32 %v8982, %v8910
      %v9019 = vadd.f32 %v8911, %v8983
      %v9020 = vadd.f32 %v8912, %v8984
      %v9021 = vadd.f32 %v8913, %v8985
      %v9022 = vadd.f32 %v8914, %v8986
      %v9023 = vadd.f32 %v8915, %v8987
      %v9024 = vadd.f32 %v8916, %v8988
      %v9025 = vadd.f32 %v8917, %v8989
      %v9026 = vadd.f32 %v8918, %v8990
      %v9027 = vadd.f32 %v8919, %v8991
      %v9028 = vadd.f32 %v8920, %v8992
      %v9029 = vadd.f32 %v8921, %v8993
      %v9030 = vadd.f32 %v8922, %v8994
      %v9031 = vadd.f32 %v8923, %v8995
      %v9032 = vadd.f32 %v8924, %v8996
      %v9033 = vadd.f32 %v8925, %v8997
      %v9034 = vadd.f32 %v8926, %v8998
      %v9035 = vadd.f32 %v8927, %v8999
      %v9036 = vadd.f32 %v8928, %v9000
      %v9037 = vadd.f32 %v8929, %v9001
      %v9038 = vadd.f32 %v8930, %v9002
      %v9039 = vadd.f32 %v8931, %v9003
      %v9040 = vadd.f32 %v8932, %v9004
      %v9041 = vadd.f32 %v8933, %v9005
      %v9042 = vadd.f32 %v8934, %v9006
      %v9043 = vadd.f32 %v8935, %v9007
      %v9044 = vadd.f32 %v8936, %v9008
      %v9045 = vadd.f32 %v8937, %v9009
      %v9046 = vadd.f32 %v8938, %v9010
      %v9047 = vadd.f32 %v8939, %v9011
      %v9048 = vadd.f32 %v8940, %v9012
      %v9049 = vadd.f32 %v8941, %v9013
      %v9050 = vadd.f32 %v8942, %v9014
      %v9051 = vadd.f32 %v8943, %v9015
      %v9052 = vadd.f32 %v8944, %v9016
      %v9053 = vadd.f32 %v8945, %v9017
      %v9054 = vadd.f32 %v8946, %v9018
      %9055 = vst [vmem:[%s170] sm:$0xff] %v9019
      %9056 = vst [vmem:[%s170 + $0x8] sm:$0xff] %v9020
      %9057 = vst [vmem:[%s170 + $0x10] sm:$0xff] %v9021
      %9058 = vst [vmem:[%s170 + $0x18] sm:$0xff] %v9022
      %9059 = vst [vmem:[%s170 + $0x20] sm:$0xff] %v9023
      %9060 = vst [vmem:[%s170 + $0x28] sm:$0xff] %v9024
      %9061 = vst [vmem:[%s170 + $0x30] sm:$0xff] %v9025
      %9062 = vst [vmem:[%s170 + $0x38] sm:$0xff] %v9026
      %9063 = vst [vmem:[%s170 + $0x40] sm:$0xff] %v9027
      %9064 = vst [vmem:[%s170 + $0x48] sm:$0xff] %v9028
      %9065 = vst [vmem:[%s170 + $0x50] sm:$0xff] %v9029
      %9066 = vst [vmem:[%s170 + $0x58] sm:$0xff] %v9030
      %9067 = vst [vmem:[%s170 + $0x60] sm:$0xff] %v9031
      %9068 = vst [vmem:[%s170 + $0x68] sm:$0xff] %v9032
      %9069 = vst [vmem:[%s170 + $0x70] sm:$0xff] %v9033
      %9070 = vst [vmem:[%s170 + $0x78] sm:$0xff] %v9034
      %9071 = vst [vmem:[%s170 + $0x80] sm:$0xff] %v9035
      %9072 = vst [vmem:[%s170 + $0x88] sm:$0xff] %v9036
      %9073 = vst [vmem:[%s170 + $0x90] sm:$0xff] %v9037
      %9074 = vst [vmem:[%s170 + $0x98] sm:$0xff] %v9038
      %9075 = vst [vmem:[%s170 + $0xa0] sm:$0xff] %v9039
      %9076 = vst [vmem:[%s170 + $0xa8] sm:$0xff] %v9040
      %9077 = vst [vmem:[%s170 + $0xb0] sm:$0xff] %v9041
      %9078 = vst [vmem:[%s170 + $0xb8] sm:$0xff] %v9042
      %9079 = vst [vmem:[%s170 + $0xc0] sm:$0xff] %v9043
      %9080 = vst [vmem:[%s170 + $0xc8] sm:$0xff] %v9044
      %9081 = vst [vmem:[%s170 + $0xd0] sm:$0xff] %v9045
      %9082 = vst [vmem:[%s170 + $0xd8] sm:$0xff] %v9046
      %9083 = vst [vmem:[%s170 + $0xe0] sm:$0xff] %v9047
      %9084 = vst [vmem:[%s170 + $0xe8] sm:$0xff] %v9048
      %9085 = vst [vmem:[%s170 + $0xf0] sm:$0xff] %v9049
      %9086 = vst [vmem:[%s170 + $0xf8] sm:$0xff] %v9050
      %9087 = vst [vmem:[%s170 + $0x100] sm:$0xff] %v9051
      %9088 = vst [vmem:[%s170 + $0x108] sm:$0xff] %v9052
      %9089 = vst [vmem:[%s170 + $0x110] sm:$0xff] %v9053
      %9090 = vst [vmem:[%s170 + $0x118] sm:$0xff] %v9054
      %p9091 = scmp.lt.s32.totalorder %s14, 1
      %s9092 = scalar_select %p9091, %s14, 1
      %s9093 = smul.addr %s9092, 36
      %s9094 = smul.addr %s9093, 8
      %s9095 = scalar_lea.vmem %s3, %s9094
      // Predicated region
      $region33: #{residual_block.1} parent=31 // pred_check
        %p9096 = pneg %p100
      $region34: #{residual_block.1} parent=31 // pred_check_branch
        %9098 = sbr.rel (%p9096) target = $region36
      $region35: #{residual_block.1} parent=31 // pred_region
        _
      $region36: #{residual_block.1} parent=31 // pred_fallthru
        _
    $region32: #{residual_block.1} parent=5 // pred_fallthru
      _
    %p9099 = scmp.le.s32.totalorder 2, %s9
    // Predicated region
    $region37: #{residual_block.1} parent=5 // pred_check
      %p9100 = pneg %p9099
    $region38: #{residual_block.1} parent=5 // pred_check_branch
      %9102 = sbr.rel (%p9100) target = $region40
    $region39: #{residual_block.1} parent=5 // pred_region
      %s9103 = ssub.s32 %s9, 2
      // Predicated region
      $region41: #{residual_block.1} parent=39 // pred_check
        %p9104 = pneg %p106
      $region42: #{residual_block.1} parent=39 // pred_check_branch
        %9106 = sbr.rel (%p9104) target = $region44
      $region43: #{residual_block.1} parent=39 // pred_region
        %p9107 = scmp.lt.s32.totalorder %s15, 1
        %s9108 = scalar_select %p9107, %s15, 1
        %s9109 = smul.addr %s9108, 36
        %s9110 = smul.addr %s9109, 8
        %s9111 = scalar_lea.vmem %s3, %s9110
      $region44: #{residual_block.1} parent=39 // pred_fallthru
        _
    $region40: #{residual_block.1} parent=5 // pred_fallthru
      _
  $region6: #{residual_block.1} parent=0 // loop_footer
    %s13 = sadd.s32 1, %s9
  $region7: #{residual_block.1} parent=0 // loop_footer_branch
    %8 = sbr.rel target = $region3
  $region8: #{residual_block.1} parent=0 // loop_exit
    _

</llo_original>
